<compile_context>
chip_gen: v7x
topology: tpu7x:2x2x1
jax: 0.10.0
libtpu: 0.0.40
codegen_flags: <defaults>
</compile_context>

<pallas_src>
import jax
import jax.numpy as jnp
from jax import lax
from jax.experimental import pallas as pl
from jax.experimental.pallas import tpu as pltpu


# Geometry fixed by the module (28x28 input forced by the 7*7*32 flatten).
H1, P1 = 28, 30          # conv1 spatial size / zero-padded size
S1 = P1 * P1             # 900 flat padded pixels per image, stage 1
H2, P2 = 14, 16          # conv2 spatial size / zero-padded size
S2 = P2 * P2             # 256 flat padded pixels per image, stage 2
H3 = 7                   # spatial size after second pool
F = 32 * H3 * H3         # 1568 flattened features
N_HID, N_OUT = 1024, 10
C1 = 2 * (P1 + 1) * (H2 - 1) + 1   # 807: flat source cols needed per image, pool1
C2 = 2 * (P2 + 1) * (H3 - 1) + 1   # 205: flat source cols needed per image, pool2
KH = 512                           # l2 weight streamed in two K-halves of this size


def _vmem():
    return pl.BlockSpec(memory_space=pltpu.MemorySpace.VMEM)


def _make_kernel(B):
    W1M = (B - 1) * S1 + C1            # pool1 (4-way max) columns
    W1COLS = W1M + P1 + 1              # conv1 output columns
    W2M = (B - 1) * S2 + C2            # pool2 (4-way max) columns
    W2COLS = W2M + P2 + 1              # conv2 output columns
    OFFS1 = [P1 * kh + kw for kh in range(3) for kw in range(3)]
    OFFS2 = [P2 * kh + kw for kh in range(3) for kw in range(3)]

    def kernel(x_ref, wc1_ref, bc1_ref, wc2_ref, bc2_ref,
               wl1_hbm, wl2_hbm, wl3_ref, bl1_ref, bl2_ref, bl3_ref,
               o_ref,
               x1_scr, p1_scr, x2_scr, p2_scr, h_scr,
               w1_vmem, w2_vmem, dma_sem):
        f32 = jnp.float32

        # ---- kick off the big MLP weight streams; they overlap the conv stage ----
        cp1 = pltpu.make_async_copy(wl1_hbm, w1_vmem, dma_sem.at[0])
        cp2a = pltpu.make_async_copy(wl2_hbm.at[0], w2_vmem.at[0], dma_sem.at[1])
        cp2b = pltpu.make_async_copy(wl2_hbm.at[1], w2_vmem.at[1], dma_sem.at[2])
        cp1.start()
        cp2a.start()
        cp2b.start()

        # ---- stride-2 pool-downsample selection matrices (built once, VPU only) ----
        # sel1[c, d] = 1 iff d = 16*(i+1)+(j+1) (interior of padded 16x16) and
        #              c = 60*i + 2*j (flat col of pooled pixel (i,j) in the 30-wide
        #              conv1 layout).  Padding slots are all-zero columns, so the
        #              matmul output is already the zero-padded conv2 input.
        cc = lax.broadcasted_iota(jnp.int32, (C1, S2), 0)
        dd = lax.broadcasted_iota(jnp.int32, (C1, S2), 1)
        di = (dd >> 4) - 1
        dj = (dd & 15) - 1
        ok1 = (di >= 0) & (di < H2) & (dj >= 0) & (dj < H2)
        sel1 = (ok1 & (cc == 2 * P1 * di + 2 * dj)).astype(f32)       # (807, 256)

        # sel2[c, d] = 1 iff c = 32*i + 2*j and d = 7*i + j  (flat 7x7, no padding).
        cc2 = lax.broadcasted_iota(jnp.int32, (C2, H3 * H3), 0)
        dd2 = lax.broadcasted_iota(jnp.int32, (C2, H3 * H3), 1)
        si = cc2 >> 5
        srem = cc2 & 31
        sj = srem >> 1
        ok2 = ((srem & 1) == 0) & (si < H3) & (sj < H3)
        sel2 = (ok2 & (dd2 == H3 * si + sj)).astype(f32)              # (205, 49)

        # ------------------- conv1 (1 -> 16) + ReLU + 2x2 max-pool -------------------
        # Flat zero-padded input: x1[0, b*900 + r*30 + c] = x_pad[b, r, c]
        x1_scr[...] = jnp.zeros(x1_scr.shape, x1_scr.dtype)
        xv = x_ref[...]                                      # (B, 28, 28)
        for b in range(B):
            for i in range(H1):
                dst = b * S1 + (i + 1) * P1 + 1
                x1_scr[:, dst:dst + H1] = xv[b, i:i + 1, :]

        # im2col: 9 lane-shifted copies of the flat padded image -> (9, W1COLS)
        x1 = x1_scr[...]
        for k, off in enumerate(OFFS1):
            p1_scr[k:k + 1, :] = x1[:, off:off + W1COLS]
        o1 = jnp.dot(wc1_ref[...], p1_scr[...], preferred_element_type=f32)  # (16, W1COLS)
        o1 = jnp.maximum(o1 + bc1_ref[...], 0.0)
        m1 = jnp.maximum(
            jnp.maximum(o1[:, 0:W1M], o1[:, 1:1 + W1M]),
            jnp.maximum(o1[:, P1:P1 + W1M], o1[:, P1 + 1:P1 + 1 + W1M]))     # (16, W1M)

        # stride-2 downsample + zero-padded re-embed: one selection matmul per image
        for b in range(B):
            x2_scr[:, b * S2:(b + 1) * S2] = jnp.dot(
                m1[:, b * S1:b * S1 + C1], sel1, preferred_element_type=f32)

        # ------------------- conv2 (16 -> 32) + ReLU + 2x2 max-pool -------------------
        x2 = x2_scr[...]                                     # (16, B*256)
        for k, off in enumerate(OFFS2):
            p2_scr[k * 16:(k + 1) * 16, :] = x2[:, off:off + W2COLS]
        o2 = jnp.dot(wc2_ref[...], p2_scr[...], preferred_element_type=f32)  # (32, W2COLS)
        o2 = jnp.maximum(o2 + bc2_ref[...], 0.0)
        m2 = jnp.maximum(
            jnp.maximum(o2[:, 0:W2M], o2[:, 1:1 + W2M]),
            jnp.maximum(o2[:, P2:P2 + W2M], o2[:, P2 + 1:P2 + 1 + W2M]))     # (32, W2M)

        # downsample + flatten to torch's NCHW view order: feature = co*49 + i*7 + j
        for b in range(B):
            yb = jnp.dot(m2[:, b * S2:b * S2 + C2], sel2,
                         preferred_element_type=f32)          # (32, 49)
            for co in range(32):
                h_scr[b:b + 1, co * 49:(co + 1) * 49] = yb[co:co + 1, :]

        # ------------------- MLP head: relu(l1) -> relu(l2) -> l3 -------------------
        h0 = h_scr[...].astype(jnp.bfloat16)                 # (B, 1568)
        cp1.wait()
        a1 = jnp.dot(h0, w1_vmem[...], preferred_element_type=f32) + bl1_ref[...]
        a1 = jnp.maximum(a1, 0.0).astype(jnp.bfloat16)       # (B, 1024)
        cp2a.wait()
        acc2 = jnp.dot(a1[:, 0:KH], w2_vmem[0], preferred_element_type=f32)
        cp2b.wait()
        acc2 = acc2 + jnp.dot(a1[:, KH:N_HID], w2_vmem[1], preferred_element_type=f32)
        a2 = jnp.maximum(acc2 + bl2_ref[...], 0.0).astype(jnp.bfloat16)
        o_ref[...] = jnp.dot(a2, wl3_ref[...], preferred_element_type=f32) + bl3_ref[...]

    return kernel, W1COLS, W2COLS


def cnn_forward(x_nchw, params):
    B = x_nchw.shape[0]
    x = x_nchw.astype(jnp.float32).reshape(B, H1, H1)        # C=1 -> free reshape
    kernel, w1cols, w2cols = _make_kernel(B)
    return pl.pallas_call(
        kernel,
        out_shape=jax.ShapeDtypeStruct((B, N_OUT), jnp.float32),
        in_specs=[
            _vmem(),                               # x
            _vmem(), _vmem(),                      # conv1 weight (16,9), bias (16,1)
            _vmem(), _vmem(),                      # conv2 weight (32,144), bias (32,1)
            pl.BlockSpec(memory_space=pl.ANY),     # l1 weight (HBM, manual DMA)
            pl.BlockSpec(memory_space=pl.ANY),     # l2 weight (HBM, manual DMA, 2 halves)
            _vmem(),                               # l3 weight (1024,10) bf16
            _vmem(), _vmem(), _vmem(),             # l1/l2/l3 biases (f32)
        ],
        out_specs=_vmem(),
        scratch_shapes=[
            pltpu.VMEM((1, B * S1), jnp.float32),          # flat padded conv1 input
            pltpu.VMEM((9, w1cols), jnp.float32),          # conv1 im2col matrix
            pltpu.VMEM((16, B * S2), jnp.float32),         # flat padded conv2 input
            pltpu.VMEM((144, w2cols), jnp.float32),        # conv2 im2col matrix
            pltpu.VMEM((B, F), jnp.float32),               # flattened MLP input
            pltpu.VMEM((F, N_HID), jnp.bfloat16),          # l1 weight landing buffer
            pltpu.VMEM((2, KH, N_HID), jnp.bfloat16),      # l2 weight landing buffers
            pltpu.SemaphoreType.DMA((3,)),
        ],
        compiler_params=pltpu.CompilerParams(vmem_limit_bytes=32 * 1024 * 1024),
    )(x,
      params["w_conv1"], params["b_conv1"],
      params["w_conv2"], params["b_conv2"],
      params["w_l1"], params["w_l2"], params["w_l3"],
      params["b_l1"], params["b_l2"], params["b_l3"])


# ------------------------- parameters & pure-JAX reference -------------------------
def init_torch_params(key):
    """Deterministic synthetic parameters in PyTorch layouts."""
    ks = jax.random.split(key, 10)

    def normal(k, shape, fan_in):
        return jax.random.normal(k, shape, jnp.float32) / jnp.sqrt(float(fan_in))

    return {
        "conv1_w": normal(ks[0], (16, 1, 3, 3), 9),
        "conv1_b": normal(ks[1], (16,), 9),
        "conv2_w": normal(ks[2], (32, 16, 3, 3), 144),
        "conv2_b": normal(ks[3], (32,), 144),
        "l1_w": normal(ks[4], (N_HID, F), F),
        "l1_b": normal(ks[5], (N_HID,), F),
        "l2_w": normal(ks[6], (N_HID, N_HID), N_HID),
        "l2_b": normal(ks[7], (N_HID,), N_HID),
        "l3_w": normal(ks[8], (N_OUT, N_HID), N_HID),
        "l3_b": normal(ks[9], (N_OUT,), N_HID),
    }


def to_kernel_params(tp):
    return {
        # conv weights as (Cout, 9*Cin), tap-major (kh, kw) with ci minor
        "w_conv1": tp["conv1_w"].reshape(16, 9),
        "b_conv1": tp["conv1_b"].reshape(16, 1),
        "w_conv2": jnp.transpose(tp["conv2_w"], (0, 2, 3, 1)).reshape(32, 144),
        "b_conv2": tp["conv2_b"].reshape(32, 1),
        # linear weights as (in, out), bf16 to halve HBM traffic;
        # l2 weight pre-split into two contiguous K-halves for chunked streaming
        "w_l1": jnp.transpose(tp["l1_w"]).astype(jnp.bfloat16),
        "b_l1": tp["l1_b"].reshape(1, -1),
        "w_l2": jnp.transpose(tp["l2_w"]).astype(jnp.bfloat16).reshape(2, KH, N_HID),
        "b_l2": tp["l2_b"].reshape(1, -1),
        "w_l3": jnp.transpose(tp["l3_w"]).astype(jnp.bfloat16),
        "b_l3": tp["l3_b"].reshape(1, -1),
    }


def reference_forward(x_nchw, tp):
    x = x_nchw.astype(jnp.float32)

    def conv(h, w, b):
        out = lax.conv_general_dilated(h, w, (1, 1), ((1, 1), (1, 1)),
                                       dimension_numbers=("NCHW", "OIHW", "NCHW"))
        return jnp.maximum(out + b.reshape(1, -1, 1, 1), 0.0)

    def pool(h):
        return lax.reduce_window(h, -jnp.inf, lax.max, (1, 1, 2, 2), (1, 1, 2, 2),
                                 "VALID")

    def lin(h, w, b):
        return jnp.dot(h.astype(jnp.bfloat16),
                       jnp.transpose(w).astype(jnp.bfloat16),
                       preferred_element_type=jnp.float32) + b

    h = pool(conv(x, tp["conv1_w"], tp["conv1_b"]))
    h = pool(conv(h, tp["conv2_w"], tp["conv2_b"]))
    h = h.reshape(h.shape[0], -1)
    h = jnp.maximum(lin(h, tp["l1_w"], tp["l1_b"]), 0.0)
    h = jnp.maximum(lin(h, tp["l2_w"], tp["l2_b"]), 0.0)
    return lin(h, tp["l3_w"], tp["l3_b"])


if __name__ == "__main__":
    key = jax.random.PRNGKey(0)
    k_x, k_p = jax.random.split(key)

    # Spatial size 28 is forced by the module (7*7*32 flatten after two 2x2 pools).
    x = jax.random.normal(k_x, (2, 1, 28, 28), jnp.float32)   # NCHW, like PyTorch
    tp = init_torch_params(k_p)
    params = to_kernel_params(tp)

    logits = jax.jit(cnn_forward)(x, params)
    jax.block_until_ready(logits)
    assert logits.shape == (2, 10) and logits.dtype == jnp.float32

    ref = reference_forward(x, tp)
    err = float(jnp.max(jnp.abs(logits - ref)))
    assert err < 5e-2, f"max abs error vs reference: {err}"
    print("KERNEL_OK")
</pallas_src>

<mosaic_0001>
module attributes {stable_mosaic.version = 11 : i64} {
  func.func @kernel(%arg0: memref<2x28x28xf32, #tpu.memory_space<vmem>>, %arg1: memref<16x9xf32, #tpu.memory_space<vmem>>, %arg2: memref<16x1xf32, #tpu.memory_space<vmem>>, %arg3: memref<32x144xf32, #tpu.memory_space<vmem>>, %arg4: memref<32x1xf32, #tpu.memory_space<vmem>>, %arg5: memref<1568x1024xbf16, #tpu.memory_space<any>>, %arg6: memref<2x512x1024xbf16, #tpu.memory_space<any>>, %arg7: memref<1024x10xbf16, #tpu.memory_space<vmem>>, %arg8: memref<1x1024xf32, #tpu.memory_space<vmem>>, %arg9: memref<1x1024xf32, #tpu.memory_space<vmem>>, %arg10: memref<1x10xf32, #tpu.memory_space<vmem>>, %arg11: memref<2x10xf32, #tpu.memory_space<vmem>>, %arg12: memref<1x1800xf32, #tpu.memory_space<vmem>>, %arg13: memref<9x1738xf32, #tpu.memory_space<vmem>>, %arg14: memref<16x512xf32, #tpu.memory_space<vmem>>, %arg15: memref<144x478xf32, #tpu.memory_space<vmem>>, %arg16: memref<2x1568xf32, #tpu.memory_space<vmem>>, %arg17: memref<1568x1024xbf16, #tpu.memory_space<vmem>>, %arg18: memref<2x512x1024xbf16, #tpu.memory_space<vmem>>, %arg19: memref<3x!tpu.dma_semaphore, #tpu.memory_space<semaphore_mem>>) attributes {dimension_semantics = [], scalar_prefetch = 0 : i64, scratch_operands = 8 : i64, tpu.core_type = #tpu.core_type<tc>} {
    %c0_i32 = arith.constant 0 : i32
    %0 = tpu.memref_slice %arg19[%c0_i32] : memref<3x!tpu.dma_semaphore, #tpu.memory_space<semaphore_mem>> -> memref<1x!tpu.dma_semaphore, #tpu.memory_space<semaphore_mem>>
    %1 = tpu.memref_squeeze %0 : memref<1x!tpu.dma_semaphore, #tpu.memory_space<semaphore_mem>> -> memref<!tpu.dma_semaphore, #tpu.memory_space<semaphore_mem>>
    tpu.enqueue_dma source(%arg5 : memref<1568x1024xbf16, #tpu.memory_space<any>>) target(%arg17 : memref<1568x1024xbf16, #tpu.memory_space<vmem>>) target_semaphore(%1 : memref<!tpu.dma_semaphore, #tpu.memory_space<semaphore_mem>>)
    %c0_i32_0 = arith.constant 0 : i32
    %c0_i32_1 = arith.constant 0 : i32
    %c1_i32 = arith.constant 1 : i32
    %c0_i32_2 = arith.constant 0 : i32
    %c0_i32_3 = arith.constant 0 : i32
    %2 = tpu.memref_slice %arg6[%c0_i32_0, %c0_i32_2, %c0_i32_3] : memref<2x512x1024xbf16, #tpu.memory_space<any>> -> memref<1x512x1024xbf16, #tpu.memory_space<any>>
    %3 = tpu.memref_squeeze %2 : memref<1x512x1024xbf16, #tpu.memory_space<any>> -> memref<512x1024xbf16, #tpu.memory_space<any>>
    %c0_i32_4 = arith.constant 0 : i32
    %c0_i32_5 = arith.constant 0 : i32
    %4 = tpu.memref_slice %arg18[%c0_i32_1, %c0_i32_4, %c0_i32_5] : memref<2x512x1024xbf16, #tpu.memory_space<vmem>> -> memref<1x512x1024xbf16, #tpu.memory_space<vmem>>
    %5 = tpu.memref_squeeze %4 : memref<1x512x1024xbf16, #tpu.memory_space<vmem>> -> memref<512x1024xbf16, #tpu.memory_space<vmem>>
    %6 = tpu.memref_slice %arg19[%c1_i32] : memref<3x!tpu.dma_semaphore, #tpu.memory_space<semaphore_mem>> -> memref<1x!tpu.dma_semaphore, #tpu.memory_space<semaphore_mem>>
    %7 = tpu.memref_squeeze %6 : memref<1x!tpu.dma_semaphore, #tpu.memory_space<semaphore_mem>> -> memref<!tpu.dma_semaphore, #tpu.memory_space<semaphore_mem>>
    tpu.enqueue_dma source(%3 : memref<512x1024xbf16, #tpu.memory_space<any>>) target(%5 : memref<512x1024xbf16, #tpu.memory_space<vmem>>) target_semaphore(%7 : memref<!tpu.dma_semaphore, #tpu.memory_space<semaphore_mem>>)
    %c1_i32_6 = arith.constant 1 : i32
    %c1_i32_7 = arith.constant 1 : i32
    %c2_i32 = arith.constant 2 : i32
    %c0_i32_8 = arith.constant 0 : i32
    %c0_i32_9 = arith.constant 0 : i32
    %8 = tpu.memref_slice %arg6[%c1_i32_6, %c0_i32_8, %c0_i32_9] : memref<2x512x1024xbf16, #tpu.memory_space<any>> -> memref<1x512x1024xbf16, #tpu.memory_space<any>>
    %9 = tpu.memref_squeeze %8 : memref<1x512x1024xbf16, #tpu.memory_space<any>> -> memref<512x1024xbf16, #tpu.memory_space<any>>
    %c0_i32_10 = arith.constant 0 : i32
    %c0_i32_11 = arith.constant 0 : i32
    %10 = tpu.memref_slice %arg18[%c1_i32_7, %c0_i32_10, %c0_i32_11] : memref<2x512x1024xbf16, #tpu.memory_space<vmem>> -> memref<1x512x1024xbf16, #tpu.memory_space<vmem>>
    %11 = tpu.memref_squeeze %10 : memref<1x512x1024xbf16, #tpu.memory_space<vmem>> -> memref<512x1024xbf16, #tpu.memory_space<vmem>>
    %12 = tpu.memref_slice %arg19[%c2_i32] : memref<3x!tpu.dma_semaphore, #tpu.memory_space<semaphore_mem>> -> memref<1x!tpu.dma_semaphore, #tpu.memory_space<semaphore_mem>>
    %13 = tpu.memref_squeeze %12 : memref<1x!tpu.dma_semaphore, #tpu.memory_space<semaphore_mem>> -> memref<!tpu.dma_semaphore, #tpu.memory_space<semaphore_mem>>
    tpu.enqueue_dma source(%9 : memref<512x1024xbf16, #tpu.memory_space<any>>) target(%11 : memref<512x1024xbf16, #tpu.memory_space<vmem>>) target_semaphore(%13 : memref<!tpu.dma_semaphore, #tpu.memory_space<semaphore_mem>>)
    %14 = tpu.iota {dimensions = array<i32: 0>} : vector<807x256xi32>
    %15 = tpu.iota {dimensions = array<i32: 1>} : vector<807x256xi32>
    %c4_i32 = arith.constant 4 : i32
    %16 = vector.broadcast %c4_i32 : i32 to vector<807x256xi32>
    %17 = arith.shrsi %15, %16 : vector<807x256xi32>
    %c1_i32_12 = arith.constant 1 : i32
    %18 = vector.broadcast %c1_i32_12 : i32 to vector<807x256xi32>
    %19 = arith.subi %17, %18 : vector<807x256xi32>
    %c15_i32 = arith.constant 15 : i32
    %20 = vector.broadcast %c15_i32 : i32 to vector<807x256xi32>
    %21 = arith.andi %15, %20 : vector<807x256xi32>
    %c1_i32_13 = arith.constant 1 : i32
    %22 = vector.broadcast %c1_i32_13 : i32 to vector<807x256xi32>
    %23 = arith.subi %21, %22 : vector<807x256xi32>
    %c0_i32_14 = arith.constant 0 : i32
    %24 = vector.broadcast %c0_i32_14 : i32 to vector<807x256xi32>
    %25 = arith.cmpi sge, %19, %24 : vector<807x256xi32>
    %c14_i32 = arith.constant 14 : i32
    %26 = vector.broadcast %c14_i32 : i32 to vector<807x256xi32>
    %27 = arith.cmpi slt, %19, %26 : vector<807x256xi32>
    %28 = arith.andi %25, %27 : vector<807x256xi1>
    %c0_i32_15 = arith.constant 0 : i32
    %29 = vector.broadcast %c0_i32_15 : i32 to vector<807x256xi32>
    %30 = arith.cmpi sge, %23, %29 : vector<807x256xi32>
    %31 = arith.andi %28, %30 : vector<807x256xi1>
    %c14_i32_16 = arith.constant 14 : i32
    %32 = vector.broadcast %c14_i32_16 : i32 to vector<807x256xi32>
    %33 = arith.cmpi slt, %23, %32 : vector<807x256xi32>
    %34 = arith.andi %31, %33 : vector<807x256xi1>
    %c60_i32 = arith.constant 60 : i32
    %35 = vector.broadcast %c60_i32 : i32 to vector<807x256xi32>
    %36 = arith.muli %35, %19 : vector<807x256xi32>
    %c2_i32_17 = arith.constant 2 : i32
    %37 = vector.broadcast %c2_i32_17 : i32 to vector<807x256xi32>
    %38 = arith.muli %37, %23 : vector<807x256xi32>
    %39 = arith.addi %36, %38 : vector<807x256xi32>
    %40 = arith.cmpi eq, %14, %39 : vector<807x256xi32>
    %41 = arith.andi %34, %40 : vector<807x256xi1>
    %42 = arith.extui %41 : vector<807x256xi1> to vector<807x256xi32>
    %43 = arith.sitofp %42 : vector<807x256xi32> to vector<807x256xf32>
    %44 = tpu.iota {dimensions = array<i32: 0>} : vector<205x49xi32>
    %45 = tpu.iota {dimensions = array<i32: 1>} : vector<205x49xi32>
    %c5_i32 = arith.constant 5 : i32
    %46 = vector.broadcast %c5_i32 : i32 to vector<205x49xi32>
    %47 = arith.shrsi %44, %46 : vector<205x49xi32>
    %c31_i32 = arith.constant 31 : i32
    %48 = vector.broadcast %c31_i32 : i32 to vector<205x49xi32>
    %49 = arith.andi %44, %48 : vector<205x49xi32>
    %c1_i32_18 = arith.constant 1 : i32
    %50 = vector.broadcast %c1_i32_18 : i32 to vector<205x49xi32>
    %51 = arith.shrsi %49, %50 : vector<205x49xi32>
    %c1_i32_19 = arith.constant 1 : i32
    %52 = vector.broadcast %c1_i32_19 : i32 to vector<205x49xi32>
    %53 = arith.andi %49, %52 : vector<205x49xi32>
    %c0_i32_20 = arith.constant 0 : i32
    %54 = vector.broadcast %c0_i32_20 : i32 to vector<205x49xi32>
    %55 = arith.cmpi eq, %53, %54 : vector<205x49xi32>
    %c7_i32 = arith.constant 7 : i32
    %56 = vector.broadcast %c7_i32 : i32 to vector<205x49xi32>
    %57 = arith.cmpi slt, %47, %56 : vector<205x49xi32>
    %58 = arith.andi %55, %57 : vector<205x49xi1>
    %c7_i32_21 = arith.constant 7 : i32
    %59 = vector.broadcast %c7_i32_21 : i32 to vector<205x49xi32>
    %60 = arith.cmpi slt, %51, %59 : vector<205x49xi32>
    %61 = arith.andi %58, %60 : vector<205x49xi1>
    %c7_i32_22 = arith.constant 7 : i32
    %62 = vector.broadcast %c7_i32_22 : i32 to vector<205x49xi32>
    %63 = arith.muli %62, %47 : vector<205x49xi32>
    %64 = arith.addi %63, %51 : vector<205x49xi32>
    %65 = arith.cmpi eq, %45, %64 : vector<205x49xi32>
    %66 = arith.andi %61, %65 : vector<205x49xi1>
    %67 = arith.extui %66 : vector<205x49xi1> to vector<205x49xi32>
    %68 = arith.sitofp %67 : vector<205x49xi32> to vector<205x49xf32>
    %cst = arith.constant 0.000000e+00 : f32
    %69 = vector.broadcast %cst : f32 to vector<1x1800xf32>
    %c0 = arith.constant 0 : index
    %c0_23 = arith.constant 0 : index
    %70 = vector.load %arg12[%c0, %c0_23] : memref<1x1800xf32, #tpu.memory_space<vmem>>, vector<1x1800xf32>
    tpu.vector_store %arg12[%c0, %c0_23], %69 {strides = array<i32>} : memref<1x1800xf32, #tpu.memory_space<vmem>>, vector<1x1800xf32>,
    %c0_24 = arith.constant 0 : index
    %c0_25 = arith.constant 0 : index
    %c0_26 = arith.constant 0 : index
    %71 = vector.load %arg0[%c0_24, %c0_25, %c0_26] : memref<2x28x28xf32, #tpu.memory_space<vmem>>, vector<2x28x28xf32>
    %72 = vector.extract_strided_slice %71 {offsets = [0, 0, 0], sizes = [1, 1, 28], strides = [1, 1, 1]} : vector<2x28x28xf32> to vector<1x1x28xf32>
    %73 = vector.shape_cast %72 : vector<1x1x28xf32> to vector<1x28xf32>
    %c0_27 = arith.constant 0 : index
    %c31 = arith.constant 31 : index
    %74 = vector.load %arg12[%c0_27, %c31] : memref<1x1800xf32, #tpu.memory_space<vmem>>, vector<1x28xf32>
    tpu.vector_store %arg12[%c0_27, %c31], %73 {strides = array<i32>} : memref<1x1800xf32, #tpu.memory_space<vmem>>, vector<1x28xf32>,
    %75 = vector.extract_strided_slice %71 {offsets = [0, 1, 0], sizes = [1, 1, 28], strides = [1, 1, 1]} : vector<2x28x28xf32> to vector<1x1x28xf32>
    %76 = vector.shape_cast %75 : vector<1x1x28xf32> to vector<1x28xf32>
    %c0_28 = arith.constant 0 : index
    %c61 = arith.constant 61 : index
    %77 = vector.load %arg12[%c0_28, %c61] : memref<1x1800xf32, #tpu.memory_space<vmem>>, vector<1x28xf32>
    tpu.vector_store %arg12[%c0_28, %c61], %76 {strides = array<i32>} : memref<1x1800xf32, #tpu.memory_space<vmem>>, vector<1x28xf32>,
    %78 = vector.extract_strided_slice %71 {offsets = [0, 2, 0], sizes = [1, 1, 28], strides = [1, 1, 1]} : vector<2x28x28xf32> to vector<1x1x28xf32>
    %79 = vector.shape_cast %78 : vector<1x1x28xf32> to vector<1x28xf32>
    %c0_29 = arith.constant 0 : index
    %c91 = arith.constant 91 : index
    %80 = vector.load %arg12[%c0_29, %c91] : memref<1x1800xf32, #tpu.memory_space<vmem>>, vector<1x28xf32>
    tpu.vector_store %arg12[%c0_29, %c91], %79 {strides = array<i32>} : memref<1x1800xf32, #tpu.memory_space<vmem>>, vector<1x28xf32>,
    %81 = vector.extract_strided_slice %71 {offsets = [0, 3, 0], sizes = [1, 1, 28], strides = [1, 1, 1]} : vector<2x28x28xf32> to vector<1x1x28xf32>
    %82 = vector.shape_cast %81 : vector<1x1x28xf32> to vector<1x28xf32>
    %c0_30 = arith.constant 0 : index
    %c121 = arith.constant 121 : index
    %83 = vector.load %arg12[%c0_30, %c121] : memref<1x1800xf32, #tpu.memory_space<vmem>>, vector<1x28xf32>
    tpu.vector_store %arg12[%c0_30, %c121], %82 {strides = array<i32>} : memref<1x1800xf32, #tpu.memory_space<vmem>>, vector<1x28xf32>,
    %84 = vector.extract_strided_slice %71 {offsets = [0, 4, 0], sizes = [1, 1, 28], strides = [1, 1, 1]} : vector<2x28x28xf32> to vector<1x1x28xf32>
    %85 = vector.shape_cast %84 : vector<1x1x28xf32> to vector<1x28xf32>
    %c0_31 = arith.constant 0 : index
    %c151 = arith.constant 151 : index
    %86 = vector.load %arg12[%c0_31, %c151] : memref<1x1800xf32, #tpu.memory_space<vmem>>, vector<1x28xf32>
    tpu.vector_store %arg12[%c0_31, %c151], %85 {strides = array<i32>} : memref<1x1800xf32, #tpu.memory_space<vmem>>, vector<1x28xf32>,
    %87 = vector.extract_strided_slice %71 {offsets = [0, 5, 0], sizes = [1, 1, 28], strides = [1, 1, 1]} : vector<2x28x28xf32> to vector<1x1x28xf32>
    %88 = vector.shape_cast %87 : vector<1x1x28xf32> to vector<1x28xf32>
    %c0_32 = arith.constant 0 : index
    %c181 = arith.constant 181 : index
    %89 = vector.load %arg12[%c0_32, %c181] : memref<1x1800xf32, #tpu.memory_space<vmem>>, vector<1x28xf32>
    tpu.vector_store %arg12[%c0_32, %c181], %88 {strides = array<i32>} : memref<1x1800xf32, #tpu.memory_space<vmem>>, vector<1x28xf32>,
    %90 = vector.extract_strided_slice %71 {offsets = [0, 6, 0], sizes = [1, 1, 28], strides = [1, 1, 1]} : vector<2x28x28xf32> to vector<1x1x28xf32>
    %91 = vector.shape_cast %90 : vector<1x1x28xf32> to vector<1x28xf32>
    %c0_33 = arith.constant 0 : index
    %c211 = arith.constant 211 : index
    %92 = vector.load %arg12[%c0_33, %c211] : memref<1x1800xf32, #tpu.memory_space<vmem>>, vector<1x28xf32>
    tpu.vector_store %arg12[%c0_33, %c211], %91 {strides = array<i32>} : memref<1x1800xf32, #tpu.memory_space<vmem>>, vector<1x28xf32>,
    %93 = vector.extract_strided_slice %71 {offsets = [0, 7, 0], sizes = [1, 1, 28], strides = [1, 1, 1]} : vector<2x28x28xf32> to vector<1x1x28xf32>
    %94 = vector.shape_cast %93 : vector<1x1x28xf32> to vector<1x28xf32>
    %c0_34 = arith.constant 0 : index
    %c241 = arith.constant 241 : index
    %95 = vector.load %arg12[%c0_34, %c241] : memref<1x1800xf32, #tpu.memory_space<vmem>>, vector<1x28xf32>
    tpu.vector_store %arg12[%c0_34, %c241], %94 {strides = array<i32>} : memref<1x1800xf32, #tpu.memory_space<vmem>>, vector<1x28xf32>,
    %96 = vector.extract_strided_slice %71 {offsets = [0, 8, 0], sizes = [1, 1, 28], strides = [1, 1, 1]} : vector<2x28x28xf32> to vector<1x1x28xf32>
    %97 = vector.shape_cast %96 : vector<1x1x28xf32> to vector<1x28xf32>
    %c0_35 = arith.constant 0 : index
    %c271 = arith.constant 271 : index
    %98 = vector.load %arg12[%c0_35, %c271] : memref<1x1800xf32, #tpu.memory_space<vmem>>, vector<1x28xf32>
    tpu.vector_store %arg12[%c0_35, %c271], %97 {strides = array<i32>} : memref<1x1800xf32, #tpu.memory_space<vmem>>, vector<1x28xf32>,
    %99 = vector.extract_strided_slice %71 {offsets = [0, 9, 0], sizes = [1, 1, 28], strides = [1, 1, 1]} : vector<2x28x28xf32> to vector<1x1x28xf32>
    %100 = vector.shape_cast %99 : vector<1x1x28xf32> to vector<1x28xf32>
    %c0_36 = arith.constant 0 : index
    %c301 = arith.constant 301 : index
    %101 = vector.load %arg12[%c0_36, %c301] : memref<1x1800xf32, #tpu.memory_space<vmem>>, vector<1x28xf32>
    tpu.vector_store %arg12[%c0_36, %c301], %100 {strides = array<i32>} : memref<1x1800xf32, #tpu.memory_space<vmem>>, vector<1x28xf32>,
    %102 = vector.extract_strided_slice %71 {offsets = [0, 10, 0], sizes = [1, 1, 28], strides = [1, 1, 1]} : vector<2x28x28xf32> to vector<1x1x28xf32>
    %103 = vector.shape_cast %102 : vector<1x1x28xf32> to vector<1x28xf32>
    %c0_37 = arith.constant 0 : index
    %c331 = arith.constant 331 : index
    %104 = vector.load %arg12[%c0_37, %c331] : memref<1x1800xf32, #tpu.memory_space<vmem>>, vector<1x28xf32>
    tpu.vector_store %arg12[%c0_37, %c331], %103 {strides = array<i32>} : memref<1x1800xf32, #tpu.memory_space<vmem>>, vector<1x28xf32>,
    %105 = vector.extract_strided_slice %71 {offsets = [0, 11, 0], sizes = [1, 1, 28], strides = [1, 1, 1]} : vector<2x28x28xf32> to vector<1x1x28xf32>
    %106 = vector.shape_cast %105 : vector<1x1x28xf32> to vector<1x28xf32>
    %c0_38 = arith.constant 0 : index
    %c361 = arith.constant 361 : index
    %107 = vector.load %arg12[%c0_38, %c361] : memref<1x1800xf32, #tpu.memory_space<vmem>>, vector<1x28xf32>
    tpu.vector_store %arg12[%c0_38, %c361], %106 {strides = array<i32>} : memref<1x1800xf32, #tpu.memory_space<vmem>>, vector<1x28xf32>,
    %108 = vector.extract_strided_slice %71 {offsets = [0, 12, 0], sizes = [1, 1, 28], strides = [1, 1, 1]} : vector<2x28x28xf32> to vector<1x1x28xf32>
    %109 = vector.shape_cast %108 : vector<1x1x28xf32> to vector<1x28xf32>
    %c0_39 = arith.constant 0 : index
    %c391 = arith.constant 391 : index
    %110 = vector.load %arg12[%c0_39, %c391] : memref<1x1800xf32, #tpu.memory_space<vmem>>, vector<1x28xf32>
    tpu.vector_store %arg12[%c0_39, %c391], %109 {strides = array<i32>} : memref<1x1800xf32, #tpu.memory_space<vmem>>, vector<1x28xf32>,
    %111 = vector.extract_strided_slice %71 {offsets = [0, 13, 0], sizes = [1, 1, 28], strides = [1, 1, 1]} : vector<2x28x28xf32> to vector<1x1x28xf32>
    %112 = vector.shape_cast %111 : vector<1x1x28xf32> to vector<1x28xf32>
    %c0_40 = arith.constant 0 : index
    %c421 = arith.constant 421 : index
    %113 = vector.load %arg12[%c0_40, %c421] : memref<1x1800xf32, #tpu.memory_space<vmem>>, vector<1x28xf32>
    tpu.vector_store %arg12[%c0_40, %c421], %112 {strides = array<i32>} : memref<1x1800xf32, #tpu.memory_space<vmem>>, vector<1x28xf32>,
    %114 = vector.extract_strided_slice %71 {offsets = [0, 14, 0], sizes = [1, 1, 28], strides = [1, 1, 1]} : vector<2x28x28xf32> to vector<1x1x28xf32>
    %115 = vector.shape_cast %114 : vector<1x1x28xf32> to vector<1x28xf32>
    %c0_41 = arith.constant 0 : index
    %c451 = arith.constant 451 : index
    %116 = vector.load %arg12[%c0_41, %c451] : memref<1x1800xf32, #tpu.memory_space<vmem>>, vector<1x28xf32>
    tpu.vector_store %arg12[%c0_41, %c451], %115 {strides = array<i32>} : memref<1x1800xf32, #tpu.memory_space<vmem>>, vector<1x28xf32>,
    %117 = vector.extract_strided_slice %71 {offsets = [0, 15, 0], sizes = [1, 1, 28], strides = [1, 1, 1]} : vector<2x28x28xf32> to vector<1x1x28xf32>
    %118 = vector.shape_cast %117 : vector<1x1x28xf32> to vector<1x28xf32>
    %c0_42 = arith.constant 0 : index
    %c481 = arith.constant 481 : index
    %119 = vector.load %arg12[%c0_42, %c481] : memref<1x1800xf32, #tpu.memory_space<vmem>>, vector<1x28xf32>
    tpu.vector_store %arg12[%c0_42, %c481], %118 {strides = array<i32>} : memref<1x1800xf32, #tpu.memory_space<vmem>>, vector<1x28xf32>,
    %120 = vector.extract_strided_slice %71 {offsets = [0, 16, 0], sizes = [1, 1, 28], strides = [1, 1, 1]} : vector<2x28x28xf32> to vector<1x1x28xf32>
    %121 = vector.shape_cast %120 : vector<1x1x28xf32> to vector<1x28xf32>
    %c0_43 = arith.constant 0 : index
    %c511 = arith.constant 511 : index
    %122 = vector.load %arg12[%c0_43, %c511] : memref<1x1800xf32, #tpu.memory_space<vmem>>, vector<1x28xf32>
    tpu.vector_store %arg12[%c0_43, %c511], %121 {strides = array<i32>} : memref<1x1800xf32, #tpu.memory_space<vmem>>, vector<1x28xf32>,
    %123 = vector.extract_strided_slice %71 {offsets = [0, 17, 0], sizes = [1, 1, 28], strides = [1, 1, 1]} : vector<2x28x28xf32> to vector<1x1x28xf32>
    %124 = vector.shape_cast %123 : vector<1x1x28xf32> to vector<1x28xf32>
    %c0_44 = arith.constant 0 : index
    %c541 = arith.constant 541 : index
    %125 = vector.load %arg12[%c0_44, %c541] : memref<1x1800xf32, #tpu.memory_space<vmem>>, vector<1x28xf32>
    tpu.vector_store %arg12[%c0_44, %c541], %124 {strides = array<i32>} : memref<1x1800xf32, #tpu.memory_space<vmem>>, vector<1x28xf32>,
    %126 = vector.extract_strided_slice %71 {offsets = [0, 18, 0], sizes = [1, 1, 28], strides = [1, 1, 1]} : vector<2x28x28xf32> to vector<1x1x28xf32>
    %127 = vector.shape_cast %126 : vector<1x1x28xf32> to vector<1x28xf32>
    %c0_45 = arith.constant 0 : index
    %c571 = arith.constant 571 : index
    %128 = vector.load %arg12[%c0_45, %c571] : memref<1x1800xf32, #tpu.memory_space<vmem>>, vector<1x28xf32>
    tpu.vector_store %arg12[%c0_45, %c571], %127 {strides = array<i32>} : memref<1x1800xf32, #tpu.memory_space<vmem>>, vector<1x28xf32>,
    %129 = vector.extract_strided_slice %71 {offsets = [0, 19, 0], sizes = [1, 1, 28], strides = [1, 1, 1]} : vector<2x28x28xf32> to vector<1x1x28xf32>
    %130 = vector.shape_cast %129 : vector<1x1x28xf32> to vector<1x28xf32>
    %c0_46 = arith.constant 0 : index
    %c601 = arith.constant 601 : index
    %131 = vector.load %arg12[%c0_46, %c601] : memref<1x1800xf32, #tpu.memory_space<vmem>>, vector<1x28xf32>
    tpu.vector_store %arg12[%c0_46, %c601], %130 {strides = array<i32>} : memref<1x1800xf32, #tpu.memory_space<vmem>>, vector<1x28xf32>,
    %132 = vector.extract_strided_slice %71 {offsets = [0, 20, 0], sizes = [1, 1, 28], strides = [1, 1, 1]} : vector<2x28x28xf32> to vector<1x1x28xf32>
    %133 = vector.shape_cast %132 : vector<1x1x28xf32> to vector<1x28xf32>
    %c0_47 = arith.constant 0 : index
    %c631 = arith.constant 631 : index
    %134 = vector.load %arg12[%c0_47, %c631] : memref<1x1800xf32, #tpu.memory_space<vmem>>, vector<1x28xf32>
    tpu.vector_store %arg12[%c0_47, %c631], %133 {strides = array<i32>} : memref<1x1800xf32, #tpu.memory_space<vmem>>, vector<1x28xf32>,
    %135 = vector.extract_strided_slice %71 {offsets = [0, 21, 0], sizes = [1, 1, 28], strides = [1, 1, 1]} : vector<2x28x28xf32> to vector<1x1x28xf32>
    %136 = vector.shape_cast %135 : vector<1x1x28xf32> to vector<1x28xf32>
    %c0_48 = arith.constant 0 : index
    %c661 = arith.constant 661 : index
    %137 = vector.load %arg12[%c0_48, %c661] : memref<1x1800xf32, #tpu.memory_space<vmem>>, vector<1x28xf32>
    tpu.vector_store %arg12[%c0_48, %c661], %136 {strides = array<i32>} : memref<1x1800xf32, #tpu.memory_space<vmem>>, vector<1x28xf32>,
    %138 = vector.extract_strided_slice %71 {offsets = [0, 22, 0], sizes = [1, 1, 28], strides = [1, 1, 1]} : vector<2x28x28xf32> to vector<1x1x28xf32>
    %139 = vector.shape_cast %138 : vector<1x1x28xf32> to vector<1x28xf32>
    %c0_49 = arith.constant 0 : index
    %c691 = arith.constant 691 : index
    %140 = vector.load %arg12[%c0_49, %c691] : memref<1x1800xf32, #tpu.memory_space<vmem>>, vector<1x28xf32>
    tpu.vector_store %arg12[%c0_49, %c691], %139 {strides = array<i32>} : memref<1x1800xf32, #tpu.memory_space<vmem>>, vector<1x28xf32>,
    %141 = vector.extract_strided_slice %71 {offsets = [0, 23, 0], sizes = [1, 1, 28], strides = [1, 1, 1]} : vector<2x28x28xf32> to vector<1x1x28xf32>
    %142 = vector.shape_cast %141 : vector<1x1x28xf32> to vector<1x28xf32>
    %c0_50 = arith.constant 0 : index
    %c721 = arith.constant 721 : index
    %143 = vector.load %arg12[%c0_50, %c721] : memref<1x1800xf32, #tpu.memory_space<vmem>>, vector<1x28xf32>
    tpu.vector_store %arg12[%c0_50, %c721], %142 {strides = array<i32>} : memref<1x1800xf32, #tpu.memory_space<vmem>>, vector<1x28xf32>,
    %144 = vector.extract_strided_slice %71 {offsets = [0, 24, 0], sizes = [1, 1, 28], strides = [1, 1, 1]} : vector<2x28x28xf32> to vector<1x1x28xf32>
    %145 = vector.shape_cast %144 : vector<1x1x28xf32> to vector<1x28xf32>
    %c0_51 = arith.constant 0 : index
    %c751 = arith.constant 751 : index
    %146 = vector.load %arg12[%c0_51, %c751] : memref<1x1800xf32, #tpu.memory_space<vmem>>, vector<1x28xf32>
    tpu.vector_store %arg12[%c0_51, %c751], %145 {strides = array<i32>} : memref<1x1800xf32, #tpu.memory_space<vmem>>, vector<1x28xf32>,
    %147 = vector.extract_strided_slice %71 {offsets = [0, 25, 0], sizes = [1, 1, 28], strides = [1, 1, 1]} : vector<2x28x28xf32> to vector<1x1x28xf32>
    %148 = vector.shape_cast %147 : vector<1x1x28xf32> to vector<1x28xf32>
    %c0_52 = arith.constant 0 : index
    %c781 = arith.constant 781 : index
    %149 = vector.load %arg12[%c0_52, %c781] : memref<1x1800xf32, #tpu.memory_space<vmem>>, vector<1x28xf32>
    tpu.vector_store %arg12[%c0_52, %c781], %148 {strides = array<i32>} : memref<1x1800xf32, #tpu.memory_space<vmem>>, vector<1x28xf32>,
    %150 = vector.extract_strided_slice %71 {offsets = [0, 26, 0], sizes = [1, 1, 28], strides = [1, 1, 1]} : vector<2x28x28xf32> to vector<1x1x28xf32>
    %151 = vector.shape_cast %150 : vector<1x1x28xf32> to vector<1x28xf32>
    %c0_53 = arith.constant 0 : index
    %c811 = arith.constant 811 : index
    %152 = vector.load %arg12[%c0_53, %c811] : memref<1x1800xf32, #tpu.memory_space<vmem>>, vector<1x28xf32>
    tpu.vector_store %arg12[%c0_53, %c811], %151 {strides = array<i32>} : memref<1x1800xf32, #tpu.memory_space<vmem>>, vector<1x28xf32>,
    %153 = vector.extract_strided_slice %71 {offsets = [0, 27, 0], sizes = [1, 1, 28], strides = [1, 1, 1]} : vector<2x28x28xf32> to vector<1x1x28xf32>
    %154 = vector.shape_cast %153 : vector<1x1x28xf32> to vector<1x28xf32>
    %c0_54 = arith.constant 0 : index
    %c841 = arith.constant 841 : index
    %155 = vector.load %arg12[%c0_54, %c841] : memref<1x1800xf32, #tpu.memory_space<vmem>>, vector<1x28xf32>
    tpu.vector_store %arg12[%c0_54, %c841], %154 {strides = array<i32>} : memref<1x1800xf32, #tpu.memory_space<vmem>>, vector<1x28xf32>,
    %156 = vector.extract_strided_slice %71 {offsets = [1, 0, 0], sizes = [1, 1, 28], strides = [1, 1, 1]} : vector<2x28x28xf32> to vector<1x1x28xf32>
    %157 = vector.shape_cast %156 : vector<1x1x28xf32> to vector<1x28xf32>
    %c0_55 = arith.constant 0 : index
    %c931 = arith.constant 931 : index
    %158 = vector.load %arg12[%c0_55, %c931] : memref<1x1800xf32, #tpu.memory_space<vmem>>, vector<1x28xf32>
    tpu.vector_store %arg12[%c0_55, %c931], %157 {strides = array<i32>} : memref<1x1800xf32, #tpu.memory_space<vmem>>, vector<1x28xf32>,
    %159 = vector.extract_strided_slice %71 {offsets = [1, 1, 0], sizes = [1, 1, 28], strides = [1, 1, 1]} : vector<2x28x28xf32> to vector<1x1x28xf32>
    %160 = vector.shape_cast %159 : vector<1x1x28xf32> to vector<1x28xf32>
    %c0_56 = arith.constant 0 : index
    %c961 = arith.constant 961 : index
    %161 = vector.load %arg12[%c0_56, %c961] : memref<1x1800xf32, #tpu.memory_space<vmem>>, vector<1x28xf32>
    tpu.vector_store %arg12[%c0_56, %c961], %160 {strides = array<i32>} : memref<1x1800xf32, #tpu.memory_space<vmem>>, vector<1x28xf32>,
    %162 = vector.extract_strided_slice %71 {offsets = [1, 2, 0], sizes = [1, 1, 28], strides = [1, 1, 1]} : vector<2x28x28xf32> to vector<1x1x28xf32>
    %163 = vector.shape_cast %162 : vector<1x1x28xf32> to vector<1x28xf32>
    %c0_57 = arith.constant 0 : index
    %c991 = arith.constant 991 : index
    %164 = vector.load %arg12[%c0_57, %c991] : memref<1x1800xf32, #tpu.memory_space<vmem>>, vector<1x28xf32>
    tpu.vector_store %arg12[%c0_57, %c991], %163 {strides = array<i32>} : memref<1x1800xf32, #tpu.memory_space<vmem>>, vector<1x28xf32>,
    %165 = vector.extract_strided_slice %71 {offsets = [1, 3, 0], sizes = [1, 1, 28], strides = [1, 1, 1]} : vector<2x28x28xf32> to vector<1x1x28xf32>
    %166 = vector.shape_cast %165 : vector<1x1x28xf32> to vector<1x28xf32>
    %c0_58 = arith.constant 0 : index
    %c1021 = arith.constant 1021 : index
    %167 = vector.load %arg12[%c0_58, %c1021] : memref<1x1800xf32, #tpu.memory_space<vmem>>, vector<1x28xf32>
    tpu.vector_store %arg12[%c0_58, %c1021], %166 {strides = array<i32>} : memref<1x1800xf32, #tpu.memory_space<vmem>>, vector<1x28xf32>,
    %168 = vector.extract_strided_slice %71 {offsets = [1, 4, 0], sizes = [1, 1, 28], strides = [1, 1, 1]} : vector<2x28x28xf32> to vector<1x1x28xf32>
    %169 = vector.shape_cast %168 : vector<1x1x28xf32> to vector<1x28xf32>
    %c0_59 = arith.constant 0 : index
    %c1051 = arith.constant 1051 : index
    %170 = vector.load %arg12[%c0_59, %c1051] : memref<1x1800xf32, #tpu.memory_space<vmem>>, vector<1x28xf32>
    tpu.vector_store %arg12[%c0_59, %c1051], %169 {strides = array<i32>} : memref<1x1800xf32, #tpu.memory_space<vmem>>, vector<1x28xf32>,
    %171 = vector.extract_strided_slice %71 {offsets = [1, 5, 0], sizes = [1, 1, 28], strides = [1, 1, 1]} : vector<2x28x28xf32> to vector<1x1x28xf32>
    %172 = vector.shape_cast %171 : vector<1x1x28xf32> to vector<1x28xf32>
    %c0_60 = arith.constant 0 : index
    %c1081 = arith.constant 1081 : index
    %173 = vector.load %arg12[%c0_60, %c1081] : memref<1x1800xf32, #tpu.memory_space<vmem>>, vector<1x28xf32>
    tpu.vector_store %arg12[%c0_60, %c1081], %172 {strides = array<i32>} : memref<1x1800xf32, #tpu.memory_space<vmem>>, vector<1x28xf32>,
    %174 = vector.extract_strided_slice %71 {offsets = [1, 6, 0], sizes = [1, 1, 28], strides = [1, 1, 1]} : vector<2x28x28xf32> to vector<1x1x28xf32>
    %175 = vector.shape_cast %174 : vector<1x1x28xf32> to vector<1x28xf32>
    %c0_61 = arith.constant 0 : index
    %c1111 = arith.constant 1111 : index
    %176 = vector.load %arg12[%c0_61, %c1111] : memref<1x1800xf32, #tpu.memory_space<vmem>>, vector<1x28xf32>
    tpu.vector_store %arg12[%c0_61, %c1111], %175 {strides = array<i32>} : memref<1x1800xf32, #tpu.memory_space<vmem>>, vector<1x28xf32>,
    %177 = vector.extract_strided_slice %71 {offsets = [1, 7, 0], sizes = [1, 1, 28], strides = [1, 1, 1]} : vector<2x28x28xf32> to vector<1x1x28xf32>
    %178 = vector.shape_cast %177 : vector<1x1x28xf32> to vector<1x28xf32>
    %c0_62 = arith.constant 0 : index
    %c1141 = arith.constant 1141 : index
    %179 = vector.load %arg12[%c0_62, %c1141] : memref<1x1800xf32, #tpu.memory_space<vmem>>, vector<1x28xf32>
    tpu.vector_store %arg12[%c0_62, %c1141], %178 {strides = array<i32>} : memref<1x1800xf32, #tpu.memory_space<vmem>>, vector<1x28xf32>,
    %180 = vector.extract_strided_slice %71 {offsets = [1, 8, 0], sizes = [1, 1, 28], strides = [1, 1, 1]} : vector<2x28x28xf32> to vector<1x1x28xf32>
    %181 = vector.shape_cast %180 : vector<1x1x28xf32> to vector<1x28xf32>
    %c0_63 = arith.constant 0 : index
    %c1171 = arith.constant 1171 : index
    %182 = vector.load %arg12[%c0_63, %c1171] : memref<1x1800xf32, #tpu.memory_space<vmem>>, vector<1x28xf32>
    tpu.vector_store %arg12[%c0_63, %c1171], %181 {strides = array<i32>} : memref<1x1800xf32, #tpu.memory_space<vmem>>, vector<1x28xf32>,
    %183 = vector.extract_strided_slice %71 {offsets = [1, 9, 0], sizes = [1, 1, 28], strides = [1, 1, 1]} : vector<2x28x28xf32> to vector<1x1x28xf32>
    %184 = vector.shape_cast %183 : vector<1x1x28xf32> to vector<1x28xf32>
    %c0_64 = arith.constant 0 : index
    %c1201 = arith.constant 1201 : index
    %185 = vector.load %arg12[%c0_64, %c1201] : memref<1x1800xf32, #tpu.memory_space<vmem>>, vector<1x28xf32>
    tpu.vector_store %arg12[%c0_64, %c1201], %184 {strides = array<i32>} : memref<1x1800xf32, #tpu.memory_space<vmem>>, vector<1x28xf32>,
    %186 = vector.extract_strided_slice %71 {offsets = [1, 10, 0], sizes = [1, 1, 28], strides = [1, 1, 1]} : vector<2x28x28xf32> to vector<1x1x28xf32>
    %187 = vector.shape_cast %186 : vector<1x1x28xf32> to vector<1x28xf32>
    %c0_65 = arith.constant 0 : index
    %c1231 = arith.constant 1231 : index
    %188 = vector.load %arg12[%c0_65, %c1231] : memref<1x1800xf32, #tpu.memory_space<vmem>>, vector<1x28xf32>
    tpu.vector_store %arg12[%c0_65, %c1231], %187 {strides = array<i32>} : memref<1x1800xf32, #tpu.memory_space<vmem>>, vector<1x28xf32>,
    %189 = vector.extract_strided_slice %71 {offsets = [1, 11, 0], sizes = [1, 1, 28], strides = [1, 1, 1]} : vector<2x28x28xf32> to vector<1x1x28xf32>
    %190 = vector.shape_cast %189 : vector<1x1x28xf32> to vector<1x28xf32>
    %c0_66 = arith.constant 0 : index
    %c1261 = arith.constant 1261 : index
    %191 = vector.load %arg12[%c0_66, %c1261] : memref<1x1800xf32, #tpu.memory_space<vmem>>, vector<1x28xf32>
    tpu.vector_store %arg12[%c0_66, %c1261], %190 {strides = array<i32>} : memref<1x1800xf32, #tpu.memory_space<vmem>>, vector<1x28xf32>,
    %192 = vector.extract_strided_slice %71 {offsets = [1, 12, 0], sizes = [1, 1, 28], strides = [1, 1, 1]} : vector<2x28x28xf32> to vector<1x1x28xf32>
    %193 = vector.shape_cast %192 : vector<1x1x28xf32> to vector<1x28xf32>
    %c0_67 = arith.constant 0 : index
    %c1291 = arith.constant 1291 : index
    %194 = vector.load %arg12[%c0_67, %c1291] : memref<1x1800xf32, #tpu.memory_space<vmem>>, vector<1x28xf32>
    tpu.vector_store %arg12[%c0_67, %c1291], %193 {strides = array<i32>} : memref<1x1800xf32, #tpu.memory_space<vmem>>, vector<1x28xf32>,
    %195 = vector.extract_strided_slice %71 {offsets = [1, 13, 0], sizes = [1, 1, 28], strides = [1, 1, 1]} : vector<2x28x28xf32> to vector<1x1x28xf32>
    %196 = vector.shape_cast %195 : vector<1x1x28xf32> to vector<1x28xf32>
    %c0_68 = arith.constant 0 : index
    %c1321 = arith.constant 1321 : index
    %197 = vector.load %arg12[%c0_68, %c1321] : memref<1x1800xf32, #tpu.memory_space<vmem>>, vector<1x28xf32>
    tpu.vector_store %arg12[%c0_68, %c1321], %196 {strides = array<i32>} : memref<1x1800xf32, #tpu.memory_space<vmem>>, vector<1x28xf32>,
    %198 = vector.extract_strided_slice %71 {offsets = [1, 14, 0], sizes = [1, 1, 28], strides = [1, 1, 1]} : vector<2x28x28xf32> to vector<1x1x28xf32>
    %199 = vector.shape_cast %198 : vector<1x1x28xf32> to vector<1x28xf32>
    %c0_69 = arith.constant 0 : index
    %c1351 = arith.constant 1351 : index
    %200 = vector.load %arg12[%c0_69, %c1351] : memref<1x1800xf32, #tpu.memory_space<vmem>>, vector<1x28xf32>
    tpu.vector_store %arg12[%c0_69, %c1351], %199 {strides = array<i32>} : memref<1x1800xf32, #tpu.memory_space<vmem>>, vector<1x28xf32>,
    %201 = vector.extract_strided_slice %71 {offsets = [1, 15, 0], sizes = [1, 1, 28], strides = [1, 1, 1]} : vector<2x28x28xf32> to vector<1x1x28xf32>
    %202 = vector.shape_cast %201 : vector<1x1x28xf32> to vector<1x28xf32>
    %c0_70 = arith.constant 0 : index
    %c1381 = arith.constant 1381 : index
    %203 = vector.load %arg12[%c0_70, %c1381] : memref<1x1800xf32, #tpu.memory_space<vmem>>, vector<1x28xf32>
    tpu.vector_store %arg12[%c0_70, %c1381], %202 {strides = array<i32>} : memref<1x1800xf32, #tpu.memory_space<vmem>>, vector<1x28xf32>,
    %204 = vector.extract_strided_slice %71 {offsets = [1, 16, 0], sizes = [1, 1, 28], strides = [1, 1, 1]} : vector<2x28x28xf32> to vector<1x1x28xf32>
    %205 = vector.shape_cast %204 : vector<1x1x28xf32> to vector<1x28xf32>
    %c0_71 = arith.constant 0 : index
    %c1411 = arith.constant 1411 : index
    %206 = vector.load %arg12[%c0_71, %c1411] : memref<1x1800xf32, #tpu.memory_space<vmem>>, vector<1x28xf32>
    tpu.vector_store %arg12[%c0_71, %c1411], %205 {strides = array<i32>} : memref<1x1800xf32, #tpu.memory_space<vmem>>, vector<1x28xf32>,
    %207 = vector.extract_strided_slice %71 {offsets = [1, 17, 0], sizes = [1, 1, 28], strides = [1, 1, 1]} : vector<2x28x28xf32> to vector<1x1x28xf32>
    %208 = vector.shape_cast %207 : vector<1x1x28xf32> to vector<1x28xf32>
    %c0_72 = arith.constant 0 : index
    %c1441 = arith.constant 1441 : index
    %209 = vector.load %arg12[%c0_72, %c1441] : memref<1x1800xf32, #tpu.memory_space<vmem>>, vector<1x28xf32>
    tpu.vector_store %arg12[%c0_72, %c1441], %208 {strides = array<i32>} : memref<1x1800xf32, #tpu.memory_space<vmem>>, vector<1x28xf32>,
    %210 = vector.extract_strided_slice %71 {offsets = [1, 18, 0], sizes = [1, 1, 28], strides = [1, 1, 1]} : vector<2x28x28xf32> to vector<1x1x28xf32>
    %211 = vector.shape_cast %210 : vector<1x1x28xf32> to vector<1x28xf32>
    %c0_73 = arith.constant 0 : index
    %c1471 = arith.constant 1471 : index
    %212 = vector.load %arg12[%c0_73, %c1471] : memref<1x1800xf32, #tpu.memory_space<vmem>>, vector<1x28xf32>
    tpu.vector_store %arg12[%c0_73, %c1471], %211 {strides = array<i32>} : memref<1x1800xf32, #tpu.memory_space<vmem>>, vector<1x28xf32>,
    %213 = vector.extract_strided_slice %71 {offsets = [1, 19, 0], sizes = [1, 1, 28], strides = [1, 1, 1]} : vector<2x28x28xf32> to vector<1x1x28xf32>
    %214 = vector.shape_cast %213 : vector<1x1x28xf32> to vector<1x28xf32>
    %c0_74 = arith.constant 0 : index
    %c1501 = arith.constant 1501 : index
    %215 = vector.load %arg12[%c0_74, %c1501] : memref<1x1800xf32, #tpu.memory_space<vmem>>, vector<1x28xf32>
    tpu.vector_store %arg12[%c0_74, %c1501], %214 {strides = array<i32>} : memref<1x1800xf32, #tpu.memory_space<vmem>>, vector<1x28xf32>,
    %216 = vector.extract_strided_slice %71 {offsets = [1, 20, 0], sizes = [1, 1, 28], strides = [1, 1, 1]} : vector<2x28x28xf32> to vector<1x1x28xf32>
    %217 = vector.shape_cast %216 : vector<1x1x28xf32> to vector<1x28xf32>
    %c0_75 = arith.constant 0 : index
    %c1531 = arith.constant 1531 : index
    %218 = vector.load %arg12[%c0_75, %c1531] : memref<1x1800xf32, #tpu.memory_space<vmem>>, vector<1x28xf32>
    tpu.vector_store %arg12[%c0_75, %c1531], %217 {strides = array<i32>} : memref<1x1800xf32, #tpu.memory_space<vmem>>, vector<1x28xf32>,
    %219 = vector.extract_strided_slice %71 {offsets = [1, 21, 0], sizes = [1, 1, 28], strides = [1, 1, 1]} : vector<2x28x28xf32> to vector<1x1x28xf32>
    %220 = vector.shape_cast %219 : vector<1x1x28xf32> to vector<1x28xf32>
    %c0_76 = arith.constant 0 : index
    %c1561 = arith.constant 1561 : index
    %221 = vector.load %arg12[%c0_76, %c1561] : memref<1x1800xf32, #tpu.memory_space<vmem>>, vector<1x28xf32>
    tpu.vector_store %arg12[%c0_76, %c1561], %220 {strides = array<i32>} : memref<1x1800xf32, #tpu.memory_space<vmem>>, vector<1x28xf32>,
    %222 = vector.extract_strided_slice %71 {offsets = [1, 22, 0], sizes = [1, 1, 28], strides = [1, 1, 1]} : vector<2x28x28xf32> to vector<1x1x28xf32>
    %223 = vector.shape_cast %222 : vector<1x1x28xf32> to vector<1x28xf32>
    %c0_77 = arith.constant 0 : index
    %c1591 = arith.constant 1591 : index
    %224 = vector.load %arg12[%c0_77, %c1591] : memref<1x1800xf32, #tpu.memory_space<vmem>>, vector<1x28xf32>
    tpu.vector_store %arg12[%c0_77, %c1591], %223 {strides = array<i32>} : memref<1x1800xf32, #tpu.memory_space<vmem>>, vector<1x28xf32>,
    %225 = vector.extract_strided_slice %71 {offsets = [1, 23, 0], sizes = [1, 1, 28], strides = [1, 1, 1]} : vector<2x28x28xf32> to vector<1x1x28xf32>
    %226 = vector.shape_cast %225 : vector<1x1x28xf32> to vector<1x28xf32>
    %c0_78 = arith.constant 0 : index
    %c1621 = arith.constant 1621 : index
    %227 = vector.load %arg12[%c0_78, %c1621] : memref<1x1800xf32, #tpu.memory_space<vmem>>, vector<1x28xf32>
    tpu.vector_store %arg12[%c0_78, %c1621], %226 {strides = array<i32>} : memref<1x1800xf32, #tpu.memory_space<vmem>>, vector<1x28xf32>,
    %228 = vector.extract_strided_slice %71 {offsets = [1, 24, 0], sizes = [1, 1, 28], strides = [1, 1, 1]} : vector<2x28x28xf32> to vector<1x1x28xf32>
    %229 = vector.shape_cast %228 : vector<1x1x28xf32> to vector<1x28xf32>
    %c0_79 = arith.constant 0 : index
    %c1651 = arith.constant 1651 : index
    %230 = vector.load %arg12[%c0_79, %c1651] : memref<1x1800xf32, #tpu.memory_space<vmem>>, vector<1x28xf32>
    tpu.vector_store %arg12[%c0_79, %c1651], %229 {strides = array<i32>} : memref<1x1800xf32, #tpu.memory_space<vmem>>, vector<1x28xf32>,
    %231 = vector.extract_strided_slice %71 {offsets = [1, 25, 0], sizes = [1, 1, 28], strides = [1, 1, 1]} : vector<2x28x28xf32> to vector<1x1x28xf32>
    %232 = vector.shape_cast %231 : vector<1x1x28xf32> to vector<1x28xf32>
    %c0_80 = arith.constant 0 : index
    %c1681 = arith.constant 1681 : index
    %233 = vector.load %arg12[%c0_80, %c1681] : memref<1x1800xf32, #tpu.memory_space<vmem>>, vector<1x28xf32>
    tpu.vector_store %arg12[%c0_80, %c1681], %232 {strides = array<i32>} : memref<1x1800xf32, #tpu.memory_space<vmem>>, vector<1x28xf32>,
    %234 = vector.extract_strided_slice %71 {offsets = [1, 26, 0], sizes = [1, 1, 28], strides = [1, 1, 1]} : vector<2x28x28xf32> to vector<1x1x28xf32>
    %235 = vector.shape_cast %234 : vector<1x1x28xf32> to vector<1x28xf32>
    %c0_81 = arith.constant 0 : index
    %c1711 = arith.constant 1711 : index
    %236 = vector.load %arg12[%c0_81, %c1711] : memref<1x1800xf32, #tpu.memory_space<vmem>>, vector<1x28xf32>
    tpu.vector_store %arg12[%c0_81, %c1711], %235 {strides = array<i32>} : memref<1x1800xf32, #tpu.memory_space<vmem>>, vector<1x28xf32>,
    %237 = vector.extract_strided_slice %71 {offsets = [1, 27, 0], sizes = [1, 1, 28], strides = [1, 1, 1]} : vector<2x28x28xf32> to vector<1x1x28xf32>
    %238 = vector.shape_cast %237 : vector<1x1x28xf32> to vector<1x28xf32>
    %c0_82 = arith.constant 0 : index
    %c1741 = arith.constant 1741 : index
    %239 = vector.load %arg12[%c0_82, %c1741] : memref<1x1800xf32, #tpu.memory_space<vmem>>, vector<1x28xf32>
    tpu.vector_store %arg12[%c0_82, %c1741], %238 {strides = array<i32>} : memref<1x1800xf32, #tpu.memory_space<vmem>>, vector<1x28xf32>,
    %c0_83 = arith.constant 0 : index
    %c0_84 = arith.constant 0 : index
    %240 = vector.load %arg12[%c0_83, %c0_84] : memref<1x1800xf32, #tpu.memory_space<vmem>>, vector<1x1800xf32>
    %241 = vector.extract_strided_slice %240 {offsets = [0, 0], sizes = [1, 1738], strides = [1, 1]} : vector<1x1800xf32> to vector<1x1738xf32>
    %c0_85 = arith.constant 0 : index
    %c0_86 = arith.constant 0 : index
    %242 = vector.load %arg13[%c0_85, %c0_86] : memref<9x1738xf32, #tpu.memory_space<vmem>>, vector<1x1738xf32>
    tpu.vector_store %arg13[%c0_85, %c0_86], %241 {strides = array<i32>} : memref<9x1738xf32, #tpu.memory_space<vmem>>, vector<1x1738xf32>,
    %243 = vector.extract_strided_slice %240 {offsets = [0, 1], sizes = [1, 1738], strides = [1, 1]} : vector<1x1800xf32> to vector<1x1738xf32>
    %c1 = arith.constant 1 : index
    %c0_87 = arith.constant 0 : index
    %244 = vector.load %arg13[%c1, %c0_87] : memref<9x1738xf32, #tpu.memory_space<vmem>>, vector<1x1738xf32>
    tpu.vector_store %arg13[%c1, %c0_87], %243 {strides = array<i32>} : memref<9x1738xf32, #tpu.memory_space<vmem>>, vector<1x1738xf32>,
    %245 = vector.extract_strided_slice %240 {offsets = [0, 2], sizes = [1, 1738], strides = [1, 1]} : vector<1x1800xf32> to vector<1x1738xf32>
    %c2 = arith.constant 2 : index
    %c0_88 = arith.constant 0 : index
    %246 = vector.load %arg13[%c2, %c0_88] : memref<9x1738xf32, #tpu.memory_space<vmem>>, vector<1x1738xf32>
    tpu.vector_store %arg13[%c2, %c0_88], %245 {strides = array<i32>} : memref<9x1738xf32, #tpu.memory_space<vmem>>, vector<1x1738xf32>,
    %247 = vector.extract_strided_slice %240 {offsets = [0, 30], sizes = [1, 1738], strides = [1, 1]} : vector<1x1800xf32> to vector<1x1738xf32>
    %c3 = arith.constant 3 : index
    %c0_89 = arith.constant 0 : index
    %248 = vector.load %arg13[%c3, %c0_89] : memref<9x1738xf32, #tpu.memory_space<vmem>>, vector<1x1738xf32>
    tpu.vector_store %arg13[%c3, %c0_89], %247 {strides = array<i32>} : memref<9x1738xf32, #tpu.memory_space<vmem>>, vector<1x1738xf32>,
    %249 = vector.extract_strided_slice %240 {offsets = [0, 31], sizes = [1, 1738], strides = [1, 1]} : vector<1x1800xf32> to vector<1x1738xf32>
    %c4 = arith.constant 4 : index
    %c0_90 = arith.constant 0 : index
    %250 = vector.load %arg13[%c4, %c0_90] : memref<9x1738xf32, #tpu.memory_space<vmem>>, vector<1x1738xf32>
    tpu.vector_store %arg13[%c4, %c0_90], %249 {strides = array<i32>} : memref<9x1738xf32, #tpu.memory_space<vmem>>, vector<1x1738xf32>,
    %251 = vector.extract_strided_slice %240 {offsets = [0, 32], sizes = [1, 1738], strides = [1, 1]} : vector<1x1800xf32> to vector<1x1738xf32>
    %c5 = arith.constant 5 : index
    %c0_91 = arith.constant 0 : index
    %252 = vector.load %arg13[%c5, %c0_91] : memref<9x1738xf32, #tpu.memory_space<vmem>>, vector<1x1738xf32>
    tpu.vector_store %arg13[%c5, %c0_91], %251 {strides = array<i32>} : memref<9x1738xf32, #tpu.memory_space<vmem>>, vector<1x1738xf32>,
    %253 = vector.extract_strided_slice %240 {offsets = [0, 60], sizes = [1, 1738], strides = [1, 1]} : vector<1x1800xf32> to vector<1x1738xf32>
    %c6 = arith.constant 6 : index
    %c0_92 = arith.constant 0 : index
    %254 = vector.load %arg13[%c6, %c0_92] : memref<9x1738xf32, #tpu.memory_space<vmem>>, vector<1x1738xf32>
    tpu.vector_store %arg13[%c6, %c0_92], %253 {strides = array<i32>} : memref<9x1738xf32, #tpu.memory_space<vmem>>, vector<1x1738xf32>,
    %255 = vector.extract_strided_slice %240 {offsets = [0, 61], sizes = [1, 1738], strides = [1, 1]} : vector<1x1800xf32> to vector<1x1738xf32>
    %c7 = arith.constant 7 : index
    %c0_93 = arith.constant 0 : index
    %256 = vector.load %arg13[%c7, %c0_93] : memref<9x1738xf32, #tpu.memory_space<vmem>>, vector<1x1738xf32>
    tpu.vector_store %arg13[%c7, %c0_93], %255 {strides = array<i32>} : memref<9x1738xf32, #tpu.memory_space<vmem>>, vector<1x1738xf32>,
    %257 = vector.extract_strided_slice %240 {offsets = [0, 62], sizes = [1, 1738], strides = [1, 1]} : vector<1x1800xf32> to vector<1x1738xf32>
    %c8 = arith.constant 8 : index
    %c0_94 = arith.constant 0 : index
    %258 = vector.load %arg13[%c8, %c0_94] : memref<9x1738xf32, #tpu.memory_space<vmem>>, vector<1x1738xf32>
    tpu.vector_store %arg13[%c8, %c0_94], %257 {strides = array<i32>} : memref<9x1738xf32, #tpu.memory_space<vmem>>, vector<1x1738xf32>,
    %c0_95 = arith.constant 0 : index
    %c0_96 = arith.constant 0 : index
    %259 = vector.load %arg1[%c0_95, %c0_96] : memref<16x9xf32, #tpu.memory_space<vmem>>, vector<16x9xf32>
    %c0_97 = arith.constant 0 : index
    %c0_98 = arith.constant 0 : index
    %260 = vector.load %arg13[%c0_97, %c0_98] : memref<9x1738xf32, #tpu.memory_space<vmem>>, vector<9x1738xf32>
    %cst_99 = arith.constant dense<0.000000e+00> : vector<16x1738xf32>
    %261 = tpu.matmul %259, %260, %cst_99 {dimension_numbers = #tpu.dot_dimension_numbers<[1], [0], [0], [1], [0, 0, 1, 1], [], []>} : vector<16x9xf32>, vector<9x1738xf32>, vector<16x1738xf32> -> vector<16x1738xf32>
    %c0_100 = arith.constant 0 : index
    %c0_101 = arith.constant 0 : index
    %262 = vector.load %arg2[%c0_100, %c0_101] : memref<16x1xf32, #tpu.memory_space<vmem>>, vector<16x1xf32>
    %263 = vector.broadcast %262 : vector<16x1xf32> to vector<16x1738xf32>
    %264 = arith.addf %261, %263 : vector<16x1738xf32>
    %cst_102 = arith.constant 0.000000e+00 : f32
    %265 = vector.broadcast %cst_102 : f32 to vector<16x1738xf32>
    %266 = arith.maximumf %264, %265 : vector<16x1738xf32>
    %267 = vector.extract_strided_slice %266 {offsets = [0, 0], sizes = [16, 1707], strides = [1, 1]} : vector<16x1738xf32> to vector<16x1707xf32>
    %268 = vector.extract_strided_slice %266 {offsets = [0, 1], sizes = [16, 1707], strides = [1, 1]} : vector<16x1738xf32> to vector<16x1707xf32>
    %269 = arith.maximumf %267, %268 : vector<16x1707xf32>
    %270 = vector.extract_strided_slice %266 {offsets = [0, 30], sizes = [16, 1707], strides = [1, 1]} : vector<16x1738xf32> to vector<16x1707xf32>
    %271 = vector.extract_strided_slice %266 {offsets = [0, 31], sizes = [16, 1707], strides = [1, 1]} : vector<16x1738xf32> to vector<16x1707xf32>
    %272 = arith.maximumf %270, %271 : vector<16x1707xf32>
    %273 = arith.maximumf %269, %272 : vector<16x1707xf32>
    %274 = vector.extract_strided_slice %273 {offsets = [0, 0], sizes = [16, 807], strides = [1, 1]} : vector<16x1707xf32> to vector<16x807xf32>
    %cst_103 = arith.constant dense<0.000000e+00> : vector<16x256xf32>
    %275 = tpu.matmul %274, %43, %cst_103 {dimension_numbers = #tpu.dot_dimension_numbers<[1], [0], [0], [1], [0, 0, 1, 1], [], []>} : vector<16x807xf32>, vector<807x256xf32>, vector<16x256xf32> -> vector<16x256xf32>
    %c0_104 = arith.constant 0 : index
    %c0_105 = arith.constant 0 : index
    %276 = vector.load %arg14[%c0_104, %c0_105] : memref<16x512xf32, #tpu.memory_space<vmem>>, vector<16x256xf32>
    tpu.vector_store %arg14[%c0_104, %c0_105], %275 {strides = array<i32>} : memref<16x512xf32, #tpu.memory_space<vmem>>, vector<16x256xf32>,
    %277 = vector.extract_strided_slice %273 {offsets = [0, 900], sizes = [16, 807], strides = [1, 1]} : vector<16x1707xf32> to vector<16x807xf32>
    %cst_106 = arith.constant dense<0.000000e+00> : vector<16x256xf32>
    %278 = tpu.matmul %277, %43, %cst_106 {dimension_numbers = #tpu.dot_dimension_numbers<[1], [0], [0], [1], [0, 0, 1, 1], [], []>} : vector<16x807xf32>, vector<807x256xf32>, vector<16x256xf32> -> vector<16x256xf32>
    %c0_107 = arith.constant 0 : index
    %c256 = arith.constant 256 : index
    %279 = vector.load %arg14[%c0_107, %c256] : memref<16x512xf32, #tpu.memory_space<vmem>>, vector<16x256xf32>
    tpu.vector_store %arg14[%c0_107, %c256], %278 {strides = array<i32>} : memref<16x512xf32, #tpu.memory_space<vmem>>, vector<16x256xf32>,
    %c0_108 = arith.constant 0 : index
    %c0_109 = arith.constant 0 : index
    %280 = vector.load %arg14[%c0_108, %c0_109] : memref<16x512xf32, #tpu.memory_space<vmem>>, vector<16x512xf32>
    %281 = vector.extract_strided_slice %280 {offsets = [0, 0], sizes = [16, 478], strides = [1, 1]} : vector<16x512xf32> to vector<16x478xf32>
    %c0_110 = arith.constant 0 : index
    %c0_111 = arith.constant 0 : index
    %282 = vector.load %arg15[%c0_110, %c0_111] : memref<144x478xf32, #tpu.memory_space<vmem>>, vector<16x478xf32>
    tpu.vector_store %arg15[%c0_110, %c0_111], %281 {strides = array<i32>} : memref<144x478xf32, #tpu.memory_space<vmem>>, vector<16x478xf32>,
    %283 = vector.extract_strided_slice %280 {offsets = [0, 1], sizes = [16, 478], strides = [1, 1]} : vector<16x512xf32> to vector<16x478xf32>
    %c16 = arith.constant 16 : index
    %c0_112 = arith.constant 0 : index
    %284 = vector.load %arg15[%c16, %c0_112] : memref<144x478xf32, #tpu.memory_space<vmem>>, vector<16x478xf32>
    tpu.vector_store %arg15[%c16, %c0_112], %283 {strides = array<i32>} : memref<144x478xf32, #tpu.memory_space<vmem>>, vector<16x478xf32>,
    %285 = vector.extract_strided_slice %280 {offsets = [0, 2], sizes = [16, 478], strides = [1, 1]} : vector<16x512xf32> to vector<16x478xf32>
    %c32 = arith.constant 32 : index
    %c0_113 = arith.constant 0 : index
    %286 = vector.load %arg15[%c32, %c0_113] : memref<144x478xf32, #tpu.memory_space<vmem>>, vector<16x478xf32>
    tpu.vector_store %arg15[%c32, %c0_113], %285 {strides = array<i32>} : memref<144x478xf32, #tpu.memory_space<vmem>>, vector<16x478xf32>,
    %287 = vector.extract_strided_slice %280 {offsets = [0, 16], sizes = [16, 478], strides = [1, 1]} : vector<16x512xf32> to vector<16x478xf32>
    %c48 = arith.constant 48 : index
    %c0_114 = arith.constant 0 : index
    %288 = vector.load %arg15[%c48, %c0_114] : memref<144x478xf32, #tpu.memory_space<vmem>>, vector<16x478xf32>
    tpu.vector_store %arg15[%c48, %c0_114], %287 {strides = array<i32>} : memref<144x478xf32, #tpu.memory_space<vmem>>, vector<16x478xf32>,
    %289 = vector.extract_strided_slice %280 {offsets = [0, 17], sizes = [16, 478], strides = [1, 1]} : vector<16x512xf32> to vector<16x478xf32>
    %c64 = arith.constant 64 : index
    %c0_115 = arith.constant 0 : index
    %290 = vector.load %arg15[%c64, %c0_115] : memref<144x478xf32, #tpu.memory_space<vmem>>, vector<16x478xf32>
    tpu.vector_store %arg15[%c64, %c0_115], %289 {strides = array<i32>} : memref<144x478xf32, #tpu.memory_space<vmem>>, vector<16x478xf32>,
    %291 = vector.extract_strided_slice %280 {offsets = [0, 18], sizes = [16, 478], strides = [1, 1]} : vector<16x512xf32> to vector<16x478xf32>
    %c80 = arith.constant 80 : index
    %c0_116 = arith.constant 0 : index
    %292 = vector.load %arg15[%c80, %c0_116] : memref<144x478xf32, #tpu.memory_space<vmem>>, vector<16x478xf32>
    tpu.vector_store %arg15[%c80, %c0_116], %291 {strides = array<i32>} : memref<144x478xf32, #tpu.memory_space<vmem>>, vector<16x478xf32>,
    %293 = vector.extract_strided_slice %280 {offsets = [0, 32], sizes = [16, 478], strides = [1, 1]} : vector<16x512xf32> to vector<16x478xf32>
    %c96 = arith.constant 96 : index
    %c0_117 = arith.constant 0 : index
    %294 = vector.load %arg15[%c96, %c0_117] : memref<144x478xf32, #tpu.memory_space<vmem>>, vector<16x478xf32>
    tpu.vector_store %arg15[%c96, %c0_117], %293 {strides = array<i32>} : memref<144x478xf32, #tpu.memory_space<vmem>>, vector<16x478xf32>,
    %295 = vector.extract_strided_slice %280 {offsets = [0, 33], sizes = [16, 478], strides = [1, 1]} : vector<16x512xf32> to vector<16x478xf32>
    %c112 = arith.constant 112 : index
    %c0_118 = arith.constant 0 : index
    %296 = vector.load %arg15[%c112, %c0_118] : memref<144x478xf32, #tpu.memory_space<vmem>>, vector<16x478xf32>
    tpu.vector_store %arg15[%c112, %c0_118], %295 {strides = array<i32>} : memref<144x478xf32, #tpu.memory_space<vmem>>, vector<16x478xf32>,
    %297 = vector.extract_strided_slice %280 {offsets = [0, 34], sizes = [16, 478], strides = [1, 1]} : vector<16x512xf32> to vector<16x478xf32>
    %c128 = arith.constant 128 : index
    %c0_119 = arith.constant 0 : index
    %298 = vector.load %arg15[%c128, %c0_119] : memref<144x478xf32, #tpu.memory_space<vmem>>, vector<16x478xf32>
    tpu.vector_store %arg15[%c128, %c0_119], %297 {strides = array<i32>} : memref<144x478xf32, #tpu.memory_space<vmem>>, vector<16x478xf32>,
    %c0_120 = arith.constant 0 : index
    %c0_121 = arith.constant 0 : index
    %299 = vector.load %arg3[%c0_120, %c0_121] : memref<32x144xf32, #tpu.memory_space<vmem>>, vector<32x144xf32>
    %c0_122 = arith.constant 0 : index
    %c0_123 = arith.constant 0 : index
    %300 = vector.load %arg15[%c0_122, %c0_123] : memref<144x478xf32, #tpu.memory_space<vmem>>, vector<144x478xf32>
    %cst_124 = arith.constant dense<0.000000e+00> : vector<32x478xf32>
    %301 = tpu.matmul %299, %300, %cst_124 {dimension_numbers = #tpu.dot_dimension_numbers<[1], [0], [0], [1], [0, 0, 1, 1], [], []>} : vector<32x144xf32>, vector<144x478xf32>, vector<32x478xf32> -> vector<32x478xf32>
    %c0_125 = arith.constant 0 : index
    %c0_126 = arith.constant 0 : index
    %302 = vector.load %arg4[%c0_125, %c0_126] : memref<32x1xf32, #tpu.memory_space<vmem>>, vector<32x1xf32>
    %303 = vector.broadcast %302 : vector<32x1xf32> to vector<32x478xf32>
    %304 = arith.addf %301, %303 : vector<32x478xf32>
    %cst_127 = arith.constant 0.000000e+00 : f32
    %305 = vector.broadcast %cst_127 : f32 to vector<32x478xf32>
    %306 = arith.maximumf %304, %305 : vector<32x478xf32>
    %307 = vector.extract_strided_slice %306 {offsets = [0, 0], sizes = [32, 461], strides = [1, 1]} : vector<32x478xf32> to vector<32x461xf32>
    %308 = vector.extract_strided_slice %306 {offsets = [0, 1], sizes = [32, 461], strides = [1, 1]} : vector<32x478xf32> to vector<32x461xf32>
    %309 = arith.maximumf %307, %308 : vector<32x461xf32>
    %310 = vector.extract_strided_slice %306 {offsets = [0, 16], sizes = [32, 461], strides = [1, 1]} : vector<32x478xf32> to vector<32x461xf32>
    %311 = vector.extract_strided_slice %306 {offsets = [0, 17], sizes = [32, 461], strides = [1, 1]} : vector<32x478xf32> to vector<32x461xf32>
    %312 = arith.maximumf %310, %311 : vector<32x461xf32>
    %313 = arith.maximumf %309, %312 : vector<32x461xf32>
    %314 = vector.extract_strided_slice %313 {offsets = [0, 0], sizes = [32, 205], strides = [1, 1]} : vector<32x461xf32> to vector<32x205xf32>
    %cst_128 = arith.constant dense<0.000000e+00> : vector<32x49xf32>
    %315 = tpu.matmul %314, %68, %cst_128 {dimension_numbers = #tpu.dot_dimension_numbers<[1], [0], [0], [1], [0, 0, 1, 1], [], []>} : vector<32x205xf32>, vector<205x49xf32>, vector<32x49xf32> -> vector<32x49xf32>
    %316 = vector.extract_strided_slice %315 {offsets = [0, 0], sizes = [1, 49], strides = [1, 1]} : vector<32x49xf32> to vector<1x49xf32>
    %c0_129 = arith.constant 0 : index
    %c0_130 = arith.constant 0 : index
    %317 = vector.load %arg16[%c0_129, %c0_130] : memref<2x1568xf32, #tpu.memory_space<vmem>>, vector<1x49xf32>
    tpu.vector_store %arg16[%c0_129, %c0_130], %316 {strides = array<i32>} : memref<2x1568xf32, #tpu.memory_space<vmem>>, vector<1x49xf32>,
    %318 = vector.extract_strided_slice %315 {offsets = [1, 0], sizes = [1, 49], strides = [1, 1]} : vector<32x49xf32> to vector<1x49xf32>
    %c0_131 = arith.constant 0 : index
    %c49 = arith.constant 49 : index
    %319 = vector.load %arg16[%c0_131, %c49] : memref<2x1568xf32, #tpu.memory_space<vmem>>, vector<1x49xf32>
    tpu.vector_store %arg16[%c0_131, %c49], %318 {strides = array<i32>} : memref<2x1568xf32, #tpu.memory_space<vmem>>, vector<1x49xf32>,
    %320 = vector.extract_strided_slice %315 {offsets = [2, 0], sizes = [1, 49], strides = [1, 1]} : vector<32x49xf32> to vector<1x49xf32>
    %c0_132 = arith.constant 0 : index
    %c98 = arith.constant 98 : index
    %321 = vector.load %arg16[%c0_132, %c98] : memref<2x1568xf32, #tpu.memory_space<vmem>>, vector<1x49xf32>
    tpu.vector_store %arg16[%c0_132, %c98], %320 {strides = array<i32>} : memref<2x1568xf32, #tpu.memory_space<vmem>>, vector<1x49xf32>,
    %322 = vector.extract_strided_slice %315 {offsets = [3, 0], sizes = [1, 49], strides = [1, 1]} : vector<32x49xf32> to vector<1x49xf32>
    %c0_133 = arith.constant 0 : index
    %c147 = arith.constant 147 : index
    %323 = vector.load %arg16[%c0_133, %c147] : memref<2x1568xf32, #tpu.memory_space<vmem>>, vector<1x49xf32>
    tpu.vector_store %arg16[%c0_133, %c147], %322 {strides = array<i32>} : memref<2x1568xf32, #tpu.memory_space<vmem>>, vector<1x49xf32>,
    %324 = vector.extract_strided_slice %315 {offsets = [4, 0], sizes = [1, 49], strides = [1, 1]} : vector<32x49xf32> to vector<1x49xf32>
    %c0_134 = arith.constant 0 : index
    %c196 = arith.constant 196 : index
    %325 = vector.load %arg16[%c0_134, %c196] : memref<2x1568xf32, #tpu.memory_space<vmem>>, vector<1x49xf32>
    tpu.vector_store %arg16[%c0_134, %c196], %324 {strides = array<i32>} : memref<2x1568xf32, #tpu.memory_space<vmem>>, vector<1x49xf32>,
    %326 = vector.extract_strided_slice %315 {offsets = [5, 0], sizes = [1, 49], strides = [1, 1]} : vector<32x49xf32> to vector<1x49xf32>
    %c0_135 = arith.constant 0 : index
    %c245 = arith.constant 245 : index
    %327 = vector.load %arg16[%c0_135, %c245] : memref<2x1568xf32, #tpu.memory_space<vmem>>, vector<1x49xf32>
    tpu.vector_store %arg16[%c0_135, %c245], %326 {strides = array<i32>} : memref<2x1568xf32, #tpu.memory_space<vmem>>, vector<1x49xf32>,
    %328 = vector.extract_strided_slice %315 {offsets = [6, 0], sizes = [1, 49], strides = [1, 1]} : vector<32x49xf32> to vector<1x49xf32>
    %c0_136 = arith.constant 0 : index
    %c294 = arith.constant 294 : index
    %329 = vector.load %arg16[%c0_136, %c294] : memref<2x1568xf32, #tpu.memory_space<vmem>>, vector<1x49xf32>
    tpu.vector_store %arg16[%c0_136, %c294], %328 {strides = array<i32>} : memref<2x1568xf32, #tpu.memory_space<vmem>>, vector<1x49xf32>,
    %330 = vector.extract_strided_slice %315 {offsets = [7, 0], sizes = [1, 49], strides = [1, 1]} : vector<32x49xf32> to vector<1x49xf32>
    %c0_137 = arith.constant 0 : index
    %c343 = arith.constant 343 : index
    %331 = vector.load %arg16[%c0_137, %c343] : memref<2x1568xf32, #tpu.memory_space<vmem>>, vector<1x49xf32>
    tpu.vector_store %arg16[%c0_137, %c343], %330 {strides = array<i32>} : memref<2x1568xf32, #tpu.memory_space<vmem>>, vector<1x49xf32>,
    %332 = vector.extract_strided_slice %315 {offsets = [8, 0], sizes = [1, 49], strides = [1, 1]} : vector<32x49xf32> to vector<1x49xf32>
    %c0_138 = arith.constant 0 : index
    %c392 = arith.constant 392 : index
    %333 = vector.load %arg16[%c0_138, %c392] : memref<2x1568xf32, #tpu.memory_space<vmem>>, vector<1x49xf32>
    tpu.vector_store %arg16[%c0_138, %c392], %332 {strides = array<i32>} : memref<2x1568xf32, #tpu.memory_space<vmem>>, vector<1x49xf32>,
    %334 = vector.extract_strided_slice %315 {offsets = [9, 0], sizes = [1, 49], strides = [1, 1]} : vector<32x49xf32> to vector<1x49xf32>
    %c0_139 = arith.constant 0 : index
    %c441 = arith.constant 441 : index
    %335 = vector.load %arg16[%c0_139, %c441] : memref<2x1568xf32, #tpu.memory_space<vmem>>, vector<1x49xf32>
    tpu.vector_store %arg16[%c0_139, %c441], %334 {strides = array<i32>} : memref<2x1568xf32, #tpu.memory_space<vmem>>, vector<1x49xf32>,
    %336 = vector.extract_strided_slice %315 {offsets = [10, 0], sizes = [1, 49], strides = [1, 1]} : vector<32x49xf32> to vector<1x49xf32>
    %c0_140 = arith.constant 0 : index
    %c490 = arith.constant 490 : index
    %337 = vector.load %arg16[%c0_140, %c490] : memref<2x1568xf32, #tpu.memory_space<vmem>>, vector<1x49xf32>
    tpu.vector_store %arg16[%c0_140, %c490], %336 {strides = array<i32>} : memref<2x1568xf32, #tpu.memory_space<vmem>>, vector<1x49xf32>,
    %338 = vector.extract_strided_slice %315 {offsets = [11, 0], sizes = [1, 49], strides = [1, 1]} : vector<32x49xf32> to vector<1x49xf32>
    %c0_141 = arith.constant 0 : index
    %c539 = arith.constant 539 : index
    %339 = vector.load %arg16[%c0_141, %c539] : memref<2x1568xf32, #tpu.memory_space<vmem>>, vector<1x49xf32>
    tpu.vector_store %arg16[%c0_141, %c539], %338 {strides = array<i32>} : memref<2x1568xf32, #tpu.memory_space<vmem>>, vector<1x49xf32>,
    %340 = vector.extract_strided_slice %315 {offsets = [12, 0], sizes = [1, 49], strides = [1, 1]} : vector<32x49xf32> to vector<1x49xf32>
    %c0_142 = arith.constant 0 : index
    %c588 = arith.constant 588 : index
    %341 = vector.load %arg16[%c0_142, %c588] : memref<2x1568xf32, #tpu.memory_space<vmem>>, vector<1x49xf32>
    tpu.vector_store %arg16[%c0_142, %c588], %340 {strides = array<i32>} : memref<2x1568xf32, #tpu.memory_space<vmem>>, vector<1x49xf32>,
    %342 = vector.extract_strided_slice %315 {offsets = [13, 0], sizes = [1, 49], strides = [1, 1]} : vector<32x49xf32> to vector<1x49xf32>
    %c0_143 = arith.constant 0 : index
    %c637 = arith.constant 637 : index
    %343 = vector.load %arg16[%c0_143, %c637] : memref<2x1568xf32, #tpu.memory_space<vmem>>, vector<1x49xf32>
    tpu.vector_store %arg16[%c0_143, %c637], %342 {strides = array<i32>} : memref<2x1568xf32, #tpu.memory_space<vmem>>, vector<1x49xf32>,
    %344 = vector.extract_strided_slice %315 {offsets = [14, 0], sizes = [1, 49], strides = [1, 1]} : vector<32x49xf32> to vector<1x49xf32>
    %c0_144 = arith.constant 0 : index
    %c686 = arith.constant 686 : index
    %345 = vector.load %arg16[%c0_144, %c686] : memref<2x1568xf32, #tpu.memory_space<vmem>>, vector<1x49xf32>
    tpu.vector_store %arg16[%c0_144, %c686], %344 {strides = array<i32>} : memref<2x1568xf32, #tpu.memory_space<vmem>>, vector<1x49xf32>,
    %346 = vector.extract_strided_slice %315 {offsets = [15, 0], sizes = [1, 49], strides = [1, 1]} : vector<32x49xf32> to vector<1x49xf32>
    %c0_145 = arith.constant 0 : index
    %c735 = arith.constant 735 : index
    %347 = vector.load %arg16[%c0_145, %c735] : memref<2x1568xf32, #tpu.memory_space<vmem>>, vector<1x49xf32>
    tpu.vector_store %arg16[%c0_145, %c735], %346 {strides = array<i32>} : memref<2x1568xf32, #tpu.memory_space<vmem>>, vector<1x49xf32>,
    %348 = vector.extract_strided_slice %315 {offsets = [16, 0], sizes = [1, 49], strides = [1, 1]} : vector<32x49xf32> to vector<1x49xf32>
    %c0_146 = arith.constant 0 : index
    %c784 = arith.constant 784 : index
    %349 = vector.load %arg16[%c0_146, %c784] : memref<2x1568xf32, #tpu.memory_space<vmem>>, vector<1x49xf32>
    tpu.vector_store %arg16[%c0_146, %c784], %348 {strides = array<i32>} : memref<2x1568xf32, #tpu.memory_space<vmem>>, vector<1x49xf32>,
    %350 = vector.extract_strided_slice %315 {offsets = [17, 0], sizes = [1, 49], strides = [1, 1]} : vector<32x49xf32> to vector<1x49xf32>
    %c0_147 = arith.constant 0 : index
    %c833 = arith.constant 833 : index
    %351 = vector.load %arg16[%c0_147, %c833] : memref<2x1568xf32, #tpu.memory_space<vmem>>, vector<1x49xf32>
    tpu.vector_store %arg16[%c0_147, %c833], %350 {strides = array<i32>} : memref<2x1568xf32, #tpu.memory_space<vmem>>, vector<1x49xf32>,
    %352 = vector.extract_strided_slice %315 {offsets = [18, 0], sizes = [1, 49], strides = [1, 1]} : vector<32x49xf32> to vector<1x49xf32>
    %c0_148 = arith.constant 0 : index
    %c882 = arith.constant 882 : index
    %353 = vector.load %arg16[%c0_148, %c882] : memref<2x1568xf32, #tpu.memory_space<vmem>>, vector<1x49xf32>
    tpu.vector_store %arg16[%c0_148, %c882], %352 {strides = array<i32>} : memref<2x1568xf32, #tpu.memory_space<vmem>>, vector<1x49xf32>,
    %354 = vector.extract_strided_slice %315 {offsets = [19, 0], sizes = [1, 49], strides = [1, 1]} : vector<32x49xf32> to vector<1x49xf32>
    %c0_149 = arith.constant 0 : index
    %c931_150 = arith.constant 931 : index
    %355 = vector.load %arg16[%c0_149, %c931_150] : memref<2x1568xf32, #tpu.memory_space<vmem>>, vector<1x49xf32>
    tpu.vector_store %arg16[%c0_149, %c931_150], %354 {strides = array<i32>} : memref<2x1568xf32, #tpu.memory_space<vmem>>, vector<1x49xf32>,
    %356 = vector.extract_strided_slice %315 {offsets = [20, 0], sizes = [1, 49], strides = [1, 1]} : vector<32x49xf32> to vector<1x49xf32>
    %c0_151 = arith.constant 0 : index
    %c980 = arith.constant 980 : index
    %357 = vector.load %arg16[%c0_151, %c980] : memref<2x1568xf32, #tpu.memory_space<vmem>>, vector<1x49xf32>
    tpu.vector_store %arg16[%c0_151, %c980], %356 {strides = array<i32>} : memref<2x1568xf32, #tpu.memory_space<vmem>>, vector<1x49xf32>,
    %358 = vector.extract_strided_slice %315 {offsets = [21, 0], sizes = [1, 49], strides = [1, 1]} : vector<32x49xf32> to vector<1x49xf32>
    %c0_152 = arith.constant 0 : index
    %c1029 = arith.constant 1029 : index
    %359 = vector.load %arg16[%c0_152, %c1029] : memref<2x1568xf32, #tpu.memory_space<vmem>>, vector<1x49xf32>
    tpu.vector_store %arg16[%c0_152, %c1029], %358 {strides = array<i32>} : memref<2x1568xf32, #tpu.memory_space<vmem>>, vector<1x49xf32>,
    %360 = vector.extract_strided_slice %315 {offsets = [22, 0], sizes = [1, 49], strides = [1, 1]} : vector<32x49xf32> to vector<1x49xf32>
    %c0_153 = arith.constant 0 : index
    %c1078 = arith.constant 1078 : index
    %361 = vector.load %arg16[%c0_153, %c1078] : memref<2x1568xf32, #tpu.memory_space<vmem>>, vector<1x49xf32>
    tpu.vector_store %arg16[%c0_153, %c1078], %360 {strides = array<i32>} : memref<2x1568xf32, #tpu.memory_space<vmem>>, vector<1x49xf32>,
    %362 = vector.extract_strided_slice %315 {offsets = [23, 0], sizes = [1, 49], strides = [1, 1]} : vector<32x49xf32> to vector<1x49xf32>
    %c0_154 = arith.constant 0 : index
    %c1127 = arith.constant 1127 : index
    %363 = vector.load %arg16[%c0_154, %c1127] : memref<2x1568xf32, #tpu.memory_space<vmem>>, vector<1x49xf32>
    tpu.vector_store %arg16[%c0_154, %c1127], %362 {strides = array<i32>} : memref<2x1568xf32, #tpu.memory_space<vmem>>, vector<1x49xf32>,
    %364 = vector.extract_strided_slice %315 {offsets = [24, 0], sizes = [1, 49], strides = [1, 1]} : vector<32x49xf32> to vector<1x49xf32>
    %c0_155 = arith.constant 0 : index
    %c1176 = arith.constant 1176 : index
    %365 = vector.load %arg16[%c0_155, %c1176] : memref<2x1568xf32, #tpu.memory_space<vmem>>, vector<1x49xf32>
    tpu.vector_store %arg16[%c0_155, %c1176], %364 {strides = array<i32>} : memref<2x1568xf32, #tpu.memory_space<vmem>>, vector<1x49xf32>,
    %366 = vector.extract_strided_slice %315 {offsets = [25, 0], sizes = [1, 49], strides = [1, 1]} : vector<32x49xf32> to vector<1x49xf32>
    %c0_156 = arith.constant 0 : index
    %c1225 = arith.constant 1225 : index
    %367 = vector.load %arg16[%c0_156, %c1225] : memref<2x1568xf32, #tpu.memory_space<vmem>>, vector<1x49xf32>
    tpu.vector_store %arg16[%c0_156, %c1225], %366 {strides = array<i32>} : memref<2x1568xf32, #tpu.memory_space<vmem>>, vector<1x49xf32>,
    %368 = vector.extract_strided_slice %315 {offsets = [26, 0], sizes = [1, 49], strides = [1, 1]} : vector<32x49xf32> to vector<1x49xf32>
    %c0_157 = arith.constant 0 : index
    %c1274 = arith.constant 1274 : index
    %369 = vector.load %arg16[%c0_157, %c1274] : memref<2x1568xf32, #tpu.memory_space<vmem>>, vector<1x49xf32>
    tpu.vector_store %arg16[%c0_157, %c1274], %368 {strides = array<i32>} : memref<2x1568xf32, #tpu.memory_space<vmem>>, vector<1x49xf32>,
    %370 = vector.extract_strided_slice %315 {offsets = [27, 0], sizes = [1, 49], strides = [1, 1]} : vector<32x49xf32> to vector<1x49xf32>
    %c0_158 = arith.constant 0 : index
    %c1323 = arith.constant 1323 : index
    %371 = vector.load %arg16[%c0_158, %c1323] : memref<2x1568xf32, #tpu.memory_space<vmem>>, vector<1x49xf32>
    tpu.vector_store %arg16[%c0_158, %c1323], %370 {strides = array<i32>} : memref<2x1568xf32, #tpu.memory_space<vmem>>, vector<1x49xf32>,
    %372 = vector.extract_strided_slice %315 {offsets = [28, 0], sizes = [1, 49], strides = [1, 1]} : vector<32x49xf32> to vector<1x49xf32>
    %c0_159 = arith.constant 0 : index
    %c1372 = arith.constant 1372 : index
    %373 = vector.load %arg16[%c0_159, %c1372] : memref<2x1568xf32, #tpu.memory_space<vmem>>, vector<1x49xf32>
    tpu.vector_store %arg16[%c0_159, %c1372], %372 {strides = array<i32>} : memref<2x1568xf32, #tpu.memory_space<vmem>>, vector<1x49xf32>,
    %374 = vector.extract_strided_slice %315 {offsets = [29, 0], sizes = [1, 49], strides = [1, 1]} : vector<32x49xf32> to vector<1x49xf32>
    %c0_160 = arith.constant 0 : index
    %c1421 = arith.constant 1421 : index
    %375 = vector.load %arg16[%c0_160, %c1421] : memref<2x1568xf32, #tpu.memory_space<vmem>>, vector<1x49xf32>
    tpu.vector_store %arg16[%c0_160, %c1421], %374 {strides = array<i32>} : memref<2x1568xf32, #tpu.memory_space<vmem>>, vector<1x49xf32>,
    %376 = vector.extract_strided_slice %315 {offsets = [30, 0], sizes = [1, 49], strides = [1, 1]} : vector<32x49xf32> to vector<1x49xf32>
    %c0_161 = arith.constant 0 : index
    %c1470 = arith.constant 1470 : index
    %377 = vector.load %arg16[%c0_161, %c1470] : memref<2x1568xf32, #tpu.memory_space<vmem>>, vector<1x49xf32>
    tpu.vector_store %arg16[%c0_161, %c1470], %376 {strides = array<i32>} : memref<2x1568xf32, #tpu.memory_space<vmem>>, vector<1x49xf32>,
    %378 = vector.extract_strided_slice %315 {offsets = [31, 0], sizes = [1, 49], strides = [1, 1]} : vector<32x49xf32> to vector<1x49xf32>
    %c0_162 = arith.constant 0 : index
    %c1519 = arith.constant 1519 : index
    %379 = vector.load %arg16[%c0_162, %c1519] : memref<2x1568xf32, #tpu.memory_space<vmem>>, vector<1x49xf32>
    tpu.vector_store %arg16[%c0_162, %c1519], %378 {strides = array<i32>} : memref<2x1568xf32, #tpu.memory_space<vmem>>, vector<1x49xf32>,
    %380 = vector.extract_strided_slice %313 {offsets = [0, 256], sizes = [32, 205], strides = [1, 1]} : vector<32x461xf32> to vector<32x205xf32>
    %cst_163 = arith.constant dense<0.000000e+00> : vector<32x49xf32>
    %381 = tpu.matmul %380, %68, %cst_163 {dimension_numbers = #tpu.dot_dimension_numbers<[1], [0], [0], [1], [0, 0, 1, 1], [], []>} : vector<32x205xf32>, vector<205x49xf32>, vector<32x49xf32> -> vector<32x49xf32>
    %382 = vector.extract_strided_slice %381 {offsets = [0, 0], sizes = [1, 49], strides = [1, 1]} : vector<32x49xf32> to vector<1x49xf32>
    %c1_164 = arith.constant 1 : index
    %c0_165 = arith.constant 0 : index
    %383 = vector.load %arg16[%c1_164, %c0_165] : memref<2x1568xf32, #tpu.memory_space<vmem>>, vector<1x49xf32>
    tpu.vector_store %arg16[%c1_164, %c0_165], %382 {strides = array<i32>} : memref<2x1568xf32, #tpu.memory_space<vmem>>, vector<1x49xf32>,
    %384 = vector.extract_strided_slice %381 {offsets = [1, 0], sizes = [1, 49], strides = [1, 1]} : vector<32x49xf32> to vector<1x49xf32>
    %c1_166 = arith.constant 1 : index
    %c49_167 = arith.constant 49 : index
    %385 = vector.load %arg16[%c1_166, %c49_167] : memref<2x1568xf32, #tpu.memory_space<vmem>>, vector<1x49xf32>
    tpu.vector_store %arg16[%c1_166, %c49_167], %384 {strides = array<i32>} : memref<2x1568xf32, #tpu.memory_space<vmem>>, vector<1x49xf32>,
    %386 = vector.extract_strided_slice %381 {offsets = [2, 0], sizes = [1, 49], strides = [1, 1]} : vector<32x49xf32> to vector<1x49xf32>
    %c1_168 = arith.constant 1 : index
    %c98_169 = arith.constant 98 : index
    %387 = vector.load %arg16[%c1_168, %c98_169] : memref<2x1568xf32, #tpu.memory_space<vmem>>, vector<1x49xf32>
    tpu.vector_store %arg16[%c1_168, %c98_169], %386 {strides = array<i32>} : memref<2x1568xf32, #tpu.memory_space<vmem>>, vector<1x49xf32>,
    %388 = vector.extract_strided_slice %381 {offsets = [3, 0], sizes = [1, 49], strides = [1, 1]} : vector<32x49xf32> to vector<1x49xf32>
    %c1_170 = arith.constant 1 : index
    %c147_171 = arith.constant 147 : index
    %389 = vector.load %arg16[%c1_170, %c147_171] : memref<2x1568xf32, #tpu.memory_space<vmem>>, vector<1x49xf32>
    tpu.vector_store %arg16[%c1_170, %c147_171], %388 {strides = array<i32>} : memref<2x1568xf32, #tpu.memory_space<vmem>>, vector<1x49xf32>,
    %390 = vector.extract_strided_slice %381 {offsets = [4, 0], sizes = [1, 49], strides = [1, 1]} : vector<32x49xf32> to vector<1x49xf32>
    %c1_172 = arith.constant 1 : index
    %c196_173 = arith.constant 196 : index
    %391 = vector.load %arg16[%c1_172, %c196_173] : memref<2x1568xf32, #tpu.memory_space<vmem>>, vector<1x49xf32>
    tpu.vector_store %arg16[%c1_172, %c196_173], %390 {strides = array<i32>} : memref<2x1568xf32, #tpu.memory_space<vmem>>, vector<1x49xf32>,
    %392 = vector.extract_strided_slice %381 {offsets = [5, 0], sizes = [1, 49], strides = [1, 1]} : vector<32x49xf32> to vector<1x49xf32>
    %c1_174 = arith.constant 1 : index
    %c245_175 = arith.constant 245 : index
    %393 = vector.load %arg16[%c1_174, %c245_175] : memref<2x1568xf32, #tpu.memory_space<vmem>>, vector<1x49xf32>
    tpu.vector_store %arg16[%c1_174, %c245_175], %392 {strides = array<i32>} : memref<2x1568xf32, #tpu.memory_space<vmem>>, vector<1x49xf32>,
    %394 = vector.extract_strided_slice %381 {offsets = [6, 0], sizes = [1, 49], strides = [1, 1]} : vector<32x49xf32> to vector<1x49xf32>
    %c1_176 = arith.constant 1 : index
    %c294_177 = arith.constant 294 : index
    %395 = vector.load %arg16[%c1_176, %c294_177] : memref<2x1568xf32, #tpu.memory_space<vmem>>, vector<1x49xf32>
    tpu.vector_store %arg16[%c1_176, %c294_177], %394 {strides = array<i32>} : memref<2x1568xf32, #tpu.memory_space<vmem>>, vector<1x49xf32>,
    %396 = vector.extract_strided_slice %381 {offsets = [7, 0], sizes = [1, 49], strides = [1, 1]} : vector<32x49xf32> to vector<1x49xf32>
    %c1_178 = arith.constant 1 : index
    %c343_179 = arith.constant 343 : index
    %397 = vector.load %arg16[%c1_178, %c343_179] : memref<2x1568xf32, #tpu.memory_space<vmem>>, vector<1x49xf32>
    tpu.vector_store %arg16[%c1_178, %c343_179], %396 {strides = array<i32>} : memref<2x1568xf32, #tpu.memory_space<vmem>>, vector<1x49xf32>,
    %398 = vector.extract_strided_slice %381 {offsets = [8, 0], sizes = [1, 49], strides = [1, 1]} : vector<32x49xf32> to vector<1x49xf32>
    %c1_180 = arith.constant 1 : index
    %c392_181 = arith.constant 392 : index
    %399 = vector.load %arg16[%c1_180, %c392_181] : memref<2x1568xf32, #tpu.memory_space<vmem>>, vector<1x49xf32>
    tpu.vector_store %arg16[%c1_180, %c392_181], %398 {strides = array<i32>} : memref<2x1568xf32, #tpu.memory_space<vmem>>, vector<1x49xf32>,
    %400 = vector.extract_strided_slice %381 {offsets = [9, 0], sizes = [1, 49], strides = [1, 1]} : vector<32x49xf32> to vector<1x49xf32>
    %c1_182 = arith.constant 1 : index
    %c441_183 = arith.constant 441 : index
    %401 = vector.load %arg16[%c1_182, %c441_183] : memref<2x1568xf32, #tpu.memory_space<vmem>>, vector<1x49xf32>
    tpu.vector_store %arg16[%c1_182, %c441_183], %400 {strides = array<i32>} : memref<2x1568xf32, #tpu.memory_space<vmem>>, vector<1x49xf32>,
    %402 = vector.extract_strided_slice %381 {offsets = [10, 0], sizes = [1, 49], strides = [1, 1]} : vector<32x49xf32> to vector<1x49xf32>
    %c1_184 = arith.constant 1 : index
    %c490_185 = arith.constant 490 : index
    %403 = vector.load %arg16[%c1_184, %c490_185] : memref<2x1568xf32, #tpu.memory_space<vmem>>, vector<1x49xf32>
    tpu.vector_store %arg16[%c1_184, %c490_185], %402 {strides = array<i32>} : memref<2x1568xf32, #tpu.memory_space<vmem>>, vector<1x49xf32>,
    %404 = vector.extract_strided_slice %381 {offsets = [11, 0], sizes = [1, 49], strides = [1, 1]} : vector<32x49xf32> to vector<1x49xf32>
    %c1_186 = arith.constant 1 : index
    %c539_187 = arith.constant 539 : index
    %405 = vector.load %arg16[%c1_186, %c539_187] : memref<2x1568xf32, #tpu.memory_space<vmem>>, vector<1x49xf32>
    tpu.vector_store %arg16[%c1_186, %c539_187], %404 {strides = array<i32>} : memref<2x1568xf32, #tpu.memory_space<vmem>>, vector<1x49xf32>,
    %406 = vector.extract_strided_slice %381 {offsets = [12, 0], sizes = [1, 49], strides = [1, 1]} : vector<32x49xf32> to vector<1x49xf32>
    %c1_188 = arith.constant 1 : index
    %c588_189 = arith.constant 588 : index
    %407 = vector.load %arg16[%c1_188, %c588_189] : memref<2x1568xf32, #tpu.memory_space<vmem>>, vector<1x49xf32>
    tpu.vector_store %arg16[%c1_188, %c588_189], %406 {strides = array<i32>} : memref<2x1568xf32, #tpu.memory_space<vmem>>, vector<1x49xf32>,
    %408 = vector.extract_strided_slice %381 {offsets = [13, 0], sizes = [1, 49], strides = [1, 1]} : vector<32x49xf32> to vector<1x49xf32>
    %c1_190 = arith.constant 1 : index
    %c637_191 = arith.constant 637 : index
    %409 = vector.load %arg16[%c1_190, %c637_191] : memref<2x1568xf32, #tpu.memory_space<vmem>>, vector<1x49xf32>
    tpu.vector_store %arg16[%c1_190, %c637_191], %408 {strides = array<i32>} : memref<2x1568xf32, #tpu.memory_space<vmem>>, vector<1x49xf32>,
    %410 = vector.extract_strided_slice %381 {offsets = [14, 0], sizes = [1, 49], strides = [1, 1]} : vector<32x49xf32> to vector<1x49xf32>
    %c1_192 = arith.constant 1 : index
    %c686_193 = arith.constant 686 : index
    %411 = vector.load %arg16[%c1_192, %c686_193] : memref<2x1568xf32, #tpu.memory_space<vmem>>, vector<1x49xf32>
    tpu.vector_store %arg16[%c1_192, %c686_193], %410 {strides = array<i32>} : memref<2x1568xf32, #tpu.memory_space<vmem>>, vector<1x49xf32>,
    %412 = vector.extract_strided_slice %381 {offsets = [15, 0], sizes = [1, 49], strides = [1, 1]} : vector<32x49xf32> to vector<1x49xf32>
    %c1_194 = arith.constant 1 : index
    %c735_195 = arith.constant 735 : index
    %413 = vector.load %arg16[%c1_194, %c735_195] : memref<2x1568xf32, #tpu.memory_space<vmem>>, vector<1x49xf32>
    tpu.vector_store %arg16[%c1_194, %c735_195], %412 {strides = array<i32>} : memref<2x1568xf32, #tpu.memory_space<vmem>>, vector<1x49xf32>,
    %414 = vector.extract_strided_slice %381 {offsets = [16, 0], sizes = [1, 49], strides = [1, 1]} : vector<32x49xf32> to vector<1x49xf32>
    %c1_196 = arith.constant 1 : index
    %c784_197 = arith.constant 784 : index
    %415 = vector.load %arg16[%c1_196, %c784_197] : memref<2x1568xf32, #tpu.memory_space<vmem>>, vector<1x49xf32>
    tpu.vector_store %arg16[%c1_196, %c784_197], %414 {strides = array<i32>} : memref<2x1568xf32, #tpu.memory_space<vmem>>, vector<1x49xf32>,
    %416 = vector.extract_strided_slice %381 {offsets = [17, 0], sizes = [1, 49], strides = [1, 1]} : vector<32x49xf32> to vector<1x49xf32>
    %c1_198 = arith.constant 1 : index
    %c833_199 = arith.constant 833 : index
    %417 = vector.load %arg16[%c1_198, %c833_199] : memref<2x1568xf32, #tpu.memory_space<vmem>>, vector<1x49xf32>
    tpu.vector_store %arg16[%c1_198, %c833_199], %416 {strides = array<i32>} : memref<2x1568xf32, #tpu.memory_space<vmem>>, vector<1x49xf32>,
    %418 = vector.extract_strided_slice %381 {offsets = [18, 0], sizes = [1, 49], strides = [1, 1]} : vector<32x49xf32> to vector<1x49xf32>
    %c1_200 = arith.constant 1 : index
    %c882_201 = arith.constant 882 : index
    %419 = vector.load %arg16[%c1_200, %c882_201] : memref<2x1568xf32, #tpu.memory_space<vmem>>, vector<1x49xf32>
    tpu.vector_store %arg16[%c1_200, %c882_201], %418 {strides = array<i32>} : memref<2x1568xf32, #tpu.memory_space<vmem>>, vector<1x49xf32>,
    %420 = vector.extract_strided_slice %381 {offsets = [19, 0], sizes = [1, 49], strides = [1, 1]} : vector<32x49xf32> to vector<1x49xf32>
    %c1_202 = arith.constant 1 : index
    %c931_203 = arith.constant 931 : index
    %421 = vector.load %arg16[%c1_202, %c931_203] : memref<2x1568xf32, #tpu.memory_space<vmem>>, vector<1x49xf32>
    tpu.vector_store %arg16[%c1_202, %c931_203], %420 {strides = array<i32>} : memref<2x1568xf32, #tpu.memory_space<vmem>>, vector<1x49xf32>,
    %422 = vector.extract_strided_slice %381 {offsets = [20, 0], sizes = [1, 49], strides = [1, 1]} : vector<32x49xf32> to vector<1x49xf32>
    %c1_204 = arith.constant 1 : index
    %c980_205 = arith.constant 980 : index
    %423 = vector.load %arg16[%c1_204, %c980_205] : memref<2x1568xf32, #tpu.memory_space<vmem>>, vector<1x49xf32>
    tpu.vector_store %arg16[%c1_204, %c980_205], %422 {strides = array<i32>} : memref<2x1568xf32, #tpu.memory_space<vmem>>, vector<1x49xf32>,
    %424 = vector.extract_strided_slice %381 {offsets = [21, 0], sizes = [1, 49], strides = [1, 1]} : vector<32x49xf32> to vector<1x49xf32>
    %c1_206 = arith.constant 1 : index
    %c1029_207 = arith.constant 1029 : index
    %425 = vector.load %arg16[%c1_206, %c1029_207] : memref<2x1568xf32, #tpu.memory_space<vmem>>, vector<1x49xf32>
    tpu.vector_store %arg16[%c1_206, %c1029_207], %424 {strides = array<i32>} : memref<2x1568xf32, #tpu.memory_space<vmem>>, vector<1x49xf32>,
    %426 = vector.extract_strided_slice %381 {offsets = [22, 0], sizes = [1, 49], strides = [1, 1]} : vector<32x49xf32> to vector<1x49xf32>
    %c1_208 = arith.constant 1 : index
    %c1078_209 = arith.constant 1078 : index
    %427 = vector.load %arg16[%c1_208, %c1078_209] : memref<2x1568xf32, #tpu.memory_space<vmem>>, vector<1x49xf32>
    tpu.vector_store %arg16[%c1_208, %c1078_209], %426 {strides = array<i32>} : memref<2x1568xf32, #tpu.memory_space<vmem>>, vector<1x49xf32>,
    %428 = vector.extract_strided_slice %381 {offsets = [23, 0], sizes = [1, 49], strides = [1, 1]} : vector<32x49xf32> to vector<1x49xf32>
    %c1_210 = arith.constant 1 : index
    %c1127_211 = arith.constant 1127 : index
    %429 = vector.load %arg16[%c1_210, %c1127_211] : memref<2x1568xf32, #tpu.memory_space<vmem>>, vector<1x49xf32>
    tpu.vector_store %arg16[%c1_210, %c1127_211], %428 {strides = array<i32>} : memref<2x1568xf32, #tpu.memory_space<vmem>>, vector<1x49xf32>,
    %430 = vector.extract_strided_slice %381 {offsets = [24, 0], sizes = [1, 49], strides = [1, 1]} : vector<32x49xf32> to vector<1x49xf32>
    %c1_212 = arith.constant 1 : index
    %c1176_213 = arith.constant 1176 : index
    %431 = vector.load %arg16[%c1_212, %c1176_213] : memref<2x1568xf32, #tpu.memory_space<vmem>>, vector<1x49xf32>
    tpu.vector_store %arg16[%c1_212, %c1176_213], %430 {strides = array<i32>} : memref<2x1568xf32, #tpu.memory_space<vmem>>, vector<1x49xf32>,
    %432 = vector.extract_strided_slice %381 {offsets = [25, 0], sizes = [1, 49], strides = [1, 1]} : vector<32x49xf32> to vector<1x49xf32>
    %c1_214 = arith.constant 1 : index
    %c1225_215 = arith.constant 1225 : index
    %433 = vector.load %arg16[%c1_214, %c1225_215] : memref<2x1568xf32, #tpu.memory_space<vmem>>, vector<1x49xf32>
    tpu.vector_store %arg16[%c1_214, %c1225_215], %432 {strides = array<i32>} : memref<2x1568xf32, #tpu.memory_space<vmem>>, vector<1x49xf32>,
    %434 = vector.extract_strided_slice %381 {offsets = [26, 0], sizes = [1, 49], strides = [1, 1]} : vector<32x49xf32> to vector<1x49xf32>
    %c1_216 = arith.constant 1 : index
    %c1274_217 = arith.constant 1274 : index
    %435 = vector.load %arg16[%c1_216, %c1274_217] : memref<2x1568xf32, #tpu.memory_space<vmem>>, vector<1x49xf32>
    tpu.vector_store %arg16[%c1_216, %c1274_217], %434 {strides = array<i32>} : memref<2x1568xf32, #tpu.memory_space<vmem>>, vector<1x49xf32>,
    %436 = vector.extract_strided_slice %381 {offsets = [27, 0], sizes = [1, 49], strides = [1, 1]} : vector<32x49xf32> to vector<1x49xf32>
    %c1_218 = arith.constant 1 : index
    %c1323_219 = arith.constant 1323 : index
    %437 = vector.load %arg16[%c1_218, %c1323_219] : memref<2x1568xf32, #tpu.memory_space<vmem>>, vector<1x49xf32>
    tpu.vector_store %arg16[%c1_218, %c1323_219], %436 {strides = array<i32>} : memref<2x1568xf32, #tpu.memory_space<vmem>>, vector<1x49xf32>,
    %438 = vector.extract_strided_slice %381 {offsets = [28, 0], sizes = [1, 49], strides = [1, 1]} : vector<32x49xf32> to vector<1x49xf32>
    %c1_220 = arith.constant 1 : index
    %c1372_221 = arith.constant 1372 : index
    %439 = vector.load %arg16[%c1_220, %c1372_221] : memref<2x1568xf32, #tpu.memory_space<vmem>>, vector<1x49xf32>
    tpu.vector_store %arg16[%c1_220, %c1372_221], %438 {strides = array<i32>} : memref<2x1568xf32, #tpu.memory_space<vmem>>, vector<1x49xf32>,
    %440 = vector.extract_strided_slice %381 {offsets = [29, 0], sizes = [1, 49], strides = [1, 1]} : vector<32x49xf32> to vector<1x49xf32>
    %c1_222 = arith.constant 1 : index
    %c1421_223 = arith.constant 1421 : index
    %441 = vector.load %arg16[%c1_222, %c1421_223] : memref<2x1568xf32, #tpu.memory_space<vmem>>, vector<1x49xf32>
    tpu.vector_store %arg16[%c1_222, %c1421_223], %440 {strides = array<i32>} : memref<2x1568xf32, #tpu.memory_space<vmem>>, vector<1x49xf32>,
    %442 = vector.extract_strided_slice %381 {offsets = [30, 0], sizes = [1, 49], strides = [1, 1]} : vector<32x49xf32> to vector<1x49xf32>
    %c1_224 = arith.constant 1 : index
    %c1470_225 = arith.constant 1470 : index
    %443 = vector.load %arg16[%c1_224, %c1470_225] : memref<2x1568xf32, #tpu.memory_space<vmem>>, vector<1x49xf32>
    tpu.vector_store %arg16[%c1_224, %c1470_225], %442 {strides = array<i32>} : memref<2x1568xf32, #tpu.memory_space<vmem>>, vector<1x49xf32>,
    %444 = vector.extract_strided_slice %381 {offsets = [31, 0], sizes = [1, 49], strides = [1, 1]} : vector<32x49xf32> to vector<1x49xf32>
    %c1_226 = arith.constant 1 : index
    %c1519_227 = arith.constant 1519 : index
    %445 = vector.load %arg16[%c1_226, %c1519_227] : memref<2x1568xf32, #tpu.memory_space<vmem>>, vector<1x49xf32>
    tpu.vector_store %arg16[%c1_226, %c1519_227], %444 {strides = array<i32>} : memref<2x1568xf32, #tpu.memory_space<vmem>>, vector<1x49xf32>,
    %c0_228 = arith.constant 0 : index
    %c0_229 = arith.constant 0 : index
    %446 = vector.load %arg16[%c0_228, %c0_229] : memref<2x1568xf32, #tpu.memory_space<vmem>>, vector<2x1568xf32>
    %447 = arith.truncf %446 : vector<2x1568xf32> to vector<2x1568xbf16>
    %c0_i32_230 = arith.constant 0 : i32
    %448 = tpu.memref_slice %arg19[%c0_i32_230] : memref<3x!tpu.dma_semaphore, #tpu.memory_space<semaphore_mem>> -> memref<1x!tpu.dma_semaphore, #tpu.memory_space<semaphore_mem>>
    %449 = tpu.memref_squeeze %448 : memref<1x!tpu.dma_semaphore, #tpu.memory_space<semaphore_mem>> -> memref<!tpu.dma_semaphore, #tpu.memory_space<semaphore_mem>>
    tpu.wait_dma2 semaphore(%449 : memref<!tpu.dma_semaphore, #tpu.memory_space<semaphore_mem>>) src(%arg5 : memref<1568x1024xbf16, #tpu.memory_space<any>>) dst(%arg17 : memref<1568x1024xbf16, #tpu.memory_space<vmem>>)
    %c0_231 = arith.constant 0 : index
    %c0_232 = arith.constant 0 : index
    %450 = vector.load %arg17[%c0_231, %c0_232] : memref<1568x1024xbf16, #tpu.memory_space<vmem>>, vector<1568x1024xbf16>
    %cst_233 = arith.constant dense<0.000000e+00> : vector<2x1024xf32>
    %451 = tpu.matmul %447, %450, %cst_233 {dimension_numbers = #tpu.dot_dimension_numbers<[1], [0], [0], [1], [0, 0, 1, 1], [], []>} : vector<2x1568xbf16>, vector<1568x1024xbf16>, vector<2x1024xf32> -> vector<2x1024xf32>
    %c0_234 = arith.constant 0 : index
    %c0_235 = arith.constant 0 : index
    %452 = vector.load %arg8[%c0_234, %c0_235] : memref<1x1024xf32, #tpu.memory_space<vmem>>, vector<1x1024xf32>
    %453 = vector.broadcast %452 : vector<1x1024xf32> to vector<2x1024xf32>
    %454 = arith.addf %451, %453 : vector<2x1024xf32>
    %cst_236 = arith.constant 0.000000e+00 : f32
    %455 = vector.broadcast %cst_236 : f32 to vector<2x1024xf32>
    %456 = arith.maximumf %454, %455 : vector<2x1024xf32>
    %457 = arith.truncf %456 : vector<2x1024xf32> to vector<2x1024xbf16>
    %c0_i32_237 = arith.constant 0 : i32
    %c0_i32_238 = arith.constant 0 : i32
    %c1_i32_239 = arith.constant 1 : i32
    %c0_i32_240 = arith.constant 0 : i32
    %c0_i32_241 = arith.constant 0 : i32
    %458 = tpu.memref_slice %arg6[%c0_i32_237, %c0_i32_240, %c0_i32_241] : memref<2x512x1024xbf16, #tpu.memory_space<any>> -> memref<1x512x1024xbf16, #tpu.memory_space<any>>
    %459 = tpu.memref_squeeze %458 : memref<1x512x1024xbf16, #tpu.memory_space<any>> -> memref<512x1024xbf16, #tpu.memory_space<any>>
    %c0_i32_242 = arith.constant 0 : i32
    %c0_i32_243 = arith.constant 0 : i32
    %460 = tpu.memref_slice %arg18[%c0_i32_238, %c0_i32_242, %c0_i32_243] : memref<2x512x1024xbf16, #tpu.memory_space<vmem>> -> memref<1x512x1024xbf16, #tpu.memory_space<vmem>>
    %461 = tpu.memref_squeeze %460 : memref<1x512x1024xbf16, #tpu.memory_space<vmem>> -> memref<512x1024xbf16, #tpu.memory_space<vmem>>
    %462 = tpu.memref_slice %arg19[%c1_i32_239] : memref<3x!tpu.dma_semaphore, #tpu.memory_space<semaphore_mem>> -> memref<1x!tpu.dma_semaphore, #tpu.memory_space<semaphore_mem>>
    %463 = tpu.memref_squeeze %462 : memref<1x!tpu.dma_semaphore, #tpu.memory_space<semaphore_mem>> -> memref<!tpu.dma_semaphore, #tpu.memory_space<semaphore_mem>>
    tpu.wait_dma2 semaphore(%463 : memref<!tpu.dma_semaphore, #tpu.memory_space<semaphore_mem>>) src(%459 : memref<512x1024xbf16, #tpu.memory_space<any>>) dst(%461 : memref<512x1024xbf16, #tpu.memory_space<vmem>>)
    %464 = vector.extract_strided_slice %457 {offsets = [0, 0], sizes = [2, 512], strides = [1, 1]} : vector<2x1024xbf16> to vector<2x512xbf16>
    %c0_244 = arith.constant 0 : index
    %c0_245 = arith.constant 0 : index
    %c0_246 = arith.constant 0 : index
    %465 = vector.load %arg18[%c0_244, %c0_245, %c0_246] : memref<2x512x1024xbf16, #tpu.memory_space<vmem>>, vector<1x512x1024xbf16>
    %466 = vector.shape_cast %465 : vector<1x512x1024xbf16> to vector<512x1024xbf16>
    %cst_247 = arith.constant dense<0.000000e+00> : vector<2x1024xf32>
    %467 = tpu.matmul %464, %466, %cst_247 {dimension_numbers = #tpu.dot_dimension_numbers<[1], [0], [0], [1], [0, 0, 1, 1], [], []>} : vector<2x512xbf16>, vector<512x1024xbf16>, vector<2x1024xf32> -> vector<2x1024xf32>
    %c1_i32_248 = arith.constant 1 : i32
    %c1_i32_249 = arith.constant 1 : i32
    %c2_i32_250 = arith.constant 2 : i32
    %c0_i32_251 = arith.constant 0 : i32
    %c0_i32_252 = arith.constant 0 : i32
    %468 = tpu.memref_slice %arg6[%c1_i32_248, %c0_i32_251, %c0_i32_252] : memref<2x512x1024xbf16, #tpu.memory_space<any>> -> memref<1x512x1024xbf16, #tpu.memory_space<any>>
    %469 = tpu.memref_squeeze %468 : memref<1x512x1024xbf16, #tpu.memory_space<any>> -> memref<512x1024xbf16, #tpu.memory_space<any>>
    %c0_i32_253 = arith.constant 0 : i32
    %c0_i32_254 = arith.constant 0 : i32
    %470 = tpu.memref_slice %arg18[%c1_i32_249, %c0_i32_253, %c0_i32_254] : memref<2x512x1024xbf16, #tpu.memory_space<vmem>> -> memref<1x512x1024xbf16, #tpu.memory_space<vmem>>
    %471 = tpu.memref_squeeze %470 : memref<1x512x1024xbf16, #tpu.memory_space<vmem>> -> memref<512x1024xbf16, #tpu.memory_space<vmem>>
    %472 = tpu.memref_slice %arg19[%c2_i32_250] : memref<3x!tpu.dma_semaphore, #tpu.memory_space<semaphore_mem>> -> memref<1x!tpu.dma_semaphore, #tpu.memory_space<semaphore_mem>>
    %473 = tpu.memref_squeeze %472 : memref<1x!tpu.dma_semaphore, #tpu.memory_space<semaphore_mem>> -> memref<!tpu.dma_semaphore, #tpu.memory_space<semaphore_mem>>
    tpu.wait_dma2 semaphore(%473 : memref<!tpu.dma_semaphore, #tpu.memory_space<semaphore_mem>>) src(%469 : memref<512x1024xbf16, #tpu.memory_space<any>>) dst(%471 : memref<512x1024xbf16, #tpu.memory_space<vmem>>)
    %474 = vector.extract_strided_slice %457 {offsets = [0, 512], sizes = [2, 512], strides = [1, 1]} : vector<2x1024xbf16> to vector<2x512xbf16>
    %c1_255 = arith.constant 1 : index
    %c0_256 = arith.constant 0 : index
    %c0_257 = arith.constant 0 : index
    %475 = vector.load %arg18[%c1_255, %c0_256, %c0_257] : memref<2x512x1024xbf16, #tpu.memory_space<vmem>>, vector<1x512x1024xbf16>
    %476 = vector.shape_cast %475 : vector<1x512x1024xbf16> to vector<512x1024xbf16>
    %cst_258 = arith.constant dense<0.000000e+00> : vector<2x1024xf32>
    %477 = tpu.matmul %474, %476, %cst_258 {dimension_numbers = #tpu.dot_dimension_numbers<[1], [0], [0], [1], [0, 0, 1, 1], [], []>} : vector<2x512xbf16>, vector<512x1024xbf16>, vector<2x1024xf32> -> vector<2x1024xf32>
    %478 = arith.addf %467, %477 : vector<2x1024xf32>
    %c0_259 = arith.constant 0 : index
    %c0_260 = arith.constant 0 : index
    %479 = vector.load %arg9[%c0_259, %c0_260] : memref<1x1024xf32, #tpu.memory_space<vmem>>, vector<1x1024xf32>
    %480 = vector.broadcast %479 : vector<1x1024xf32> to vector<2x1024xf32>
    %481 = arith.addf %478, %480 : vector<2x1024xf32>
    %cst_261 = arith.constant 0.000000e+00 : f32
    %482 = vector.broadcast %cst_261 : f32 to vector<2x1024xf32>
    %483 = arith.maximumf %481, %482 : vector<2x1024xf32>
    %484 = arith.truncf %483 : vector<2x1024xf32> to vector<2x1024xbf16>
    %c0_262 = arith.constant 0 : index
    %c0_263 = arith.constant 0 : index
    %485 = vector.load %arg7[%c0_262, %c0_263] : memref<1024x10xbf16, #tpu.memory_space<vmem>>, vector<1024x10xbf16>
    %cst_264 = arith.constant dense<0.000000e+00> : vector<2x10xf32>
    %486 = tpu.matmul %484, %485, %cst_264 {dimension_numbers = #tpu.dot_dimension_numbers<[1], [0], [0], [1], [0, 0, 1, 1], [], []>} : vector<2x1024xbf16>, vector<1024x10xbf16>, vector<2x10xf32> -> vector<2x10xf32>
    %c0_265 = arith.constant 0 : index
    %c0_266 = arith.constant 0 : index
    %487 = vector.load %arg10[%c0_265, %c0_266] : memref<1x10xf32, #tpu.memory_space<vmem>>, vector<1x10xf32>
    %488 = vector.broadcast %487 : vector<1x10xf32> to vector<2x10xf32>
    %489 = arith.addf %486, %488 : vector<2x10xf32>
    %c0_267 = arith.constant 0 : index
    %c0_268 = arith.constant 0 : index
    %490 = vector.load %arg11[%c0_267, %c0_268] : memref<2x10xf32, #tpu.memory_space<vmem>>, vector<2x10xf32>
    tpu.vector_store %arg11[%c0_267, %c0_268], %489 {strides = array<i32>} : memref<2x10xf32, #tpu.memory_space<vmem>>, vector<2x10xf32>,
    return
  }
}

</mosaic_0001>

<llo_original>
// kernel: cnn_forward.1
$region0: #{cnn_forward.1}
  #allocation0 [shape = 'u32[]', space=smem, size = 0x4, offset = 0x4, fixed_abs, tag = 'smem constant byte address 0x4 - core index']
  #allocation1 [shape = 'u32[144,128]{1,0:T(1,128)}', space=vmem, size = 0x12000, scoped, tag = 'internal scratch']
  #allocation2 [shape = 'f32[1,1800]{1,0:T(1,128)}', space=vmem, size = 0x1e00, scoped, tag = 'scratch operand']
  #allocation3 [shape = 'f32[9,1738]{1,0:T(8,128)}', space=vmem, size = 0x1c000, scoped, tag = 'scratch operand']
  #allocation4 [shape = 'f32[16,512]{1,0:T(8,128)}', space=vmem, size = 0x8000, scoped, tag = 'scratch operand']
  #allocation5 [shape = 'f32[144,478]{1,0:T(8,128)}', space=vmem, size = 0x48000, scoped, tag = 'scratch operand']
  #allocation6 [shape = 'f32[2,1568]{1,0:T(2,128)}', space=vmem, size = 0x3400, scoped, tag = 'scratch operand']
  #allocation7 [shape = 'bf16[1568,1024]{1,0:T(16,128)(2,1)}', space=vmem, size = 0x310000, scoped, tag = 'scratch operand']
  #allocation8 [shape = 'bf16[2,512,1024]{2,1,0:T(16,128)(2,1)}', space=vmem, size = 0x200000, scoped, tag = 'scratch operand']
  #allocation9 [shape = 's32[3]{0}', space=sflag, size = 0xc, scoped, tag = 'scratch operand']
  #allocation20 [shape = 's32[]', space=sflag, size = 0x4, offset = 0, fixed_abs, tag = 'sflag constant byte address 0x0 - dummy sync flag']
  #allocation22 [shape = 's32[]', space=sflag, size = 0x4, offset = 0, fixed_abs, tag = 'sflag constant byte address 0x0 - dummy sync flag']
  #allocation24 [shape = 's32[]', space=sflag, size = 0x4, offset = 0, fixed_abs, tag = 'sflag constant byte address 0x0 - dummy sync flag']
  %s0 = inlined_call_operand.vmem [shape: f32[2,28,28], index: 0, kind: input, shape index: {}]
  %s1 = inlined_call_operand.hbm [shape: f32[16,9], index: 1, kind: input, shape index: {}]
  %s2 = inlined_call_operand.vmem [shape: f32[16,1], index: 2, kind: input, shape index: {}]
  %s3 = inlined_call_operand.hbm [shape: f32[32,144], index: 3, kind: input, shape index: {}]
  %s4 = inlined_call_operand.vmem [shape: f32[32,1], index: 4, kind: input, shape index: {}]
  %s5 = inlined_call_operand.hbm [shape: bf16[1568,1024], index: 5, kind: input, shape index: {}]
  %s6 = inlined_call_operand.hbm [shape: bf16[2,512,1024], index: 6, kind: input, shape index: {}]
  %s7 = inlined_call_operand.vmem [shape: bf16[1024,10], index: 7, kind: input, shape index: {}]
  %s8 = inlined_call_operand.hbm [shape: f32[1,1024], index: 8, kind: input, shape index: {}]
  %s9 = inlined_call_operand.hbm [shape: f32[1,1024], index: 9, kind: input, shape index: {}]
  %s10 = inlined_call_operand.hbm [shape: f32[1,10], index: 10, kind: input, shape index: {}]
  %s11 = inlined_call_operand.hbm [shape: f32[2,10], index: 11, kind: output, shape index: {}]
  %s12 = sld [smem:[#allocation0]]
  $region66: #{cnn_forward.1} parent=0
    _
  %s14 = ssub.s32 1, %s12
  %s15 = scalar_select 0, %s14, %s12
  $region1: #{cnn_forward.1} parent=0
    #allocation10 [shape = 'u8[8192]{0}', space=vmem, size = 0x2000, scoped, tag = 'input window, operand 1, single buffered']
    #allocation11 [shape = 's32[1]{0}', space=sflag, size = 0x4, scoped, tag = 'scoped memory for cnn_forward.1']
    #allocation12 [shape = 's32[1]{0}', space=sflag, size = 0x4, scoped, tag = 'scoped memory for cnn_forward.1']
    #allocation13 [shape = 'u8[32768]{0}', space=vmem, size = 0x8000, scoped, tag = 'input window, operand 3, single buffered']
    #allocation14 [shape = 's32[1]{0}', space=sflag, size = 0x4, scoped, tag = 'scoped memory for cnn_forward.1']
    #allocation15 [shape = 'u8[4096]{0}', space=vmem, size = 0x1000, scoped, tag = 'input window, operand 8, single buffered']
    #allocation16 [shape = 'u8[4096]{0}', space=vmem, size = 0x1000, scoped, tag = 'input window, operand 9, single buffered']
    #allocation17 [shape = 's32[1]{0}', space=sflag, size = 0x4, scoped, tag = 'scoped memory for cnn_forward.1']
    #allocation18 [shape = 'u8[512]{0}', space=vmem, size = 0x400, scoped, tag = 'input window, operand 10, single buffered']
    #allocation19 [shape = 'u8[1024]{0}', space=vmem, size = 0x400, scoped, tag = 'output window, operand 0, single buffered']
    #allocation21 [shape = 'u32[9]{0}', space=smem, size = 0x24, scoped, tag = 'DMA stride descriptor']
    #allocation23 [shape = 'u32[9]{0}', space=smem, size = 0x24, scoped, tag = 'DMA stride descriptor']
    #allocation25 [shape = 'u32[9]{0}', space=smem, size = 0x24, scoped, tag = 'DMA stride descriptor']
    %16 = vsyncpa [#allocation11], 0
    %17 = vsyncpa [#allocation14], 0
    %18 = vsyncpa [#allocation17], 0
    %19 = vsyncpa [#allocation12], 0
    // Predicated region
    $region2: #{cnn_forward.1} parent=1 // pred_check
      _
    $region3: #{cnn_forward.1} parent=1 // pred_check_branch
      %21 = sbr.rel (0) target = $region5
    $region4: #{cnn_forward.1} parent=1 // pred_region
      _
    $region5: #{cnn_forward.1} parent=1 // pred_fallthru
      _
    // Predicated region
    $region6: #{cnn_forward.1} parent=1 // pred_check
      _
    $region7: #{cnn_forward.1} parent=1 // pred_check_branch
      %23 = sbr.rel (0) target = $region9
    $region8: #{cnn_forward.1} parent=1 // pred_region
      %s25 = ssub.s32 256, 256
      %26 = vsyncadd [#allocation11], %s25
      %s27 = sshll.u32 [#allocation10], 4
      %s28 = int_to_ptr.vmem [resolvable:$true] %s27
      %33 = dma.hbm_to_vmem [thread:$0]  %s1, 256, %s28, [#allocation11], 128, 128, 8
    $region9: #{cnn_forward.1} parent=1 // pred_fallthru
      _
    // Predicated region
    $region10: #{cnn_forward.1} parent=1 // pred_check
      _
    $region11: #{cnn_forward.1} parent=1 // pred_check_branch
      %35 = sbr.rel (0) target = $region13
    $region12: #{cnn_forward.1} parent=1 // pred_region
      _
    $region13: #{cnn_forward.1} parent=1 // pred_fallthru
      _
    // Predicated region
    $region14: #{cnn_forward.1} parent=1 // pred_check
      _
    $region15: #{cnn_forward.1} parent=1 // pred_check_branch
      %37 = sbr.rel (0) target = $region17
    $region16: #{cnn_forward.1} parent=1 // pred_region
      %s39 = ssub.s32 1024, 1024
      %40 = vsyncadd [#allocation14], %s39
      %s41 = sshll.u32 [#allocation13], 4
      %s42 = int_to_ptr.vmem [resolvable:$true] %s41
      %47 = dma.hbm_to_vmem [thread:$0]  %s3, 1024, %s42, [#allocation14], 256, 256, 16
    $region17: #{cnn_forward.1} parent=1 // pred_fallthru
      _
    // Predicated region
    $region18: #{cnn_forward.1} parent=1 // pred_check
      _
    $region19: #{cnn_forward.1} parent=1 // pred_check_branch
      %49 = sbr.rel (0) target = $region21
    $region20: #{cnn_forward.1} parent=1 // pred_region
      _
    $region21: #{cnn_forward.1} parent=1 // pred_fallthru
      _
    // Predicated region
    $region22: #{cnn_forward.1} parent=1 // pred_check
      _
    $region23: #{cnn_forward.1} parent=1 // pred_check_branch
      %51 = sbr.rel (0) target = $region25
    $region24: #{cnn_forward.1} parent=1 // pred_region
      _
    $region25: #{cnn_forward.1} parent=1 // pred_fallthru
      _
    // Predicated region
    $region26: #{cnn_forward.1} parent=1 // pred_check
      _
    $region27: #{cnn_forward.1} parent=1 // pred_check_branch
      %53 = sbr.rel (0) target = $region29
    $region28: #{cnn_forward.1} parent=1 // pred_region
      %s55 = ssub.s32 128, 128
      %56 = vsyncadd [#allocation14], %s55
      %s58 = sshll.u32 [#allocation15], 4
      %s59 = int_to_ptr.vmem [resolvable:$true] %s58
      %61 = dma.hbm_to_vmem [thread:$0]  %s8, 128, %s59, [#allocation14]
    $region29: #{cnn_forward.1} parent=1 // pred_fallthru
      _
    // Predicated region
    $region30: #{cnn_forward.1} parent=1 // pred_check
      _
    $region31: #{cnn_forward.1} parent=1 // pred_check_branch
      %63 = sbr.rel (0) target = $region33
    $region32: #{cnn_forward.1} parent=1 // pred_region
      %s65 = ssub.s32 128, 128
      %66 = vsyncadd [#allocation17], %s65
      %s68 = sshll.u32 [#allocation16], 4
      %s69 = int_to_ptr.vmem [resolvable:$true] %s68
      %71 = dma.hbm_to_vmem [thread:$0]  %s9, 128, %s69, [#allocation17]
    $region33: #{cnn_forward.1} parent=1 // pred_fallthru
      _
    // Predicated region
    $region34: #{cnn_forward.1} parent=1 // pred_check
      _
    $region35: #{cnn_forward.1} parent=1 // pred_check_branch
      %73 = sbr.rel (0) target = $region37
    $region36: #{cnn_forward.1} parent=1 // pred_region
      %s75 = ssub.s32 16, 16
      %76 = vsyncadd [#allocation17], %s75
      %s78 = sshll.u32 [#allocation18], 4
      %s79 = int_to_ptr.vmem [resolvable:$true] %s78
      %81 = dma.hbm_to_vmem [thread:$0]  %s10, 16, %s79, [#allocation17]
    $region37: #{cnn_forward.1} parent=1 // pred_fallthru
      _
    // Predicated region
    $region38: #{cnn_forward.1} parent=1 // pred_check
      _
    $region39: #{cnn_forward.1} parent=1 // pred_check_branch
      %83 = sbr.rel (0) target = $region41
    $region40: #{cnn_forward.1} parent=1 // pred_region
      %84 = dma.done [#allocation11], 256
    $region41: #{cnn_forward.1} parent=1 // pred_fallthru
      _
    // Predicated region
    $region42: #{cnn_forward.1} parent=1 // pred_check
      _
    $region43: #{cnn_forward.1} parent=1 // pred_check_branch
      %86 = sbr.rel (0) target = $region45
    $region44: #{cnn_forward.1} parent=1 // pred_region
      %87 = dma.done [#allocation14], 1024
    $region45: #{cnn_forward.1} parent=1 // pred_fallthru
      _
    // Predicated region
    $region46: #{cnn_forward.1} parent=1 // pred_check
      _
    $region47: #{cnn_forward.1} parent=1 // pred_check_branch
      %89 = sbr.rel (0) target = $region49
    $region48: #{cnn_forward.1} parent=1 // pred_region
      %90 = dma.done [#allocation14], 128
    $region49: #{cnn_forward.1} parent=1 // pred_fallthru
      _
    // Predicated region
    $region50: #{cnn_forward.1} parent=1 // pred_check
      _
    $region51: #{cnn_forward.1} parent=1 // pred_check_branch
      %92 = sbr.rel (0) target = $region53
    $region52: #{cnn_forward.1} parent=1 // pred_region
      %93 = dma.done [#allocation17], 128
    $region53: #{cnn_forward.1} parent=1 // pred_fallthru
      _
    // Predicated region
    $region54: #{cnn_forward.1} parent=1 // pred_check
      _
    $region55: #{cnn_forward.1} parent=1 // pred_check_branch
      %95 = sbr.rel (0) target = $region57
    $region56: #{cnn_forward.1} parent=1 // pred_region
      %96 = dma.done [#allocation17], 16
    $region57: #{cnn_forward.1} parent=1 // pred_fallthru
      _
    %s99 = sshll.u32 1, 14
    %s100 = sxor.u32 4294967295, %s99
    %s102 = sld [smem:[#allocation0]]
    %s103 = sadd.s32 2, %s102
    %s105 = sshll.u32 7, 26
    %s106 = sxor.u32 4294967295, %s105
    %s107 = sand.u32 0, %s106
    %s108 = sshll.u32 %s103, 26
    %s109 = sor.u32 %s107, %s108
    %s110 = sshll.u32 [#allocation7], 4
    %s111 = int_to_ptr.vmem [resolvable:$true] %s110
    %114 = sst [smem:[#allocation21]] 1024
    %s115 = scalar_lea.smem [#allocation21], 1
    %116 = sst [smem:[%s115]] 1024
    %s117 = scalar_lea.smem [#allocation21], 2
    %118 = sst [smem:[%s117]] 8
    %s119 = scalar_lea.smem [#allocation21], 3
    %120 = sst [smem:[%s119]] 64
    %s121 = scalar_lea.smem [#allocation21], 4
    %122 = sst [smem:[%s121]] 128
    %s123 = scalar_lea.smem [#allocation21], 5
    %124 = sst [smem:[%s123]] 2
    %s125 = scalar_lea.smem [#allocation21], 6
    %126 = sst [smem:[%s125]] 512
    %s127 = scalar_lea.smem [#allocation21], 7
    %128 = sst [smem:[%s127]] 64
    %s129 = scalar_lea.smem [#allocation21], 8
    %130 = sst [smem:[%s129]] 4
    %132 = dma.general %s5, 100352, %s111, [#allocation9], [#allocation20], [#allocation21], %s109, 0
    %s133 = scalar_lea.sflag [#allocation9], 1
    %s135 = sshll.u32 1, 14
    %s136 = sxor.u32 4294967295, %s135
    %s138 = sadd.s32 2, %s102
    %s140 = sshll.u32 7, 26
    %s141 = sxor.u32 4294967295, %s140
    %s142 = sand.u32 0, %s141
    %s143 = sshll.u32 %s138, 26
    %s144 = sor.u32 %s142, %s143
    %s145 = sshll.u32 [#allocation8], 4
    %s146 = int_to_ptr.vmem [resolvable:$true] %s145
    %149 = sst [smem:[#allocation23]] 1024
    %s150 = scalar_lea.smem [#allocation23], 1
    %151 = sst [smem:[%s150]] 1024
    %s152 = scalar_lea.smem [#allocation23], 2
    %153 = sst [smem:[%s152]] 8
    %s154 = scalar_lea.smem [#allocation23], 3
    %155 = sst [smem:[%s154]] 64
    %s156 = scalar_lea.smem [#allocation23], 4
    %157 = sst [smem:[%s156]] 128
    %s158 = scalar_lea.smem [#allocation23], 5
    %159 = sst [smem:[%s158]] 2
    %s160 = scalar_lea.smem [#allocation23], 6
    %161 = sst [smem:[%s160]] 512
    %s162 = scalar_lea.smem [#allocation23], 7
    %163 = sst [smem:[%s162]] 64
    %s164 = scalar_lea.smem [#allocation23], 8
    %165 = sst [smem:[%s164]] 4
    %167 = dma.general %s6, 32768, %s146, %s133, [#allocation22], [#allocation23], %s144, 0
    %s168 = scalar_lea.hbm %s6, 32768
    %s169 = scalar_lea.vmem [#allocation8], 2048
    %s170 = scalar_lea.sflag [#allocation9], 2
    %s172 = sshll.u32 1, 14
    %s173 = sxor.u32 4294967295, %s172
    %s175 = sadd.s32 2, %s102
    %s177 = sshll.u32 7, 26
    %s178 = sxor.u32 4294967295, %s177
    %s179 = sand.u32 0, %s178
    %s180 = sshll.u32 %s175, 26
    %s181 = sor.u32 %s179, %s180
    %s182 = sshll.u32 %s169, 4
    %s183 = int_to_ptr.vmem [resolvable:$true] %s182
    %186 = sst [smem:[#allocation25]] 1024
    %s187 = scalar_lea.smem [#allocation25], 1
    %188 = sst [smem:[%s187]] 1024
    %s189 = scalar_lea.smem [#allocation25], 2
    %190 = sst [smem:[%s189]] 8
    %s191 = scalar_lea.smem [#allocation25], 3
    %192 = sst [smem:[%s191]] 64
    %s193 = scalar_lea.smem [#allocation25], 4
    %194 = sst [smem:[%s193]] 128
    %s195 = scalar_lea.smem [#allocation25], 5
    %196 = sst [smem:[%s195]] 2
    %s197 = scalar_lea.smem [#allocation25], 6
    %198 = sst [smem:[%s197]] 512
    %s199 = scalar_lea.smem [#allocation25], 7
    %200 = sst [smem:[%s199]] 64
    %s201 = scalar_lea.smem [#allocation25], 8
    %202 = sst [smem:[%s201]] 4
    %204 = dma.general %s168, 32768, %s183, %s170, [#allocation24], [#allocation25], %s181, 0
    %v205 = vlaneseq
    %v206 = vshrl.u32 %v205, 7
    %v207 = vadd.s32 %v206, 8
    %v208 = vadd.s32 %v206, 16
    %v209 = vadd.s32 %v206, 24
    %v210 = vadd.s32 %v206, 32
    %v211 = vadd.s32 %v206, 40
    %v212 = vadd.s32 %v206, 48
    %v213 = vadd.s32 %v206, 56
    %v214 = vadd.s32 %v206, 64
    %v215 = vadd.s32 %v206, 72
    %v216 = vadd.s32 %v206, 80
    %v217 = vadd.s32 %v206, 88
    %v218 = vadd.s32 %v206, 96
    %v219 = vadd.s32 %v206, 104
    %v220 = vadd.s32 %v206, 112
    %v221 = vadd.s32 %v206, 120
    %v222 = vadd.s32 %v206, 128
    %v223 = vadd.s32 %v206, 136
    %v224 = vadd.s32 %v206, 144
    %v225 = vadd.s32 %v206, 152
    %v226 = vadd.s32 %v206, 160
    %v227 = vadd.s32 %v206, 168
    %v228 = vadd.s32 %v206, 176
    %v229 = vadd.s32 %v206, 184
    %v230 = vadd.s32 %v206, 192
    %v231 = vadd.s32 %v206, 200
    %v232 = vadd.s32 %v206, 208
    %v233 = vadd.s32 %v206, 216
    %v234 = vadd.s32 %v206, 224
    %v235 = vadd.s32 %v206, 232
    %v236 = vadd.s32 %v206, 240
    %v237 = vadd.s32 %v206, 248
    %v238 = vadd.s32 %v206, 256
    %v239 = vadd.s32 %v206, 264
    %v240 = vadd.s32 %v206, 272
    %v241 = vadd.s32 %v206, 280
    %v242 = vadd.s32 %v206, 288
    %v243 = vadd.s32 %v206, 296
    %v244 = vadd.s32 %v206, 304
    %v245 = vadd.s32 %v206, 312
    %v246 = vadd.s32 %v206, 320
    %v247 = vadd.s32 %v206, 328
    %v248 = vadd.s32 %v206, 336
    %v249 = vadd.s32 %v206, 344
    %v250 = vadd.s32 %v206, 352
    %v251 = vadd.s32 %v206, 360
    %v252 = vadd.s32 %v206, 368
    %v253 = vadd.s32 %v206, 376
    %v254 = vadd.s32 %v206, 384
    %v255 = vadd.s32 %v206, 392
    %v256 = vadd.s32 %v206, 400
    %v257 = vadd.s32 %v206, 408
    %v258 = vadd.s32 %v206, 416
    %v259 = vadd.s32 %v206, 424
    %v260 = vadd.s32 %v206, 432
    %v261 = vadd.s32 %v206, 440
    %v262 = vadd.s32 %v206, 448
    %v263 = vadd.s32 %v206, 456
    %v264 = vadd.s32 %v206, 464
    %v265 = vadd.s32 %v206, 472
    %v266 = vadd.s32 %v206, 480
    %v267 = vadd.s32 %v206, 488
    %v268 = vadd.s32 %v206, 496
    %v269 = vadd.s32 %v206, 504
    %v270 = vadd.s32 %v206, 512
    %v271 = vadd.s32 %v206, 520
    %v272 = vadd.s32 %v206, 528
    %v273 = vadd.s32 %v206, 536
    %v274 = vadd.s32 %v206, 544
    %v275 = vadd.s32 %v206, 552
    %v276 = vadd.s32 %v206, 560
    %v277 = vadd.s32 %v206, 568
    %v278 = vadd.s32 %v206, 576
    %v279 = vadd.s32 %v206, 584
    %v280 = vadd.s32 %v206, 592
    %v281 = vadd.s32 %v206, 600
    %v282 = vadd.s32 %v206, 608
    %v283 = vadd.s32 %v206, 616
    %v284 = vadd.s32 %v206, 624
    %v285 = vadd.s32 %v206, 632
    %v286 = vadd.s32 %v206, 640
    %v287 = vadd.s32 %v206, 648
    %v288 = vadd.s32 %v206, 656
    %v289 = vadd.s32 %v206, 664
    %v290 = vadd.s32 %v206, 672
    %v291 = vadd.s32 %v206, 680
    %v292 = vadd.s32 %v206, 688
    %v293 = vadd.s32 %v206, 696
    %v294 = vadd.s32 %v206, 704
    %v295 = vadd.s32 %v206, 712
    %v296 = vadd.s32 %v206, 720
    %v297 = vadd.s32 %v206, 728
    %v298 = vadd.s32 %v206, 736
    %v299 = vadd.s32 %v206, 744
    %v300 = vadd.s32 %v206, 752
    %v301 = vadd.s32 %v206, 760
    %v302 = vadd.s32 %v206, 768
    %v303 = vadd.s32 %v206, 776
    %v304 = vadd.s32 %v206, 784
    %v305 = vadd.s32 %v206, 792
    %v306 = vadd.s32 %v206, 800
    %v307 = vlaneseq
    %v308 = vand.u32 %v307, 127
    %v309 = vadd.s32 %v308, 128
    %v310 = vshra.s32 %v308, 4
    %v311 = vshra.s32 %v309, 4
    %v312 = vsub.s32 %v310, 1
    %v313 = vsub.s32 %v311, 1
    %v314 = vand.u32 %v308, 15
    %v315 = vand.u32 %v309, 15
    %v316 = vsub.s32 %v314, 1
    %v317 = vsub.s32 %v315, 1
    %vm318 = vcmp.ge.s32.totalorder %v312, 0
    %vm319 = vcmp.ge.s32.totalorder %v313, 0
    %vm320 = vcmp.lt.s32.totalorder %v312, 14
    %vm321 = vcmp.lt.s32.totalorder %v313, 14
    %vm322 = vmand %vm318, %vm320
    %vm323 = vmand %vm319, %vm321
    %vm324 = vcmp.ge.s32.totalorder %v316, 0
    %vm325 = vcmp.ge.s32.totalorder %v317, 0
    %vm326 = vmand %vm322, %vm324
    %vm327 = vmand %vm323, %vm325
    %vm328 = vcmp.lt.s32.totalorder %v316, 14
    %vm329 = vcmp.lt.s32.totalorder %v317, 14
    %vm330 = vmand %vm326, %vm328
    %vm331 = vmand %vm327, %vm329
    %v332 = vmul.u32 %v312, 60
    %v333 = vmul.u32 %v313, 60
    %v334 = vmul.u32 %v316, 2
    %v335 = vmul.u32 %v317, 2
    %v336 = vadd.s32 %v332, %v334
    %v337 = vadd.s32 %v333, %v335
    %vm338 = vcmp.eq.s32.totalorder %v206, %v336
    %vm339 = vcmp.eq.s32.totalorder %v206, %v337
    %vm340 = vcmp.eq.s32.totalorder %v207, %v336
    %vm341 = vcmp.eq.s32.totalorder %v207, %v337
    %vm342 = vcmp.eq.s32.totalorder %v208, %v336
    %vm343 = vcmp.eq.s32.totalorder %v208, %v337
    %vm344 = vcmp.eq.s32.totalorder %v209, %v336
    %vm345 = vcmp.eq.s32.totalorder %v209, %v337
    %vm346 = vcmp.eq.s32.totalorder %v210, %v336
    %vm347 = vcmp.eq.s32.totalorder %v210, %v337
    %vm348 = vcmp.eq.s32.totalorder %v211, %v336
    %vm349 = vcmp.eq.s32.totalorder %v211, %v337
    %vm350 = vcmp.eq.s32.totalorder %v212, %v336
    %vm351 = vcmp.eq.s32.totalorder %v212, %v337
    %vm352 = vcmp.eq.s32.totalorder %v213, %v336
    %vm353 = vcmp.eq.s32.totalorder %v213, %v337
    %vm354 = vcmp.eq.s32.totalorder %v214, %v336
    %vm355 = vcmp.eq.s32.totalorder %v214, %v337
    %vm356 = vcmp.eq.s32.totalorder %v215, %v336
    %vm357 = vcmp.eq.s32.totalorder %v215, %v337
    %vm358 = vcmp.eq.s32.totalorder %v216, %v336
    %vm359 = vcmp.eq.s32.totalorder %v216, %v337
    %vm360 = vcmp.eq.s32.totalorder %v217, %v336
    %vm361 = vcmp.eq.s32.totalorder %v217, %v337
    %vm362 = vcmp.eq.s32.totalorder %v218, %v336
    %vm363 = vcmp.eq.s32.totalorder %v218, %v337
    %vm364 = vcmp.eq.s32.totalorder %v219, %v336
    %vm365 = vcmp.eq.s32.totalorder %v219, %v337
    %vm366 = vcmp.eq.s32.totalorder %v220, %v336
    %vm367 = vcmp.eq.s32.totalorder %v220, %v337
    %vm368 = vcmp.eq.s32.totalorder %v221, %v336
    %vm369 = vcmp.eq.s32.totalorder %v221, %v337
    %vm370 = vcmp.eq.s32.totalorder %v222, %v336
    %vm371 = vcmp.eq.s32.totalorder %v222, %v337
    %vm372 = vcmp.eq.s32.totalorder %v223, %v336
    %vm373 = vcmp.eq.s32.totalorder %v223, %v337
    %vm374 = vcmp.eq.s32.totalorder %v224, %v336
    %vm375 = vcmp.eq.s32.totalorder %v224, %v337
    %vm376 = vcmp.eq.s32.totalorder %v225, %v336
    %vm377 = vcmp.eq.s32.totalorder %v225, %v337
    %vm378 = vcmp.eq.s32.totalorder %v226, %v336
    %vm379 = vcmp.eq.s32.totalorder %v226, %v337
    %vm380 = vcmp.eq.s32.totalorder %v227, %v336
    %vm381 = vcmp.eq.s32.totalorder %v227, %v337
    %vm382 = vcmp.eq.s32.totalorder %v228, %v336
    %vm383 = vcmp.eq.s32.totalorder %v228, %v337
    %vm384 = vcmp.eq.s32.totalorder %v229, %v336
    %vm385 = vcmp.eq.s32.totalorder %v229, %v337
    %vm386 = vcmp.eq.s32.totalorder %v230, %v336
    %vm387 = vcmp.eq.s32.totalorder %v230, %v337
    %vm388 = vcmp.eq.s32.totalorder %v231, %v336
    %vm389 = vcmp.eq.s32.totalorder %v231, %v337
    %vm390 = vcmp.eq.s32.totalorder %v232, %v336
    %vm391 = vcmp.eq.s32.totalorder %v232, %v337
    %vm392 = vcmp.eq.s32.totalorder %v233, %v336
    %vm393 = vcmp.eq.s32.totalorder %v233, %v337
    %vm394 = vcmp.eq.s32.totalorder %v234, %v336
    %vm395 = vcmp.eq.s32.totalorder %v234, %v337
    %vm396 = vcmp.eq.s32.totalorder %v235, %v336
    %vm397 = vcmp.eq.s32.totalorder %v235, %v337
    %vm398 = vcmp.eq.s32.totalorder %v236, %v336
    %vm399 = vcmp.eq.s32.totalorder %v236, %v337
    %vm400 = vcmp.eq.s32.totalorder %v237, %v336
    %vm401 = vcmp.eq.s32.totalorder %v237, %v337
    %vm402 = vcmp.eq.s32.totalorder %v238, %v336
    %vm403 = vcmp.eq.s32.totalorder %v238, %v337
    %vm404 = vcmp.eq.s32.totalorder %v239, %v336
    %vm405 = vcmp.eq.s32.totalorder %v239, %v337
    %vm406 = vcmp.eq.s32.totalorder %v240, %v336
    %vm407 = vcmp.eq.s32.totalorder %v240, %v337
    %vm408 = vcmp.eq.s32.totalorder %v241, %v336
    %vm409 = vcmp.eq.s32.totalorder %v241, %v337
    %vm410 = vcmp.eq.s32.totalorder %v242, %v336
    %vm411 = vcmp.eq.s32.totalorder %v242, %v337
    %vm412 = vcmp.eq.s32.totalorder %v243, %v336
    %vm413 = vcmp.eq.s32.totalorder %v243, %v337
    %vm414 = vcmp.eq.s32.totalorder %v244, %v336
    %vm415 = vcmp.eq.s32.totalorder %v244, %v337
    %vm416 = vcmp.eq.s32.totalorder %v245, %v336
    %vm417 = vcmp.eq.s32.totalorder %v245, %v337
    %vm418 = vcmp.eq.s32.totalorder %v246, %v336
    %vm419 = vcmp.eq.s32.totalorder %v246, %v337
    %vm420 = vcmp.eq.s32.totalorder %v247, %v336
    %vm421 = vcmp.eq.s32.totalorder %v247, %v337
    %vm422 = vcmp.eq.s32.totalorder %v248, %v336
    %vm423 = vcmp.eq.s32.totalorder %v248, %v337
    %vm424 = vcmp.eq.s32.totalorder %v249, %v336
    %vm425 = vcmp.eq.s32.totalorder %v249, %v337
    %vm426 = vcmp.eq.s32.totalorder %v250, %v336
    %vm427 = vcmp.eq.s32.totalorder %v250, %v337
    %vm428 = vcmp.eq.s32.totalorder %v251, %v336
    %vm429 = vcmp.eq.s32.totalorder %v251, %v337
    %vm430 = vcmp.eq.s32.totalorder %v252, %v336
    %vm431 = vcmp.eq.s32.totalorder %v252, %v337
    %vm432 = vcmp.eq.s32.totalorder %v253, %v336
    %vm433 = vcmp.eq.s32.totalorder %v253, %v337
    %vm434 = vcmp.eq.s32.totalorder %v254, %v336
    %vm435 = vcmp.eq.s32.totalorder %v254, %v337
    %vm436 = vcmp.eq.s32.totalorder %v255, %v336
    %vm437 = vcmp.eq.s32.totalorder %v255, %v337
    %vm438 = vcmp.eq.s32.totalorder %v256, %v336
    %vm439 = vcmp.eq.s32.totalorder %v256, %v337
    %vm440 = vcmp.eq.s32.totalorder %v257, %v336
    %vm441 = vcmp.eq.s32.totalorder %v257, %v337
    %vm442 = vcmp.eq.s32.totalorder %v258, %v336
    %vm443 = vcmp.eq.s32.totalorder %v258, %v337
    %vm444 = vcmp.eq.s32.totalorder %v259, %v336
    %vm445 = vcmp.eq.s32.totalorder %v259, %v337
    %vm446 = vcmp.eq.s32.totalorder %v260, %v336
    %vm447 = vcmp.eq.s32.totalorder %v260, %v337
    %vm448 = vcmp.eq.s32.totalorder %v261, %v336
    %vm449 = vcmp.eq.s32.totalorder %v261, %v337
    %vm450 = vcmp.eq.s32.totalorder %v262, %v336
    %vm451 = vcmp.eq.s32.totalorder %v262, %v337
    %vm452 = vcmp.eq.s32.totalorder %v263, %v336
    %vm453 = vcmp.eq.s32.totalorder %v263, %v337
    %vm454 = vcmp.eq.s32.totalorder %v264, %v336
    %vm455 = vcmp.eq.s32.totalorder %v264, %v337
    %vm456 = vcmp.eq.s32.totalorder %v265, %v336
    %vm457 = vcmp.eq.s32.totalorder %v265, %v337
    %vm458 = vcmp.eq.s32.totalorder %v266, %v336
    %vm459 = vcmp.eq.s32.totalorder %v266, %v337
    %vm460 = vcmp.eq.s32.totalorder %v267, %v336
    %vm461 = vcmp.eq.s32.totalorder %v267, %v337
    %vm462 = vcmp.eq.s32.totalorder %v268, %v336
    %vm463 = vcmp.eq.s32.totalorder %v268, %v337
    %vm464 = vcmp.eq.s32.totalorder %v269, %v336
    %vm465 = vcmp.eq.s32.totalorder %v269, %v337
    %vm466 = vcmp.eq.s32.totalorder %v270, %v336
    %vm467 = vcmp.eq.s32.totalorder %v270, %v337
    %vm468 = vcmp.eq.s32.totalorder %v271, %v336
    %vm469 = vcmp.eq.s32.totalorder %v271, %v337
    %vm470 = vcmp.eq.s32.totalorder %v272, %v336
    %vm471 = vcmp.eq.s32.totalorder %v272, %v337
    %vm472 = vcmp.eq.s32.totalorder %v273, %v336
    %vm473 = vcmp.eq.s32.totalorder %v273, %v337
    %vm474 = vcmp.eq.s32.totalorder %v274, %v336
    %vm475 = vcmp.eq.s32.totalorder %v274, %v337
    %vm476 = vcmp.eq.s32.totalorder %v275, %v336
    %vm477 = vcmp.eq.s32.totalorder %v275, %v337
    %vm478 = vcmp.eq.s32.totalorder %v276, %v336
    %vm479 = vcmp.eq.s32.totalorder %v276, %v337
    %vm480 = vcmp.eq.s32.totalorder %v277, %v336
    %vm481 = vcmp.eq.s32.totalorder %v277, %v337
    %vm482 = vcmp.eq.s32.totalorder %v278, %v336
    %vm483 = vcmp.eq.s32.totalorder %v278, %v337
    %vm484 = vcmp.eq.s32.totalorder %v279, %v336
    %vm485 = vcmp.eq.s32.totalorder %v279, %v337
    %vm486 = vcmp.eq.s32.totalorder %v280, %v336
    %vm487 = vcmp.eq.s32.totalorder %v280, %v337
    %vm488 = vcmp.eq.s32.totalorder %v281, %v336
    %vm489 = vcmp.eq.s32.totalorder %v281, %v337
    %vm490 = vcmp.eq.s32.totalorder %v282, %v336
    %vm491 = vcmp.eq.s32.totalorder %v282, %v337
    %vm492 = vcmp.eq.s32.totalorder %v283, %v336
    %vm493 = vcmp.eq.s32.totalorder %v283, %v337
    %vm494 = vcmp.eq.s32.totalorder %v284, %v336
    %vm495 = vcmp.eq.s32.totalorder %v284, %v337
    %vm496 = vcmp.eq.s32.totalorder %v285, %v336
    %vm497 = vcmp.eq.s32.totalorder %v285, %v337
    %vm498 = vcmp.eq.s32.totalorder %v286, %v336
    %vm499 = vcmp.eq.s32.totalorder %v286, %v337
    %vm500 = vcmp.eq.s32.totalorder %v287, %v336
    %vm501 = vcmp.eq.s32.totalorder %v287, %v337
    %vm502 = vcmp.eq.s32.totalorder %v288, %v336
    %vm503 = vcmp.eq.s32.totalorder %v288, %v337
    %vm504 = vcmp.eq.s32.totalorder %v289, %v336
    %vm505 = vcmp.eq.s32.totalorder %v289, %v337
    %vm506 = vcmp.eq.s32.totalorder %v290, %v336
    %vm507 = vcmp.eq.s32.totalorder %v290, %v337
    %vm508 = vcmp.eq.s32.totalorder %v291, %v336
    %vm509 = vcmp.eq.s32.totalorder %v291, %v337
    %vm510 = vcmp.eq.s32.totalorder %v292, %v336
    %vm511 = vcmp.eq.s32.totalorder %v292, %v337
    %vm512 = vcmp.eq.s32.totalorder %v293, %v336
    %vm513 = vcmp.eq.s32.totalorder %v293, %v337
    %vm514 = vcmp.eq.s32.totalorder %v294, %v336
    %vm515 = vcmp.eq.s32.totalorder %v294, %v337
    %vm516 = vcmp.eq.s32.totalorder %v295, %v336
    %vm517 = vcmp.eq.s32.totalorder %v295, %v337
    %vm518 = vcmp.eq.s32.totalorder %v296, %v336
    %vm519 = vcmp.eq.s32.totalorder %v296, %v337
    %vm520 = vcmp.eq.s32.totalorder %v297, %v336
    %vm521 = vcmp.eq.s32.totalorder %v297, %v337
    %vm522 = vcmp.eq.s32.totalorder %v298, %v336
    %vm523 = vcmp.eq.s32.totalorder %v298, %v337
    %vm524 = vcmp.eq.s32.totalorder %v299, %v336
    %vm525 = vcmp.eq.s32.totalorder %v299, %v337
    %vm526 = vcmp.eq.s32.totalorder %v300, %v336
    %vm527 = vcmp.eq.s32.totalorder %v300, %v337
    %vm528 = vcmp.eq.s32.totalorder %v301, %v336
    %vm529 = vcmp.eq.s32.totalorder %v301, %v337
    %vm530 = vcmp.eq.s32.totalorder %v302, %v336
    %vm531 = vcmp.eq.s32.totalorder %v302, %v337
    %vm532 = vcmp.eq.s32.totalorder %v303, %v336
    %vm533 = vcmp.eq.s32.totalorder %v303, %v337
    %vm534 = vcmp.eq.s32.totalorder %v304, %v336
    %vm535 = vcmp.eq.s32.totalorder %v304, %v337
    %vm536 = vcmp.eq.s32.totalorder %v305, %v336
    %vm537 = vcmp.eq.s32.totalorder %v305, %v337
    %vm538 = vcmp.eq.s32.totalorder %v306, %v336
    %vm539 = vcmp.eq.s32.totalorder %v306, %v337
    %vm540 = vmand %vm330, %vm338
    %vm541 = vmand %vm331, %vm339
    %vm542 = vmand %vm330, %vm340
    %vm543 = vmand %vm331, %vm341
    %vm544 = vmand %vm330, %vm342
    %vm545 = vmand %vm331, %vm343
    %vm546 = vmand %vm330, %vm344
    %vm547 = vmand %vm331, %vm345
    %vm548 = vmand %vm330, %vm346
    %vm549 = vmand %vm331, %vm347
    %vm550 = vmand %vm330, %vm348
    %vm551 = vmand %vm331, %vm349
    %vm552 = vmand %vm330, %vm350
    %vm553 = vmand %vm331, %vm351
    %vm554 = vmand %vm330, %vm352
    %vm555 = vmand %vm331, %vm353
    %vm556 = vmand %vm330, %vm354
    %vm557 = vmand %vm331, %vm355
    %vm558 = vmand %vm330, %vm356
    %vm559 = vmand %vm331, %vm357
    %vm560 = vmand %vm330, %vm358
    %vm561 = vmand %vm331, %vm359
    %vm562 = vmand %vm330, %vm360
    %vm563 = vmand %vm331, %vm361
    %vm564 = vmand %vm330, %vm362
    %vm565 = vmand %vm331, %vm363
    %vm566 = vmand %vm330, %vm364
    %vm567 = vmand %vm331, %vm365
    %vm568 = vmand %vm330, %vm366
    %vm569 = vmand %vm331, %vm367
    %vm570 = vmand %vm330, %vm368
    %vm571 = vmand %vm331, %vm369
    %vm572 = vmand %vm330, %vm370
    %vm573 = vmand %vm331, %vm371
    %vm574 = vmand %vm330, %vm372
    %vm575 = vmand %vm331, %vm373
    %vm576 = vmand %vm330, %vm374
    %vm577 = vmand %vm331, %vm375
    %vm578 = vmand %vm330, %vm376
    %vm579 = vmand %vm331, %vm377
    %vm580 = vmand %vm330, %vm378
    %vm581 = vmand %vm331, %vm379
    %vm582 = vmand %vm330, %vm380
    %vm583 = vmand %vm331, %vm381
    %vm584 = vmand %vm330, %vm382
    %vm585 = vmand %vm331, %vm383
    %vm586 = vmand %vm330, %vm384
    %vm587 = vmand %vm331, %vm385
    %vm588 = vmand %vm330, %vm386
    %vm589 = vmand %vm331, %vm387
    %vm590 = vmand %vm330, %vm388
    %vm591 = vmand %vm331, %vm389
    %vm592 = vmand %vm330, %vm390
    %vm593 = vmand %vm331, %vm391
    %vm594 = vmand %vm330, %vm392
    %vm595 = vmand %vm331, %vm393
    %vm596 = vmand %vm330, %vm394
    %vm597 = vmand %vm331, %vm395
    %vm598 = vmand %vm330, %vm396
    %vm599 = vmand %vm331, %vm397
    %vm600 = vmand %vm330, %vm398
    %vm601 = vmand %vm331, %vm399
    %vm602 = vmand %vm330, %vm400
    %vm603 = vmand %vm331, %vm401
    %vm604 = vmand %vm330, %vm402
    %vm605 = vmand %vm331, %vm403
    %vm606 = vmand %vm330, %vm404
    %vm607 = vmand %vm331, %vm405
    %vm608 = vmand %vm330, %vm406
    %vm609 = vmand %vm331, %vm407
    %vm610 = vmand %vm330, %vm408
    %vm611 = vmand %vm331, %vm409
    %vm612 = vmand %vm330, %vm410
    %vm613 = vmand %vm331, %vm411
    %vm614 = vmand %vm330, %vm412
    %vm615 = vmand %vm331, %vm413
    %vm616 = vmand %vm330, %vm414
    %vm617 = vmand %vm331, %vm415
    %vm618 = vmand %vm330, %vm416
    %vm619 = vmand %vm331, %vm417
    %vm620 = vmand %vm330, %vm418
    %vm621 = vmand %vm331, %vm419
    %vm622 = vmand %vm330, %vm420
    %vm623 = vmand %vm331, %vm421
    %vm624 = vmand %vm330, %vm422
    %vm625 = vmand %vm331, %vm423
    %vm626 = vmand %vm330, %vm424
    %vm627 = vmand %vm331, %vm425
    %vm628 = vmand %vm330, %vm426
    %vm629 = vmand %vm331, %vm427
    %vm630 = vmand %vm330, %vm428
    %vm631 = vmand %vm331, %vm429
    %vm632 = vmand %vm330, %vm430
    %vm633 = vmand %vm331, %vm431
    %vm634 = vmand %vm330, %vm432
    %vm635 = vmand %vm331, %vm433
    %vm636 = vmand %vm330, %vm434
    %vm637 = vmand %vm331, %vm435
    %vm638 = vmand %vm330, %vm436
    %vm639 = vmand %vm331, %vm437
    %vm640 = vmand %vm330, %vm438
    %vm641 = vmand %vm331, %vm439
    %vm642 = vmand %vm330, %vm440
    %vm643 = vmand %vm331, %vm441
    %vm644 = vmand %vm330, %vm442
    %vm645 = vmand %vm331, %vm443
    %vm646 = vmand %vm330, %vm444
    %vm647 = vmand %vm331, %vm445
    %vm648 = vmand %vm330, %vm446
    %vm649 = vmand %vm331, %vm447
    %vm650 = vmand %vm330, %vm448
    %vm651 = vmand %vm331, %vm449
    %vm652 = vmand %vm330, %vm450
    %vm653 = vmand %vm331, %vm451
    %vm654 = vmand %vm330, %vm452
    %vm655 = vmand %vm331, %vm453
    %vm656 = vmand %vm330, %vm454
    %vm657 = vmand %vm331, %vm455
    %vm658 = vmand %vm330, %vm456
    %vm659 = vmand %vm331, %vm457
    %vm660 = vmand %vm330, %vm458
    %vm661 = vmand %vm331, %vm459
    %vm662 = vmand %vm330, %vm460
    %vm663 = vmand %vm331, %vm461
    %vm664 = vmand %vm330, %vm462
    %vm665 = vmand %vm331, %vm463
    %vm666 = vmand %vm330, %vm464
    %vm667 = vmand %vm331, %vm465
    %vm668 = vmand %vm330, %vm466
    %vm669 = vmand %vm331, %vm467
    %vm670 = vmand %vm330, %vm468
    %vm671 = vmand %vm331, %vm469
    %vm672 = vmand %vm330, %vm470
    %vm673 = vmand %vm331, %vm471
    %vm674 = vmand %vm330, %vm472
    %vm675 = vmand %vm331, %vm473
    %vm676 = vmand %vm330, %vm474
    %vm677 = vmand %vm331, %vm475
    %vm678 = vmand %vm330, %vm476
    %vm679 = vmand %vm331, %vm477
    %vm680 = vmand %vm330, %vm478
    %vm681 = vmand %vm331, %vm479
    %vm682 = vmand %vm330, %vm480
    %vm683 = vmand %vm331, %vm481
    %vm684 = vmand %vm330, %vm482
    %vm685 = vmand %vm331, %vm483
    %vm686 = vmand %vm330, %vm484
    %vm687 = vmand %vm331, %vm485
    %vm688 = vmand %vm330, %vm486
    %vm689 = vmand %vm331, %vm487
    %vm690 = vmand %vm330, %vm488
    %vm691 = vmand %vm331, %vm489
    %vm692 = vmand %vm330, %vm490
    %vm693 = vmand %vm331, %vm491
    %vm694 = vmand %vm330, %vm492
    %vm695 = vmand %vm331, %vm493
    %vm696 = vmand %vm330, %vm494
    %vm697 = vmand %vm331, %vm495
    %vm698 = vmand %vm330, %vm496
    %vm699 = vmand %vm331, %vm497
    %vm700 = vmand %vm330, %vm498
    %vm701 = vmand %vm331, %vm499
    %vm702 = vmand %vm330, %vm500
    %vm703 = vmand %vm331, %vm501
    %vm704 = vmand %vm330, %vm502
    %vm705 = vmand %vm331, %vm503
    %vm706 = vmand %vm330, %vm504
    %vm707 = vmand %vm331, %vm505
    %vm708 = vmand %vm330, %vm506
    %vm709 = vmand %vm331, %vm507
    %vm710 = vmand %vm330, %vm508
    %vm711 = vmand %vm331, %vm509
    %vm712 = vmand %vm330, %vm510
    %vm713 = vmand %vm331, %vm511
    %vm714 = vmand %vm330, %vm512
    %vm715 = vmand %vm331, %vm513
    %vm716 = vmand %vm330, %vm514
    %vm717 = vmand %vm331, %vm515
    %vm718 = vmand %vm330, %vm516
    %vm719 = vmand %vm331, %vm517
    %vm720 = vmand %vm330, %vm518
    %vm721 = vmand %vm331, %vm519
    %vm722 = vmand %vm330, %vm520
    %vm723 = vmand %vm331, %vm521
    %vm724 = vmand %vm330, %vm522
    %vm725 = vmand %vm331, %vm523
    %vm726 = vmand %vm330, %vm524
    %vm727 = vmand %vm331, %vm525
    %vm728 = vmand %vm330, %vm526
    %vm729 = vmand %vm331, %vm527
    %vm730 = vmand %vm330, %vm528
    %vm731 = vmand %vm331, %vm529
    %vm732 = vmand %vm330, %vm530
    %vm733 = vmand %vm331, %vm531
    %vm734 = vmand %vm330, %vm532
    %vm735 = vmand %vm331, %vm533
    %vm736 = vmand %vm330, %vm534
    %vm737 = vmand %vm331, %vm535
    %vm738 = vmand %vm330, %vm536
    %vm739 = vmand %vm331, %vm537
    %vm740 = vmand %vm330, %vm538
    %vm741 = vmand %vm331, %vm539
    %v742 = vsel %vm540, 1, 0
    %v743 = vsel %vm541, 1, 0
    %v744 = vsel %vm542, 1, 0
    %v745 = vsel %vm543, 1, 0
    %v746 = vsel %vm544, 1, 0
    %v747 = vsel %vm545, 1, 0
    %v748 = vsel %vm546, 1, 0
    %v749 = vsel %vm547, 1, 0
    %v750 = vsel %vm548, 1, 0
    %v751 = vsel %vm549, 1, 0
    %v752 = vsel %vm550, 1, 0
    %v753 = vsel %vm551, 1, 0
    %v754 = vsel %vm552, 1, 0
    %v755 = vsel %vm553, 1, 0
    %v756 = vsel %vm554, 1, 0
    %v757 = vsel %vm555, 1, 0
    %v758 = vsel %vm556, 1, 0
    %v759 = vsel %vm557, 1, 0
    %v760 = vsel %vm558, 1, 0
    %v761 = vsel %vm559, 1, 0
    %v762 = vsel %vm560, 1, 0
    %v763 = vsel %vm561, 1, 0
    %v764 = vsel %vm562, 1, 0
    %v765 = vsel %vm563, 1, 0
    %v766 = vsel %vm564, 1, 0
    %v767 = vsel %vm565, 1, 0
    %v768 = vsel %vm566, 1, 0
    %v769 = vsel %vm567, 1, 0
    %v770 = vsel %vm568, 1, 0
    %v771 = vsel %vm569, 1, 0
    %v772 = vsel %vm570, 1, 0
    %v773 = vsel %vm571, 1, 0
    %v774 = vsel %vm572, 1, 0
    %v775 = vsel %vm573, 1, 0
    %v776 = vsel %vm574, 1, 0
    %v777 = vsel %vm575, 1, 0
    %v778 = vsel %vm576, 1, 0
    %v779 = vsel %vm577, 1, 0
    %v780 = vsel %vm578, 1, 0
    %v781 = vsel %vm579, 1, 0
    %v782 = vsel %vm580, 1, 0
    %v783 = vsel %vm581, 1, 0
    %v784 = vsel %vm582, 1, 0
    %v785 = vsel %vm583, 1, 0
    %v786 = vsel %vm584, 1, 0
    %v787 = vsel %vm585, 1, 0
    %v788 = vsel %vm586, 1, 0
    %v789 = vsel %vm587, 1, 0
    %v790 = vsel %vm588, 1, 0
    %v791 = vsel %vm589, 1, 0
    %v792 = vsel %vm590, 1, 0
    %v793 = vsel %vm591, 1, 0
    %v794 = vsel %vm592, 1, 0
    %v795 = vsel %vm593, 1, 0
    %v796 = vsel %vm594, 1, 0
    %v797 = vsel %vm595, 1, 0
    %v798 = vsel %vm596, 1, 0
    %v799 = vsel %vm597, 1, 0
    %v800 = vsel %vm598, 1, 0
    %v801 = vsel %vm599, 1, 0
    %v802 = vsel %vm600, 1, 0
    %v803 = vsel %vm601, 1, 0
    %v804 = vsel %vm602, 1, 0
    %v805 = vsel %vm603, 1, 0
    %v806 = vsel %vm604, 1, 0
    %v807 = vsel %vm605, 1, 0
    %v808 = vsel %vm606, 1, 0
    %v809 = vsel %vm607, 1, 0
    %v810 = vsel %vm608, 1, 0
    %v811 = vsel %vm609, 1, 0
    %v812 = vsel %vm610, 1, 0
    %v813 = vsel %vm611, 1, 0
    %v814 = vsel %vm612, 1, 0
    %v815 = vsel %vm613, 1, 0
    %v816 = vsel %vm614, 1, 0
    %v817 = vsel %vm615, 1, 0
    %v818 = vsel %vm616, 1, 0
    %v819 = vsel %vm617, 1, 0
    %v820 = vsel %vm618, 1, 0
    %v821 = vsel %vm619, 1, 0
    %v822 = vsel %vm620, 1, 0
    %v823 = vsel %vm621, 1, 0
    %v824 = vsel %vm622, 1, 0
    %v825 = vsel %vm623, 1, 0
    %v826 = vsel %vm624, 1, 0
    %v827 = vsel %vm625, 1, 0
    %v828 = vsel %vm626, 1, 0
    %v829 = vsel %vm627, 1, 0
    %v830 = vsel %vm628, 1, 0
    %v831 = vsel %vm629, 1, 0
    %v832 = vsel %vm630, 1, 0
    %v833 = vsel %vm631, 1, 0
    %v834 = vsel %vm632, 1, 0
    %v835 = vsel %vm633, 1, 0
    %v836 = vsel %vm634, 1, 0
    %v837 = vsel %vm635, 1, 0
    %v838 = vsel %vm636, 1, 0
    %v839 = vsel %vm637, 1, 0
    %v840 = vsel %vm638, 1, 0
    %v841 = vsel %vm639, 1, 0
    %v842 = vsel %vm640, 1, 0
    %v843 = vsel %vm641, 1, 0
    %v844 = vsel %vm642, 1, 0
    %v845 = vsel %vm643, 1, 0
    %v846 = vsel %vm644, 1, 0
    %v847 = vsel %vm645, 1, 0
    %v848 = vsel %vm646, 1, 0
    %v849 = vsel %vm647, 1, 0
    %v850 = vsel %vm648, 1, 0
    %v851 = vsel %vm649, 1, 0
    %v852 = vsel %vm650, 1, 0
    %v853 = vsel %vm651, 1, 0
    %v854 = vsel %vm652, 1, 0
    %v855 = vsel %vm653, 1, 0
    %v856 = vsel %vm654, 1, 0
    %v857 = vsel %vm655, 1, 0
    %v858 = vsel %vm656, 1, 0
    %v859 = vsel %vm657, 1, 0
    %v860 = vsel %vm658, 1, 0
    %v861 = vsel %vm659, 1, 0
    %v862 = vsel %vm660, 1, 0
    %v863 = vsel %vm661, 1, 0
    %v864 = vsel %vm662, 1, 0
    %v865 = vsel %vm663, 1, 0
    %v866 = vsel %vm664, 1, 0
    %v867 = vsel %vm665, 1, 0
    %v868 = vsel %vm666, 1, 0
    %v869 = vsel %vm667, 1, 0
    %v870 = vsel %vm668, 1, 0
    %v871 = vsel %vm669, 1, 0
    %v872 = vsel %vm670, 1, 0
    %v873 = vsel %vm671, 1, 0
    %v874 = vsel %vm672, 1, 0
    %v875 = vsel %vm673, 1, 0
    %v876 = vsel %vm674, 1, 0
    %v877 = vsel %vm675, 1, 0
    %v878 = vsel %vm676, 1, 0
    %v879 = vsel %vm677, 1, 0
    %v880 = vsel %vm678, 1, 0
    %v881 = vsel %vm679, 1, 0
    %v882 = vsel %vm680, 1, 0
    %v883 = vsel %vm681, 1, 0
    %v884 = vsel %vm682, 1, 0
    %v885 = vsel %vm683, 1, 0
    %v886 = vsel %vm684, 1, 0
    %v887 = vsel %vm685, 1, 0
    %v888 = vsel %vm686, 1, 0
    %v889 = vsel %vm687, 1, 0
    %v890 = vsel %vm688, 1, 0
    %v891 = vsel %vm689, 1, 0
    %v892 = vsel %vm690, 1, 0
    %v893 = vsel %vm691, 1, 0
    %v894 = vsel %vm692, 1, 0
    %v895 = vsel %vm693, 1, 0
    %v896 = vsel %vm694, 1, 0
    %v897 = vsel %vm695, 1, 0
    %v898 = vsel %vm696, 1, 0
    %v899 = vsel %vm697, 1, 0
    %v900 = vsel %vm698, 1, 0
    %v901 = vsel %vm699, 1, 0
    %v902 = vsel %vm700, 1, 0
    %v903 = vsel %vm701, 1, 0
    %v904 = vsel %vm702, 1, 0
    %v905 = vsel %vm703, 1, 0
    %v906 = vsel %vm704, 1, 0
    %v907 = vsel %vm705, 1, 0
    %v908 = vsel %vm706, 1, 0
    %v909 = vsel %vm707, 1, 0
    %v910 = vsel %vm708, 1, 0
    %v911 = vsel %vm709, 1, 0
    %v912 = vsel %vm710, 1, 0
    %v913 = vsel %vm711, 1, 0
    %v914 = vsel %vm712, 1, 0
    %v915 = vsel %vm713, 1, 0
    %v916 = vsel %vm714, 1, 0
    %v917 = vsel %vm715, 1, 0
    %v918 = vsel %vm716, 1, 0
    %v919 = vsel %vm717, 1, 0
    %v920 = vsel %vm718, 1, 0
    %v921 = vsel %vm719, 1, 0
    %v922 = vsel %vm720, 1, 0
    %v923 = vsel %vm721, 1, 0
    %v924 = vsel %vm722, 1, 0
    %v925 = vsel %vm723, 1, 0
    %v926 = vsel %vm724, 1, 0
    %v927 = vsel %vm725, 1, 0
    %v928 = vsel %vm726, 1, 0
    %v929 = vsel %vm727, 1, 0
    %v930 = vsel %vm728, 1, 0
    %v931 = vsel %vm729, 1, 0
    %v932 = vsel %vm730, 1, 0
    %v933 = vsel %vm731, 1, 0
    %v934 = vsel %vm732, 1, 0
    %v935 = vsel %vm733, 1, 0
    %v936 = vsel %vm734, 1, 0
    %v937 = vsel %vm735, 1, 0
    %v938 = vsel %vm736, 1, 0
    %v939 = vsel %vm737, 1, 0
    %v940 = vsel %vm738, 1, 0
    %v941 = vsel %vm739, 1, 0
    %v942 = vsel %vm740, 1, 0
    %v943 = vsel %vm741, 1, 0
    %v944 = vcvt.s32.f32 %v742
    %v945 = vcvt.s32.f32 %v743
    %v946 = vcvt.s32.f32 %v744
    %v947 = vcvt.s32.f32 %v745
    %v948 = vcvt.s32.f32 %v746
    %v949 = vcvt.s32.f32 %v747
    %v950 = vcvt.s32.f32 %v748
    %v951 = vcvt.s32.f32 %v749
    %v952 = vcvt.s32.f32 %v750
    %v953 = vcvt.s32.f32 %v751
    %v954 = vcvt.s32.f32 %v752
    %v955 = vcvt.s32.f32 %v753
    %v956 = vcvt.s32.f32 %v754
    %v957 = vcvt.s32.f32 %v755
    %v958 = vcvt.s32.f32 %v756
    %v959 = vcvt.s32.f32 %v757
    %v960 = vcvt.s32.f32 %v758
    %v961 = vcvt.s32.f32 %v759
    %v962 = vcvt.s32.f32 %v760
    %v963 = vcvt.s32.f32 %v761
    %v964 = vcvt.s32.f32 %v762
    %v965 = vcvt.s32.f32 %v763
    %v966 = vcvt.s32.f32 %v764
    %v967 = vcvt.s32.f32 %v765
    %v968 = vcvt.s32.f32 %v766
    %v969 = vcvt.s32.f32 %v767
    %v970 = vcvt.s32.f32 %v768
    %v971 = vcvt.s32.f32 %v769
    %v972 = vcvt.s32.f32 %v770
    %v973 = vcvt.s32.f32 %v771
    %v974 = vcvt.s32.f32 %v772
    %v975 = vcvt.s32.f32 %v773
    %v976 = vcvt.s32.f32 %v774
    %v977 = vcvt.s32.f32 %v775
    %v978 = vcvt.s32.f32 %v776
    %v979 = vcvt.s32.f32 %v777
    %v980 = vcvt.s32.f32 %v778
    %v981 = vcvt.s32.f32 %v779
    %v982 = vcvt.s32.f32 %v780
    %v983 = vcvt.s32.f32 %v781
    %v984 = vcvt.s32.f32 %v782
    %v985 = vcvt.s32.f32 %v783
    %v986 = vcvt.s32.f32 %v784
    %v987 = vcvt.s32.f32 %v785
    %v988 = vcvt.s32.f32 %v786
    %v989 = vcvt.s32.f32 %v787
    %v990 = vcvt.s32.f32 %v788
    %v991 = vcvt.s32.f32 %v789
    %v992 = vcvt.s32.f32 %v790
    %v993 = vcvt.s32.f32 %v791
    %v994 = vcvt.s32.f32 %v792
    %v995 = vcvt.s32.f32 %v793
    %v996 = vcvt.s32.f32 %v794
    %v997 = vcvt.s32.f32 %v795
    %v998 = vcvt.s32.f32 %v796
    %v999 = vcvt.s32.f32 %v797
    %v1000 = vcvt.s32.f32 %v798
    %v1001 = vcvt.s32.f32 %v799
    %v1002 = vcvt.s32.f32 %v800
    %v1003 = vcvt.s32.f32 %v801
    %v1004 = vcvt.s32.f32 %v802
    %v1005 = vcvt.s32.f32 %v803
    %v1006 = vcvt.s32.f32 %v804
    %v1007 = vcvt.s32.f32 %v805
    %v1008 = vcvt.s32.f32 %v806
    %v1009 = vcvt.s32.f32 %v807
    %v1010 = vcvt.s32.f32 %v808
    %v1011 = vcvt.s32.f32 %v809
    %v1012 = vcvt.s32.f32 %v810
    %v1013 = vcvt.s32.f32 %v811
    %v1014 = vcvt.s32.f32 %v812
    %v1015 = vcvt.s32.f32 %v813
    %v1016 = vcvt.s32.f32 %v814
    %v1017 = vcvt.s32.f32 %v815
    %v1018 = vcvt.s32.f32 %v816
    %v1019 = vcvt.s32.f32 %v817
    %v1020 = vcvt.s32.f32 %v818
    %v1021 = vcvt.s32.f32 %v819
    %v1022 = vcvt.s32.f32 %v820
    %v1023 = vcvt.s32.f32 %v821
    %v1024 = vcvt.s32.f32 %v822
    %v1025 = vcvt.s32.f32 %v823
    %v1026 = vcvt.s32.f32 %v824
    %v1027 = vcvt.s32.f32 %v825
    %v1028 = vcvt.s32.f32 %v826
    %v1029 = vcvt.s32.f32 %v827
    %v1030 = vcvt.s32.f32 %v828
    %v1031 = vcvt.s32.f32 %v829
    %v1032 = vcvt.s32.f32 %v830
    %v1033 = vcvt.s32.f32 %v831
    %v1034 = vcvt.s32.f32 %v832
    %v1035 = vcvt.s32.f32 %v833
    %v1036 = vcvt.s32.f32 %v834
    %v1037 = vcvt.s32.f32 %v835
    %v1038 = vcvt.s32.f32 %v836
    %v1039 = vcvt.s32.f32 %v837
    %v1040 = vcvt.s32.f32 %v838
    %v1041 = vcvt.s32.f32 %v839
    %v1042 = vcvt.s32.f32 %v840
    %v1043 = vcvt.s32.f32 %v841
    %v1044 = vcvt.s32.f32 %v842
    %v1045 = vcvt.s32.f32 %v843
    %v1046 = vcvt.s32.f32 %v844
    %v1047 = vcvt.s32.f32 %v845
    %v1048 = vcvt.s32.f32 %v846
    %v1049 = vcvt.s32.f32 %v847
    %v1050 = vcvt.s32.f32 %v848
    %v1051 = vcvt.s32.f32 %v849
    %v1052 = vcvt.s32.f32 %v850
    %v1053 = vcvt.s32.f32 %v851
    %v1054 = vcvt.s32.f32 %v852
    %v1055 = vcvt.s32.f32 %v853
    %v1056 = vcvt.s32.f32 %v854
    %v1057 = vcvt.s32.f32 %v855
    %v1058 = vcvt.s32.f32 %v856
    %v1059 = vcvt.s32.f32 %v857
    %v1060 = vcvt.s32.f32 %v858
    %v1061 = vcvt.s32.f32 %v859
    %v1062 = vcvt.s32.f32 %v860
    %v1063 = vcvt.s32.f32 %v861
    %v1064 = vcvt.s32.f32 %v862
    %v1065 = vcvt.s32.f32 %v863
    %v1066 = vcvt.s32.f32 %v864
    %v1067 = vcvt.s32.f32 %v865
    %v1068 = vcvt.s32.f32 %v866
    %v1069 = vcvt.s32.f32 %v867
    %v1070 = vcvt.s32.f32 %v868
    %v1071 = vcvt.s32.f32 %v869
    %v1072 = vcvt.s32.f32 %v870
    %v1073 = vcvt.s32.f32 %v871
    %v1074 = vcvt.s32.f32 %v872
    %v1075 = vcvt.s32.f32 %v873
    %v1076 = vcvt.s32.f32 %v874
    %v1077 = vcvt.s32.f32 %v875
    %v1078 = vcvt.s32.f32 %v876
    %v1079 = vcvt.s32.f32 %v877
    %v1080 = vcvt.s32.f32 %v878
    %v1081 = vcvt.s32.f32 %v879
    %v1082 = vcvt.s32.f32 %v880
    %v1083 = vcvt.s32.f32 %v881
    %v1084 = vcvt.s32.f32 %v882
    %v1085 = vcvt.s32.f32 %v883
    %v1086 = vcvt.s32.f32 %v884
    %v1087 = vcvt.s32.f32 %v885
    %v1088 = vcvt.s32.f32 %v886
    %v1089 = vcvt.s32.f32 %v887
    %v1090 = vcvt.s32.f32 %v888
    %v1091 = vcvt.s32.f32 %v889
    %v1092 = vcvt.s32.f32 %v890
    %v1093 = vcvt.s32.f32 %v891
    %v1094 = vcvt.s32.f32 %v892
    %v1095 = vcvt.s32.f32 %v893
    %v1096 = vcvt.s32.f32 %v894
    %v1097 = vcvt.s32.f32 %v895
    %v1098 = vcvt.s32.f32 %v896
    %v1099 = vcvt.s32.f32 %v897
    %v1100 = vcvt.s32.f32 %v898
    %v1101 = vcvt.s32.f32 %v899
    %v1102 = vcvt.s32.f32 %v900
    %v1103 = vcvt.s32.f32 %v901
    %v1104 = vcvt.s32.f32 %v902
    %v1105 = vcvt.s32.f32 %v903
    %v1106 = vcvt.s32.f32 %v904
    %v1107 = vcvt.s32.f32 %v905
    %v1108 = vcvt.s32.f32 %v906
    %v1109 = vcvt.s32.f32 %v907
    %v1110 = vcvt.s32.f32 %v908
    %v1111 = vcvt.s32.f32 %v909
    %v1112 = vcvt.s32.f32 %v910
    %v1113 = vcvt.s32.f32 %v911
    %v1114 = vcvt.s32.f32 %v912
    %v1115 = vcvt.s32.f32 %v913
    %v1116 = vcvt.s32.f32 %v914
    %v1117 = vcvt.s32.f32 %v915
    %v1118 = vcvt.s32.f32 %v916
    %v1119 = vcvt.s32.f32 %v917
    %v1120 = vcvt.s32.f32 %v918
    %v1121 = vcvt.s32.f32 %v919
    %v1122 = vcvt.s32.f32 %v920
    %v1123 = vcvt.s32.f32 %v921
    %v1124 = vcvt.s32.f32 %v922
    %v1125 = vcvt.s32.f32 %v923
    %v1126 = vcvt.s32.f32 %v924
    %v1127 = vcvt.s32.f32 %v925
    %v1128 = vcvt.s32.f32 %v926
    %v1129 = vcvt.s32.f32 %v927
    %v1130 = vcvt.s32.f32 %v928
    %v1131 = vcvt.s32.f32 %v929
    %v1132 = vcvt.s32.f32 %v930
    %v1133 = vcvt.s32.f32 %v931
    %v1134 = vcvt.s32.f32 %v932
    %v1135 = vcvt.s32.f32 %v933
    %v1136 = vcvt.s32.f32 %v934
    %v1137 = vcvt.s32.f32 %v935
    %v1138 = vcvt.s32.f32 %v936
    %v1139 = vcvt.s32.f32 %v937
    %v1140 = vcvt.s32.f32 %v938
    %v1141 = vcvt.s32.f32 %v939
    %v1142 = vcvt.s32.f32 %v940
    %v1143 = vcvt.s32.f32 %v941
    %v1144 = vcvt.s32.f32 %v942
    %v1145 = vcvt.s32.f32 %v943
    %v1146 = vshra.s32 %v206, 5
    %v1147 = vshra.s32 %v207, 5
    %v1148 = vshra.s32 %v208, 5
    %v1149 = vshra.s32 %v209, 5
    %v1150 = vshra.s32 %v210, 5
    %v1151 = vshra.s32 %v211, 5
    %v1152 = vshra.s32 %v212, 5
    %v1153 = vshra.s32 %v213, 5
    %v1154 = vshra.s32 %v214, 5
    %v1155 = vshra.s32 %v215, 5
    %v1156 = vshra.s32 %v216, 5
    %v1157 = vshra.s32 %v217, 5
    %v1158 = vshra.s32 %v218, 5
    %v1159 = vshra.s32 %v219, 5
    %v1160 = vshra.s32 %v220, 5
    %v1161 = vshra.s32 %v221, 5
    %v1162 = vshra.s32 %v222, 5
    %v1163 = vshra.s32 %v223, 5
    %v1164 = vshra.s32 %v224, 5
    %v1165 = vshra.s32 %v225, 5
    %v1166 = vshra.s32 %v226, 5
    %v1167 = vshra.s32 %v227, 5
    %v1168 = vshra.s32 %v228, 5
    %v1169 = vshra.s32 %v229, 5
    %v1170 = vshra.s32 %v230, 5
    %v1171 = vshra.s32 %v231, 5
    %v1172 = vand.u32 %v206, 31
    %v1173 = vand.u32 %v207, 31
    %v1174 = vand.u32 %v208, 31
    %v1175 = vand.u32 %v209, 31
    %v1176 = vand.u32 %v210, 31
    %v1177 = vand.u32 %v211, 31
    %v1178 = vand.u32 %v212, 31
    %v1179 = vand.u32 %v213, 31
    %v1180 = vand.u32 %v214, 31
    %v1181 = vand.u32 %v215, 31
    %v1182 = vand.u32 %v216, 31
    %v1183 = vand.u32 %v217, 31
    %v1184 = vand.u32 %v218, 31
    %v1185 = vand.u32 %v219, 31
    %v1186 = vand.u32 %v220, 31
    %v1187 = vand.u32 %v221, 31
    %v1188 = vand.u32 %v222, 31
    %v1189 = vand.u32 %v223, 31
    %v1190 = vand.u32 %v224, 31
    %v1191 = vand.u32 %v225, 31
    %v1192 = vand.u32 %v226, 31
    %v1193 = vand.u32 %v227, 31
    %v1194 = vand.u32 %v228, 31
    %v1195 = vand.u32 %v229, 31
    %v1196 = vand.u32 %v230, 31
    %v1197 = vand.u32 %v231, 31
    %v1198 = vshra.s32 %v1172, 1
    %v1199 = vshra.s32 %v1173, 1
    %v1200 = vshra.s32 %v1174, 1
    %v1201 = vshra.s32 %v1175, 1
    %v1202 = vshra.s32 %v1176, 1
    %v1203 = vshra.s32 %v1177, 1
    %v1204 = vshra.s32 %v1178, 1
    %v1205 = vshra.s32 %v1179, 1
    %v1206 = vshra.s32 %v1180, 1
    %v1207 = vshra.s32 %v1181, 1
    %v1208 = vshra.s32 %v1182, 1
    %v1209 = vshra.s32 %v1183, 1
    %v1210 = vshra.s32 %v1184, 1
    %v1211 = vshra.s32 %v1185, 1
    %v1212 = vshra.s32 %v1186, 1
    %v1213 = vshra.s32 %v1187, 1
    %v1214 = vshra.s32 %v1188, 1
    %v1215 = vshra.s32 %v1189, 1
    %v1216 = vshra.s32 %v1190, 1
    %v1217 = vshra.s32 %v1191, 1
    %v1218 = vshra.s32 %v1192, 1
    %v1219 = vshra.s32 %v1193, 1
    %v1220 = vshra.s32 %v1194, 1
    %v1221 = vshra.s32 %v1195, 1
    %v1222 = vshra.s32 %v1196, 1
    %v1223 = vshra.s32 %v1197, 1
    %v1224 = vand.u32 %v1172, 1
    %v1225 = vand.u32 %v1173, 1
    %v1226 = vand.u32 %v1174, 1
    %v1227 = vand.u32 %v1175, 1
    %v1228 = vand.u32 %v1176, 1
    %v1229 = vand.u32 %v1177, 1
    %v1230 = vand.u32 %v1178, 1
    %v1231 = vand.u32 %v1179, 1
    %v1232 = vand.u32 %v1180, 1
    %v1233 = vand.u32 %v1181, 1
    %v1234 = vand.u32 %v1182, 1
    %v1235 = vand.u32 %v1183, 1
    %v1236 = vand.u32 %v1184, 1
    %v1237 = vand.u32 %v1185, 1
    %v1238 = vand.u32 %v1186, 1
    %v1239 = vand.u32 %v1187, 1
    %v1240 = vand.u32 %v1188, 1
    %v1241 = vand.u32 %v1189, 1
    %v1242 = vand.u32 %v1190, 1
    %v1243 = vand.u32 %v1191, 1
    %v1244 = vand.u32 %v1192, 1
    %v1245 = vand.u32 %v1193, 1
    %v1246 = vand.u32 %v1194, 1
    %v1247 = vand.u32 %v1195, 1
    %v1248 = vand.u32 %v1196, 1
    %v1249 = vand.u32 %v1197, 1
    %vm1250 = vcmp.eq.s32.totalorder %v1224, 0
    %vm1251 = vcmp.eq.s32.totalorder %v1225, 0
    %vm1252 = vcmp.eq.s32.totalorder %v1226, 0
    %vm1253 = vcmp.eq.s32.totalorder %v1227, 0
    %vm1254 = vcmp.eq.s32.totalorder %v1228, 0
    %vm1255 = vcmp.eq.s32.totalorder %v1229, 0
    %vm1256 = vcmp.eq.s32.totalorder %v1230, 0
    %vm1257 = vcmp.eq.s32.totalorder %v1231, 0
    %vm1258 = vcmp.eq.s32.totalorder %v1232, 0
    %vm1259 = vcmp.eq.s32.totalorder %v1233, 0
    %vm1260 = vcmp.eq.s32.totalorder %v1234, 0
    %vm1261 = vcmp.eq.s32.totalorder %v1235, 0
    %vm1262 = vcmp.eq.s32.totalorder %v1236, 0
    %vm1263 = vcmp.eq.s32.totalorder %v1237, 0
    %vm1264 = vcmp.eq.s32.totalorder %v1238, 0
    %vm1265 = vcmp.eq.s32.totalorder %v1239, 0
    %vm1266 = vcmp.eq.s32.totalorder %v1240, 0
    %vm1267 = vcmp.eq.s32.totalorder %v1241, 0
    %vm1268 = vcmp.eq.s32.totalorder %v1242, 0
    %vm1269 = vcmp.eq.s32.totalorder %v1243, 0
    %vm1270 = vcmp.eq.s32.totalorder %v1244, 0
    %vm1271 = vcmp.eq.s32.totalorder %v1245, 0
    %vm1272 = vcmp.eq.s32.totalorder %v1246, 0
    %vm1273 = vcmp.eq.s32.totalorder %v1247, 0
    %vm1274 = vcmp.eq.s32.totalorder %v1248, 0
    %vm1275 = vcmp.eq.s32.totalorder %v1249, 0
    %vm1276 = vcmp.lt.s32.totalorder %v1146, 7
    %vm1277 = vcmp.lt.s32.totalorder %v1147, 7
    %vm1278 = vcmp.lt.s32.totalorder %v1148, 7
    %vm1279 = vcmp.lt.s32.totalorder %v1149, 7
    %vm1280 = vcmp.lt.s32.totalorder %v1150, 7
    %vm1281 = vcmp.lt.s32.totalorder %v1151, 7
    %vm1282 = vcmp.lt.s32.totalorder %v1152, 7
    %vm1283 = vcmp.lt.s32.totalorder %v1153, 7
    %vm1284 = vcmp.lt.s32.totalorder %v1154, 7
    %vm1285 = vcmp.lt.s32.totalorder %v1155, 7
    %vm1286 = vcmp.lt.s32.totalorder %v1156, 7
    %vm1287 = vcmp.lt.s32.totalorder %v1157, 7
    %vm1288 = vcmp.lt.s32.totalorder %v1158, 7
    %vm1289 = vcmp.lt.s32.totalorder %v1159, 7
    %vm1290 = vcmp.lt.s32.totalorder %v1160, 7
    %vm1291 = vcmp.lt.s32.totalorder %v1161, 7
    %vm1292 = vcmp.lt.s32.totalorder %v1162, 7
    %vm1293 = vcmp.lt.s32.totalorder %v1163, 7
    %vm1294 = vcmp.lt.s32.totalorder %v1164, 7
    %vm1295 = vcmp.lt.s32.totalorder %v1165, 7
    %vm1296 = vcmp.lt.s32.totalorder %v1166, 7
    %vm1297 = vcmp.lt.s32.totalorder %v1167, 7
    %vm1298 = vcmp.lt.s32.totalorder %v1168, 7
    %vm1299 = vcmp.lt.s32.totalorder %v1169, 7
    %vm1300 = vcmp.lt.s32.totalorder %v1170, 7
    %vm1301 = vcmp.lt.s32.totalorder %v1171, 7
    %vm1302 = vmand %vm1250, %vm1276
    %vm1303 = vmand %vm1251, %vm1277
    %vm1304 = vmand %vm1252, %vm1278
    %vm1305 = vmand %vm1253, %vm1279
    %vm1306 = vmand %vm1254, %vm1280
    %vm1307 = vmand %vm1255, %vm1281
    %vm1308 = vmand %vm1256, %vm1282
    %vm1309 = vmand %vm1257, %vm1283
    %vm1310 = vmand %vm1258, %vm1284
    %vm1311 = vmand %vm1259, %vm1285
    %vm1312 = vmand %vm1260, %vm1286
    %vm1313 = vmand %vm1261, %vm1287
    %vm1314 = vmand %vm1262, %vm1288
    %vm1315 = vmand %vm1263, %vm1289
    %vm1316 = vmand %vm1264, %vm1290
    %vm1317 = vmand %vm1265, %vm1291
    %vm1318 = vmand %vm1266, %vm1292
    %vm1319 = vmand %vm1267, %vm1293
    %vm1320 = vmand %vm1268, %vm1294
    %vm1321 = vmand %vm1269, %vm1295
    %vm1322 = vmand %vm1270, %vm1296
    %vm1323 = vmand %vm1271, %vm1297
    %vm1324 = vmand %vm1272, %vm1298
    %vm1325 = vmand %vm1273, %vm1299
    %vm1326 = vmand %vm1274, %vm1300
    %vm1327 = vmand %vm1275, %vm1301
    %vm1328 = vcmp.lt.s32.totalorder %v1198, 7
    %vm1329 = vcmp.lt.s32.totalorder %v1199, 7
    %vm1330 = vcmp.lt.s32.totalorder %v1200, 7
    %vm1331 = vcmp.lt.s32.totalorder %v1201, 7
    %vm1332 = vcmp.lt.s32.totalorder %v1202, 7
    %vm1333 = vcmp.lt.s32.totalorder %v1203, 7
    %vm1334 = vcmp.lt.s32.totalorder %v1204, 7
    %vm1335 = vcmp.lt.s32.totalorder %v1205, 7
    %vm1336 = vcmp.lt.s32.totalorder %v1206, 7
    %vm1337 = vcmp.lt.s32.totalorder %v1207, 7
    %vm1338 = vcmp.lt.s32.totalorder %v1208, 7
    %vm1339 = vcmp.lt.s32.totalorder %v1209, 7
    %vm1340 = vcmp.lt.s32.totalorder %v1210, 7
    %vm1341 = vcmp.lt.s32.totalorder %v1211, 7
    %vm1342 = vcmp.lt.s32.totalorder %v1212, 7
    %vm1343 = vcmp.lt.s32.totalorder %v1213, 7
    %vm1344 = vcmp.lt.s32.totalorder %v1214, 7
    %vm1345 = vcmp.lt.s32.totalorder %v1215, 7
    %vm1346 = vcmp.lt.s32.totalorder %v1216, 7
    %vm1347 = vcmp.lt.s32.totalorder %v1217, 7
    %vm1348 = vcmp.lt.s32.totalorder %v1218, 7
    %vm1349 = vcmp.lt.s32.totalorder %v1219, 7
    %vm1350 = vcmp.lt.s32.totalorder %v1220, 7
    %vm1351 = vcmp.lt.s32.totalorder %v1221, 7
    %vm1352 = vcmp.lt.s32.totalorder %v1222, 7
    %vm1353 = vcmp.lt.s32.totalorder %v1223, 7
    %vm1354 = vmand %vm1302, %vm1328
    %vm1355 = vmand %vm1303, %vm1329
    %vm1356 = vmand %vm1304, %vm1330
    %vm1357 = vmand %vm1305, %vm1331
    %vm1358 = vmand %vm1306, %vm1332
    %vm1359 = vmand %vm1307, %vm1333
    %vm1360 = vmand %vm1308, %vm1334
    %vm1361 = vmand %vm1309, %vm1335
    %vm1362 = vmand %vm1310, %vm1336
    %vm1363 = vmand %vm1311, %vm1337
    %vm1364 = vmand %vm1312, %vm1338
    %vm1365 = vmand %vm1313, %vm1339
    %vm1366 = vmand %vm1314, %vm1340
    %vm1367 = vmand %vm1315, %vm1341
    %vm1368 = vmand %vm1316, %vm1342
    %vm1369 = vmand %vm1317, %vm1343
    %vm1370 = vmand %vm1318, %vm1344
    %vm1371 = vmand %vm1319, %vm1345
    %vm1372 = vmand %vm1320, %vm1346
    %vm1373 = vmand %vm1321, %vm1347
    %vm1374 = vmand %vm1322, %vm1348
    %vm1375 = vmand %vm1323, %vm1349
    %vm1376 = vmand %vm1324, %vm1350
    %vm1377 = vmand %vm1325, %vm1351
    %vm1378 = vmand %vm1326, %vm1352
    %vm1379 = vmand %vm1327, %vm1353
    %v1380 = vmul.u32 %v1146, 7
    %v1381 = vmul.u32 %v1147, 7
    %v1382 = vmul.u32 %v1148, 7
    %v1383 = vmul.u32 %v1149, 7
    %v1384 = vmul.u32 %v1150, 7
    %v1385 = vmul.u32 %v1151, 7
    %v1386 = vmul.u32 %v1152, 7
    %v1387 = vmul.u32 %v1153, 7
    %v1388 = vmul.u32 %v1154, 7
    %v1389 = vmul.u32 %v1155, 7
    %v1390 = vmul.u32 %v1156, 7
    %v1391 = vmul.u32 %v1157, 7
    %v1392 = vmul.u32 %v1158, 7
    %v1393 = vmul.u32 %v1159, 7
    %v1394 = vmul.u32 %v1160, 7
    %v1395 = vmul.u32 %v1161, 7
    %v1396 = vmul.u32 %v1162, 7
    %v1397 = vmul.u32 %v1163, 7
    %v1398 = vmul.u32 %v1164, 7
    %v1399 = vmul.u32 %v1165, 7
    %v1400 = vmul.u32 %v1166, 7
    %v1401 = vmul.u32 %v1167, 7
    %v1402 = vmul.u32 %v1168, 7
    %v1403 = vmul.u32 %v1169, 7
    %v1404 = vmul.u32 %v1170, 7
    %v1405 = vmul.u32 %v1171, 7
    %v1406 = vadd.s32 %v1380, %v1198
    %v1407 = vadd.s32 %v1381, %v1199
    %v1408 = vadd.s32 %v1382, %v1200
    %v1409 = vadd.s32 %v1383, %v1201
    %v1410 = vadd.s32 %v1384, %v1202
    %v1411 = vadd.s32 %v1385, %v1203
    %v1412 = vadd.s32 %v1386, %v1204
    %v1413 = vadd.s32 %v1387, %v1205
    %v1414 = vadd.s32 %v1388, %v1206
    %v1415 = vadd.s32 %v1389, %v1207
    %v1416 = vadd.s32 %v1390, %v1208
    %v1417 = vadd.s32 %v1391, %v1209
    %v1418 = vadd.s32 %v1392, %v1210
    %v1419 = vadd.s32 %v1393, %v1211
    %v1420 = vadd.s32 %v1394, %v1212
    %v1421 = vadd.s32 %v1395, %v1213
    %v1422 = vadd.s32 %v1396, %v1214
    %v1423 = vadd.s32 %v1397, %v1215
    %v1424 = vadd.s32 %v1398, %v1216
    %v1425 = vadd.s32 %v1399, %v1217
    %v1426 = vadd.s32 %v1400, %v1218
    %v1427 = vadd.s32 %v1401, %v1219
    %v1428 = vadd.s32 %v1402, %v1220
    %v1429 = vadd.s32 %v1403, %v1221
    %v1430 = vadd.s32 %v1404, %v1222
    %v1431 = vadd.s32 %v1405, %v1223
    %vm1432 = vcmp.eq.s32.totalorder %v308, %v1406
    %vm1433 = vcmp.eq.s32.totalorder %v308, %v1407
    %vm1434 = vcmp.eq.s32.totalorder %v308, %v1408
    %vm1435 = vcmp.eq.s32.totalorder %v308, %v1409
    %vm1436 = vcmp.eq.s32.totalorder %v308, %v1410
    %vm1437 = vcmp.eq.s32.totalorder %v308, %v1411
    %vm1438 = vcmp.eq.s32.totalorder %v308, %v1412
    %vm1439 = vcmp.eq.s32.totalorder %v308, %v1413
    %vm1440 = vcmp.eq.s32.totalorder %v308, %v1414
    %vm1441 = vcmp.eq.s32.totalorder %v308, %v1415
    %vm1442 = vcmp.eq.s32.totalorder %v308, %v1416
    %vm1443 = vcmp.eq.s32.totalorder %v308, %v1417
    %vm1444 = vcmp.eq.s32.totalorder %v308, %v1418
    %vm1445 = vcmp.eq.s32.totalorder %v308, %v1419
    %vm1446 = vcmp.eq.s32.totalorder %v308, %v1420
    %vm1447 = vcmp.eq.s32.totalorder %v308, %v1421
    %vm1448 = vcmp.eq.s32.totalorder %v308, %v1422
    %vm1449 = vcmp.eq.s32.totalorder %v308, %v1423
    %vm1450 = vcmp.eq.s32.totalorder %v308, %v1424
    %vm1451 = vcmp.eq.s32.totalorder %v308, %v1425
    %vm1452 = vcmp.eq.s32.totalorder %v308, %v1426
    %vm1453 = vcmp.eq.s32.totalorder %v308, %v1427
    %vm1454 = vcmp.eq.s32.totalorder %v308, %v1428
    %vm1455 = vcmp.eq.s32.totalorder %v308, %v1429
    %vm1456 = vcmp.eq.s32.totalorder %v308, %v1430
    %vm1457 = vcmp.eq.s32.totalorder %v308, %v1431
    %vm1458 = vmand %vm1354, %vm1432
    %vm1459 = vmand %vm1355, %vm1433
    %vm1460 = vmand %vm1356, %vm1434
    %vm1461 = vmand %vm1357, %vm1435
    %vm1462 = vmand %vm1358, %vm1436
    %vm1463 = vmand %vm1359, %vm1437
    %vm1464 = vmand %vm1360, %vm1438
    %vm1465 = vmand %vm1361, %vm1439
    %vm1466 = vmand %vm1362, %vm1440
    %vm1467 = vmand %vm1363, %vm1441
    %vm1468 = vmand %vm1364, %vm1442
    %vm1469 = vmand %vm1365, %vm1443
    %vm1470 = vmand %vm1366, %vm1444
    %vm1471 = vmand %vm1367, %vm1445
    %vm1472 = vmand %vm1368, %vm1446
    %vm1473 = vmand %vm1369, %vm1447
    %vm1474 = vmand %vm1370, %vm1448
    %vm1475 = vmand %vm1371, %vm1449
    %vm1476 = vmand %vm1372, %vm1450
    %vm1477 = vmand %vm1373, %vm1451
    %vm1478 = vmand %vm1374, %vm1452
    %vm1479 = vmand %vm1375, %vm1453
    %vm1480 = vmand %vm1376, %vm1454
    %vm1481 = vmand %vm1377, %vm1455
    %vm1482 = vmand %vm1378, %vm1456
    %vm1483 = vmand %vm1379, %vm1457
    %v1484 = vsel %vm1458, 1, 0
    %v1485 = vsel %vm1459, 1, 0
    %v1486 = vsel %vm1460, 1, 0
    %v1487 = vsel %vm1461, 1, 0
    %v1488 = vsel %vm1462, 1, 0
    %v1489 = vsel %vm1463, 1, 0
    %v1490 = vsel %vm1464, 1, 0
    %v1491 = vsel %vm1465, 1, 0
    %v1492 = vsel %vm1466, 1, 0
    %v1493 = vsel %vm1467, 1, 0
    %v1494 = vsel %vm1468, 1, 0
    %v1495 = vsel %vm1469, 1, 0
    %v1496 = vsel %vm1470, 1, 0
    %v1497 = vsel %vm1471, 1, 0
    %v1498 = vsel %vm1472, 1, 0
    %v1499 = vsel %vm1473, 1, 0
    %v1500 = vsel %vm1474, 1, 0
    %v1501 = vsel %vm1475, 1, 0
    %v1502 = vsel %vm1476, 1, 0
    %v1503 = vsel %vm1477, 1, 0
    %v1504 = vsel %vm1478, 1, 0
    %v1505 = vsel %vm1479, 1, 0
    %v1506 = vsel %vm1480, 1, 0
    %v1507 = vsel %vm1481, 1, 0
    %v1508 = vsel %vm1482, 1, 0
    %v1509 = vsel %vm1483, 1, 0
    %v1510 = vcvt.s32.f32 %v1484
    %v1511 = vcvt.s32.f32 %v1485
    %v1512 = vcvt.s32.f32 %v1486
    %v1513 = vcvt.s32.f32 %v1487
    %v1514 = vcvt.s32.f32 %v1488
    %v1515 = vcvt.s32.f32 %v1489
    %v1516 = vcvt.s32.f32 %v1490
    %v1517 = vcvt.s32.f32 %v1491
    %v1518 = vcvt.s32.f32 %v1492
    %v1519 = vcvt.s32.f32 %v1493
    %v1520 = vcvt.s32.f32 %v1494
    %v1521 = vcvt.s32.f32 %v1495
    %v1522 = vcvt.s32.f32 %v1496
    %v1523 = vcvt.s32.f32 %v1497
    %v1524 = vcvt.s32.f32 %v1498
    %v1525 = vcvt.s32.f32 %v1499
    %v1526 = vcvt.s32.f32 %v1500
    %v1527 = vcvt.s32.f32 %v1501
    %v1528 = vcvt.s32.f32 %v1502
    %v1529 = vcvt.s32.f32 %v1503
    %v1530 = vcvt.s32.f32 %v1504
    %v1531 = vcvt.s32.f32 %v1505
    %v1532 = vcvt.s32.f32 %v1506
    %v1533 = vcvt.s32.f32 %v1507
    %v1534 = vcvt.s32.f32 %v1508
    %v1535 = vcvt.s32.f32 %v1509
    %1536 = vst [vmem:[#allocation2] sm:$0xff] 0.0
    %v1537 = vlaneseq
    %vm1538 = vcmp.ge.s32.totalorder %v1537, 0
    %vm1539 = vcmp.lt.s32.totalorder %v1537, 776
    %vm1540 = vmand %vm1538, %vm1539
    %1541 = vst.msk [vmem:[#allocation2 + $0x8] sm:$0x7f] %vm1540, 0.0
    %v1542 = vld [vmem:[%s0] sm:$0xff]
    %v1543 = vld [vmem:[%s0 + $0x8] sm:$0xff]
    %v1544 = vld [vmem:[%s0 + $0x10] sm:$0xff]
    %v1545 = vld [vmem:[%s0 + $0x18] sm:$0xf]
    %v1546 = vld [vmem:[%s0 + $0x20] sm:$0xff]
    %v1547 = vld [vmem:[%s0 + $0x28] sm:$0xff]
    %v1548 = vld [vmem:[%s0 + $0x30] sm:$0xff]
    %v1549 = vld [vmem:[%s0 + $0x38] sm:$0xf]
    %v1552 = vunpack.c.l.s4 1966171168
    %v1553 = vunpack.c.0.s8 %v1552
    %v1554 = vlaneseq
    %v1555 = vshrl.u32 %v1554, 7
    %v1556 = vsub.s32 %v1553, %v1555
    %v1557 = vrot.slane %v1542, %v1556
    %v1559 = vunpack.c.l.s4 1966171168
    %v1560 = vunpack.c.0.s8 %v1559
    %v1561 = vlaneseq
    %v1562 = vshrl.u32 %v1561, 7
    %v1563 = vsub.s32 %v1560, %v1562
    %v1564 = vrot.slane %v1557, %v1563
    %1565 = vrot.lane.b32.xlu0 %v1564, 31
    %v1566 = vpop.permute.xlu0 %1565
    %vm1568 = vcmp.ge.s32.totalorder %v1537, 31
    %vm1569 = vcmp.lt.s32.totalorder %v1537, 59
    %vm1570 = vmand %vm1568, %vm1569
    %1571 = vst.msk [vmem:[#allocation2] sm:$0x1] %vm1570, %v1566
    %v1572 = vcombine.high %v1557, %v1557
    %v1574 = vunpack.c.l.s4 1966171168
    %v1575 = vunpack.c.0.s8 %v1574
    %v1576 = vlaneseq
    %v1577 = vshrl.u32 %v1576, 7
    %v1578 = vsub.s32 %v1575, %v1577
    %v1579 = vrot.slane %v1572, %v1578
    %1580 = vrot.lane.b32.xlu0 %v1579, 61
    %v1581 = vpop.permute.xlu0 %1580
    %vm1583 = vcmp.ge.s32.totalorder %v1537, 61
    %vm1584 = vcmp.lt.s32.totalorder %v1537, 89
    %vm1585 = vmand %vm1583, %vm1584
    %1586 = vst.msk [vmem:[#allocation2] sm:$0x1] %vm1585, %v1581
    %v1587 = vcombine.high %v1564, %v1564
    %1588 = vrot.lane.b32.xlu0 %v1587, 91
    %v1589 = vpop.permute.xlu0 %1588
    %vm1591 = vcmp.ge.s32.totalorder %v1537, 91
    %vm1592 = vcmp.lt.s32.totalorder %v1537, 119
    %vm1593 = vmand %vm1591, %vm1592
    %1594 = vst.msk [vmem:[#allocation2] sm:$0x1] %vm1593, %v1589
    %v1595 = vcombine.high %v1579, %v1579
    %1596 = vrot.lane.b32.xlu0 %v1595, 121
    %v1597 = vpop.permute.xlu0 %1596
    %v1598 = vrot.slane %v1597, 7
    %vm1599 = vcmask 990208
    %v1600 = vsel %vm1599, %v1598, %v1597
    %vm1602 = vcmp.ge.s32.totalorder %v1537, 121
    %vm1603 = vcmp.lt.s32.totalorder %v1537, 149
    %vm1604 = vmand %vm1602, %vm1603
    %1605 = vst.msk [vmem:[#allocation2] sm:$0x3] %vm1604, %v1600
    %v1606 = vcombine.high %v1542, %v1542
    %v1608 = vunpack.c.l.s4 1966171168
    %v1609 = vunpack.c.0.s8 %v1608
    %v1610 = vlaneseq
    %v1611 = vshrl.u32 %v1610, 7
    %v1612 = vsub.s32 %v1609, %v1611
    %v1613 = vrot.slane %v1606, %v1612
    %v1615 = vunpack.c.l.s4 1966171168
    %v1616 = vunpack.c.0.s8 %v1615
    %v1617 = vlaneseq
    %v1618 = vshrl.u32 %v1617, 7
    %v1619 = vsub.s32 %v1616, %v1618
    %v1620 = vrot.slane %v1613, %v1619
    %1621 = vrot.lane.b32.xlu0 %v1620, 23
    %v1622 = vpop.permute.xlu0 %1621
    %vm1624 = vcmp.ge.s32.totalorder %v1537, 23
    %vm1625 = vcmp.lt.s32.totalorder %v1537, 51
    %vm1626 = vmand %vm1624, %vm1625
    %1627 = vst.msk [vmem:[#allocation2 + $0x1] sm:$0x1] %vm1626, %v1622
    %v1628 = vcombine.high %v1613, %v1613
    %v1630 = vunpack.c.l.s4 1966171168
    %v1631 = vunpack.c.0.s8 %v1630
    %v1632 = vlaneseq
    %v1633 = vshrl.u32 %v1632, 7
    %v1634 = vsub.s32 %v1631, %v1633
    %v1635 = vrot.slane %v1628, %v1634
    %1636 = vrot.lane.b32.xlu0 %v1635, 53
    %v1637 = vpop.permute.xlu0 %1636
    %vm1639 = vcmp.ge.s32.totalorder %v1537, 53
    %vm1640 = vcmp.lt.s32.totalorder %v1537, 81
    %vm1641 = vmand %vm1639, %vm1640
    %1642 = vst.msk [vmem:[#allocation2 + $0x1] sm:$0x1] %vm1641, %v1637
    %v1643 = vcombine.high %v1620, %v1620
    %1644 = vrot.lane.b32.xlu0 %v1643, 83
    %v1645 = vpop.permute.xlu0 %1644
    %vm1647 = vcmp.ge.s32.totalorder %v1537, 83
    %vm1648 = vcmp.lt.s32.totalorder %v1537, 111
    %vm1649 = vmand %vm1647, %vm1648
    %1650 = vst.msk [vmem:[#allocation2 + $0x1] sm:$0x1] %vm1649, %v1645
    %v1651 = vcombine.high %v1635, %v1635
    %1652 = vrot.lane.b32.xlu0 %v1651, 113
    %v1653 = vpop.permute.xlu0 %1652
    %v1654 = vrot.slane %v1653, 7
    %vm1655 = vcmask 924672
    %v1656 = vsel %vm1655, %v1654, %v1653
    %vm1658 = vcmp.ge.s32.totalorder %v1537, 113
    %vm1659 = vcmp.lt.s32.totalorder %v1537, 141
    %vm1660 = vmand %vm1658, %vm1659
    %1661 = vst.msk [vmem:[#allocation2 + $0x1] sm:$0x3] %vm1660, %v1656
    %v1664 = vunpack.c.l.s4 1966171168
    %v1665 = vunpack.c.0.s8 %v1664
    %v1666 = vlaneseq
    %v1667 = vshrl.u32 %v1666, 7
    %v1668 = vsub.s32 %v1665, %v1667
    %v1669 = vrot.slane %v1543, %v1668
    %v1671 = vunpack.c.l.s4 1966171168
    %v1672 = vunpack.c.0.s8 %v1671
    %v1673 = vlaneseq
    %v1674 = vshrl.u32 %v1673, 7
    %v1675 = vsub.s32 %v1672, %v1674
    %v1676 = vrot.slane %v1669, %v1675
    %1677 = vrot.lane.b32.xlu0 %v1676, 15
    %v1678 = vpop.permute.xlu0 %1677
    %vm1680 = vcmp.ge.s32.totalorder %v1537, 15
    %vm1681 = vcmp.lt.s32.totalorder %v1537, 43
    %vm1682 = vmand %vm1680, %vm1681
    %1683 = vst.msk [vmem:[#allocation2 + $0x2] sm:$0x1] %vm1682, %v1678
    %v1684 = vcombine.high %v1669, %v1669
    %v1686 = vunpack.c.l.s4 1966171168
    %v1687 = vunpack.c.0.s8 %v1686
    %v1688 = vlaneseq
    %v1689 = vshrl.u32 %v1688, 7
    %v1690 = vsub.s32 %v1687, %v1689
    %v1691 = vrot.slane %v1684, %v1690
    %1692 = vrot.lane.b32.xlu0 %v1691, 45
    %v1693 = vpop.permute.xlu0 %1692
    %vm1695 = vcmp.ge.s32.totalorder %v1537, 45
    %vm1696 = vcmp.lt.s32.totalorder %v1537, 73
    %vm1697 = vmand %vm1695, %vm1696
    %1698 = vst.msk [vmem:[#allocation2 + $0x2] sm:$0x1] %vm1697, %v1693
    %v1699 = vcombine.high %v1676, %v1676
    %1700 = vrot.lane.b32.xlu0 %v1699, 75
    %v1701 = vpop.permute.xlu0 %1700
    %vm1703 = vcmp.ge.s32.totalorder %v1537, 75
    %vm1704 = vcmp.lt.s32.totalorder %v1537, 103
    %vm1705 = vmand %vm1703, %vm1704
    %1706 = vst.msk [vmem:[#allocation2 + $0x2] sm:$0x1] %vm1705, %v1701
    %v1707 = vcombine.high %v1691, %v1691
    %1708 = vrot.lane.b32.xlu0 %v1707, 105
    %v1709 = vpop.permute.xlu0 %1708
    %v1710 = vrot.slane %v1709, 7
    %vm1711 = vcmask 859136
    %v1712 = vsel %vm1711, %v1710, %v1709
    %vm1714 = vcmp.ge.s32.totalorder %v1537, 105
    %vm1715 = vcmp.lt.s32.totalorder %v1537, 133
    %vm1716 = vmand %vm1714, %vm1715
    %1717 = vst.msk [vmem:[#allocation2 + $0x2] sm:$0x3] %vm1716, %v1712
    %v1718 = vcombine.high %v1543, %v1543
    %v1720 = vunpack.c.l.s4 1966171168
    %v1721 = vunpack.c.0.s8 %v1720
    %v1722 = vlaneseq
    %v1723 = vshrl.u32 %v1722, 7
    %v1724 = vsub.s32 %v1721, %v1723
    %v1725 = vrot.slane %v1718, %v1724
    %v1727 = vunpack.c.l.s4 1966171168
    %v1728 = vunpack.c.0.s8 %v1727
    %v1729 = vlaneseq
    %v1730 = vshrl.u32 %v1729, 7
    %v1731 = vsub.s32 %v1728, %v1730
    %v1732 = vrot.slane %v1725, %v1731
    %1733 = vrot.lane.b32.xlu0 %v1732, 7
    %v1734 = vpop.permute.xlu0 %1733
    %vm1736 = vcmp.ge.s32.totalorder %v1537, 7
    %vm1737 = vcmp.lt.s32.totalorder %v1537, 35
    %vm1738 = vmand %vm1736, %vm1737
    %1739 = vst.msk [vmem:[#allocation2 + $0x3] sm:$0x1] %vm1738, %v1734
    %v1740 = vcombine.high %v1725, %v1725
    %v1742 = vunpack.c.l.s4 1966171168
    %v1743 = vunpack.c.0.s8 %v1742
    %v1744 = vlaneseq
    %v1745 = vshrl.u32 %v1744, 7
    %v1746 = vsub.s32 %v1743, %v1745
    %v1747 = vrot.slane %v1740, %v1746
    %1748 = vrot.lane.b32.xlu0 %v1747, 37
    %v1749 = vpop.permute.xlu0 %1748
    %vm1751 = vcmp.ge.s32.totalorder %v1537, 37
    %vm1752 = vcmp.lt.s32.totalorder %v1537, 65
    %vm1753 = vmand %vm1751, %vm1752
    %1754 = vst.msk [vmem:[#allocation2 + $0x3] sm:$0x1] %vm1753, %v1749
    %v1755 = vcombine.high %v1732, %v1732
    %1756 = vrot.lane.b32.xlu0 %v1755, 67
    %v1757 = vpop.permute.xlu0 %1756
    %vm1759 = vcmp.ge.s32.totalorder %v1537, 67
    %vm1760 = vcmp.lt.s32.totalorder %v1537, 95
    %vm1761 = vmand %vm1759, %vm1760
    %1762 = vst.msk [vmem:[#allocation2 + $0x3] sm:$0x1] %vm1761, %v1757
    %v1763 = vcombine.high %v1747, %v1747
    %1764 = vrot.lane.b32.xlu0 %v1763, 97
    %v1765 = vpop.permute.xlu0 %1764
    %vm1767 = vcmp.ge.s32.totalorder %v1537, 97
    %vm1768 = vcmp.lt.s32.totalorder %v1537, 125
    %vm1769 = vmand %vm1767, %vm1768
    %1770 = vst.msk [vmem:[#allocation2 + $0x3] sm:$0x1] %vm1769, %v1765
    %v1773 = vunpack.c.l.s4 1966171168
    %v1774 = vunpack.c.0.s8 %v1773
    %v1775 = vlaneseq
    %v1776 = vshrl.u32 %v1775, 7
    %v1777 = vsub.s32 %v1774, %v1776
    %v1778 = vrot.slane %v1544, %v1777
    %v1780 = vunpack.c.l.s4 1966171168
    %v1781 = vunpack.c.0.s8 %v1780
    %v1782 = vlaneseq
    %v1783 = vshrl.u32 %v1782, 7
    %v1784 = vsub.s32 %v1781, %v1783
    %v1785 = vrot.slane %v1778, %v1784
    %1786 = vrot.lane.b32.xlu0 %v1785, 127
    %v1787 = vpop.permute.xlu0 %1786
    %v1788 = vrot.slane %v1787, 7
    %vm1789 = vcmask 1039360
    %v1790 = vsel %vm1789, %v1788, %v1787
    %vm1792 = vcmp.ge.s32.totalorder %v1537, 127
    %vm1793 = vcmp.lt.s32.totalorder %v1537, 155
    %vm1794 = vmand %vm1792, %vm1793
    %1795 = vst.msk [vmem:[#allocation2 + $0x3] sm:$0x3] %vm1794, %v1790
    %v1796 = vcombine.high %v1778, %v1778
    %v1798 = vunpack.c.l.s4 1966171168
    %v1799 = vunpack.c.0.s8 %v1798
    %v1800 = vlaneseq
    %v1801 = vshrl.u32 %v1800, 7
    %v1802 = vsub.s32 %v1799, %v1801
    %v1803 = vrot.slane %v1796, %v1802
    %1804 = vrot.lane.b32.xlu0 %v1803, 29
    %v1805 = vpop.permute.xlu0 %1804
    %vm1807 = vcmp.ge.s32.totalorder %v1537, 29
    %vm1808 = vcmp.lt.s32.totalorder %v1537, 57
    %vm1809 = vmand %vm1807, %vm1808
    %1810 = vst.msk [vmem:[#allocation2 + $0x4] sm:$0x1] %vm1809, %v1805
    %v1811 = vcombine.high %v1785, %v1785
    %1812 = vrot.lane.b32.xlu0 %v1811, 59
    %v1813 = vpop.permute.xlu0 %1812
    %vm1815 = vcmp.ge.s32.totalorder %v1537, 59
    %vm1816 = vcmp.lt.s32.totalorder %v1537, 87
    %vm1817 = vmand %vm1815, %vm1816
    %1818 = vst.msk [vmem:[#allocation2 + $0x4] sm:$0x1] %vm1817, %v1813
    %v1819 = vcombine.high %v1803, %v1803
    %1820 = vrot.lane.b32.xlu0 %v1819, 89
    %v1821 = vpop.permute.xlu0 %1820
    %vm1823 = vcmp.ge.s32.totalorder %v1537, 89
    %vm1824 = vcmp.lt.s32.totalorder %v1537, 117
    %vm1825 = vmand %vm1823, %vm1824
    %1826 = vst.msk [vmem:[#allocation2 + $0x4] sm:$0x1] %vm1825, %v1821
    %v1827 = vcombine.high %v1544, %v1544
    %v1829 = vunpack.c.l.s4 1966171168
    %v1830 = vunpack.c.0.s8 %v1829
    %v1831 = vlaneseq
    %v1832 = vshrl.u32 %v1831, 7
    %v1833 = vsub.s32 %v1830, %v1832
    %v1834 = vrot.slane %v1827, %v1833
    %v1836 = vunpack.c.l.s4 1966171168
    %v1837 = vunpack.c.0.s8 %v1836
    %v1838 = vlaneseq
    %v1839 = vshrl.u32 %v1838, 7
    %v1840 = vsub.s32 %v1837, %v1839
    %v1841 = vrot.slane %v1834, %v1840
    %1842 = vrot.lane.b32.xlu0 %v1841, 119
    %v1843 = vpop.permute.xlu0 %1842
    %v1844 = vrot.slane %v1843, 7
    %vm1845 = vcmask 973824
    %v1846 = vsel %vm1845, %v1844, %v1843
    %vm1848 = vcmp.ge.s32.totalorder %v1537, 119
    %vm1849 = vcmp.lt.s32.totalorder %v1537, 147
    %vm1850 = vmand %vm1848, %vm1849
    %1851 = vst.msk [vmem:[#allocation2 + $0x4] sm:$0x3] %vm1850, %v1846
    %v1852 = vcombine.high %v1834, %v1834
    %v1854 = vunpack.c.l.s4 1966171168
    %v1855 = vunpack.c.0.s8 %v1854
    %v1856 = vlaneseq
    %v1857 = vshrl.u32 %v1856, 7
    %v1858 = vsub.s32 %v1855, %v1857
    %v1859 = vrot.slane %v1852, %v1858
    %1860 = vrot.lane.b32.xlu0 %v1859, 21
    %v1861 = vpop.permute.xlu0 %1860
    %vm1863 = vcmp.ge.s32.totalorder %v1537, 21
    %vm1864 = vcmp.lt.s32.totalorder %v1537, 49
    %vm1865 = vmand %vm1863, %vm1864
    %1866 = vst.msk [vmem:[#allocation2 + $0x5] sm:$0x1] %vm1865, %v1861
    %v1867 = vcombine.high %v1841, %v1841
    %1868 = vrot.lane.b32.xlu0 %v1867, 51
    %v1869 = vpop.permute.xlu0 %1868
    %vm1871 = vcmp.ge.s32.totalorder %v1537, 51
    %vm1872 = vcmp.lt.s32.totalorder %v1537, 79
    %vm1873 = vmand %vm1871, %vm1872
    %1874 = vst.msk [vmem:[#allocation2 + $0x5] sm:$0x1] %vm1873, %v1869
    %v1875 = vcombine.high %v1859, %v1859
    %1876 = vrot.lane.b32.xlu0 %v1875, 81
    %v1877 = vpop.permute.xlu0 %1876
    %vm1879 = vcmp.ge.s32.totalorder %v1537, 81
    %vm1880 = vcmp.lt.s32.totalorder %v1537, 109
    %vm1881 = vmand %vm1879, %vm1880
    %1882 = vst.msk [vmem:[#allocation2 + $0x5] sm:$0x1] %vm1881, %v1877
    %v1885 = vunpack.c.l.s4 1966171168
    %v1886 = vunpack.c.0.s8 %v1885
    %v1887 = vlaneseq
    %v1888 = vshrl.u32 %v1887, 7
    %v1889 = vsub.s32 %v1886, %v1888
    %v1890 = vrot.slane %v1545, %v1889
    %v1892 = vunpack.c.l.s4 1966171168
    %v1893 = vunpack.c.0.s8 %v1892
    %v1894 = vlaneseq
    %v1895 = vshrl.u32 %v1894, 7
    %v1896 = vsub.s32 %v1893, %v1895
    %v1897 = vrot.slane %v1890, %v1896
    %1898 = vrot.lane.b32.xlu0 %v1897, 111
    %v1899 = vpop.permute.xlu0 %1898
    %v1900 = vrot.slane %v1899, 7
    %vm1901 = vcmask 908288
    %v1902 = vsel %vm1901, %v1900, %v1899
    %vm1904 = vcmp.ge.s32.totalorder %v1537, 111
    %vm1905 = vcmp.lt.s32.totalorder %v1537, 139
    %vm1906 = vmand %vm1904, %vm1905
    %1907 = vst.msk [vmem:[#allocation2 + $0x5] sm:$0x3] %vm1906, %v1902
    %v1908 = vcombine.high %v1890, %v1890
    %v1910 = vunpack.c.l.s4 1966171168
    %v1911 = vunpack.c.0.s8 %v1910
    %v1912 = vlaneseq
    %v1913 = vshrl.u32 %v1912, 7
    %v1914 = vsub.s32 %v1911, %v1913
    %v1915 = vrot.slane %v1908, %v1914
    %1916 = vrot.lane.b32.xlu0 %v1915, 13
    %v1917 = vpop.permute.xlu0 %1916
    %vm1919 = vcmp.ge.s32.totalorder %v1537, 13
    %vm1920 = vcmp.lt.s32.totalorder %v1537, 41
    %vm1921 = vmand %vm1919, %vm1920
    %1922 = vst.msk [vmem:[#allocation2 + $0x6] sm:$0x1] %vm1921, %v1917
    %v1923 = vcombine.high %v1897, %v1897
    %1924 = vrot.lane.b32.xlu0 %v1923, 43
    %v1925 = vpop.permute.xlu0 %1924
    %vm1927 = vcmp.ge.s32.totalorder %v1537, 43
    %vm1928 = vcmp.lt.s32.totalorder %v1537, 71
    %vm1929 = vmand %vm1927, %vm1928
    %1930 = vst.msk [vmem:[#allocation2 + $0x6] sm:$0x1] %vm1929, %v1925
    %v1931 = vcombine.high %v1915, %v1915
    %1932 = vrot.lane.b32.xlu0 %v1931, 73
    %v1933 = vpop.permute.xlu0 %1932
    %vm1935 = vcmp.ge.s32.totalorder %v1537, 73
    %vm1936 = vcmp.lt.s32.totalorder %v1537, 101
    %vm1937 = vmand %vm1935, %vm1936
    %1938 = vst.msk [vmem:[#allocation2 + $0x6] sm:$0x1] %vm1937, %v1933
    %v1941 = vunpack.c.l.s4 1966171168
    %v1942 = vunpack.c.0.s8 %v1941
    %v1943 = vlaneseq
    %v1944 = vshrl.u32 %v1943, 7
    %v1945 = vsub.s32 %v1942, %v1944
    %v1946 = vrot.slane %v1546, %v1945
    %v1948 = vunpack.c.l.s4 1966171168
    %v1949 = vunpack.c.0.s8 %v1948
    %v1950 = vlaneseq
    %v1951 = vshrl.u32 %v1950, 7
    %v1952 = vsub.s32 %v1949, %v1951
    %v1953 = vrot.slane %v1946, %v1952
    %1954 = vrot.lane.b32.xlu0 %v1953, 35
    %v1955 = vpop.permute.xlu0 %1954
    %vm1957 = vcmp.ge.s32.totalorder %v1537, 35
    %vm1958 = vcmp.lt.s32.totalorder %v1537, 63
    %vm1959 = vmand %vm1957, %vm1958
    %1960 = vst.msk [vmem:[#allocation2 + $0x7] sm:$0x1] %vm1959, %v1955
    %v1961 = vcombine.high %v1946, %v1946
    %v1963 = vunpack.c.l.s4 1966171168
    %v1964 = vunpack.c.0.s8 %v1963
    %v1965 = vlaneseq
    %v1966 = vshrl.u32 %v1965, 7
    %v1967 = vsub.s32 %v1964, %v1966
    %v1968 = vrot.slane %v1961, %v1967
    %1969 = vrot.lane.b32.xlu0 %v1968, 65
    %v1970 = vpop.permute.xlu0 %1969
    %vm1972 = vcmp.ge.s32.totalorder %v1537, 65
    %vm1973 = vcmp.lt.s32.totalorder %v1537, 93
    %vm1974 = vmand %vm1972, %vm1973
    %1975 = vst.msk [vmem:[#allocation2 + $0x7] sm:$0x1] %vm1974, %v1970
    %v1976 = vcombine.high %v1953, %v1953
    %1977 = vrot.lane.b32.xlu0 %v1976, 95
    %v1978 = vpop.permute.xlu0 %1977
    %vm1980 = vcmp.ge.s32.totalorder %v1537, 95
    %vm1981 = vcmp.lt.s32.totalorder %v1537, 123
    %vm1982 = vmand %vm1980, %vm1981
    %1983 = vst.msk [vmem:[#allocation2 + $0x7] sm:$0x1] %vm1982, %v1978
    %v1984 = vcombine.high %v1968, %v1968
    %1985 = vrot.lane.b32.xlu0 %v1984, 125
    %v1986 = vpop.permute.xlu0 %1985
    %v1987 = vrot.slane %v1986, 7
    %vm1988 = vcmask 1022976
    %v1989 = vsel %vm1988, %v1987, %v1986
    %vm1991 = vcmp.ge.s32.totalorder %v1537, 125
    %vm1992 = vcmp.lt.s32.totalorder %v1537, 153
    %vm1993 = vmand %vm1991, %vm1992
    %1994 = vst.msk [vmem:[#allocation2 + $0x7] sm:$0x3] %vm1993, %v1989
    %v1995 = vcombine.high %v1546, %v1546
    %v1997 = vunpack.c.l.s4 1966171168
    %v1998 = vunpack.c.0.s8 %v1997
    %v1999 = vlaneseq
    %v2000 = vshrl.u32 %v1999, 7
    %v2001 = vsub.s32 %v1998, %v2000
    %v2002 = vrot.slane %v1995, %v2001
    %v2004 = vunpack.c.l.s4 1966171168
    %v2005 = vunpack.c.0.s8 %v2004
    %v2006 = vlaneseq
    %v2007 = vshrl.u32 %v2006, 7
    %v2008 = vsub.s32 %v2005, %v2007
    %v2009 = vrot.slane %v2002, %v2008
    %2010 = vrot.lane.b32.xlu0 %v2009, 27
    %v2011 = vpop.permute.xlu0 %2010
    %vm2013 = vcmp.ge.s32.totalorder %v1537, 27
    %vm2014 = vcmp.lt.s32.totalorder %v1537, 55
    %vm2015 = vmand %vm2013, %vm2014
    %2016 = vst.msk [vmem:[#allocation2 + $0x8] sm:$0x1] %vm2015, %v2011
    %v2017 = vcombine.high %v2002, %v2002
    %v2019 = vunpack.c.l.s4 1966171168
    %v2020 = vunpack.c.0.s8 %v2019
    %v2021 = vlaneseq
    %v2022 = vshrl.u32 %v2021, 7
    %v2023 = vsub.s32 %v2020, %v2022
    %v2024 = vrot.slane %v2017, %v2023
    %2025 = vrot.lane.b32.xlu0 %v2024, 57
    %v2026 = vpop.permute.xlu0 %2025
    %vm2028 = vcmp.ge.s32.totalorder %v1537, 57
    %vm2029 = vcmp.lt.s32.totalorder %v1537, 85
    %vm2030 = vmand %vm2028, %vm2029
    %2031 = vst.msk [vmem:[#allocation2 + $0x8] sm:$0x1] %vm2030, %v2026
    %v2032 = vcombine.high %v2009, %v2009
    %2033 = vrot.lane.b32.xlu0 %v2032, 87
    %v2034 = vpop.permute.xlu0 %2033
    %vm2036 = vcmp.ge.s32.totalorder %v1537, 87
    %vm2037 = vcmp.lt.s32.totalorder %v1537, 115
    %vm2038 = vmand %vm2036, %vm2037
    %2039 = vst.msk [vmem:[#allocation2 + $0x8] sm:$0x1] %vm2038, %v2034
    %v2040 = vcombine.high %v2024, %v2024
    %2041 = vrot.lane.b32.xlu0 %v2040, 117
    %v2042 = vpop.permute.xlu0 %2041
    %v2043 = vrot.slane %v2042, 7
    %vm2044 = vcmask 957440
    %v2045 = vsel %vm2044, %v2043, %v2042
    %vm2047 = vcmp.ge.s32.totalorder %v1537, 117
    %vm2048 = vcmp.lt.s32.totalorder %v1537, 145
    %vm2049 = vmand %vm2047, %vm2048
    %2050 = vst.msk [vmem:[#allocation2 + $0x8] sm:$0x3] %vm2049, %v2045
    %v2053 = vunpack.c.l.s4 1966171168
    %v2054 = vunpack.c.0.s8 %v2053
    %v2055 = vlaneseq
    %v2056 = vshrl.u32 %v2055, 7
    %v2057 = vsub.s32 %v2054, %v2056
    %v2058 = vrot.slane %v1547, %v2057
    %v2060 = vunpack.c.l.s4 1966171168
    %v2061 = vunpack.c.0.s8 %v2060
    %v2062 = vlaneseq
    %v2063 = vshrl.u32 %v2062, 7
    %v2064 = vsub.s32 %v2061, %v2063
    %v2065 = vrot.slane %v2058, %v2064
    %2066 = vrot.lane.b32.xlu0 %v2065, 19
    %v2067 = vpop.permute.xlu0 %2066
    %vm2069 = vcmp.ge.s32.totalorder %v1537, 19
    %vm2070 = vcmp.lt.s32.totalorder %v1537, 47
    %vm2071 = vmand %vm2069, %vm2070
    %2072 = vst.msk [vmem:[#allocation2 + $0x9] sm:$0x1] %vm2071, %v2067
    %v2073 = vcombine.high %v2058, %v2058
    %v2075 = vunpack.c.l.s4 1966171168
    %v2076 = vunpack.c.0.s8 %v2075
    %v2077 = vlaneseq
    %v2078 = vshrl.u32 %v2077, 7
    %v2079 = vsub.s32 %v2076, %v2078
    %v2080 = vrot.slane %v2073, %v2079
    %2081 = vrot.lane.b32.xlu0 %v2080, 49
    %v2082 = vpop.permute.xlu0 %2081
    %vm2084 = vcmp.ge.s32.totalorder %v1537, 49
    %vm2085 = vcmp.lt.s32.totalorder %v1537, 77
    %vm2086 = vmand %vm2084, %vm2085
    %2087 = vst.msk [vmem:[#allocation2 + $0x9] sm:$0x1] %vm2086, %v2082
    %v2088 = vcombine.high %v2065, %v2065
    %2089 = vrot.lane.b32.xlu0 %v2088, 79
    %v2090 = vpop.permute.xlu0 %2089
    %vm2092 = vcmp.ge.s32.totalorder %v1537, 79
    %vm2093 = vcmp.lt.s32.totalorder %v1537, 107
    %vm2094 = vmand %vm2092, %vm2093
    %2095 = vst.msk [vmem:[#allocation2 + $0x9] sm:$0x1] %vm2094, %v2090
    %v2096 = vcombine.high %v2080, %v2080
    %2097 = vrot.lane.b32.xlu0 %v2096, 109
    %v2098 = vpop.permute.xlu0 %2097
    %v2099 = vrot.slane %v2098, 7
    %vm2100 = vcmask 891904
    %v2101 = vsel %vm2100, %v2099, %v2098
    %vm2103 = vcmp.ge.s32.totalorder %v1537, 109
    %vm2104 = vcmp.lt.s32.totalorder %v1537, 137
    %vm2105 = vmand %vm2103, %vm2104
    %2106 = vst.msk [vmem:[#allocation2 + $0x9] sm:$0x3] %vm2105, %v2101
    %v2107 = vcombine.high %v1547, %v1547
    %v2109 = vunpack.c.l.s4 1966171168
    %v2110 = vunpack.c.0.s8 %v2109
    %v2111 = vlaneseq
    %v2112 = vshrl.u32 %v2111, 7
    %v2113 = vsub.s32 %v2110, %v2112
    %v2114 = vrot.slane %v2107, %v2113
    %v2116 = vunpack.c.l.s4 1966171168
    %v2117 = vunpack.c.0.s8 %v2116
    %v2118 = vlaneseq
    %v2119 = vshrl.u32 %v2118, 7
    %v2120 = vsub.s32 %v2117, %v2119
    %v2121 = vrot.slane %v2114, %v2120
    %2122 = vrot.lane.b32.xlu0 %v2121, 11
    %v2123 = vpop.permute.xlu0 %2122
    %vm2125 = vcmp.ge.s32.totalorder %v1537, 11
    %vm2126 = vcmp.lt.s32.totalorder %v1537, 39
    %vm2127 = vmand %vm2125, %vm2126
    %2128 = vst.msk [vmem:[#allocation2 + $0xa] sm:$0x1] %vm2127, %v2123
    %v2129 = vcombine.high %v2114, %v2114
    %v2131 = vunpack.c.l.s4 1966171168
    %v2132 = vunpack.c.0.s8 %v2131
    %v2133 = vlaneseq
    %v2134 = vshrl.u32 %v2133, 7
    %v2135 = vsub.s32 %v2132, %v2134
    %v2136 = vrot.slane %v2129, %v2135
    %2137 = vrot.lane.b32.xlu0 %v2136, 41
    %v2138 = vpop.permute.xlu0 %2137
    %vm2140 = vcmp.ge.s32.totalorder %v1537, 41
    %vm2141 = vcmp.lt.s32.totalorder %v1537, 69
    %vm2142 = vmand %vm2140, %vm2141
    %2143 = vst.msk [vmem:[#allocation2 + $0xa] sm:$0x1] %vm2142, %v2138
    %v2144 = vcombine.high %v2121, %v2121
    %2145 = vrot.lane.b32.xlu0 %v2144, 71
    %v2146 = vpop.permute.xlu0 %2145
    %vm2148 = vcmp.ge.s32.totalorder %v1537, 71
    %vm2149 = vcmp.lt.s32.totalorder %v1537, 99
    %vm2150 = vmand %vm2148, %vm2149
    %2151 = vst.msk [vmem:[#allocation2 + $0xa] sm:$0x1] %vm2150, %v2146
    %v2152 = vcombine.high %v2136, %v2136
    %2153 = vrot.lane.b32.xlu0 %v2152, 101
    %v2154 = vpop.permute.xlu0 %2153
    %v2155 = vrot.slane %v2154, 7
    %vm2156 = vcmask 826368
    %v2157 = vsel %vm2156, %v2155, %v2154
    %vm2159 = vcmp.ge.s32.totalorder %v1537, 101
    %vm2160 = vcmp.lt.s32.totalorder %v1537, 129
    %vm2161 = vmand %vm2159, %vm2160
    %2162 = vst.msk [vmem:[#allocation2 + $0xa] sm:$0x3] %vm2161, %v2157
    %v2165 = vunpack.c.l.s4 1966171168
    %v2166 = vunpack.c.0.s8 %v2165
    %v2167 = vlaneseq
    %v2168 = vshrl.u32 %v2167, 7
    %v2169 = vsub.s32 %v2166, %v2168
    %v2170 = vrot.slane %v1548, %v2169
    %v2172 = vunpack.c.l.s4 1966171168
    %v2173 = vunpack.c.0.s8 %v2172
    %v2174 = vlaneseq
    %v2175 = vshrl.u32 %v2174, 7
    %v2176 = vsub.s32 %v2173, %v2175
    %v2177 = vrot.slane %v2170, %v2176
    %2178 = vrot.lane.b32.xlu0 %v2177, 3
    %v2179 = vpop.permute.xlu0 %2178
    %vm2181 = vcmp.ge.s32.totalorder %v1537, 3
    %vm2182 = vcmp.lt.s32.totalorder %v1537, 31
    %vm2183 = vmand %vm2181, %vm2182
    %2184 = vst.msk [vmem:[#allocation2 + $0xb] sm:$0x1] %vm2183, %v2179
    %v2185 = vcombine.high %v2170, %v2170
    %v2187 = vunpack.c.l.s4 1966171168
    %v2188 = vunpack.c.0.s8 %v2187
    %v2189 = vlaneseq
    %v2190 = vshrl.u32 %v2189, 7
    %v2191 = vsub.s32 %v2188, %v2190
    %v2192 = vrot.slane %v2185, %v2191
    %2193 = vrot.lane.b32.xlu0 %v2192, 33
    %v2194 = vpop.permute.xlu0 %2193
    %vm2196 = vcmp.ge.s32.totalorder %v1537, 33
    %vm2197 = vcmp.lt.s32.totalorder %v1537, 61
    %vm2198 = vmand %vm2196, %vm2197
    %2199 = vst.msk [vmem:[#allocation2 + $0xb] sm:$0x1] %vm2198, %v2194
    %v2200 = vcombine.high %v2177, %v2177
    %2201 = vrot.lane.b32.xlu0 %v2200, 63
    %v2202 = vpop.permute.xlu0 %2201
    %vm2204 = vcmp.ge.s32.totalorder %v1537, 63
    %vm2205 = vcmp.lt.s32.totalorder %v1537, 91
    %vm2206 = vmand %vm2204, %vm2205
    %2207 = vst.msk [vmem:[#allocation2 + $0xb] sm:$0x1] %vm2206, %v2202
    %v2208 = vcombine.high %v2192, %v2192
    %2209 = vrot.lane.b32.xlu0 %v2208, 93
    %v2210 = vpop.permute.xlu0 %2209
    %vm2212 = vcmp.ge.s32.totalorder %v1537, 93
    %vm2213 = vcmp.lt.s32.totalorder %v1537, 121
    %vm2214 = vmand %vm2212, %vm2213
    %2215 = vst.msk [vmem:[#allocation2 + $0xb] sm:$0x1] %vm2214, %v2210
    %v2216 = vcombine.high %v1548, %v1548
    %v2218 = vunpack.c.l.s4 1966171168
    %v2219 = vunpack.c.0.s8 %v2218
    %v2220 = vlaneseq
    %v2221 = vshrl.u32 %v2220, 7
    %v2222 = vsub.s32 %v2219, %v2221
    %v2223 = vrot.slane %v2216, %v2222
    %v2225 = vunpack.c.l.s4 1966171168
    %v2226 = vunpack.c.0.s8 %v2225
    %v2227 = vlaneseq
    %v2228 = vshrl.u32 %v2227, 7
    %v2229 = vsub.s32 %v2226, %v2228
    %v2230 = vrot.slane %v2223, %v2229
    %2231 = vrot.lane.b32.xlu0 %v2230, 123
    %v2232 = vpop.permute.xlu0 %2231
    %v2233 = vrot.slane %v2232, 7
    %vm2234 = vcmask 1006592
    %v2235 = vsel %vm2234, %v2233, %v2232
    %vm2237 = vcmp.ge.s32.totalorder %v1537, 123
    %vm2238 = vcmp.lt.s32.totalorder %v1537, 151
    %vm2239 = vmand %vm2237, %vm2238
    %2240 = vst.msk [vmem:[#allocation2 + $0xb] sm:$0x3] %vm2239, %v2235
    %v2241 = vcombine.high %v2223, %v2223
    %v2243 = vunpack.c.l.s4 1966171168
    %v2244 = vunpack.c.0.s8 %v2243
    %v2245 = vlaneseq
    %v2246 = vshrl.u32 %v2245, 7
    %v2247 = vsub.s32 %v2244, %v2246
    %v2248 = vrot.slane %v2241, %v2247
    %2249 = vrot.lane.b32.xlu0 %v2248, 25
    %v2250 = vpop.permute.xlu0 %2249
    %vm2252 = vcmp.ge.s32.totalorder %v1537, 25
    %vm2253 = vcmp.lt.s32.totalorder %v1537, 53
    %vm2254 = vmand %vm2252, %vm2253
    %2255 = vst.msk [vmem:[#allocation2 + $0xc] sm:$0x1] %vm2254, %v2250
    %v2256 = vcombine.high %v2230, %v2230
    %2257 = vrot.lane.b32.xlu0 %v2256, 55
    %v2258 = vpop.permute.xlu0 %2257
    %vm2260 = vcmp.ge.s32.totalorder %v1537, 55
    %vm2261 = vcmp.lt.s32.totalorder %v1537, 83
    %vm2262 = vmand %vm2260, %vm2261
    %2263 = vst.msk [vmem:[#allocation2 + $0xc] sm:$0x1] %vm2262, %v2258
    %v2264 = vcombine.high %v2248, %v2248
    %2265 = vrot.lane.b32.xlu0 %v2264, 85
    %v2266 = vpop.permute.xlu0 %2265
    %vm2268 = vcmp.ge.s32.totalorder %v1537, 85
    %vm2269 = vcmp.lt.s32.totalorder %v1537, 113
    %vm2270 = vmand %vm2268, %vm2269
    %2271 = vst.msk [vmem:[#allocation2 + $0xc] sm:$0x1] %vm2270, %v2266
    %v2274 = vunpack.c.l.s4 1966171168
    %v2275 = vunpack.c.0.s8 %v2274
    %v2276 = vlaneseq
    %v2277 = vshrl.u32 %v2276, 7
    %v2278 = vsub.s32 %v2275, %v2277
    %v2279 = vrot.slane %v1549, %v2278
    %v2281 = vunpack.c.l.s4 1966171168
    %v2282 = vunpack.c.0.s8 %v2281
    %v2283 = vlaneseq
    %v2284 = vshrl.u32 %v2283, 7
    %v2285 = vsub.s32 %v2282, %v2284
    %v2286 = vrot.slane %v2279, %v2285
    %2287 = vrot.lane.b32.xlu0 %v2286, 115
    %v2288 = vpop.permute.xlu0 %2287
    %v2289 = vrot.slane %v2288, 7
    %vm2290 = vcmask 941056
    %v2291 = vsel %vm2290, %v2289, %v2288
    %vm2293 = vcmp.ge.s32.totalorder %v1537, 115
    %vm2294 = vcmp.lt.s32.totalorder %v1537, 143
    %vm2295 = vmand %vm2293, %vm2294
    %2296 = vst.msk [vmem:[#allocation2 + $0xc] sm:$0x3] %vm2295, %v2291
    %v2297 = vcombine.high %v2279, %v2279
    %v2299 = vunpack.c.l.s4 1966171168
    %v2300 = vunpack.c.0.s8 %v2299
    %v2301 = vlaneseq
    %v2302 = vshrl.u32 %v2301, 7
    %v2303 = vsub.s32 %v2300, %v2302
    %v2304 = vrot.slane %v2297, %v2303
    %2305 = vrot.lane.b32.xlu0 %v2304, 17
    %v2306 = vpop.permute.xlu0 %2305
    %vm2308 = vcmp.ge.s32.totalorder %v1537, 17
    %vm2309 = vcmp.lt.s32.totalorder %v1537, 45
    %vm2310 = vmand %vm2308, %vm2309
    %2311 = vst.msk [vmem:[#allocation2 + $0xd] sm:$0x1] %vm2310, %v2306
    %v2312 = vcombine.high %v2286, %v2286
    %2313 = vrot.lane.b32.xlu0 %v2312, 47
    %v2314 = vpop.permute.xlu0 %2313
    %vm2316 = vcmp.ge.s32.totalorder %v1537, 47
    %vm2317 = vcmp.lt.s32.totalorder %v1537, 75
    %vm2318 = vmand %vm2316, %vm2317
    %2319 = vst.msk [vmem:[#allocation2 + $0xd] sm:$0x1] %vm2318, %v2314
    %v2320 = vcombine.high %v2304, %v2304
    %2321 = vrot.lane.b32.xlu0 %v2320, 77
    %v2322 = vpop.permute.xlu0 %2321
    %vm2324 = vcmp.ge.s32.totalorder %v1537, 77
    %vm2325 = vcmp.lt.s32.totalorder %v1537, 105
    %vm2326 = vmand %vm2324, %vm2325
    %2327 = vst.msk [vmem:[#allocation2 + $0xd] sm:$0x1] %vm2326, %v2322
    %v2328 = vld [vmem:[#allocation2] sm:$0xff]
    %v2329 = vld [vmem:[#allocation2 + $0x8] sm:$0x7f]
    %2330 = vst [vmem:[#allocation3] ss:$8 sm:$0xf] %v2328
    %2331 = vst [vmem:[#allocation3] ss:$8 sm:$0xf0] %v2328
    %vm2332 = vcmp.lt.s32.totalorder %v1537, 714
    %vm2333 = vmand %vm1538, %vm2332
    %s2334 = scalar_lea.vmem [#allocation3], 64
    %2335 = vst.msk [vmem:[%s2334] ss:$8 sm:$0xf] %vm2333, %v2329
    %2336 = vst.msk [vmem:[%s2334] ss:$8 sm:$0x30] %vm2333, %v2329
    %2339 = vrot.lane.b32.xlu0 %v2328, 127
    %v2340 = vpop.permute.xlu0 %2339
    %2341 = vrot.lane.b32.xlu0 %v2329, 127
    %v2342 = vpop.permute.xlu0 %2341
    %v2343 = vrot.slane %v2340, 1
    %v2344 = vrot.slane %v2342, 1
    %vm2345 = vcmask 1046528
    %v2346 = vsel %vm2345, %v2343, %v2344
    %v2347 = vsel %vm1789, %v2340, %v2346
    %v2348 = vsel %vm1789, %v2342, %v2344
    %s2351 = scalar_lea.vmem [#allocation3], 1
    %2352 = vst [vmem:[%s2351] ss:$8 sm:$0xf] %v2347
    %2353 = vst [vmem:[%s2351] ss:$8 sm:$0xf0] %v2347
    %s2354 = scalar_lea.vmem [#allocation3], 65
    %2355 = vst.msk [vmem:[%s2354] ss:$8 sm:$0xf] %vm2333, %v2348
    %2356 = vst.msk [vmem:[%s2354] ss:$8 sm:$0x30] %vm2333, %v2348
    %2357 = vrot.lane.b32.xlu0 %v2328, 126
    %v2358 = vpop.permute.xlu0 %2357
    %2359 = vrot.lane.b32.xlu0 %v2329, 126
    %v2360 = vpop.permute.xlu0 %2359
    %v2361 = vrot.slane %v2358, 1
    %v2362 = vrot.slane %v2360, 1
    %v2363 = vsel %vm2345, %v2361, %v2362
    %vm2364 = vcmask 1031168
    %v2365 = vsel %vm2364, %v2358, %v2363
    %v2366 = vsel %vm2364, %v2360, %v2362
    %s2369 = scalar_lea.vmem [#allocation3], 2
    %2370 = vst [vmem:[%s2369] ss:$8 sm:$0xf] %v2365
    %2371 = vst [vmem:[%s2369] ss:$8 sm:$0xf0] %v2365
    %s2372 = scalar_lea.vmem [#allocation3], 66
    %2373 = vst.msk [vmem:[%s2372] ss:$8 sm:$0xf] %vm2333, %v2366
    %2374 = vst.msk [vmem:[%s2372] ss:$8 sm:$0x30] %vm2333, %v2366
    %2375 = vrot.lane.b32.xlu0 %v2328, 98
    %v2376 = vpop.permute.xlu0 %2375
    %2377 = vrot.lane.b32.xlu0 %v2329, 98
    %v2378 = vpop.permute.xlu0 %2377
    %v2379 = vrot.slane %v2376, 1
    %v2380 = vrot.slane %v2378, 1
    %v2381 = vsel %vm2345, %v2379, %v2380
    %vm2382 = vcmask 801792
    %v2383 = vsel %vm2382, %v2376, %v2381
    %v2384 = vsel %vm2382, %v2378, %v2380
    %s2387 = scalar_lea.vmem [#allocation3], 3
    %2388 = vst [vmem:[%s2387] ss:$8 sm:$0xf] %v2383
    %2389 = vst [vmem:[%s2387] ss:$8 sm:$0xf0] %v2383
    %s2390 = scalar_lea.vmem [#allocation3], 67
    %2391 = vst.msk [vmem:[%s2390] ss:$8 sm:$0xf] %vm2333, %v2384
    %2392 = vst.msk [vmem:[%s2390] ss:$8 sm:$0x30] %vm2333, %v2384
    %2393 = vrot.lane.b32.xlu0 %v2328, 97
    %v2394 = vpop.permute.xlu0 %2393
    %2395 = vrot.lane.b32.xlu0 %v2329, 97
    %v2396 = vpop.permute.xlu0 %2395
    %v2397 = vrot.slane %v2394, 1
    %v2398 = vrot.slane %v2396, 1
    %v2399 = vsel %vm2345, %v2397, %v2398
    %vm2400 = vcmask 793600
    %v2401 = vsel %vm2400, %v2394, %v2399
    %v2402 = vsel %vm2400, %v2396, %v2398
    %s2405 = scalar_lea.vmem [#allocation3], 4
    %2406 = vst [vmem:[%s2405] ss:$8 sm:$0xf] %v2401
    %2407 = vst [vmem:[%s2405] ss:$8 sm:$0xf0] %v2401
    %s2408 = scalar_lea.vmem [#allocation3], 68
    %2409 = vst.msk [vmem:[%s2408] ss:$8 sm:$0xf] %vm2333, %v2402
    %2410 = vst.msk [vmem:[%s2408] ss:$8 sm:$0x30] %vm2333, %v2402
    %2411 = vrot.lane.b32.xlu0 %v2328, 96
    %v2412 = vpop.permute.xlu0 %2411
    %2413 = vrot.lane.b32.xlu0 %v2329, 96
    %v2414 = vpop.permute.xlu0 %2413
    %v2415 = vrot.slane %v2412, 1
    %v2416 = vrot.slane %v2414, 1
    %v2417 = vsel %vm2345, %v2415, %v2416
    %vm2418 = vcmask 785408
    %v2419 = vsel %vm2418, %v2412, %v2417
    %v2420 = vsel %vm2418, %v2414, %v2416
    %s2423 = scalar_lea.vmem [#allocation3], 5
    %2424 = vst [vmem:[%s2423] ss:$8 sm:$0xf] %v2419
    %2425 = vst [vmem:[%s2423] ss:$8 sm:$0xf0] %v2419
    %s2426 = scalar_lea.vmem [#allocation3], 69
    %2427 = vst.msk [vmem:[%s2426] ss:$8 sm:$0xf] %vm2333, %v2420
    %2428 = vst.msk [vmem:[%s2426] ss:$8 sm:$0x30] %vm2333, %v2420
    %2429 = vrot.lane.b32.xlu0 %v2328, 68
    %v2430 = vpop.permute.xlu0 %2429
    %2431 = vrot.lane.b32.xlu0 %v2329, 68
    %v2432 = vpop.permute.xlu0 %2431
    %v2433 = vrot.slane %v2430, 1
    %v2434 = vrot.slane %v2432, 1
    %v2435 = vsel %vm2345, %v2433, %v2434
    %vm2436 = vcmask 556032
    %v2437 = vsel %vm2436, %v2430, %v2435
    %v2438 = vsel %vm2436, %v2432, %v2434
    %s2441 = scalar_lea.vmem [#allocation3], 6
    %2442 = vst [vmem:[%s2441] ss:$8 sm:$0xf] %v2437
    %2443 = vst [vmem:[%s2441] ss:$8 sm:$0xf0] %v2437
    %s2444 = scalar_lea.vmem [#allocation3], 70
    %2445 = vst.msk [vmem:[%s2444] ss:$8 sm:$0xf] %vm2333, %v2438
    %2446 = vst.msk [vmem:[%s2444] ss:$8 sm:$0x30] %vm2333, %v2438
    %2447 = vrot.lane.b32.xlu0 %v2328, 67
    %v2448 = vpop.permute.xlu0 %2447
    %2449 = vrot.lane.b32.xlu0 %v2329, 67
    %v2450 = vpop.permute.xlu0 %2449
    %v2451 = vrot.slane %v2448, 1
    %v2452 = vrot.slane %v2450, 1
    %v2453 = vsel %vm2345, %v2451, %v2452
    %vm2454 = vcmask 547840
    %v2455 = vsel %vm2454, %v2448, %v2453
    %v2456 = vsel %vm2454, %v2450, %v2452
    %s2459 = scalar_lea.vmem [#allocation3], 7
    %2460 = vst [vmem:[%s2459] ss:$8 sm:$0xf] %v2455
    %2461 = vst [vmem:[%s2459] ss:$8 sm:$0xf0] %v2455
    %s2462 = scalar_lea.vmem [#allocation3], 71
    %2463 = vst.msk [vmem:[%s2462] ss:$8 sm:$0xf] %vm2333, %v2456
    %2464 = vst.msk [vmem:[%s2462] ss:$8 sm:$0x30] %vm2333, %v2456
    %2465 = vrot.lane.b32.xlu0 %v2328, 66
    %v2466 = vpop.permute.xlu0 %2465
    %2467 = vrot.lane.b32.xlu0 %v2329, 66
    %v2468 = vpop.permute.xlu0 %2467
    %v2469 = vrot.slane %v2466, 1
    %v2470 = vrot.slane %v2468, 1
    %v2471 = vsel %vm2345, %v2469, %v2470
    %vm2472 = vcmask 539648
    %v2473 = vsel %vm2472, %v2466, %v2471
    %v2474 = vsel %vm2472, %v2468, %v2470
    %s2477 = scalar_lea.vmem [#allocation3], 112
    %2478 = vst [vmem:[%s2477] ss:$8 sm:$0xf] %v2473
    %2479 = vst [vmem:[%s2477] ss:$8 sm:$0xf0] %v2473
    %s2480 = scalar_lea.vmem [#allocation3], 176
    %2481 = vst.msk [vmem:[%s2480] ss:$8 sm:$0xf] %vm2333, %v2474
    %2482 = vst.msk [vmem:[%s2480] ss:$8 sm:$0x30] %vm2333, %v2474
    %v2483 = vld [vmem:[#allocation10] sm:$0xff]
    %v2484 = vld [vmem:[#allocation10 + $0x8] sm:$0xff]
    %v2485 = vld [vmem:[#allocation3] sm:$0xff]
    %v2486 = vld [vmem:[#allocation3 + $0x8] sm:$0xff]
    %v2487 = vld [vmem:[#allocation3 + $0x10] sm:$0xff]
    %v2488 = vld [vmem:[#allocation3 + $0x18] sm:$0xff]
    %v2489 = vld [vmem:[#allocation3 + $0x20] sm:$0xff]
    %v2490 = vld [vmem:[#allocation3 + $0x28] sm:$0xff]
    %v2491 = vld [vmem:[#allocation3 + $0x30] sm:$0xff]
    %v2492 = vld [vmem:[#allocation3 + $0x38] sm:$0xff]
    %v2493 = vld [vmem:[#allocation3 + $0x40] sm:$0xff]
    %v2494 = vld [vmem:[#allocation3 + $0x48] sm:$0xff]
    %v2495 = vld [vmem:[#allocation3 + $0x50] sm:$0xff]
    %v2496 = vld [vmem:[#allocation3 + $0x58] sm:$0xff]
    %v2497 = vld [vmem:[#allocation3 + $0x60] sm:$0xff]
    %v2498 = vld [vmem:[#allocation3 + $0x68] sm:$0xff]
    %v2499 = vld [vmem:[#allocation3 + $0x70] sm:$0x1]
    %v2500 = vld [vmem:[#allocation3 + $0x78] sm:$0x1]
    %v2501 = vld [vmem:[#allocation3 + $0x80] sm:$0x1]
    %v2502 = vld [vmem:[#allocation3 + $0x88] sm:$0x1]
    %v2503 = vld [vmem:[#allocation3 + $0x90] sm:$0x1]
    %v2504 = vld [vmem:[#allocation3 + $0x98] sm:$0x1]
    %v2505 = vld [vmem:[#allocation3 + $0xa0] sm:$0x1]
    %v2506 = vld [vmem:[#allocation3 + $0xa8] sm:$0x1]
    %v2507 = vld [vmem:[#allocation3 + $0xb0] sm:$0x1]
    %v2508 = vld [vmem:[#allocation3 + $0xb8] sm:$0x1]
    %v2509 = vld [vmem:[#allocation3 + $0xc0] sm:$0x1]
    %v2510 = vld [vmem:[#allocation3 + $0xc8] sm:$0x1]
    %v2511 = vld [vmem:[#allocation3 + $0xd0] sm:$0x1]
    %v2512 = vld [vmem:[#allocation3 + $0xd8] sm:$0x1]
    %v2513 = vld [vmem:[%s2] sm:$0xff]
    %v2514 = vld [vmem:[%s2 + $0x8] sm:$0xff]
    %2516 = vset.pattern.permute.xlu0 0
    %2517 = vperm.xlu0 %2516, %v2513
    %v2518 = vpop.permute.xlu0 %2517
    %2521 = vset.pattern.permute.xlu0 0
    %2522 = vperm.xlu0 %2521, %v2514
    %v2523 = vpop.permute.xlu0 %2522
    %vm2525 = vcmask 72704
    %v2527 = vsel %vm2525, %v2483, 0
    %v2530 = vsel %vm2525, %v2484, 0
    %vm2532 = vcmask 1040384
    %v2534 = vsel %vm2532, %v2499, 0
    %v2537 = vsel %vm2532, %v2500, 0
    %v2540 = vsel %vm2532, %v2501, 0
    %v2543 = vsel %vm2532, %v2502, 0
    %v2546 = vsel %vm2532, %v2503, 0
    %v2549 = vsel %vm2532, %v2504, 0
    %v2552 = vsel %vm2532, %v2505, 0
    %v2555 = vsel %vm2532, %v2506, 0
    %v2558 = vsel %vm2532, %v2507, 0
    %v2561 = vsel %vm2532, %v2508, 0
    %v2564 = vsel %vm2532, %v2509, 0
    %v2567 = vsel %vm2532, %v2510, 0
    %v2570 = vsel %vm2532, %v2511, 0
    %v2573 = vsel %vm2532, %v2512, 0
    %2575 = vmatprep.subr.mxu0 %v2486
    %2576 = vmatpush1.msra.mxu0 %v2485
    %2577 = vmatprep.subr.mxu0 %v2537
    %2578 = vmatpush1.msra.mxu0 %v2534
    %2579 = vmatprep.subr.mxu0 0.0
    %2580 = vmatpush1.msra.mxu0 0.0
    %2581 = vmatprep.subr.mxu0 0.0
    %2582 = vmatpush1.msra.mxu0 0.0
    %2583 = vmatprep.subr.mxu0 0.0
    %2584 = vmatpush1.msra.mxu0 0.0
    %2585 = vmatprep.subr.mxu0 0.0
    %2586 = vmatpush1.msra.mxu0 0.0
    %2587 = vmatprep.subr.mxu0 0.0
    %2588 = vmatpush1.msra.mxu0 0.0
    %2589 = vmatprep.subr.mxu0 0.0
    %2590 = vmatpush1.msra.mxu0 0.0
    %2591 = vmatprep.subr.mxu0 0.0
    %2592 = vmatpush1.msra.mxu0 0.0
    %2593 = vmatprep.subr.mxu0 0.0
    %2594 = vmatpush1.msra.mxu0 0.0
    %2595 = vmatprep.subr.mxu0 0.0
    %2596 = vmatpush1.msra.mxu0 0.0
    %2597 = vmatprep.subr.mxu0 0.0
    %2598 = vmatpush1.msra.mxu0 0.0
    %2599 = vmatprep.subr.mxu0 0.0
    %2600 = vmatpush1.msra.mxu0 0.0
    %2601 = vmatprep.subr.mxu0 0.0
    %2602 = vmatpush1.msra.mxu0 0.0
    %2603 = vmatprep.subr.mxu0 0.0
    %2604 = vmatpush1.msra.mxu0 0.0
    %2605 = vmatprep.subr.mxu0 0.0
    %2606 = vmatpush1.msra.mxu0 0.0
    %2607 = vmatprep.subr.mxu0 0.0
    %2608 = vmatpush1.msra.mxu0 0.0
    %2609 = vmatprep.subr.mxu0 0.0
    %2610 = vmatpush1.msra.mxu0 0.0
    %2611 = vmatprep.subr.mxu0 0.0
    %2612 = vmatpush1.msra.mxu0 0.0
    %2613 = vmatprep.subr.mxu0 0.0
    %2614 = vmatpush1.msra.mxu0 0.0
    %2615 = vmatprep.subr.mxu0 0.0
    %2616 = vmatpush1.msra.mxu0 0.0
    %2617 = vmatprep.subr.mxu0 0.0
    %2618 = vmatpush1.msra.mxu0 0.0
    %2619 = vmatprep.subr.mxu0 0.0
    %2620 = vmatpush1.msra.mxu0 0.0
    %2621 = vmatprep.subr.mxu0 0.0
    %2622 = vmatpush1.msra.mxu0 0.0
    %2623 = vmatprep.subr.mxu0 0.0
    %2624 = vmatpush1.msra.mxu0 0.0
    %2625 = vmatprep.subr.mxu0 0.0
    %2626 = vmatpush1.msra.mxu0 0.0
    %2627 = vmatprep.subr.mxu0 0.0
    %2628 = vmatpush1.msra.mxu0 0.0
    %2629 = vmatprep.subr.mxu0 0.0
    %2630 = vmatpush1.msra.mxu0 0.0
    %2631 = vmatprep.subr.mxu0 0.0
    %2632 = vmatpush1.msra.mxu0 0.0
    %2633 = vmatprep.subr.mxu0 0.0
    %2634 = vmatpush1.msra.mxu0 0.0
    %2635 = vmatprep.subr.mxu0 0.0
    %2636 = vmatpush1.msra.mxu0 0.0
    %2637 = vmatprep.subr.mxu0 0.0
    %2638 = vmatpush1.msra.mxu0 0.0
    %2639 = vmatprep.mubr.f32.mxu0 0.0
    %2640 = vmatmul.mubr.f32.gmra.mrb[0].mxu0 %v2527
    %v2641 = vpop.f32.mrb[0].mxu0
    %v2642 = vadd.f32 %v2518, %v2641
    %v2643 = vpop.f32.mrb[0].mxu0
    %v2644 = vadd.f32 %v2518, %v2643
    %2645 = vmatprep.mubr.f32.mxu0 0.0
    %2646 = vmatmul.mubr.f32.gmra.mrb[0].mxu0 %v2530
    %v2647 = vpop.f32.mrb[0].mxu0
    %v2648 = vadd.f32 %v2523, %v2647
    %v2649 = vpop.f32.mrb[0].mxu0
    %v2650 = vadd.f32 %v2523, %v2649
    %2651 = vdwg.mxu0
    %2652 = vmatprep.subr.mxu0 %v2488
    %2653 = vmatpush1.msra.mxu0 %v2487
    %2654 = vmatprep.subr.mxu0 %v2543
    %2655 = vmatpush1.msra.mxu0 %v2540
    %2656 = vmatprep.subr.mxu0 0.0
    %2657 = vmatpush1.msra.mxu0 0.0
    %2658 = vmatprep.subr.mxu0 0.0
    %2659 = vmatpush1.msra.mxu0 0.0
    %2660 = vmatprep.subr.mxu0 0.0
    %2661 = vmatpush1.msra.mxu0 0.0
    %2662 = vmatprep.subr.mxu0 0.0
    %2663 = vmatpush1.msra.mxu0 0.0
    %2664 = vmatprep.subr.mxu0 0.0
    %2665 = vmatpush1.msra.mxu0 0.0
    %2666 = vmatprep.subr.mxu0 0.0
    %2667 = vmatpush1.msra.mxu0 0.0
    %2668 = vmatprep.subr.mxu0 0.0
    %2669 = vmatpush1.msra.mxu0 0.0
    %2670 = vmatprep.subr.mxu0 0.0
    %2671 = vmatpush1.msra.mxu0 0.0
    %2672 = vmatprep.subr.mxu0 0.0
    %2673 = vmatpush1.msra.mxu0 0.0
    %2674 = vmatprep.subr.mxu0 0.0
    %2675 = vmatpush1.msra.mxu0 0.0
    %2676 = vmatprep.subr.mxu0 0.0
    %2677 = vmatpush1.msra.mxu0 0.0
    %2678 = vmatprep.subr.mxu0 0.0
    %2679 = vmatpush1.msra.mxu0 0.0
    %2680 = vmatprep.subr.mxu0 0.0
    %2681 = vmatpush1.msra.mxu0 0.0
    %2682 = vmatprep.subr.mxu0 0.0
    %2683 = vmatpush1.msra.mxu0 0.0
    %2684 = vmatprep.subr.mxu0 0.0
    %2685 = vmatpush1.msra.mxu0 0.0
    %2686 = vmatprep.subr.mxu0 0.0
    %2687 = vmatpush1.msra.mxu0 0.0
    %2688 = vmatprep.subr.mxu0 0.0
    %2689 = vmatpush1.msra.mxu0 0.0
    %2690 = vmatprep.subr.mxu0 0.0
    %2691 = vmatpush1.msra.mxu0 0.0
    %2692 = vmatprep.subr.mxu0 0.0
    %2693 = vmatpush1.msra.mxu0 0.0
    %2694 = vmatprep.subr.mxu0 0.0
    %2695 = vmatpush1.msra.mxu0 0.0
    %2696 = vmatprep.subr.mxu0 0.0
    %2697 = vmatpush1.msra.mxu0 0.0
    %2698 = vmatprep.subr.mxu0 0.0
    %2699 = vmatpush1.msra.mxu0 0.0
    %2700 = vmatprep.subr.mxu0 0.0
    %2701 = vmatpush1.msra.mxu0 0.0
    %2702 = vmatprep.subr.mxu0 0.0
    %2703 = vmatpush1.msra.mxu0 0.0
    %2704 = vmatprep.subr.mxu0 0.0
    %2705 = vmatpush1.msra.mxu0 0.0
    %2706 = vmatprep.subr.mxu0 0.0
    %2707 = vmatpush1.msra.mxu0 0.0
    %2708 = vmatprep.subr.mxu0 0.0
    %2709 = vmatpush1.msra.mxu0 0.0
    %2710 = vmatprep.subr.mxu0 0.0
    %2711 = vmatpush1.msra.mxu0 0.0
    %2712 = vmatprep.subr.mxu0 0.0
    %2713 = vmatpush1.msra.mxu0 0.0
    %2714 = vmatprep.subr.mxu0 0.0
    %2715 = vmatpush1.msra.mxu0 0.0
    %2716 = vmatprep.mubr.f32.mxu0 0.0
    %2717 = vmatmul.mubr.f32.gmra.mrb[0].mxu0 %v2527
    %v2718 = vpop.f32.mrb[0].mxu0
    %v2719 = vadd.f32 %v2518, %v2718
    %v2720 = vpop.f32.mrb[0].mxu0
    %v2721 = vadd.f32 %v2518, %v2720
    %2722 = vmatprep.mubr.f32.mxu0 0.0
    %2723 = vmatmul.mubr.f32.gmra.mrb[0].mxu0 %v2530
    %v2724 = vpop.f32.mrb[0].mxu0
    %v2725 = vadd.f32 %v2523, %v2724
    %v2726 = vpop.f32.mrb[0].mxu0
    %v2727 = vadd.f32 %v2523, %v2726
    %2728 = vdwg.mxu0
    %2729 = vmatprep.subr.mxu0 %v2490
    %2730 = vmatpush1.msra.mxu0 %v2489
    %2731 = vmatprep.subr.mxu0 %v2549
    %2732 = vmatpush1.msra.mxu0 %v2546
    %2733 = vmatprep.subr.mxu0 0.0
    %2734 = vmatpush1.msra.mxu0 0.0
    %2735 = vmatprep.subr.mxu0 0.0
    %2736 = vmatpush1.msra.mxu0 0.0
    %2737 = vmatprep.subr.mxu0 0.0
    %2738 = vmatpush1.msra.mxu0 0.0
    %2739 = vmatprep.subr.mxu0 0.0
    %2740 = vmatpush1.msra.mxu0 0.0
    %2741 = vmatprep.subr.mxu0 0.0
    %2742 = vmatpush1.msra.mxu0 0.0
    %2743 = vmatprep.subr.mxu0 0.0
    %2744 = vmatpush1.msra.mxu0 0.0
    %2745 = vmatprep.subr.mxu0 0.0
    %2746 = vmatpush1.msra.mxu0 0.0
    %2747 = vmatprep.subr.mxu0 0.0
    %2748 = vmatpush1.msra.mxu0 0.0
    %2749 = vmatprep.subr.mxu0 0.0
    %2750 = vmatpush1.msra.mxu0 0.0
    %2751 = vmatprep.subr.mxu0 0.0
    %2752 = vmatpush1.msra.mxu0 0.0
    %2753 = vmatprep.subr.mxu0 0.0
    %2754 = vmatpush1.msra.mxu0 0.0
    %2755 = vmatprep.subr.mxu0 0.0
    %2756 = vmatpush1.msra.mxu0 0.0
    %2757 = vmatprep.subr.mxu0 0.0
    %2758 = vmatpush1.msra.mxu0 0.0
    %2759 = vmatprep.subr.mxu0 0.0
    %2760 = vmatpush1.msra.mxu0 0.0
    %2761 = vmatprep.subr.mxu0 0.0
    %2762 = vmatpush1.msra.mxu0 0.0
    %2763 = vmatprep.subr.mxu0 0.0
    %2764 = vmatpush1.msra.mxu0 0.0
    %2765 = vmatprep.subr.mxu0 0.0
    %2766 = vmatpush1.msra.mxu0 0.0
    %2767 = vmatprep.subr.mxu0 0.0
    %2768 = vmatpush1.msra.mxu0 0.0
    %2769 = vmatprep.subr.mxu0 0.0
    %2770 = vmatpush1.msra.mxu0 0.0
    %2771 = vmatprep.subr.mxu0 0.0
    %2772 = vmatpush1.msra.mxu0 0.0
    %2773 = vmatprep.subr.mxu0 0.0
    %2774 = vmatpush1.msra.mxu0 0.0
    %2775 = vmatprep.subr.mxu0 0.0
    %2776 = vmatpush1.msra.mxu0 0.0
    %2777 = vmatprep.subr.mxu0 0.0
    %2778 = vmatpush1.msra.mxu0 0.0
    %2779 = vmatprep.subr.mxu0 0.0
    %2780 = vmatpush1.msra.mxu0 0.0
    %2781 = vmatprep.subr.mxu0 0.0
    %2782 = vmatpush1.msra.mxu0 0.0
    %2783 = vmatprep.subr.mxu0 0.0
    %2784 = vmatpush1.msra.mxu0 0.0
    %2785 = vmatprep.subr.mxu0 0.0
    %2786 = vmatpush1.msra.mxu0 0.0
    %2787 = vmatprep.subr.mxu0 0.0
    %2788 = vmatpush1.msra.mxu0 0.0
    %2789 = vmatprep.subr.mxu0 0.0
    %2790 = vmatpush1.msra.mxu0 0.0
    %2791 = vmatprep.subr.mxu0 0.0
    %2792 = vmatpush1.msra.mxu0 0.0
    %2793 = vmatprep.mubr.f32.mxu0 0.0
    %2794 = vmatmul.mubr.f32.gmra.mrb[0].mxu0 %v2527
    %v2795 = vpop.f32.mrb[0].mxu0
    %v2796 = vadd.f32 %v2518, %v2795
    %v2797 = vpop.f32.mrb[0].mxu0
    %v2798 = vadd.f32 %v2518, %v2797
    %2799 = vmatprep.mubr.f32.mxu0 0.0
    %2800 = vmatmul.mubr.f32.gmra.mrb[0].mxu0 %v2530
    %v2801 = vpop.f32.mrb[0].mxu0
    %v2802 = vadd.f32 %v2523, %v2801
    %v2803 = vpop.f32.mrb[0].mxu0
    %v2804 = vadd.f32 %v2523, %v2803
    %2805 = vdwg.mxu0
    %2806 = vmatprep.subr.mxu0 %v2492
    %2807 = vmatpush1.msra.mxu0 %v2491
    %2808 = vmatprep.subr.mxu0 %v2555
    %2809 = vmatpush1.msra.mxu0 %v2552
    %2810 = vmatprep.subr.mxu0 0.0
    %2811 = vmatpush1.msra.mxu0 0.0
    %2812 = vmatprep.subr.mxu0 0.0
    %2813 = vmatpush1.msra.mxu0 0.0
    %2814 = vmatprep.subr.mxu0 0.0
    %2815 = vmatpush1.msra.mxu0 0.0
    %2816 = vmatprep.subr.mxu0 0.0
    %2817 = vmatpush1.msra.mxu0 0.0
    %2818 = vmatprep.subr.mxu0 0.0
    %2819 = vmatpush1.msra.mxu0 0.0
    %2820 = vmatprep.subr.mxu0 0.0
    %2821 = vmatpush1.msra.mxu0 0.0
    %2822 = vmatprep.subr.mxu0 0.0
    %2823 = vmatpush1.msra.mxu0 0.0
    %2824 = vmatprep.subr.mxu0 0.0
    %2825 = vmatpush1.msra.mxu0 0.0
    %2826 = vmatprep.subr.mxu0 0.0
    %2827 = vmatpush1.msra.mxu0 0.0
    %2828 = vmatprep.subr.mxu0 0.0
    %2829 = vmatpush1.msra.mxu0 0.0
    %2830 = vmatprep.subr.mxu0 0.0
    %2831 = vmatpush1.msra.mxu0 0.0
    %2832 = vmatprep.subr.mxu0 0.0
    %2833 = vmatpush1.msra.mxu0 0.0
    %2834 = vmatprep.subr.mxu0 0.0
    %2835 = vmatpush1.msra.mxu0 0.0
    %2836 = vmatprep.subr.mxu0 0.0
    %2837 = vmatpush1.msra.mxu0 0.0
    %2838 = vmatprep.subr.mxu0 0.0
    %2839 = vmatpush1.msra.mxu0 0.0
    %2840 = vmatprep.subr.mxu0 0.0
    %2841 = vmatpush1.msra.mxu0 0.0
    %2842 = vmatprep.subr.mxu0 0.0
    %2843 = vmatpush1.msra.mxu0 0.0
    %2844 = vmatprep.subr.mxu0 0.0
    %2845 = vmatpush1.msra.mxu0 0.0
    %2846 = vmatprep.subr.mxu0 0.0
    %2847 = vmatpush1.msra.mxu0 0.0
    %2848 = vmatprep.subr.mxu0 0.0
    %2849 = vmatpush1.msra.mxu0 0.0
    %2850 = vmatprep.subr.mxu0 0.0
    %2851 = vmatpush1.msra.mxu0 0.0
    %2852 = vmatprep.subr.mxu0 0.0
    %2853 = vmatpush1.msra.mxu0 0.0
    %2854 = vmatprep.subr.mxu0 0.0
    %2855 = vmatpush1.msra.mxu0 0.0
    %2856 = vmatprep.subr.mxu0 0.0
    %2857 = vmatpush1.msra.mxu0 0.0
    %2858 = vmatprep.subr.mxu0 0.0
    %2859 = vmatpush1.msra.mxu0 0.0
    %2860 = vmatprep.subr.mxu0 0.0
    %2861 = vmatpush1.msra.mxu0 0.0
    %2862 = vmatprep.subr.mxu0 0.0
    %2863 = vmatpush1.msra.mxu0 0.0
    %2864 = vmatprep.subr.mxu0 0.0
    %2865 = vmatpush1.msra.mxu0 0.0
    %2866 = vmatprep.subr.mxu0 0.0
    %2867 = vmatpush1.msra.mxu0 0.0
    %2868 = vmatprep.subr.mxu0 0.0
    %2869 = vmatpush1.msra.mxu0 0.0
    %2870 = vmatprep.mubr.f32.mxu0 0.0
    %2871 = vmatmul.mubr.f32.gmra.mrb[0].mxu0 %v2527
    %v2872 = vpop.f32.mrb[0].mxu0
    %v2873 = vadd.f32 %v2518, %v2872
    %v2874 = vpop.f32.mrb[0].mxu0
    %v2875 = vadd.f32 %v2518, %v2874
    %2876 = vmatprep.mubr.f32.mxu0 0.0
    %2877 = vmatmul.mubr.f32.gmra.mrb[0].mxu0 %v2530
    %v2878 = vpop.f32.mrb[0].mxu0
    %v2879 = vadd.f32 %v2523, %v2878
    %v2880 = vpop.f32.mrb[0].mxu0
    %v2881 = vadd.f32 %v2523, %v2880
    %2882 = vdwg.mxu0
    %2883 = vmatprep.subr.mxu0 %v2494
    %2884 = vmatpush1.msra.mxu0 %v2493
    %2885 = vmatprep.subr.mxu0 %v2561
    %2886 = vmatpush1.msra.mxu0 %v2558
    %2887 = vmatprep.subr.mxu0 0.0
    %2888 = vmatpush1.msra.mxu0 0.0
    %2889 = vmatprep.subr.mxu0 0.0
    %2890 = vmatpush1.msra.mxu0 0.0
    %2891 = vmatprep.subr.mxu0 0.0
    %2892 = vmatpush1.msra.mxu0 0.0
    %2893 = vmatprep.subr.mxu0 0.0
    %2894 = vmatpush1.msra.mxu0 0.0
    %2895 = vmatprep.subr.mxu0 0.0
    %2896 = vmatpush1.msra.mxu0 0.0
    %2897 = vmatprep.subr.mxu0 0.0
    %2898 = vmatpush1.msra.mxu0 0.0
    %2899 = vmatprep.subr.mxu0 0.0
    %2900 = vmatpush1.msra.mxu0 0.0
    %2901 = vmatprep.subr.mxu0 0.0
    %2902 = vmatpush1.msra.mxu0 0.0
    %2903 = vmatprep.subr.mxu0 0.0
    %2904 = vmatpush1.msra.mxu0 0.0
    %2905 = vmatprep.subr.mxu0 0.0
    %2906 = vmatpush1.msra.mxu0 0.0
    %2907 = vmatprep.subr.mxu0 0.0
    %2908 = vmatpush1.msra.mxu0 0.0
    %2909 = vmatprep.subr.mxu0 0.0
    %2910 = vmatpush1.msra.mxu0 0.0
    %2911 = vmatprep.subr.mxu0 0.0
    %2912 = vmatpush1.msra.mxu0 0.0
    %2913 = vmatprep.subr.mxu0 0.0
    %2914 = vmatpush1.msra.mxu0 0.0
    %2915 = vmatprep.subr.mxu0 0.0
    %2916 = vmatpush1.msra.mxu0 0.0
    %2917 = vmatprep.subr.mxu0 0.0
    %2918 = vmatpush1.msra.mxu0 0.0
    %2919 = vmatprep.subr.mxu0 0.0
    %2920 = vmatpush1.msra.mxu0 0.0
    %2921 = vmatprep.subr.mxu0 0.0
    %2922 = vmatpush1.msra.mxu0 0.0
    %2923 = vmatprep.subr.mxu0 0.0
    %2924 = vmatpush1.msra.mxu0 0.0
    %2925 = vmatprep.subr.mxu0 0.0
    %2926 = vmatpush1.msra.mxu0 0.0
    %2927 = vmatprep.subr.mxu0 0.0
    %2928 = vmatpush1.msra.mxu0 0.0
    %2929 = vmatprep.subr.mxu0 0.0
    %2930 = vmatpush1.msra.mxu0 0.0
    %2931 = vmatprep.subr.mxu0 0.0
    %2932 = vmatpush1.msra.mxu0 0.0
    %2933 = vmatprep.subr.mxu0 0.0
    %2934 = vmatpush1.msra.mxu0 0.0
    %2935 = vmatprep.subr.mxu0 0.0
    %2936 = vmatpush1.msra.mxu0 0.0
    %2937 = vmatprep.subr.mxu0 0.0
    %2938 = vmatpush1.msra.mxu0 0.0
    %2939 = vmatprep.subr.mxu0 0.0
    %2940 = vmatpush1.msra.mxu0 0.0
    %2941 = vmatprep.subr.mxu0 0.0
    %2942 = vmatpush1.msra.mxu0 0.0
    %2943 = vmatprep.subr.mxu0 0.0
    %2944 = vmatpush1.msra.mxu0 0.0
    %2945 = vmatprep.subr.mxu0 0.0
    %2946 = vmatpush1.msra.mxu0 0.0
    %2947 = vmatprep.mubr.f32.mxu0 0.0
    %2948 = vmatmul.mubr.f32.gmra.mrb[0].mxu0 %v2527
    %v2949 = vpop.f32.mrb[0].mxu0
    %v2950 = vadd.f32 %v2518, %v2949
    %v2951 = vpop.f32.mrb[0].mxu0
    %v2952 = vadd.f32 %v2518, %v2951
    %2953 = vmatprep.mubr.f32.mxu0 0.0
    %2954 = vmatmul.mubr.f32.gmra.mrb[0].mxu0 %v2530
    %v2955 = vpop.f32.mrb[0].mxu0
    %v2956 = vadd.f32 %v2523, %v2955
    %v2957 = vpop.f32.mrb[0].mxu0
    %v2958 = vadd.f32 %v2523, %v2957
    %2959 = vdwg.mxu0
    %2960 = vmatprep.subr.mxu0 %v2496
    %2961 = vmatpush1.msra.mxu0 %v2495
    %2962 = vmatprep.subr.mxu0 %v2567
    %2963 = vmatpush1.msra.mxu0 %v2564
    %2964 = vmatprep.subr.mxu0 0.0
    %2965 = vmatpush1.msra.mxu0 0.0
    %2966 = vmatprep.subr.mxu0 0.0
    %2967 = vmatpush1.msra.mxu0 0.0
    %2968 = vmatprep.subr.mxu0 0.0
    %2969 = vmatpush1.msra.mxu0 0.0
    %2970 = vmatprep.subr.mxu0 0.0
    %2971 = vmatpush1.msra.mxu0 0.0
    %2972 = vmatprep.subr.mxu0 0.0
    %2973 = vmatpush1.msra.mxu0 0.0
    %2974 = vmatprep.subr.mxu0 0.0
    %2975 = vmatpush1.msra.mxu0 0.0
    %2976 = vmatprep.subr.mxu0 0.0
    %2977 = vmatpush1.msra.mxu0 0.0
    %2978 = vmatprep.subr.mxu0 0.0
    %2979 = vmatpush1.msra.mxu0 0.0
    %2980 = vmatprep.subr.mxu0 0.0
    %2981 = vmatpush1.msra.mxu0 0.0
    %2982 = vmatprep.subr.mxu0 0.0
    %2983 = vmatpush1.msra.mxu0 0.0
    %2984 = vmatprep.subr.mxu0 0.0
    %2985 = vmatpush1.msra.mxu0 0.0
    %2986 = vmatprep.subr.mxu0 0.0
    %2987 = vmatpush1.msra.mxu0 0.0
    %2988 = vmatprep.subr.mxu0 0.0
    %2989 = vmatpush1.msra.mxu0 0.0
    %2990 = vmatprep.subr.mxu0 0.0
    %2991 = vmatpush1.msra.mxu0 0.0
    %2992 = vmatprep.subr.mxu0 0.0
    %2993 = vmatpush1.msra.mxu0 0.0
    %2994 = vmatprep.subr.mxu0 0.0
    %2995 = vmatpush1.msra.mxu0 0.0
    %2996 = vmatprep.subr.mxu0 0.0
    %2997 = vmatpush1.msra.mxu0 0.0
    %2998 = vmatprep.subr.mxu0 0.0
    %2999 = vmatpush1.msra.mxu0 0.0
    %3000 = vmatprep.subr.mxu0 0.0
    %3001 = vmatpush1.msra.mxu0 0.0
    %3002 = vmatprep.subr.mxu0 0.0
    %3003 = vmatpush1.msra.mxu0 0.0
    %3004 = vmatprep.subr.mxu0 0.0
    %3005 = vmatpush1.msra.mxu0 0.0
    %3006 = vmatprep.subr.mxu0 0.0
    %3007 = vmatpush1.msra.mxu0 0.0
    %3008 = vmatprep.subr.mxu0 0.0
    %3009 = vmatpush1.msra.mxu0 0.0
    %3010 = vmatprep.subr.mxu0 0.0
    %3011 = vmatpush1.msra.mxu0 0.0
    %3012 = vmatprep.subr.mxu0 0.0
    %3013 = vmatpush1.msra.mxu0 0.0
    %3014 = vmatprep.subr.mxu0 0.0
    %3015 = vmatpush1.msra.mxu0 0.0
    %3016 = vmatprep.subr.mxu0 0.0
    %3017 = vmatpush1.msra.mxu0 0.0
    %3018 = vmatprep.subr.mxu0 0.0
    %3019 = vmatpush1.msra.mxu0 0.0
    %3020 = vmatprep.subr.mxu0 0.0
    %3021 = vmatpush1.msra.mxu0 0.0
    %3022 = vmatprep.subr.mxu0 0.0
    %3023 = vmatpush1.msra.mxu0 0.0
    %3024 = vmatprep.mubr.f32.mxu0 0.0
    %3025 = vmatmul.mubr.f32.gmra.mrb[0].mxu0 %v2527
    %v3026 = vpop.f32.mrb[0].mxu0
    %v3027 = vadd.f32 %v2518, %v3026
    %v3028 = vpop.f32.mrb[0].mxu0
    %v3029 = vadd.f32 %v2518, %v3028
    %3030 = vmatprep.mubr.f32.mxu0 0.0
    %3031 = vmatmul.mubr.f32.gmra.mrb[0].mxu0 %v2530
    %v3032 = vpop.f32.mrb[0].mxu0
    %v3033 = vadd.f32 %v2523, %v3032
    %v3034 = vpop.f32.mrb[0].mxu0
    %v3035 = vadd.f32 %v2523, %v3034
    %3036 = vdwg.mxu0
    %3037 = vmatprep.subr.mxu0 %v2498
    %3038 = vmatpush1.msra.mxu0 %v2497
    %3039 = vmatprep.subr.mxu0 %v2573
    %3040 = vmatpush1.msra.mxu0 %v2570
    %3041 = vmatprep.subr.mxu0 0.0
    %3042 = vmatpush1.msra.mxu0 0.0
    %3043 = vmatprep.subr.mxu0 0.0
    %3044 = vmatpush1.msra.mxu0 0.0
    %3045 = vmatprep.subr.mxu0 0.0
    %3046 = vmatpush1.msra.mxu0 0.0
    %3047 = vmatprep.subr.mxu0 0.0
    %3048 = vmatpush1.msra.mxu0 0.0
    %3049 = vmatprep.subr.mxu0 0.0
    %3050 = vmatpush1.msra.mxu0 0.0
    %3051 = vmatprep.subr.mxu0 0.0
    %3052 = vmatpush1.msra.mxu0 0.0
    %3053 = vmatprep.subr.mxu0 0.0
    %3054 = vmatpush1.msra.mxu0 0.0
    %3055 = vmatprep.subr.mxu0 0.0
    %3056 = vmatpush1.msra.mxu0 0.0
    %3057 = vmatprep.subr.mxu0 0.0
    %3058 = vmatpush1.msra.mxu0 0.0
    %3059 = vmatprep.subr.mxu0 0.0
    %3060 = vmatpush1.msra.mxu0 0.0
    %3061 = vmatprep.subr.mxu0 0.0
    %3062 = vmatpush1.msra.mxu0 0.0
    %3063 = vmatprep.subr.mxu0 0.0
    %3064 = vmatpush1.msra.mxu0 0.0
    %3065 = vmatprep.subr.mxu0 0.0
    %3066 = vmatpush1.msra.mxu0 0.0
    %3067 = vmatprep.subr.mxu0 0.0
    %3068 = vmatpush1.msra.mxu0 0.0
    %3069 = vmatprep.subr.mxu0 0.0
    %3070 = vmatpush1.msra.mxu0 0.0
    %3071 = vmatprep.subr.mxu0 0.0
    %3072 = vmatpush1.msra.mxu0 0.0
    %3073 = vmatprep.subr.mxu0 0.0
    %3074 = vmatpush1.msra.mxu0 0.0
    %3075 = vmatprep.subr.mxu0 0.0
    %3076 = vmatpush1.msra.mxu0 0.0
    %3077 = vmatprep.subr.mxu0 0.0
    %3078 = vmatpush1.msra.mxu0 0.0
    %3079 = vmatprep.subr.mxu0 0.0
    %3080 = vmatpush1.msra.mxu0 0.0
    %3081 = vmatprep.subr.mxu0 0.0
    %3082 = vmatpush1.msra.mxu0 0.0
    %3083 = vmatprep.subr.mxu0 0.0
    %3084 = vmatpush1.msra.mxu0 0.0
    %3085 = vmatprep.subr.mxu0 0.0
    %3086 = vmatpush1.msra.mxu0 0.0
    %3087 = vmatprep.subr.mxu0 0.0
    %3088 = vmatpush1.msra.mxu0 0.0
    %3089 = vmatprep.subr.mxu0 0.0
    %3090 = vmatpush1.msra.mxu0 0.0
    %3091 = vmatprep.subr.mxu0 0.0
    %3092 = vmatpush1.msra.mxu0 0.0
    %3093 = vmatprep.subr.mxu0 0.0
    %3094 = vmatpush1.msra.mxu0 0.0
    %3095 = vmatprep.subr.mxu0 0.0
    %3096 = vmatpush1.msra.mxu0 0.0
    %3097 = vmatprep.subr.mxu0 0.0
    %3098 = vmatpush1.msra.mxu0 0.0
    %3099 = vmatprep.subr.mxu0 0.0
    %3100 = vmatpush1.msra.mxu0 0.0
    %3101 = vmatprep.mubr.f32.mxu0 0.0
    %3102 = vmatmul.mubr.f32.gmra.mrb[0].mxu0 %v2527
    %v3103 = vpop.f32.mrb[0].mxu0
    %v3104 = vadd.f32 %v2518, %v3103
    %v3105 = vpop.f32.mrb[0].mxu0
    %v3106 = vadd.f32 %v2518, %v3105
    %3107 = vmatprep.mubr.f32.mxu0 0.0
    %3108 = vmatmul.mubr.f32.gmra.mrb[0].mxu0 %v2530
    %v3109 = vpop.f32.mrb[0].mxu0
    %v3110 = vadd.f32 %v2523, %v3109
    %v3111 = vpop.f32.mrb[0].mxu0
    %v3112 = vadd.f32 %v2523, %v3111
    %3113 = vdwg.mxu0
    %v3114 = vmax.f32 %v2642, 0.0
    %v3115 = vmax.f32 %v2644, 0.0
    %v3116 = vmax.f32 %v2719, 0.0
    %v3117 = vmax.f32 %v2721, 0.0
    %v3118 = vmax.f32 %v2796, 0.0
    %v3119 = vmax.f32 %v2798, 0.0
    %v3120 = vmax.f32 %v2873, 0.0
    %v3121 = vmax.f32 %v2875, 0.0
    %v3122 = vmax.f32 %v2950, 0.0
    %v3123 = vmax.f32 %v2952, 0.0
    %v3124 = vmax.f32 %v3027, 0.0
    %v3125 = vmax.f32 %v3029, 0.0
    %v3126 = vmax.f32 %v3104, 0.0
    %v3127 = vmax.f32 %v3106, 0.0
    %v3128 = vmax.f32 %v2648, 0.0
    %v3129 = vmax.f32 %v2650, 0.0
    %v3130 = vmax.f32 %v2725, 0.0
    %v3131 = vmax.f32 %v2727, 0.0
    %v3132 = vmax.f32 %v2802, 0.0
    %v3133 = vmax.f32 %v2804, 0.0
    %v3134 = vmax.f32 %v2879, 0.0
    %v3135 = vmax.f32 %v2881, 0.0
    %v3136 = vmax.f32 %v2956, 0.0
    %v3137 = vmax.f32 %v2958, 0.0
    %v3138 = vmax.f32 %v3033, 0.0
    %v3139 = vmax.f32 %v3035, 0.0
    %v3140 = vmax.f32 %v3110, 0.0
    %v3141 = vmax.f32 %v3112, 0.0
    %3170 = vrot.lane.b32.xlu0 %v3114, 127
    %v3171 = vpop.permute.xlu0 %3170
    %3172 = vrot.lane.b32.xlu0 %v3115, 127
    %v3173 = vpop.permute.xlu0 %3172
    %3174 = vrot.lane.b32.xlu0 %v3116, 127
    %v3175 = vpop.permute.xlu0 %3174
    %3176 = vrot.lane.b32.xlu0 %v3117, 127
    %v3177 = vpop.permute.xlu0 %3176
    %3178 = vrot.lane.b32.xlu0 %v3118, 127
    %v3179 = vpop.permute.xlu0 %3178
    %3180 = vrot.lane.b32.xlu0 %v3119, 127
    %v3181 = vpop.permute.xlu0 %3180
    %3182 = vrot.lane.b32.xlu0 %v3120, 127
    %v3183 = vpop.permute.xlu0 %3182
    %3184 = vrot.lane.b32.xlu0 %v3121, 127
    %v3185 = vpop.permute.xlu0 %3184
    %3186 = vrot.lane.b32.xlu0 %v3122, 127
    %v3187 = vpop.permute.xlu0 %3186
    %3188 = vrot.lane.b32.xlu0 %v3123, 127
    %v3189 = vpop.permute.xlu0 %3188
    %3190 = vrot.lane.b32.xlu0 %v3124, 127
    %v3191 = vpop.permute.xlu0 %3190
    %3192 = vrot.lane.b32.xlu0 %v3125, 127
    %v3193 = vpop.permute.xlu0 %3192
    %3194 = vrot.lane.b32.xlu0 %v3126, 127
    %v3195 = vpop.permute.xlu0 %3194
    %3196 = vrot.lane.b32.xlu0 %v3127, 127
    %v3197 = vpop.permute.xlu0 %3196
    %3198 = vrot.lane.b32.xlu0 %v3128, 127
    %v3199 = vpop.permute.xlu0 %3198
    %3200 = vrot.lane.b32.xlu0 %v3129, 127
    %v3201 = vpop.permute.xlu0 %3200
    %3202 = vrot.lane.b32.xlu0 %v3130, 127
    %v3203 = vpop.permute.xlu0 %3202
    %3204 = vrot.lane.b32.xlu0 %v3131, 127
    %v3205 = vpop.permute.xlu0 %3204
    %3206 = vrot.lane.b32.xlu0 %v3132, 127
    %v3207 = vpop.permute.xlu0 %3206
    %3208 = vrot.lane.b32.xlu0 %v3133, 127
    %v3209 = vpop.permute.xlu0 %3208
    %3210 = vrot.lane.b32.xlu0 %v3134, 127
    %v3211 = vpop.permute.xlu0 %3210
    %3212 = vrot.lane.b32.xlu0 %v3135, 127
    %v3213 = vpop.permute.xlu0 %3212
    %3214 = vrot.lane.b32.xlu0 %v3136, 127
    %v3215 = vpop.permute.xlu0 %3214
    %3216 = vrot.lane.b32.xlu0 %v3137, 127
    %v3217 = vpop.permute.xlu0 %3216
    %3218 = vrot.lane.b32.xlu0 %v3138, 127
    %v3219 = vpop.permute.xlu0 %3218
    %3220 = vrot.lane.b32.xlu0 %v3139, 127
    %v3221 = vpop.permute.xlu0 %3220
    %3222 = vrot.lane.b32.xlu0 %v3140, 127
    %v3223 = vpop.permute.xlu0 %3222
    %3224 = vrot.lane.b32.xlu0 %v3141, 127
    %v3225 = vpop.permute.xlu0 %3224
    %v3226 = vsel %vm1789, %v3171, %v3173
    %v3227 = vsel %vm1789, %v3173, %v3175
    %v3228 = vsel %vm1789, %v3175, %v3177
    %v3229 = vsel %vm1789, %v3177, %v3179
    %v3230 = vsel %vm1789, %v3179, %v3181
    %v3231 = vsel %vm1789, %v3181, %v3183
    %v3232 = vsel %vm1789, %v3183, %v3185
    %v3233 = vsel %vm1789, %v3185, %v3187
    %v3234 = vsel %vm1789, %v3187, %v3189
    %v3235 = vsel %vm1789, %v3189, %v3191
    %v3236 = vsel %vm1789, %v3191, %v3193
    %v3237 = vsel %vm1789, %v3193, %v3195
    %v3238 = vsel %vm1789, %v3195, %v3197
    %v3239 = vsel %vm1789, %v3199, %v3201
    %v3240 = vsel %vm1789, %v3201, %v3203
    %v3241 = vsel %vm1789, %v3203, %v3205
    %v3242 = vsel %vm1789, %v3205, %v3207
    %v3243 = vsel %vm1789, %v3207, %v3209
    %v3244 = vsel %vm1789, %v3209, %v3211
    %v3245 = vsel %vm1789, %v3211, %v3213
    %v3246 = vsel %vm1789, %v3213, %v3215
    %v3247 = vsel %vm1789, %v3215, %v3217
    %v3248 = vsel %vm1789, %v3217, %v3219
    %v3249 = vsel %vm1789, %v3219, %v3221
    %v3250 = vsel %vm1789, %v3221, %v3223
    %v3251 = vsel %vm1789, %v3223, %v3225
    %v3280 = vmax.f32 %v3114, %v3226
    %v3281 = vmax.f32 %v3115, %v3227
    %v3282 = vmax.f32 %v3116, %v3228
    %v3283 = vmax.f32 %v3117, %v3229
    %v3284 = vmax.f32 %v3118, %v3230
    %v3285 = vmax.f32 %v3119, %v3231
    %v3286 = vmax.f32 %v3120, %v3232
    %v3287 = vmax.f32 %v3121, %v3233
    %v3288 = vmax.f32 %v3122, %v3234
    %v3289 = vmax.f32 %v3123, %v3235
    %v3290 = vmax.f32 %v3124, %v3236
    %v3291 = vmax.f32 %v3125, %v3237
    %v3292 = vmax.f32 %v3126, %v3238
    %v3293 = vmax.f32 %v3127, %v3197
    %v3294 = vmax.f32 %v3128, %v3239
    %v3295 = vmax.f32 %v3129, %v3240
    %v3296 = vmax.f32 %v3130, %v3241
    %v3297 = vmax.f32 %v3131, %v3242
    %v3298 = vmax.f32 %v3132, %v3243
    %v3299 = vmax.f32 %v3133, %v3244
    %v3300 = vmax.f32 %v3134, %v3245
    %v3301 = vmax.f32 %v3135, %v3246
    %v3302 = vmax.f32 %v3136, %v3247
    %v3303 = vmax.f32 %v3137, %v3248
    %v3304 = vmax.f32 %v3138, %v3249
    %v3305 = vmax.f32 %v3139, %v3250
    %v3306 = vmax.f32 %v3140, %v3251
    %v3307 = vmax.f32 %v3141, %v3225
    %3336 = vrot.lane.b32.xlu0 %v3280, 98
    %v3337 = vpop.permute.xlu0 %3336
    %3338 = vrot.lane.b32.xlu0 %v3281, 98
    %v3339 = vpop.permute.xlu0 %3338
    %3340 = vrot.lane.b32.xlu0 %v3282, 98
    %v3341 = vpop.permute.xlu0 %3340
    %3342 = vrot.lane.b32.xlu0 %v3283, 98
    %v3343 = vpop.permute.xlu0 %3342
    %3344 = vrot.lane.b32.xlu0 %v3284, 98
    %v3345 = vpop.permute.xlu0 %3344
    %3346 = vrot.lane.b32.xlu0 %v3285, 98
    %v3347 = vpop.permute.xlu0 %3346
    %3348 = vrot.lane.b32.xlu0 %v3286, 98
    %v3349 = vpop.permute.xlu0 %3348
    %3350 = vrot.lane.b32.xlu0 %v3287, 98
    %v3351 = vpop.permute.xlu0 %3350
    %3352 = vrot.lane.b32.xlu0 %v3288, 98
    %v3353 = vpop.permute.xlu0 %3352
    %3354 = vrot.lane.b32.xlu0 %v3289, 98
    %v3355 = vpop.permute.xlu0 %3354
    %3356 = vrot.lane.b32.xlu0 %v3290, 98
    %v3357 = vpop.permute.xlu0 %3356
    %3358 = vrot.lane.b32.xlu0 %v3291, 98
    %v3359 = vpop.permute.xlu0 %3358
    %3360 = vrot.lane.b32.xlu0 %v3292, 98
    %v3361 = vpop.permute.xlu0 %3360
    %3362 = vrot.lane.b32.xlu0 %v3293, 98
    %v3363 = vpop.permute.xlu0 %3362
    %3364 = vrot.lane.b32.xlu0 %v3294, 98
    %v3365 = vpop.permute.xlu0 %3364
    %3366 = vrot.lane.b32.xlu0 %v3295, 98
    %v3367 = vpop.permute.xlu0 %3366
    %3368 = vrot.lane.b32.xlu0 %v3296, 98
    %v3369 = vpop.permute.xlu0 %3368
    %3370 = vrot.lane.b32.xlu0 %v3297, 98
    %v3371 = vpop.permute.xlu0 %3370
    %3372 = vrot.lane.b32.xlu0 %v3298, 98
    %v3373 = vpop.permute.xlu0 %3372
    %3374 = vrot.lane.b32.xlu0 %v3299, 98
    %v3375 = vpop.permute.xlu0 %3374
    %3376 = vrot.lane.b32.xlu0 %v3300, 98
    %v3377 = vpop.permute.xlu0 %3376
    %3378 = vrot.lane.b32.xlu0 %v3301, 98
    %v3379 = vpop.permute.xlu0 %3378
    %3380 = vrot.lane.b32.xlu0 %v3302, 98
    %v3381 = vpop.permute.xlu0 %3380
    %3382 = vrot.lane.b32.xlu0 %v3303, 98
    %v3383 = vpop.permute.xlu0 %3382
    %3384 = vrot.lane.b32.xlu0 %v3304, 98
    %v3385 = vpop.permute.xlu0 %3384
    %3386 = vrot.lane.b32.xlu0 %v3305, 98
    %v3387 = vpop.permute.xlu0 %3386
    %3388 = vrot.lane.b32.xlu0 %v3306, 98
    %v3389 = vpop.permute.xlu0 %3388
    %3390 = vrot.lane.b32.xlu0 %v3307, 98
    %v3391 = vpop.permute.xlu0 %3390
    %v3392 = vsel %vm2382, %v3337, %v3339
    %v3393 = vsel %vm2382, %v3339, %v3341
    %v3394 = vsel %vm2382, %v3341, %v3343
    %v3395 = vsel %vm2382, %v3343, %v3345
    %v3396 = vsel %vm2382, %v3345, %v3347
    %v3397 = vsel %vm2382, %v3347, %v3349
    %v3398 = vsel %vm2382, %v3349, %v3351
    %v3399 = vsel %vm2382, %v3351, %v3353
    %v3400 = vsel %vm2382, %v3353, %v3355
    %v3401 = vsel %vm2382, %v3355, %v3357
    %v3402 = vsel %vm2382, %v3357, %v3359
    %v3403 = vsel %vm2382, %v3359, %v3361
    %v3404 = vsel %vm2382, %v3361, %v3363
    %v3405 = vsel %vm2382, %v3365, %v3367
    %v3406 = vsel %vm2382, %v3367, %v3369
    %v3407 = vsel %vm2382, %v3369, %v3371
    %v3408 = vsel %vm2382, %v3371, %v3373
    %v3409 = vsel %vm2382, %v3373, %v3375
    %v3410 = vsel %vm2382, %v3375, %v3377
    %v3411 = vsel %vm2382, %v3377, %v3379
    %v3412 = vsel %vm2382, %v3379, %v3381
    %v3413 = vsel %vm2382, %v3381, %v3383
    %v3414 = vsel %vm2382, %v3383, %v3385
    %v3415 = vsel %vm2382, %v3385, %v3387
    %v3416 = vsel %vm2382, %v3387, %v3389
    %v3417 = vsel %vm2382, %v3389, %v3391
    %v3446 = vmax.f32 %v3280, %v3392
    %v3447 = vmax.f32 %v3281, %v3393
    %v3448 = vmax.f32 %v3282, %v3394
    %v3449 = vmax.f32 %v3283, %v3395
    %v3450 = vmax.f32 %v3284, %v3396
    %v3451 = vmax.f32 %v3285, %v3397
    %v3452 = vmax.f32 %v3286, %v3398
    %v3453 = vmax.f32 %v3287, %v3399
    %v3454 = vmax.f32 %v3288, %v3400
    %v3455 = vmax.f32 %v3289, %v3401
    %v3456 = vmax.f32 %v3290, %v3402
    %v3457 = vmax.f32 %v3291, %v3403
    %v3458 = vmax.f32 %v3292, %v3404
    %v3459 = vmax.f32 %v3293, %v3363
    %v3460 = vmax.f32 %v3294, %v3405
    %v3461 = vmax.f32 %v3295, %v3406
    %v3462 = vmax.f32 %v3296, %v3407
    %v3463 = vmax.f32 %v3297, %v3408
    %v3464 = vmax.f32 %v3298, %v3409
    %v3465 = vmax.f32 %v3299, %v3410
    %v3466 = vmax.f32 %v3300, %v3411
    %v3467 = vmax.f32 %v3301, %v3412
    %v3468 = vmax.f32 %v3302, %v3413
    %v3469 = vmax.f32 %v3303, %v3414
    %v3470 = vmax.f32 %v3304, %v3415
    %v3471 = vmax.f32 %v3305, %v3416
    %v3472 = vmax.f32 %v3306, %v3417
    %v3473 = vmax.f32 %v3307, %v3391
    %vm3474 = vcmask 318464
    %v3476 = vsel %vm3474, %v3452, 0
    %v3479 = vsel %vm3474, %v3466, 0
    %v3482 = vsel %vm2345, %v1144, 0
    %v3485 = vsel %vm2345, %v1145, 0
    %3487 = vmatprep.subr.mxu0 %v945
    %3488 = vmatpush1.msra.mxu0 %v944
    %3489 = vmatprep.subr.mxu0 %v947
    %3490 = vmatpush1.msra.mxu0 %v946
    %3491 = vmatprep.subr.mxu0 %v949
    %3492 = vmatpush1.msra.mxu0 %v948
    %3493 = vmatprep.subr.mxu0 %v951
    %3494 = vmatpush1.msra.mxu0 %v950
    %3495 = vmatprep.subr.mxu0 %v953
    %3496 = vmatpush1.msra.mxu0 %v952
    %3497 = vmatprep.subr.mxu0 %v955
    %3498 = vmatpush1.msra.mxu0 %v954
    %3499 = vmatprep.subr.mxu0 %v957
    %3500 = vmatpush1.msra.mxu0 %v956
    %3501 = vmatprep.subr.mxu0 %v959
    %3502 = vmatpush1.msra.mxu0 %v958
    %3503 = vmatprep.subr.mxu0 %v961
    %3504 = vmatpush1.msra.mxu0 %v960
    %3505 = vmatprep.subr.mxu0 %v963
    %3506 = vmatpush1.msra.mxu0 %v962
    %3507 = vmatprep.subr.mxu0 %v965
    %3508 = vmatpush1.msra.mxu0 %v964
    %3509 = vmatprep.subr.mxu0 %v967
    %3510 = vmatpush1.msra.mxu0 %v966
    %3511 = vmatprep.subr.mxu0 %v969
    %3512 = vmatpush1.msra.mxu0 %v968
    %3513 = vmatprep.subr.mxu0 %v971
    %3514 = vmatpush1.msra.mxu0 %v970
    %3515 = vmatprep.subr.mxu0 %v973
    %3516 = vmatpush1.msra.mxu0 %v972
    %3517 = vmatprep.subr.mxu0 %v975
    %3518 = vmatpush1.msra.mxu0 %v974
    %3519 = vmatprep.subr.mxu0 %v977
    %3520 = vmatpush1.msra.mxu0 %v976
    %3521 = vmatprep.subr.mxu0 %v979
    %3522 = vmatpush1.msra.mxu0 %v978
    %3523 = vmatprep.subr.mxu0 %v981
    %3524 = vmatpush1.msra.mxu0 %v980
    %3525 = vmatprep.subr.mxu0 %v983
    %3526 = vmatpush1.msra.mxu0 %v982
    %3527 = vmatprep.subr.mxu0 %v985
    %3528 = vmatpush1.msra.mxu0 %v984
    %3529 = vmatprep.subr.mxu0 %v987
    %3530 = vmatpush1.msra.mxu0 %v986
    %3531 = vmatprep.subr.mxu0 %v989
    %3532 = vmatpush1.msra.mxu0 %v988
    %3533 = vmatprep.subr.mxu0 %v991
    %3534 = vmatpush1.msra.mxu0 %v990
    %3535 = vmatprep.subr.mxu0 %v993
    %3536 = vmatpush1.msra.mxu0 %v992
    %3537 = vmatprep.subr.mxu0 %v995
    %3538 = vmatpush1.msra.mxu0 %v994
    %3539 = vmatprep.subr.mxu0 %v997
    %3540 = vmatpush1.msra.mxu0 %v996
    %3541 = vmatprep.subr.mxu0 %v999
    %3542 = vmatpush1.msra.mxu0 %v998
    %3543 = vmatprep.subr.mxu0 %v1001
    %3544 = vmatpush1.msra.mxu0 %v1000
    %3545 = vmatprep.subr.mxu0 %v1003
    %3546 = vmatpush1.msra.mxu0 %v1002
    %3547 = vmatprep.subr.mxu0 %v1005
    %3548 = vmatpush1.msra.mxu0 %v1004
    %3549 = vmatprep.subr.mxu0 %v1007
    %3550 = vmatpush1.msra.mxu0 %v1006
    %3551 = vmatprep.mubr.f32.mxu0 %v3447
    %3552 = vmatmul.mubr.f32.gmra.mrb[0].mxu0 %v3446
    %v3553 = vpop.f32.mrb[0].mxu0
    %v3554 = vadd.f32 0.0, %v3553
    %v3555 = vpop.f32.mrb[0].mxu0
    %v3556 = vadd.f32 0.0, %v3555
    %3557 = vmatprep.mubr.f32.mxu0 %v3461
    %3558 = vmatmul.mubr.f32.gmra.mrb[0].mxu0 %v3460
    %v3559 = vpop.f32.mrb[0].mxu0
    %v3560 = vadd.f32 0.0, %v3559
    %v3561 = vpop.f32.mrb[0].mxu0
    %v3562 = vadd.f32 0.0, %v3561
    %3563 = vdwg.mxu0
    %3564 = vmatprep.subr.mxu0 %v1009
    %3565 = vmatpush1.msra.mxu0 %v1008
    %3566 = vmatprep.subr.mxu0 %v1011
    %3567 = vmatpush1.msra.mxu0 %v1010
    %3568 = vmatprep.subr.mxu0 %v1013
    %3569 = vmatpush1.msra.mxu0 %v1012
    %3570 = vmatprep.subr.mxu0 %v1015
    %3571 = vmatpush1.msra.mxu0 %v1014
    %3572 = vmatprep.subr.mxu0 %v1017
    %3573 = vmatpush1.msra.mxu0 %v1016
    %3574 = vmatprep.subr.mxu0 %v1019
    %3575 = vmatpush1.msra.mxu0 %v1018
    %3576 = vmatprep.subr.mxu0 %v1021
    %3577 = vmatpush1.msra.mxu0 %v1020
    %3578 = vmatprep.subr.mxu0 %v1023
    %3579 = vmatpush1.msra.mxu0 %v1022
    %3580 = vmatprep.subr.mxu0 %v1025
    %3581 = vmatpush1.msra.mxu0 %v1024
    %3582 = vmatprep.subr.mxu0 %v1027
    %3583 = vmatpush1.msra.mxu0 %v1026
    %3584 = vmatprep.subr.mxu0 %v1029
    %3585 = vmatpush1.msra.mxu0 %v1028
    %3586 = vmatprep.subr.mxu0 %v1031
    %3587 = vmatpush1.msra.mxu0 %v1030
    %3588 = vmatprep.subr.mxu0 %v1033
    %3589 = vmatpush1.msra.mxu0 %v1032
    %3590 = vmatprep.subr.mxu0 %v1035
    %3591 = vmatpush1.msra.mxu0 %v1034
    %3592 = vmatprep.subr.mxu0 %v1037
    %3593 = vmatpush1.msra.mxu0 %v1036
    %3594 = vmatprep.subr.mxu0 %v1039
    %3595 = vmatpush1.msra.mxu0 %v1038
    %3596 = vmatprep.subr.mxu0 %v1041
    %3597 = vmatpush1.msra.mxu0 %v1040
    %3598 = vmatprep.subr.mxu0 %v1043
    %3599 = vmatpush1.msra.mxu0 %v1042
    %3600 = vmatprep.subr.mxu0 %v1045
    %3601 = vmatpush1.msra.mxu0 %v1044
    %3602 = vmatprep.subr.mxu0 %v1047
    %3603 = vmatpush1.msra.mxu0 %v1046
    %3604 = vmatprep.subr.mxu0 %v1049
    %3605 = vmatpush1.msra.mxu0 %v1048
    %3606 = vmatprep.subr.mxu0 %v1051
    %3607 = vmatpush1.msra.mxu0 %v1050
    %3608 = vmatprep.subr.mxu0 %v1053
    %3609 = vmatpush1.msra.mxu0 %v1052
    %3610 = vmatprep.subr.mxu0 %v1055
    %3611 = vmatpush1.msra.mxu0 %v1054
    %3612 = vmatprep.subr.mxu0 %v1057
    %3613 = vmatpush1.msra.mxu0 %v1056
    %3614 = vmatprep.subr.mxu0 %v1059
    %3615 = vmatpush1.msra.mxu0 %v1058
    %3616 = vmatprep.subr.mxu0 %v1061
    %3617 = vmatpush1.msra.mxu0 %v1060
    %3618 = vmatprep.subr.mxu0 %v1063
    %3619 = vmatpush1.msra.mxu0 %v1062
    %3620 = vmatprep.subr.mxu0 %v1065
    %3621 = vmatpush1.msra.mxu0 %v1064
    %3622 = vmatprep.subr.mxu0 %v1067
    %3623 = vmatpush1.msra.mxu0 %v1066
    %3624 = vmatprep.subr.mxu0 %v1069
    %3625 = vmatpush1.msra.mxu0 %v1068
    %3626 = vmatprep.subr.mxu0 %v1071
    %3627 = vmatpush1.msra.mxu0 %v1070
    %3628 = vmatprep.mubr.f32.mxu0 %v3449
    %3629 = vmatmul.mubr.f32.gmra.mrb[0].mxu0 %v3448
    %v3630 = vpop.f32.mrb[0].mxu0
    %v3631 = vadd.f32 %v3554, %v3630
    %v3632 = vpop.f32.mrb[0].mxu0
    %v3633 = vadd.f32 %v3556, %v3632
    %3634 = vmatprep.mubr.f32.mxu0 %v3463
    %3635 = vmatmul.mubr.f32.gmra.mrb[0].mxu0 %v3462
    %v3636 = vpop.f32.mrb[0].mxu0
    %v3637 = vadd.f32 %v3560, %v3636
    %v3638 = vpop.f32.mrb[0].mxu0
    %v3639 = vadd.f32 %v3562, %v3638
    %3640 = vdwg.mxu0
    %3641 = vmatprep.subr.mxu0 %v1073
    %3642 = vmatpush1.msra.mxu0 %v1072
    %3643 = vmatprep.subr.mxu0 %v1075
    %3644 = vmatpush1.msra.mxu0 %v1074
    %3645 = vmatprep.subr.mxu0 %v1077
    %3646 = vmatpush1.msra.mxu0 %v1076
    %3647 = vmatprep.subr.mxu0 %v1079
    %3648 = vmatpush1.msra.mxu0 %v1078
    %3649 = vmatprep.subr.mxu0 %v1081
    %3650 = vmatpush1.msra.mxu0 %v1080
    %3651 = vmatprep.subr.mxu0 %v1083
    %3652 = vmatpush1.msra.mxu0 %v1082
    %3653 = vmatprep.subr.mxu0 %v1085
    %3654 = vmatpush1.msra.mxu0 %v1084
    %3655 = vmatprep.subr.mxu0 %v1087
    %3656 = vmatpush1.msra.mxu0 %v1086
    %3657 = vmatprep.subr.mxu0 %v1089
    %3658 = vmatpush1.msra.mxu0 %v1088
    %3659 = vmatprep.subr.mxu0 %v1091
    %3660 = vmatpush1.msra.mxu0 %v1090
    %3661 = vmatprep.subr.mxu0 %v1093
    %3662 = vmatpush1.msra.mxu0 %v1092
    %3663 = vmatprep.subr.mxu0 %v1095
    %3664 = vmatpush1.msra.mxu0 %v1094
    %3665 = vmatprep.subr.mxu0 %v1097
    %3666 = vmatpush1.msra.mxu0 %v1096
    %3667 = vmatprep.subr.mxu0 %v1099
    %3668 = vmatpush1.msra.mxu0 %v1098
    %3669 = vmatprep.subr.mxu0 %v1101
    %3670 = vmatpush1.msra.mxu0 %v1100
    %3671 = vmatprep.subr.mxu0 %v1103
    %3672 = vmatpush1.msra.mxu0 %v1102
    %3673 = vmatprep.subr.mxu0 %v1105
    %3674 = vmatpush1.msra.mxu0 %v1104
    %3675 = vmatprep.subr.mxu0 %v1107
    %3676 = vmatpush1.msra.mxu0 %v1106
    %3677 = vmatprep.subr.mxu0 %v1109
    %3678 = vmatpush1.msra.mxu0 %v1108
    %3679 = vmatprep.subr.mxu0 %v1111
    %3680 = vmatpush1.msra.mxu0 %v1110
    %3681 = vmatprep.subr.mxu0 %v1113
    %3682 = vmatpush1.msra.mxu0 %v1112
    %3683 = vmatprep.subr.mxu0 %v1115
    %3684 = vmatpush1.msra.mxu0 %v1114
    %3685 = vmatprep.subr.mxu0 %v1117
    %3686 = vmatpush1.msra.mxu0 %v1116
    %3687 = vmatprep.subr.mxu0 %v1119
    %3688 = vmatpush1.msra.mxu0 %v1118
    %3689 = vmatprep.subr.mxu0 %v1121
    %3690 = vmatpush1.msra.mxu0 %v1120
    %3691 = vmatprep.subr.mxu0 %v1123
    %3692 = vmatpush1.msra.mxu0 %v1122
    %3693 = vmatprep.subr.mxu0 %v1125
    %3694 = vmatpush1.msra.mxu0 %v1124
    %3695 = vmatprep.subr.mxu0 %v1127
    %3696 = vmatpush1.msra.mxu0 %v1126
    %3697 = vmatprep.subr.mxu0 %v1129
    %3698 = vmatpush1.msra.mxu0 %v1128
    %3699 = vmatprep.subr.mxu0 %v1131
    %3700 = vmatpush1.msra.mxu0 %v1130
    %3701 = vmatprep.subr.mxu0 %v1133
    %3702 = vmatpush1.msra.mxu0 %v1132
    %3703 = vmatprep.subr.mxu0 %v1135
    %3704 = vmatpush1.msra.mxu0 %v1134
    %3705 = vmatprep.mubr.f32.mxu0 %v3451
    %3706 = vmatmul.mubr.f32.gmra.mrb[0].mxu0 %v3450
    %v3707 = vpop.f32.mrb[0].mxu0
    %v3708 = vadd.f32 %v3631, %v3707
    %v3709 = vpop.f32.mrb[0].mxu0
    %v3710 = vadd.f32 %v3633, %v3709
    %3711 = vmatprep.mubr.f32.mxu0 %v3465
    %3712 = vmatmul.mubr.f32.gmra.mrb[0].mxu0 %v3464
    %v3713 = vpop.f32.mrb[0].mxu0
    %v3714 = vadd.f32 %v3637, %v3713
    %v3715 = vpop.f32.mrb[0].mxu0
    %v3716 = vadd.f32 %v3639, %v3715
    %3717 = vdwg.mxu0
    %3718 = vmatprep.subr.mxu0 %v1137
    %3719 = vmatpush1.msra.mxu0 %v1136
    %3720 = vmatprep.subr.mxu0 %v1139
    %3721 = vmatpush1.msra.mxu0 %v1138
    %3722 = vmatprep.subr.mxu0 %v1141
    %3723 = vmatpush1.msra.mxu0 %v1140
    %3724 = vmatprep.subr.mxu0 %v1143
    %3725 = vmatpush1.msra.mxu0 %v1142
    %3726 = vmatprep.subr.mxu0 %v3485
    %3727 = vmatpush1.msra.mxu0 %v3482
    %3728 = vmatprep.subr.mxu0 0.0
    %3729 = vmatpush1.msra.mxu0 0.0
    %3730 = vmatprep.subr.mxu0 0.0
    %3731 = vmatpush1.msra.mxu0 0.0
    %3732 = vmatprep.subr.mxu0 0.0
    %3733 = vmatpush1.msra.mxu0 0.0
    %3734 = vmatprep.subr.mxu0 0.0
    %3735 = vmatpush1.msra.mxu0 0.0
    %3736 = vmatprep.subr.mxu0 0.0
    %3737 = vmatpush1.msra.mxu0 0.0
    %3738 = vmatprep.subr.mxu0 0.0
    %3739 = vmatpush1.msra.mxu0 0.0
    %3740 = vmatprep.subr.mxu0 0.0
    %3741 = vmatpush1.msra.mxu0 0.0
    %3742 = vmatprep.subr.mxu0 0.0
    %3743 = vmatpush1.msra.mxu0 0.0
    %3744 = vmatprep.subr.mxu0 0.0
    %3745 = vmatpush1.msra.mxu0 0.0
    %3746 = vmatprep.subr.mxu0 0.0
    %3747 = vmatpush1.msra.mxu0 0.0
    %3748 = vmatprep.subr.mxu0 0.0
    %3749 = vmatpush1.msra.mxu0 0.0
    %3750 = vmatprep.subr.mxu0 0.0
    %3751 = vmatpush1.msra.mxu0 0.0
    %3752 = vmatprep.subr.mxu0 0.0
    %3753 = vmatpush1.msra.mxu0 0.0
    %3754 = vmatprep.subr.mxu0 0.0
    %3755 = vmatpush1.msra.mxu0 0.0
    %3756 = vmatprep.subr.mxu0 0.0
    %3757 = vmatpush1.msra.mxu0 0.0
    %3758 = vmatprep.subr.mxu0 0.0
    %3759 = vmatpush1.msra.mxu0 0.0
    %3760 = vmatprep.subr.mxu0 0.0
    %3761 = vmatpush1.msra.mxu0 0.0
    %3762 = vmatprep.subr.mxu0 0.0
    %3763 = vmatpush1.msra.mxu0 0.0
    %3764 = vmatprep.subr.mxu0 0.0
    %3765 = vmatpush1.msra.mxu0 0.0
    %3766 = vmatprep.subr.mxu0 0.0
    %3767 = vmatpush1.msra.mxu0 0.0
    %3768 = vmatprep.subr.mxu0 0.0
    %3769 = vmatpush1.msra.mxu0 0.0
    %3770 = vmatprep.subr.mxu0 0.0
    %3771 = vmatpush1.msra.mxu0 0.0
    %3772 = vmatprep.subr.mxu0 0.0
    %3773 = vmatpush1.msra.mxu0 0.0
    %3774 = vmatprep.subr.mxu0 0.0
    %3775 = vmatpush1.msra.mxu0 0.0
    %3776 = vmatprep.subr.mxu0 0.0
    %3777 = vmatpush1.msra.mxu0 0.0
    %3778 = vmatprep.subr.mxu0 0.0
    %3779 = vmatpush1.msra.mxu0 0.0
    %3780 = vmatprep.subr.mxu0 0.0
    %3781 = vmatpush1.msra.mxu0 0.0
    %3782 = vmatprep.mubr.f32.mxu0 0.0
    %3783 = vmatmul.mubr.f32.gmra.mrb[0].mxu0 %v3476
    %v3784 = vpop.f32.mrb[0].mxu0
    %v3785 = vadd.f32 %v3708, %v3784
    %v3786 = vpop.f32.mrb[0].mxu0
    %v3787 = vadd.f32 %v3710, %v3786
    %3788 = vmatprep.mubr.f32.mxu0 0.0
    %3789 = vmatmul.mubr.f32.gmra.mrb[0].mxu0 %v3479
    %v3790 = vpop.f32.mrb[0].mxu0
    %v3791 = vadd.f32 %v3714, %v3790
    %v3792 = vpop.f32.mrb[0].mxu0
    %v3793 = vadd.f32 %v3716, %v3792
    %3794 = vdwg.mxu0
    %3795 = vst [vmem:[#allocation4] sm:$0xff] %v3785
    %3796 = vst [vmem:[#allocation4 + $0x8] sm:$0xff] %v3787
    %3797 = vst [vmem:[#allocation4 + $0x20] sm:$0xff] %v3791
    %3798 = vst [vmem:[#allocation4 + $0x28] sm:$0xff] %v3793
    %3813 = vrot.lane.b32.xlu0 %v3453, 124
    %v3814 = vpop.permute.xlu0 %3813
    %3815 = vrot.lane.b32.xlu0 %v3454, 124
    %v3816 = vpop.permute.xlu0 %3815
    %3817 = vrot.lane.b32.xlu0 %v3455, 124
    %v3818 = vpop.permute.xlu0 %3817
    %3819 = vrot.lane.b32.xlu0 %v3456, 124
    %v3820 = vpop.permute.xlu0 %3819
    %3821 = vrot.lane.b32.xlu0 %v3457, 124
    %v3822 = vpop.permute.xlu0 %3821
    %3823 = vrot.lane.b32.xlu0 %v3458, 124
    %v3824 = vpop.permute.xlu0 %3823
    %3825 = vrot.lane.b32.xlu0 %v3459, 124
    %v3826 = vpop.permute.xlu0 %3825
    %3827 = vrot.lane.b32.xlu0 %v3467, 124
    %v3828 = vpop.permute.xlu0 %3827
    %3829 = vrot.lane.b32.xlu0 %v3468, 124
    %v3830 = vpop.permute.xlu0 %3829
    %3831 = vrot.lane.b32.xlu0 %v3469, 124
    %v3832 = vpop.permute.xlu0 %3831
    %3833 = vrot.lane.b32.xlu0 %v3470, 124
    %v3834 = vpop.permute.xlu0 %3833
    %3835 = vrot.lane.b32.xlu0 %v3471, 124
    %v3836 = vpop.permute.xlu0 %3835
    %3837 = vrot.lane.b32.xlu0 %v3472, 124
    %v3838 = vpop.permute.xlu0 %3837
    %3839 = vrot.lane.b32.xlu0 %v3473, 124
    %v3840 = vpop.permute.xlu0 %3839
    %vm3841 = vcmask 1014784
    %v3842 = vsel %vm3841, %v3814, %v3816
    %v3843 = vsel %vm3841, %v3816, %v3818
    %v3844 = vsel %vm3841, %v3818, %v3820
    %v3845 = vsel %vm3841, %v3820, %v3822
    %v3846 = vsel %vm3841, %v3822, %v3824
    %v3847 = vsel %vm3841, %v3824, %v3826
    %v3848 = vsel %vm3841, %v3828, %v3830
    %v3849 = vsel %vm3841, %v3830, %v3832
    %v3850 = vsel %vm3841, %v3832, %v3834
    %v3851 = vsel %vm3841, %v3834, %v3836
    %v3852 = vsel %vm3841, %v3836, %v3838
    %v3853 = vsel %vm3841, %v3838, %v3840
    %v3866 = vsel %vm3474, %v3826, 0
    %v3868 = vsel %vm3474, %v3840, 0
    %3870 = vmatprep.subr.mxu0 %v945
    %3871 = vmatpush1.msra.mxu0 %v944
    %3872 = vmatprep.subr.mxu0 %v947
    %3873 = vmatpush1.msra.mxu0 %v946
    %3874 = vmatprep.subr.mxu0 %v949
    %3875 = vmatpush1.msra.mxu0 %v948
    %3876 = vmatprep.subr.mxu0 %v951
    %3877 = vmatpush1.msra.mxu0 %v950
    %3878 = vmatprep.subr.mxu0 %v953
    %3879 = vmatpush1.msra.mxu0 %v952
    %3880 = vmatprep.subr.mxu0 %v955
    %3881 = vmatpush1.msra.mxu0 %v954
    %3882 = vmatprep.subr.mxu0 %v957
    %3883 = vmatpush1.msra.mxu0 %v956
    %3884 = vmatprep.subr.mxu0 %v959
    %3885 = vmatpush1.msra.mxu0 %v958
    %3886 = vmatprep.subr.mxu0 %v961
    %3887 = vmatpush1.msra.mxu0 %v960
    %3888 = vmatprep.subr.mxu0 %v963
    %3889 = vmatpush1.msra.mxu0 %v962
    %3890 = vmatprep.subr.mxu0 %v965
    %3891 = vmatpush1.msra.mxu0 %v964
    %3892 = vmatprep.subr.mxu0 %v967
    %3893 = vmatpush1.msra.mxu0 %v966
    %3894 = vmatprep.subr.mxu0 %v969
    %3895 = vmatpush1.msra.mxu0 %v968
    %3896 = vmatprep.subr.mxu0 %v971
    %3897 = vmatpush1.msra.mxu0 %v970
    %3898 = vmatprep.subr.mxu0 %v973
    %3899 = vmatpush1.msra.mxu0 %v972
    %3900 = vmatprep.subr.mxu0 %v975
    %3901 = vmatpush1.msra.mxu0 %v974
    %3902 = vmatprep.subr.mxu0 %v977
    %3903 = vmatpush1.msra.mxu0 %v976
    %3904 = vmatprep.subr.mxu0 %v979
    %3905 = vmatpush1.msra.mxu0 %v978
    %3906 = vmatprep.subr.mxu0 %v981
    %3907 = vmatpush1.msra.mxu0 %v980
    %3908 = vmatprep.subr.mxu0 %v983
    %3909 = vmatpush1.msra.mxu0 %v982
    %3910 = vmatprep.subr.mxu0 %v985
    %3911 = vmatpush1.msra.mxu0 %v984
    %3912 = vmatprep.subr.mxu0 %v987
    %3913 = vmatpush1.msra.mxu0 %v986
    %3914 = vmatprep.subr.mxu0 %v989
    %3915 = vmatpush1.msra.mxu0 %v988
    %3916 = vmatprep.subr.mxu0 %v991
    %3917 = vmatpush1.msra.mxu0 %v990
    %3918 = vmatprep.subr.mxu0 %v993
    %3919 = vmatpush1.msra.mxu0 %v992
    %3920 = vmatprep.subr.mxu0 %v995
    %3921 = vmatpush1.msra.mxu0 %v994
    %3922 = vmatprep.subr.mxu0 %v997
    %3923 = vmatpush1.msra.mxu0 %v996
    %3924 = vmatprep.subr.mxu0 %v999
    %3925 = vmatpush1.msra.mxu0 %v998
    %3926 = vmatprep.subr.mxu0 %v1001
    %3927 = vmatpush1.msra.mxu0 %v1000
    %3928 = vmatprep.subr.mxu0 %v1003
    %3929 = vmatpush1.msra.mxu0 %v1002
    %3930 = vmatprep.subr.mxu0 %v1005
    %3931 = vmatpush1.msra.mxu0 %v1004
    %3932 = vmatprep.subr.mxu0 %v1007
    %3933 = vmatpush1.msra.mxu0 %v1006
    %3934 = vmatprep.mubr.f32.mxu0 %v3843
    %3935 = vmatmul.mubr.f32.gmra.mrb[0].mxu0 %v3842
    %v3936 = vpop.f32.mrb[0].mxu0
    %v3937 = vadd.f32 0.0, %v3936
    %v3938 = vpop.f32.mrb[0].mxu0
    %v3939 = vadd.f32 0.0, %v3938
    %3940 = vmatprep.mubr.f32.mxu0 %v3849
    %3941 = vmatmul.mubr.f32.gmra.mrb[0].mxu0 %v3848
    %v3942 = vpop.f32.mrb[0].mxu0
    %v3943 = vadd.f32 0.0, %v3942
    %v3944 = vpop.f32.mrb[0].mxu0
    %v3945 = vadd.f32 0.0, %v3944
    %3946 = vdwg.mxu0
    %3947 = vmatprep.subr.mxu0 %v1009
    %3948 = vmatpush1.msra.mxu0 %v1008
    %3949 = vmatprep.subr.mxu0 %v1011
    %3950 = vmatpush1.msra.mxu0 %v1010
    %3951 = vmatprep.subr.mxu0 %v1013
    %3952 = vmatpush1.msra.mxu0 %v1012
    %3953 = vmatprep.subr.mxu0 %v1015
    %3954 = vmatpush1.msra.mxu0 %v1014
    %3955 = vmatprep.subr.mxu0 %v1017
    %3956 = vmatpush1.msra.mxu0 %v1016
    %3957 = vmatprep.subr.mxu0 %v1019
    %3958 = vmatpush1.msra.mxu0 %v1018
    %3959 = vmatprep.subr.mxu0 %v1021
    %3960 = vmatpush1.msra.mxu0 %v1020
    %3961 = vmatprep.subr.mxu0 %v1023
    %3962 = vmatpush1.msra.mxu0 %v1022
    %3963 = vmatprep.subr.mxu0 %v1025
    %3964 = vmatpush1.msra.mxu0 %v1024
    %3965 = vmatprep.subr.mxu0 %v1027
    %3966 = vmatpush1.msra.mxu0 %v1026
    %3967 = vmatprep.subr.mxu0 %v1029
    %3968 = vmatpush1.msra.mxu0 %v1028
    %3969 = vmatprep.subr.mxu0 %v1031
    %3970 = vmatpush1.msra.mxu0 %v1030
    %3971 = vmatprep.subr.mxu0 %v1033
    %3972 = vmatpush1.msra.mxu0 %v1032
    %3973 = vmatprep.subr.mxu0 %v1035
    %3974 = vmatpush1.msra.mxu0 %v1034
    %3975 = vmatprep.subr.mxu0 %v1037
    %3976 = vmatpush1.msra.mxu0 %v1036
    %3977 = vmatprep.subr.mxu0 %v1039
    %3978 = vmatpush1.msra.mxu0 %v1038
    %3979 = vmatprep.subr.mxu0 %v1041
    %3980 = vmatpush1.msra.mxu0 %v1040
    %3981 = vmatprep.subr.mxu0 %v1043
    %3982 = vmatpush1.msra.mxu0 %v1042
    %3983 = vmatprep.subr.mxu0 %v1045
    %3984 = vmatpush1.msra.mxu0 %v1044
    %3985 = vmatprep.subr.mxu0 %v1047
    %3986 = vmatpush1.msra.mxu0 %v1046
    %3987 = vmatprep.subr.mxu0 %v1049
    %3988 = vmatpush1.msra.mxu0 %v1048
    %3989 = vmatprep.subr.mxu0 %v1051
    %3990 = vmatpush1.msra.mxu0 %v1050
    %3991 = vmatprep.subr.mxu0 %v1053
    %3992 = vmatpush1.msra.mxu0 %v1052
    %3993 = vmatprep.subr.mxu0 %v1055
    %3994 = vmatpush1.msra.mxu0 %v1054
    %3995 = vmatprep.subr.mxu0 %v1057
    %3996 = vmatpush1.msra.mxu0 %v1056
    %3997 = vmatprep.subr.mxu0 %v1059
    %3998 = vmatpush1.msra.mxu0 %v1058
    %3999 = vmatprep.subr.mxu0 %v1061
    %4000 = vmatpush1.msra.mxu0 %v1060
    %4001 = vmatprep.subr.mxu0 %v1063
    %4002 = vmatpush1.msra.mxu0 %v1062
    %4003 = vmatprep.subr.mxu0 %v1065
    %4004 = vmatpush1.msra.mxu0 %v1064
    %4005 = vmatprep.subr.mxu0 %v1067
    %4006 = vmatpush1.msra.mxu0 %v1066
    %4007 = vmatprep.subr.mxu0 %v1069
    %4008 = vmatpush1.msra.mxu0 %v1068
    %4009 = vmatprep.subr.mxu0 %v1071
    %4010 = vmatpush1.msra.mxu0 %v1070
    %4011 = vmatprep.mubr.f32.mxu0 %v3845
    %4012 = vmatmul.mubr.f32.gmra.mrb[0].mxu0 %v3844
    %v4013 = vpop.f32.mrb[0].mxu0
    %v4014 = vadd.f32 %v3937, %v4013
    %v4015 = vpop.f32.mrb[0].mxu0
    %v4016 = vadd.f32 %v3939, %v4015
    %4017 = vmatprep.mubr.f32.mxu0 %v3851
    %4018 = vmatmul.mubr.f32.gmra.mrb[0].mxu0 %v3850
    %v4019 = vpop.f32.mrb[0].mxu0
    %v4020 = vadd.f32 %v3943, %v4019
    %v4021 = vpop.f32.mrb[0].mxu0
    %v4022 = vadd.f32 %v3945, %v4021
    %4023 = vdwg.mxu0
    %4024 = vmatprep.subr.mxu0 %v1073
    %4025 = vmatpush1.msra.mxu0 %v1072
    %4026 = vmatprep.subr.mxu0 %v1075
    %4027 = vmatpush1.msra.mxu0 %v1074
    %4028 = vmatprep.subr.mxu0 %v1077
    %4029 = vmatpush1.msra.mxu0 %v1076
    %4030 = vmatprep.subr.mxu0 %v1079
    %4031 = vmatpush1.msra.mxu0 %v1078
    %4032 = vmatprep.subr.mxu0 %v1081
    %4033 = vmatpush1.msra.mxu0 %v1080
    %4034 = vmatprep.subr.mxu0 %v1083
    %4035 = vmatpush1.msra.mxu0 %v1082
    %4036 = vmatprep.subr.mxu0 %v1085
    %4037 = vmatpush1.msra.mxu0 %v1084
    %4038 = vmatprep.subr.mxu0 %v1087
    %4039 = vmatpush1.msra.mxu0 %v1086
    %4040 = vmatprep.subr.mxu0 %v1089
    %4041 = vmatpush1.msra.mxu0 %v1088
    %4042 = vmatprep.subr.mxu0 %v1091
    %4043 = vmatpush1.msra.mxu0 %v1090
    %4044 = vmatprep.subr.mxu0 %v1093
    %4045 = vmatpush1.msra.mxu0 %v1092
    %4046 = vmatprep.subr.mxu0 %v1095
    %4047 = vmatpush1.msra.mxu0 %v1094
    %4048 = vmatprep.subr.mxu0 %v1097
    %4049 = vmatpush1.msra.mxu0 %v1096
    %4050 = vmatprep.subr.mxu0 %v1099
    %4051 = vmatpush1.msra.mxu0 %v1098
    %4052 = vmatprep.subr.mxu0 %v1101
    %4053 = vmatpush1.msra.mxu0 %v1100
    %4054 = vmatprep.subr.mxu0 %v1103
    %4055 = vmatpush1.msra.mxu0 %v1102
    %4056 = vmatprep.subr.mxu0 %v1105
    %4057 = vmatpush1.msra.mxu0 %v1104
    %4058 = vmatprep.subr.mxu0 %v1107
    %4059 = vmatpush1.msra.mxu0 %v1106
    %4060 = vmatprep.subr.mxu0 %v1109
    %4061 = vmatpush1.msra.mxu0 %v1108
    %4062 = vmatprep.subr.mxu0 %v1111
    %4063 = vmatpush1.msra.mxu0 %v1110
    %4064 = vmatprep.subr.mxu0 %v1113
    %4065 = vmatpush1.msra.mxu0 %v1112
    %4066 = vmatprep.subr.mxu0 %v1115
    %4067 = vmatpush1.msra.mxu0 %v1114
    %4068 = vmatprep.subr.mxu0 %v1117
    %4069 = vmatpush1.msra.mxu0 %v1116
    %4070 = vmatprep.subr.mxu0 %v1119
    %4071 = vmatpush1.msra.mxu0 %v1118
    %4072 = vmatprep.subr.mxu0 %v1121
    %4073 = vmatpush1.msra.mxu0 %v1120
    %4074 = vmatprep.subr.mxu0 %v1123
    %4075 = vmatpush1.msra.mxu0 %v1122
    %4076 = vmatprep.subr.mxu0 %v1125
    %4077 = vmatpush1.msra.mxu0 %v1124
    %4078 = vmatprep.subr.mxu0 %v1127
    %4079 = vmatpush1.msra.mxu0 %v1126
    %4080 = vmatprep.subr.mxu0 %v1129
    %4081 = vmatpush1.msra.mxu0 %v1128
    %4082 = vmatprep.subr.mxu0 %v1131
    %4083 = vmatpush1.msra.mxu0 %v1130
    %4084 = vmatprep.subr.mxu0 %v1133
    %4085 = vmatpush1.msra.mxu0 %v1132
    %4086 = vmatprep.subr.mxu0 %v1135
    %4087 = vmatpush1.msra.mxu0 %v1134
    %4088 = vmatprep.mubr.f32.mxu0 %v3847
    %4089 = vmatmul.mubr.f32.gmra.mrb[0].mxu0 %v3846
    %v4090 = vpop.f32.mrb[0].mxu0
    %v4091 = vadd.f32 %v4014, %v4090
    %v4092 = vpop.f32.mrb[0].mxu0
    %v4093 = vadd.f32 %v4016, %v4092
    %4094 = vmatprep.mubr.f32.mxu0 %v3853
    %4095 = vmatmul.mubr.f32.gmra.mrb[0].mxu0 %v3852
    %v4096 = vpop.f32.mrb[0].mxu0
    %v4097 = vadd.f32 %v4020, %v4096
    %v4098 = vpop.f32.mrb[0].mxu0
    %v4099 = vadd.f32 %v4022, %v4098
    %4100 = vdwg.mxu0
    %4101 = vmatprep.subr.mxu0 %v1137
    %4102 = vmatpush1.msra.mxu0 %v1136
    %4103 = vmatprep.subr.mxu0 %v1139
    %4104 = vmatpush1.msra.mxu0 %v1138
    %4105 = vmatprep.subr.mxu0 %v1141
    %4106 = vmatpush1.msra.mxu0 %v1140
    %4107 = vmatprep.subr.mxu0 %v1143
    %4108 = vmatpush1.msra.mxu0 %v1142
    %4109 = vmatprep.subr.mxu0 %v3485
    %4110 = vmatpush1.msra.mxu0 %v3482
    %4111 = vmatprep.subr.mxu0 0.0
    %4112 = vmatpush1.msra.mxu0 0.0
    %4113 = vmatprep.subr.mxu0 0.0
    %4114 = vmatpush1.msra.mxu0 0.0
    %4115 = vmatprep.subr.mxu0 0.0
    %4116 = vmatpush1.msra.mxu0 0.0
    %4117 = vmatprep.subr.mxu0 0.0
    %4118 = vmatpush1.msra.mxu0 0.0
    %4119 = vmatprep.subr.mxu0 0.0
    %4120 = vmatpush1.msra.mxu0 0.0
    %4121 = vmatprep.subr.mxu0 0.0
    %4122 = vmatpush1.msra.mxu0 0.0
    %4123 = vmatprep.subr.mxu0 0.0
    %4124 = vmatpush1.msra.mxu0 0.0
    %4125 = vmatprep.subr.mxu0 0.0
    %4126 = vmatpush1.msra.mxu0 0.0
    %4127 = vmatprep.subr.mxu0 0.0
    %4128 = vmatpush1.msra.mxu0 0.0
    %4129 = vmatprep.subr.mxu0 0.0
    %4130 = vmatpush1.msra.mxu0 0.0
    %4131 = vmatprep.subr.mxu0 0.0
    %4132 = vmatpush1.msra.mxu0 0.0
    %4133 = vmatprep.subr.mxu0 0.0
    %4134 = vmatpush1.msra.mxu0 0.0
    %4135 = vmatprep.subr.mxu0 0.0
    %4136 = vmatpush1.msra.mxu0 0.0
    %4137 = vmatprep.subr.mxu0 0.0
    %4138 = vmatpush1.msra.mxu0 0.0
    %4139 = vmatprep.subr.mxu0 0.0
    %4140 = vmatpush1.msra.mxu0 0.0
    %4141 = vmatprep.subr.mxu0 0.0
    %4142 = vmatpush1.msra.mxu0 0.0
    %4143 = vmatprep.subr.mxu0 0.0
    %4144 = vmatpush1.msra.mxu0 0.0
    %4145 = vmatprep.subr.mxu0 0.0
    %4146 = vmatpush1.msra.mxu0 0.0
    %4147 = vmatprep.subr.mxu0 0.0
    %4148 = vmatpush1.msra.mxu0 0.0
    %4149 = vmatprep.subr.mxu0 0.0
    %4150 = vmatpush1.msra.mxu0 0.0
    %4151 = vmatprep.subr.mxu0 0.0
    %4152 = vmatpush1.msra.mxu0 0.0
    %4153 = vmatprep.subr.mxu0 0.0
    %4154 = vmatpush1.msra.mxu0 0.0
    %4155 = vmatprep.subr.mxu0 0.0
    %4156 = vmatpush1.msra.mxu0 0.0
    %4157 = vmatprep.subr.mxu0 0.0
    %4158 = vmatpush1.msra.mxu0 0.0
    %4159 = vmatprep.subr.mxu0 0.0
    %4160 = vmatpush1.msra.mxu0 0.0
    %4161 = vmatprep.subr.mxu0 0.0
    %4162 = vmatpush1.msra.mxu0 0.0
    %4163 = vmatprep.subr.mxu0 0.0
    %4164 = vmatpush1.msra.mxu0 0.0
    %4165 = vmatprep.mubr.f32.mxu0 0.0
    %4166 = vmatmul.mubr.f32.gmra.mrb[0].mxu0 %v3866
    %v4167 = vpop.f32.mrb[0].mxu0
    %v4168 = vadd.f32 %v4091, %v4167
    %v4169 = vpop.f32.mrb[0].mxu0
    %v4170 = vadd.f32 %v4093, %v4169
    %4171 = vmatprep.mubr.f32.mxu0 0.0
    %4172 = vmatmul.mubr.f32.gmra.mrb[0].mxu0 %v3868
    %v4173 = vpop.f32.mrb[0].mxu0
    %v4174 = vadd.f32 %v4097, %v4173
    %v4175 = vpop.f32.mrb[0].mxu0
    %v4176 = vadd.f32 %v4099, %v4175
    %4177 = vdwg.mxu0
    %4178 = vst [vmem:[#allocation4 + $0x10] sm:$0xff] %v4168
    %4179 = vst [vmem:[#allocation4 + $0x18] sm:$0xff] %v4170
    %4180 = vst [vmem:[#allocation4 + $0x30] sm:$0xff] %v4174
    %4181 = vst [vmem:[#allocation4 + $0x38] sm:$0xff] %v4176
    %v4182 = vld [vmem:[#allocation4] sm:$0xff]
    %v4183 = vld [vmem:[#allocation4 + $0x8] sm:$0xff]
    %v4184 = vld [vmem:[#allocation4 + $0x10] sm:$0xff]
    %v4185 = vld [vmem:[#allocation4 + $0x18] sm:$0xff]
    %v4186 = vld [vmem:[#allocation4 + $0x20] sm:$0xff]
    %v4187 = vld [vmem:[#allocation4 + $0x28] sm:$0xff]
    %v4188 = vld [vmem:[#allocation4 + $0x30] sm:$0xff]
    %v4189 = vld [vmem:[#allocation4 + $0x38] sm:$0xff]
    %4190 = vst [vmem:[#allocation5] sm:$0xff] %v4182
    %4191 = vst [vmem:[#allocation5 + $0x8] sm:$0xff] %v4183
    %4192 = vst [vmem:[#allocation5 + $0x10] sm:$0xff] %v4184
    %vm4193 = vcmask 769024
    %4194 = vst.msk [vmem:[#allocation5 + $0x18] sm:$0xff] %vm4193, %v4185
    %4195 = vst [vmem:[#allocation5 + $0x20] sm:$0xff] %v4186
    %4196 = vst [vmem:[#allocation5 + $0x28] sm:$0xff] %v4187
    %4197 = vst [vmem:[#allocation5 + $0x30] sm:$0xff] %v4188
    %4198 = vst.msk [vmem:[#allocation5 + $0x38] sm:$0xff] %vm4193, %v4189
    %4207 = vrot.lane.b32.xlu0 %v4182, 127
    %v4208 = vpop.permute.xlu0 %4207
    %4209 = vrot.lane.b32.xlu0 %v4183, 127
    %v4210 = vpop.permute.xlu0 %4209
    %4211 = vrot.lane.b32.xlu0 %v4184, 127
    %v4212 = vpop.permute.xlu0 %4211
    %4213 = vrot.lane.b32.xlu0 %v4185, 127
    %v4214 = vpop.permute.xlu0 %4213
    %4215 = vrot.lane.b32.xlu0 %v4186, 127
    %v4216 = vpop.permute.xlu0 %4215
    %4217 = vrot.lane.b32.xlu0 %v4187, 127
    %v4218 = vpop.permute.xlu0 %4217
    %4219 = vrot.lane.b32.xlu0 %v4188, 127
    %v4220 = vpop.permute.xlu0 %4219
    %4221 = vrot.lane.b32.xlu0 %v4189, 127
    %v4222 = vpop.permute.xlu0 %4221
    %v4223 = vsel %vm1789, %v4208, %v4210
    %v4224 = vsel %vm1789, %v4210, %v4212
    %v4225 = vsel %vm1789, %v4212, %v4214
    %v4226 = vsel %vm1789, %v4216, %v4218
    %v4227 = vsel %vm1789, %v4218, %v4220
    %v4228 = vsel %vm1789, %v4220, %v4222
    %4237 = vst [vmem:[#allocation5 + $0x40] sm:$0xff] %v4223
    %4238 = vst [vmem:[#allocation5 + $0x48] sm:$0xff] %v4224
    %4239 = vst [vmem:[#allocation5 + $0x50] sm:$0xff] %v4225
    %4240 = vst.msk [vmem:[#allocation5 + $0x58] sm:$0xff] %vm4193, %v4214
    %4241 = vst [vmem:[#allocation5 + $0x60] sm:$0xff] %v4226
    %4242 = vst [vmem:[#allocation5 + $0x68] sm:$0xff] %v4227
    %4243 = vst [vmem:[#allocation5 + $0x70] sm:$0xff] %v4228
    %4244 = vst.msk [vmem:[#allocation5 + $0x78] sm:$0xff] %vm4193, %v4222
    %4245 = vrot.lane.b32.xlu0 %v4182, 126
    %v4246 = vpop.permute.xlu0 %4245
    %4247 = vrot.lane.b32.xlu0 %v4183, 126
    %v4248 = vpop.permute.xlu0 %4247
    %4249 = vrot.lane.b32.xlu0 %v4184, 126
    %v4250 = vpop.permute.xlu0 %4249
    %4251 = vrot.lane.b32.xlu0 %v4185, 126
    %v4252 = vpop.permute.xlu0 %4251
    %4253 = vrot.lane.b32.xlu0 %v4186, 126
    %v4254 = vpop.permute.xlu0 %4253
    %4255 = vrot.lane.b32.xlu0 %v4187, 126
    %v4256 = vpop.permute.xlu0 %4255
    %4257 = vrot.lane.b32.xlu0 %v4188, 126
    %v4258 = vpop.permute.xlu0 %4257
    %4259 = vrot.lane.b32.xlu0 %v4189, 126
    %v4260 = vpop.permute.xlu0 %4259
    %v4261 = vsel %vm2364, %v4246, %v4248
    %v4262 = vsel %vm2364, %v4248, %v4250
    %v4263 = vsel %vm2364, %v4250, %v4252
    %v4264 = vsel %vm2364, %v4254, %v4256
    %v4265 = vsel %vm2364, %v4256, %v4258
    %v4266 = vsel %vm2364, %v4258, %v4260
    %4275 = vst [vmem:[#allocation5 + $0x80] sm:$0xff] %v4261
    %4276 = vst [vmem:[#allocation5 + $0x88] sm:$0xff] %v4262
    %4277 = vst [vmem:[#allocation5 + $0x90] sm:$0xff] %v4263
    %4278 = vst.msk [vmem:[#allocation5 + $0x98] sm:$0xff] %vm4193, %v4252
    %4279 = vst [vmem:[#allocation5 + $0xa0] sm:$0xff] %v4264
    %4280 = vst [vmem:[#allocation5 + $0xa8] sm:$0xff] %v4265
    %4281 = vst [vmem:[#allocation5 + $0xb0] sm:$0xff] %v4266
    %4282 = vst.msk [vmem:[#allocation5 + $0xb8] sm:$0xff] %vm4193, %v4260
    %4283 = vrot.lane.b32.xlu0 %v4182, 112
    %v4284 = vpop.permute.xlu0 %4283
    %4285 = vrot.lane.b32.xlu0 %v4183, 112
    %v4286 = vpop.permute.xlu0 %4285
    %4287 = vrot.lane.b32.xlu0 %v4184, 112
    %v4288 = vpop.permute.xlu0 %4287
    %4289 = vrot.lane.b32.xlu0 %v4185, 112
    %v4290 = vpop.permute.xlu0 %4289
    %4291 = vrot.lane.b32.xlu0 %v4186, 112
    %v4292 = vpop.permute.xlu0 %4291
    %4293 = vrot.lane.b32.xlu0 %v4187, 112
    %v4294 = vpop.permute.xlu0 %4293
    %4295 = vrot.lane.b32.xlu0 %v4188, 112
    %v4296 = vpop.permute.xlu0 %4295
    %4297 = vrot.lane.b32.xlu0 %v4189, 112
    %v4298 = vpop.permute.xlu0 %4297
    %vm4299 = vcmask 916480
    %v4300 = vsel %vm4299, %v4284, %v4286
    %v4301 = vsel %vm4299, %v4286, %v4288
    %v4302 = vsel %vm4299, %v4288, %v4290
    %v4303 = vsel %vm4299, %v4292, %v4294
    %v4304 = vsel %vm4299, %v4294, %v4296
    %v4305 = vsel %vm4299, %v4296, %v4298
    %4314 = vst [vmem:[#allocation5 + $0xc0] sm:$0xff] %v4300
    %4315 = vst [vmem:[#allocation5 + $0xc8] sm:$0xff] %v4301
    %4316 = vst [vmem:[#allocation5 + $0xd0] sm:$0xff] %v4302
    %4317 = vst.msk [vmem:[#allocation5 + $0xd8] sm:$0xff] %vm4193, %v4290
    %4318 = vst [vmem:[#allocation5 + $0xe0] sm:$0xff] %v4303
    %4319 = vst [vmem:[#allocation5 + $0xe8] sm:$0xff] %v4304
    %4320 = vst [vmem:[#allocation5 + $0xf0] sm:$0xff] %v4305
    %4321 = vst.msk [vmem:[#allocation5 + $0xf8] sm:$0xff] %vm4193, %v4298
    %4322 = vrot.lane.b32.xlu0 %v4182, 111
    %v4323 = vpop.permute.xlu0 %4322
    %4324 = vrot.lane.b32.xlu0 %v4183, 111
    %v4325 = vpop.permute.xlu0 %4324
    %4326 = vrot.lane.b32.xlu0 %v4184, 111
    %v4327 = vpop.permute.xlu0 %4326
    %4328 = vrot.lane.b32.xlu0 %v4185, 111
    %v4329 = vpop.permute.xlu0 %4328
    %4330 = vrot.lane.b32.xlu0 %v4186, 111
    %v4331 = vpop.permute.xlu0 %4330
    %4332 = vrot.lane.b32.xlu0 %v4187, 111
    %v4333 = vpop.permute.xlu0 %4332
    %4334 = vrot.lane.b32.xlu0 %v4188, 111
    %v4335 = vpop.permute.xlu0 %4334
    %4336 = vrot.lane.b32.xlu0 %v4189, 111
    %v4337 = vpop.permute.xlu0 %4336
    %v4338 = vsel %vm1901, %v4323, %v4325
    %v4339 = vsel %vm1901, %v4325, %v4327
    %v4340 = vsel %vm1901, %v4327, %v4329
    %v4341 = vsel %vm1901, %v4331, %v4333
    %v4342 = vsel %vm1901, %v4333, %v4335
    %v4343 = vsel %vm1901, %v4335, %v4337
    %4352 = vst [vmem:[#allocation5 + $0x100] sm:$0xff] %v4338
    %4353 = vst [vmem:[#allocation5 + $0x108] sm:$0xff] %v4339
    %4354 = vst [vmem:[#allocation5 + $0x110] sm:$0xff] %v4340
    %4355 = vst.msk [vmem:[#allocation5 + $0x118] sm:$0xff] %vm4193, %v4329
    %4356 = vst [vmem:[#allocation5 + $0x120] sm:$0xff] %v4341
    %4357 = vst [vmem:[#allocation5 + $0x128] sm:$0xff] %v4342
    %4358 = vst [vmem:[#allocation5 + $0x130] sm:$0xff] %v4343
    %4359 = vst.msk [vmem:[#allocation5 + $0x138] sm:$0xff] %vm4193, %v4337
    %4360 = vrot.lane.b32.xlu0 %v4182, 110
    %v4361 = vpop.permute.xlu0 %4360
    %4362 = vrot.lane.b32.xlu0 %v4183, 110
    %v4363 = vpop.permute.xlu0 %4362
    %4364 = vrot.lane.b32.xlu0 %v4184, 110
    %v4365 = vpop.permute.xlu0 %4364
    %4366 = vrot.lane.b32.xlu0 %v4185, 110
    %v4367 = vpop.permute.xlu0 %4366
    %4368 = vrot.lane.b32.xlu0 %v4186, 110
    %v4369 = vpop.permute.xlu0 %4368
    %4370 = vrot.lane.b32.xlu0 %v4187, 110
    %v4371 = vpop.permute.xlu0 %4370
    %4372 = vrot.lane.b32.xlu0 %v4188, 110
    %v4373 = vpop.permute.xlu0 %4372
    %4374 = vrot.lane.b32.xlu0 %v4189, 110
    %v4375 = vpop.permute.xlu0 %4374
    %vm4376 = vcmask 900096
    %v4377 = vsel %vm4376, %v4361, %v4363
    %v4378 = vsel %vm4376, %v4363, %v4365
    %v4379 = vsel %vm4376, %v4365, %v4367
    %v4380 = vsel %vm4376, %v4369, %v4371
    %v4381 = vsel %vm4376, %v4371, %v4373
    %v4382 = vsel %vm4376, %v4373, %v4375
    %4391 = vst [vmem:[#allocation5 + $0x140] sm:$0xff] %v4377
    %4392 = vst [vmem:[#allocation5 + $0x148] sm:$0xff] %v4378
    %4393 = vst [vmem:[#allocation5 + $0x150] sm:$0xff] %v4379
    %4394 = vst.msk [vmem:[#allocation5 + $0x158] sm:$0xff] %vm4193, %v4367
    %4395 = vst [vmem:[#allocation5 + $0x160] sm:$0xff] %v4380
    %4396 = vst [vmem:[#allocation5 + $0x168] sm:$0xff] %v4381
    %4397 = vst [vmem:[#allocation5 + $0x170] sm:$0xff] %v4382
    %4398 = vst.msk [vmem:[#allocation5 + $0x178] sm:$0xff] %vm4193, %v4375
    %4399 = vrot.lane.b32.xlu0 %v4182, 96
    %v4400 = vpop.permute.xlu0 %4399
    %4401 = vrot.lane.b32.xlu0 %v4183, 96
    %v4402 = vpop.permute.xlu0 %4401
    %4403 = vrot.lane.b32.xlu0 %v4184, 96
    %v4404 = vpop.permute.xlu0 %4403
    %4405 = vrot.lane.b32.xlu0 %v4185, 96
    %v4406 = vpop.permute.xlu0 %4405
    %4407 = vrot.lane.b32.xlu0 %v4186, 96
    %v4408 = vpop.permute.xlu0 %4407
    %4409 = vrot.lane.b32.xlu0 %v4187, 96
    %v4410 = vpop.permute.xlu0 %4409
    %4411 = vrot.lane.b32.xlu0 %v4188, 96
    %v4412 = vpop.permute.xlu0 %4411
    %4413 = vrot.lane.b32.xlu0 %v4189, 96
    %v4414 = vpop.permute.xlu0 %4413
    %v4415 = vsel %vm2418, %v4400, %v4402
    %v4416 = vsel %vm2418, %v4402, %v4404
    %v4417 = vsel %vm2418, %v4404, %v4406
    %v4418 = vsel %vm2418, %v4408, %v4410
    %v4419 = vsel %vm2418, %v4410, %v4412
    %v4420 = vsel %vm2418, %v4412, %v4414
    %4429 = vst [vmem:[#allocation5 + $0x180] sm:$0xff] %v4415
    %4430 = vst [vmem:[#allocation5 + $0x188] sm:$0xff] %v4416
    %4431 = vst [vmem:[#allocation5 + $0x190] sm:$0xff] %v4417
    %4432 = vst.msk [vmem:[#allocation5 + $0x198] sm:$0xff] %vm4193, %v4406
    %4433 = vst [vmem:[#allocation5 + $0x1a0] sm:$0xff] %v4418
    %4434 = vst [vmem:[#allocation5 + $0x1a8] sm:$0xff] %v4419
    %4435 = vst [vmem:[#allocation5 + $0x1b0] sm:$0xff] %v4420
    %4436 = vst.msk [vmem:[#allocation5 + $0x1b8] sm:$0xff] %vm4193, %v4414
    %4437 = vrot.lane.b32.xlu0 %v4182, 95
    %v4438 = vpop.permute.xlu0 %4437
    %4439 = vrot.lane.b32.xlu0 %v4183, 95
    %v4440 = vpop.permute.xlu0 %4439
    %4441 = vrot.lane.b32.xlu0 %v4184, 95
    %v4442 = vpop.permute.xlu0 %4441
    %4443 = vrot.lane.b32.xlu0 %v4185, 95
    %v4444 = vpop.permute.xlu0 %4443
    %4445 = vrot.lane.b32.xlu0 %v4186, 95
    %v4446 = vpop.permute.xlu0 %4445
    %4447 = vrot.lane.b32.xlu0 %v4187, 95
    %v4448 = vpop.permute.xlu0 %4447
    %4449 = vrot.lane.b32.xlu0 %v4188, 95
    %v4450 = vpop.permute.xlu0 %4449
    %4451 = vrot.lane.b32.xlu0 %v4189, 95
    %v4452 = vpop.permute.xlu0 %4451
    %vm4453 = vcmask 777216
    %v4454 = vsel %vm4453, %v4438, %v4440
    %v4455 = vsel %vm4453, %v4440, %v4442
    %v4456 = vsel %vm4453, %v4442, %v4444
    %v4457 = vsel %vm4453, %v4446, %v4448
    %v4458 = vsel %vm4453, %v4448, %v4450
    %v4459 = vsel %vm4453, %v4450, %v4452
    %4468 = vst [vmem:[#allocation5 + $0x1c0] sm:$0xff] %v4454
    %4469 = vst [vmem:[#allocation5 + $0x1c8] sm:$0xff] %v4455
    %4470 = vst [vmem:[#allocation5 + $0x1d0] sm:$0xff] %v4456
    %4471 = vst.msk [vmem:[#allocation5 + $0x1d8] sm:$0xff] %vm4193, %v4444
    %4472 = vst [vmem:[#allocation5 + $0x1e0] sm:$0xff] %v4457
    %4473 = vst [vmem:[#allocation5 + $0x1e8] sm:$0xff] %v4458
    %4474 = vst [vmem:[#allocation5 + $0x1f0] sm:$0xff] %v4459
    %4475 = vst.msk [vmem:[#allocation5 + $0x1f8] sm:$0xff] %vm4193, %v4452
    %4476 = vrot.lane.b32.xlu0 %v4182, 94
    %v4477 = vpop.permute.xlu0 %4476
    %4478 = vrot.lane.b32.xlu0 %v4183, 94
    %v4479 = vpop.permute.xlu0 %4478
    %4480 = vrot.lane.b32.xlu0 %v4184, 94
    %v4481 = vpop.permute.xlu0 %4480
    %4482 = vrot.lane.b32.xlu0 %v4185, 94
    %v4483 = vpop.permute.xlu0 %4482
    %4484 = vrot.lane.b32.xlu0 %v4186, 94
    %v4485 = vpop.permute.xlu0 %4484
    %4486 = vrot.lane.b32.xlu0 %v4187, 94
    %v4487 = vpop.permute.xlu0 %4486
    %4488 = vrot.lane.b32.xlu0 %v4188, 94
    %v4489 = vpop.permute.xlu0 %4488
    %4490 = vrot.lane.b32.xlu0 %v4189, 94
    %v4491 = vpop.permute.xlu0 %4490
    %v4492 = vsel %vm4193, %v4477, %v4479
    %v4493 = vsel %vm4193, %v4479, %v4481
    %v4494 = vsel %vm4193, %v4481, %v4483
    %v4495 = vsel %vm4193, %v4485, %v4487
    %v4496 = vsel %vm4193, %v4487, %v4489
    %v4497 = vsel %vm4193, %v4489, %v4491
    %4506 = vst [vmem:[#allocation5 + $0x200] sm:$0xff] %v4492
    %4507 = vst [vmem:[#allocation5 + $0x208] sm:$0xff] %v4493
    %4508 = vst [vmem:[#allocation5 + $0x210] sm:$0xff] %v4494
    %4509 = vst.msk [vmem:[#allocation5 + $0x218] sm:$0xff] %vm4193, %v4483
    %4510 = vst [vmem:[#allocation5 + $0x220] sm:$0xff] %v4495
    %4511 = vst [vmem:[#allocation5 + $0x228] sm:$0xff] %v4496
    %4512 = vst [vmem:[#allocation5 + $0x230] sm:$0xff] %v4497
    %4513 = vst.msk [vmem:[#allocation5 + $0x238] sm:$0xff] %vm4193, %v4491
    %v4514 = vld [vmem:[#allocation13] sm:$0xff]
    %v4515 = vld [vmem:[#allocation13 + $0x8] sm:$0xff]
    %v4516 = vld [vmem:[#allocation13 + $0x10] sm:$0xff]
    %v4517 = vld [vmem:[#allocation13 + $0x18] sm:$0xff]
    %v4518 = vld [vmem:[#allocation13 + $0x20] sm:$0xff]
    %v4519 = vld [vmem:[#allocation13 + $0x28] sm:$0xff]
    %v4520 = vld [vmem:[#allocation13 + $0x30] sm:$0xff]
    %v4521 = vld [vmem:[#allocation13 + $0x38] sm:$0xff]
    %v4522 = vld [vmem:[#allocation5] sm:$0xff]
    %v4523 = vld [vmem:[#allocation5 + $0x8] sm:$0xff]
    %v4524 = vld [vmem:[#allocation5 + $0x10] sm:$0xff]
    %v4525 = vld [vmem:[#allocation5 + $0x18] sm:$0xff]
    %v4526 = vld [vmem:[#allocation5 + $0x20] sm:$0xff]
    %v4527 = vld [vmem:[#allocation5 + $0x28] sm:$0xff]
    %v4528 = vld [vmem:[#allocation5 + $0x30] sm:$0xff]
    %v4529 = vld [vmem:[#allocation5 + $0x38] sm:$0xff]
    %v4530 = vld [vmem:[#allocation5 + $0x40] sm:$0xff]
    %v4531 = vld [vmem:[#allocation5 + $0x48] sm:$0xff]
    %v4532 = vld [vmem:[#allocation5 + $0x50] sm:$0xff]
    %v4533 = vld [vmem:[#allocation5 + $0x58] sm:$0xff]
    %v4534 = vld [vmem:[#allocation5 + $0x60] sm:$0xff]
    %v4535 = vld [vmem:[#allocation5 + $0x68] sm:$0xff]
    %v4536 = vld [vmem:[#allocation5 + $0x70] sm:$0xff]
    %v4537 = vld [vmem:[#allocation5 + $0x78] sm:$0xff]
    %v4538 = vld [vmem:[#allocation5 + $0x80] sm:$0xff]
    %v4539 = vld [vmem:[#allocation5 + $0x88] sm:$0xff]
    %v4540 = vld [vmem:[#allocation5 + $0x90] sm:$0xff]
    %v4541 = vld [vmem:[#allocation5 + $0x98] sm:$0xff]
    %v4542 = vld [vmem:[#allocation5 + $0xa0] sm:$0xff]
    %v4543 = vld [vmem:[#allocation5 + $0xa8] sm:$0xff]
    %v4544 = vld [vmem:[#allocation5 + $0xb0] sm:$0xff]
    %v4545 = vld [vmem:[#allocation5 + $0xb8] sm:$0xff]
    %v4546 = vld [vmem:[#allocation5 + $0xc0] sm:$0xff]
    %v4547 = vld [vmem:[#allocation5 + $0xc8] sm:$0xff]
    %v4548 = vld [vmem:[#allocation5 + $0xd0] sm:$0xff]
    %v4549 = vld [vmem:[#allocation5 + $0xd8] sm:$0xff]
    %v4550 = vld [vmem:[#allocation5 + $0xe0] sm:$0xff]
    %v4551 = vld [vmem:[#allocation5 + $0xe8] sm:$0xff]
    %v4552 = vld [vmem:[#allocation5 + $0xf0] sm:$0xff]
    %v4553 = vld [vmem:[#allocation5 + $0xf8] sm:$0xff]
    %v4554 = vld [vmem:[#allocation5 + $0x100] sm:$0xff]
    %v4555 = vld [vmem:[#allocation5 + $0x108] sm:$0xff]
    %v4556 = vld [vmem:[#allocation5 + $0x110] sm:$0xff]
    %v4557 = vld [vmem:[#allocation5 + $0x118] sm:$0xff]
    %v4558 = vld [vmem:[#allocation5 + $0x120] sm:$0xff]
    %v4559 = vld [vmem:[#allocation5 + $0x128] sm:$0xff]
    %v4560 = vld [vmem:[#allocation5 + $0x130] sm:$0xff]
    %v4561 = vld [vmem:[#allocation5 + $0x138] sm:$0xff]
    %v4562 = vld [vmem:[#allocation5 + $0x140] sm:$0xff]
    %v4563 = vld [vmem:[#allocation5 + $0x148] sm:$0xff]
    %v4564 = vld [vmem:[#allocation5 + $0x150] sm:$0xff]
    %v4565 = vld [vmem:[#allocation5 + $0x158] sm:$0xff]
    %v4566 = vld [vmem:[#allocation5 + $0x160] sm:$0xff]
    %v4567 = vld [vmem:[#allocation5 + $0x168] sm:$0xff]
    %v4568 = vld [vmem:[#allocation5 + $0x170] sm:$0xff]
    %v4569 = vld [vmem:[#allocation5 + $0x178] sm:$0xff]
    %v4570 = vld [vmem:[#allocation5 + $0x180] sm:$0xff]
    %v4571 = vld [vmem:[#allocation5 + $0x188] sm:$0xff]
    %v4572 = vld [vmem:[#allocation5 + $0x190] sm:$0xff]
    %v4573 = vld [vmem:[#allocation5 + $0x198] sm:$0xff]
    %v4574 = vld [vmem:[#allocation5 + $0x1a0] sm:$0xff]
    %v4575 = vld [vmem:[#allocation5 + $0x1a8] sm:$0xff]
    %v4576 = vld [vmem:[#allocation5 + $0x1b0] sm:$0xff]
    %v4577 = vld [vmem:[#allocation5 + $0x1b8] sm:$0xff]
    %v4578 = vld [vmem:[#allocation5 + $0x1c0] sm:$0xff]
    %v4579 = vld [vmem:[#allocation5 + $0x1c8] sm:$0xff]
    %v4580 = vld [vmem:[#allocation5 + $0x1d0] sm:$0xff]
    %v4581 = vld [vmem:[#allocation5 + $0x1d8] sm:$0xff]
    %v4582 = vld [vmem:[#allocation5 + $0x1e0] sm:$0xff]
    %v4583 = vld [vmem:[#allocation5 + $0x1e8] sm:$0xff]
    %v4584 = vld [vmem:[#allocation5 + $0x1f0] sm:$0xff]
    %v4585 = vld [vmem:[#allocation5 + $0x1f8] sm:$0xff]
    %v4586 = vld [vmem:[#allocation5 + $0x200] sm:$0xff]
    %v4587 = vld [vmem:[#allocation5 + $0x208] sm:$0xff]
    %v4588 = vld [vmem:[#allocation5 + $0x210] sm:$0xff]
    %v4589 = vld [vmem:[#allocation5 + $0x218] sm:$0xff]
    %v4590 = vld [vmem:[#allocation5 + $0x220] sm:$0xff]
    %v4591 = vld [vmem:[#allocation5 + $0x228] sm:$0xff]
    %v4592 = vld [vmem:[#allocation5 + $0x230] sm:$0xff]
    %v4593 = vld [vmem:[#allocation5 + $0x238] sm:$0xff]
    %v4594 = vld [vmem:[%s4] sm:$0xff]
    %v4595 = vld [vmem:[%s4 + $0x8] sm:$0xff]
    %v4596 = vld [vmem:[%s4 + $0x10] sm:$0xff]
    %v4597 = vld [vmem:[%s4 + $0x18] sm:$0xff]
    %4599 = vset.pattern.permute.xlu0 0
    %4600 = vperm.xlu0 %4599, %v4594
    %v4601 = vpop.permute.xlu0 %4600
    %4604 = vset.pattern.permute.xlu0 0
    %4605 = vperm.xlu0 %4604, %v4595
    %v4606 = vpop.permute.xlu0 %4605
    %4609 = vset.pattern.permute.xlu0 0
    %4610 = vperm.xlu0 %4609, %v4596
    %v4611 = vpop.permute.xlu0 %4610
    %4614 = vset.pattern.permute.xlu0 0
    %4615 = vperm.xlu0 %4614, %v4597
    %v4616 = vpop.permute.xlu0 %4615
    %vm4618 = vcmask 130048
    %v4620 = vsel %vm4618, %v4515, 0
    %v4623 = vsel %vm4618, %v4517, 0
    %v4626 = vsel %vm4618, %v4519, 0
    %v4629 = vsel %vm4618, %v4521, 0
    %4631 = vmatprep.subr.mxu0 %v4523
    %4632 = vmatpush1.msra.mxu0 %v4522
    %4633 = vmatprep.subr.mxu0 %v4527
    %4634 = vmatpush1.msra.mxu0 %v4526
    %4635 = vmatprep.subr.mxu0 %v4531
    %4636 = vmatpush1.msra.mxu0 %v4530
    %4637 = vmatprep.subr.mxu0 %v4535
    %4638 = vmatpush1.msra.mxu0 %v4534
    %4639 = vmatprep.subr.mxu0 %v4539
    %4640 = vmatpush1.msra.mxu0 %v4538
    %4641 = vmatprep.subr.mxu0 %v4543
    %4642 = vmatpush1.msra.mxu0 %v4542
    %4643 = vmatprep.subr.mxu0 %v4547
    %4644 = vmatpush1.msra.mxu0 %v4546
    %4645 = vmatprep.subr.mxu0 %v4551
    %4646 = vmatpush1.msra.mxu0 %v4550
    %4647 = vmatprep.subr.mxu0 %v4555
    %4648 = vmatpush1.msra.mxu0 %v4554
    %4649 = vmatprep.subr.mxu0 %v4559
    %4650 = vmatpush1.msra.mxu0 %v4558
    %4651 = vmatprep.subr.mxu0 %v4563
    %4652 = vmatpush1.msra.mxu0 %v4562
    %4653 = vmatprep.subr.mxu0 %v4567
    %4654 = vmatpush1.msra.mxu0 %v4566
    %4655 = vmatprep.subr.mxu0 %v4571
    %4656 = vmatpush1.msra.mxu0 %v4570
    %4657 = vmatprep.subr.mxu0 %v4575
    %4658 = vmatpush1.msra.mxu0 %v4574
    %4659 = vmatprep.subr.mxu0 %v4579
    %4660 = vmatpush1.msra.mxu0 %v4578
    %4661 = vmatprep.subr.mxu0 %v4583
    %4662 = vmatpush1.msra.mxu0 %v4582
    %4663 = vmatprep.subr.mxu0 %v4587
    %4664 = vmatpush1.msra.mxu0 %v4586
    %4665 = vmatprep.subr.mxu0 %v4591
    %4666 = vmatpush1.msra.mxu0 %v4590
    %4667 = vmatprep.subr.mxu0 0.0
    %4668 = vmatpush1.msra.mxu0 0.0
    %4669 = vmatprep.subr.mxu0 0.0
    %4670 = vmatpush1.msra.mxu0 0.0
    %4671 = vmatprep.subr.mxu0 0.0
    %4672 = vmatpush1.msra.mxu0 0.0
    %4673 = vmatprep.subr.mxu0 0.0
    %4674 = vmatpush1.msra.mxu0 0.0
    %4675 = vmatprep.subr.mxu0 0.0
    %4676 = vmatpush1.msra.mxu0 0.0
    %4677 = vmatprep.subr.mxu0 0.0
    %4678 = vmatpush1.msra.mxu0 0.0
    %4679 = vmatprep.subr.mxu0 0.0
    %4680 = vmatpush1.msra.mxu0 0.0
    %4681 = vmatprep.subr.mxu0 0.0
    %4682 = vmatpush1.msra.mxu0 0.0
    %4683 = vmatprep.subr.mxu0 0.0
    %4684 = vmatpush1.msra.mxu0 0.0
    %4685 = vmatprep.subr.mxu0 0.0
    %4686 = vmatpush1.msra.mxu0 0.0
    %4687 = vmatprep.subr.mxu0 0.0
    %4688 = vmatpush1.msra.mxu0 0.0
    %4689 = vmatprep.subr.mxu0 0.0
    %4690 = vmatpush1.msra.mxu0 0.0
    %4691 = vmatprep.subr.mxu0 0.0
    %4692 = vmatpush1.msra.mxu0 0.0
    %4693 = vmatprep.subr.mxu0 0.0
    %4694 = vmatpush1.msra.mxu0 0.0
    %4695 = vmatprep.mubr.f32.mxu0 %v4620
    %4696 = vmatmul.mubr.f32.gmra.mrb[0].mxu0 %v4514
    %v4697 = vpop.f32.mrb[0].mxu0
    %v4698 = vadd.f32 %v4601, %v4697
    %v4699 = vpop.f32.mrb[0].mxu0
    %v4700 = vadd.f32 %v4601, %v4699
    %4701 = vmatprep.mubr.f32.mxu0 %v4623
    %4702 = vmatmul.mubr.f32.gmra.mrb[0].mxu0 %v4516
    %v4703 = vpop.f32.mrb[0].mxu0
    %v4704 = vadd.f32 %v4606, %v4703
    %v4705 = vpop.f32.mrb[0].mxu0
    %v4706 = vadd.f32 %v4606, %v4705
    %4707 = vmatprep.mubr.f32.mxu0 %v4626
    %4708 = vmatmul.mubr.f32.gmra.mrb[0].mxu0 %v4518
    %v4709 = vpop.f32.mrb[0].mxu0
    %v4710 = vadd.f32 %v4611, %v4709
    %v4711 = vpop.f32.mrb[0].mxu0
    %v4712 = vadd.f32 %v4611, %v4711
    %4713 = vmatprep.mubr.f32.mxu0 %v4629
    %4714 = vmatmul.mubr.f32.gmra.mrb[0].mxu0 %v4520
    %v4715 = vpop.f32.mrb[0].mxu0
    %v4716 = vadd.f32 %v4616, %v4715
    %v4717 = vpop.f32.mrb[0].mxu0
    %v4718 = vadd.f32 %v4616, %v4717
    %4719 = vdwg.mxu0
    %4720 = vmatprep.subr.mxu0 %v4525
    %4721 = vmatpush1.msra.mxu0 %v4524
    %4722 = vmatprep.subr.mxu0 %v4529
    %4723 = vmatpush1.msra.mxu0 %v4528
    %4724 = vmatprep.subr.mxu0 %v4533
    %4725 = vmatpush1.msra.mxu0 %v4532
    %4726 = vmatprep.subr.mxu0 %v4537
    %4727 = vmatpush1.msra.mxu0 %v4536
    %4728 = vmatprep.subr.mxu0 %v4541
    %4729 = vmatpush1.msra.mxu0 %v4540
    %4730 = vmatprep.subr.mxu0 %v4545
    %4731 = vmatpush1.msra.mxu0 %v4544
    %4732 = vmatprep.subr.mxu0 %v4549
    %4733 = vmatpush1.msra.mxu0 %v4548
    %4734 = vmatprep.subr.mxu0 %v4553
    %4735 = vmatpush1.msra.mxu0 %v4552
    %4736 = vmatprep.subr.mxu0 %v4557
    %4737 = vmatpush1.msra.mxu0 %v4556
    %4738 = vmatprep.subr.mxu0 %v4561
    %4739 = vmatpush1.msra.mxu0 %v4560
    %4740 = vmatprep.subr.mxu0 %v4565
    %4741 = vmatpush1.msra.mxu0 %v4564
    %4742 = vmatprep.subr.mxu0 %v4569
    %4743 = vmatpush1.msra.mxu0 %v4568
    %4744 = vmatprep.subr.mxu0 %v4573
    %4745 = vmatpush1.msra.mxu0 %v4572
    %4746 = vmatprep.subr.mxu0 %v4577
    %4747 = vmatpush1.msra.mxu0 %v4576
    %4748 = vmatprep.subr.mxu0 %v4581
    %4749 = vmatpush1.msra.mxu0 %v4580
    %4750 = vmatprep.subr.mxu0 %v4585
    %4751 = vmatpush1.msra.mxu0 %v4584
    %4752 = vmatprep.subr.mxu0 %v4589
    %4753 = vmatpush1.msra.mxu0 %v4588
    %4754 = vmatprep.subr.mxu0 %v4593
    %4755 = vmatpush1.msra.mxu0 %v4592
    %4756 = vmatprep.subr.mxu0 0.0
    %4757 = vmatpush1.msra.mxu0 0.0
    %4758 = vmatprep.subr.mxu0 0.0
    %4759 = vmatpush1.msra.mxu0 0.0
    %4760 = vmatprep.subr.mxu0 0.0
    %4761 = vmatpush1.msra.mxu0 0.0
    %4762 = vmatprep.subr.mxu0 0.0
    %4763 = vmatpush1.msra.mxu0 0.0
    %4764 = vmatprep.subr.mxu0 0.0
    %4765 = vmatpush1.msra.mxu0 0.0
    %4766 = vmatprep.subr.mxu0 0.0
    %4767 = vmatpush1.msra.mxu0 0.0
    %4768 = vmatprep.subr.mxu0 0.0
    %4769 = vmatpush1.msra.mxu0 0.0
    %4770 = vmatprep.subr.mxu0 0.0
    %4771 = vmatpush1.msra.mxu0 0.0
    %4772 = vmatprep.subr.mxu0 0.0
    %4773 = vmatpush1.msra.mxu0 0.0
    %4774 = vmatprep.subr.mxu0 0.0
    %4775 = vmatpush1.msra.mxu0 0.0
    %4776 = vmatprep.subr.mxu0 0.0
    %4777 = vmatpush1.msra.mxu0 0.0
    %4778 = vmatprep.subr.mxu0 0.0
    %4779 = vmatpush1.msra.mxu0 0.0
    %4780 = vmatprep.subr.mxu0 0.0
    %4781 = vmatpush1.msra.mxu0 0.0
    %4782 = vmatprep.subr.mxu0 0.0
    %4783 = vmatpush1.msra.mxu0 0.0
    %4784 = vmatprep.mubr.f32.mxu0 %v4620
    %4785 = vmatmul.mubr.f32.gmra.mrb[0].mxu0 %v4514
    %v4786 = vpop.f32.mrb[0].mxu0
    %v4787 = vadd.f32 %v4601, %v4786
    %v4788 = vpop.f32.mrb[0].mxu0
    %v4789 = vadd.f32 %v4601, %v4788
    %4790 = vmatprep.mubr.f32.mxu0 %v4623
    %4791 = vmatmul.mubr.f32.gmra.mrb[0].mxu0 %v4516
    %v4792 = vpop.f32.mrb[0].mxu0
    %v4793 = vadd.f32 %v4606, %v4792
    %v4794 = vpop.f32.mrb[0].mxu0
    %v4795 = vadd.f32 %v4606, %v4794
    %4796 = vmatprep.mubr.f32.mxu0 %v4626
    %4797 = vmatmul.mubr.f32.gmra.mrb[0].mxu0 %v4518
    %v4798 = vpop.f32.mrb[0].mxu0
    %v4799 = vadd.f32 %v4611, %v4798
    %v4800 = vpop.f32.mrb[0].mxu0
    %v4801 = vadd.f32 %v4611, %v4800
    %4802 = vmatprep.mubr.f32.mxu0 %v4629
    %4803 = vmatmul.mubr.f32.gmra.mrb[0].mxu0 %v4520
    %v4804 = vpop.f32.mrb[0].mxu0
    %v4805 = vadd.f32 %v4616, %v4804
    %v4806 = vpop.f32.mrb[0].mxu0
    %v4807 = vadd.f32 %v4616, %v4806
    %4808 = vdwg.mxu0
    %v4809 = vmax.f32 %v4698, 0.0
    %v4810 = vmax.f32 %v4700, 0.0
    %v4811 = vmax.f32 %v4787, 0.0
    %v4812 = vmax.f32 %v4789, 0.0
    %v4813 = vmax.f32 %v4704, 0.0
    %v4814 = vmax.f32 %v4706, 0.0
    %v4815 = vmax.f32 %v4793, 0.0
    %v4816 = vmax.f32 %v4795, 0.0
    %v4817 = vmax.f32 %v4710, 0.0
    %v4818 = vmax.f32 %v4712, 0.0
    %v4819 = vmax.f32 %v4799, 0.0
    %v4820 = vmax.f32 %v4801, 0.0
    %v4821 = vmax.f32 %v4716, 0.0
    %v4822 = vmax.f32 %v4718, 0.0
    %v4823 = vmax.f32 %v4805, 0.0
    %v4824 = vmax.f32 %v4807, 0.0
    %4841 = vrot.lane.b32.xlu0 %v4809, 127
    %v4842 = vpop.permute.xlu0 %4841
    %4843 = vrot.lane.b32.xlu0 %v4810, 127
    %v4844 = vpop.permute.xlu0 %4843
    %4845 = vrot.lane.b32.xlu0 %v4811, 127
    %v4846 = vpop.permute.xlu0 %4845
    %4847 = vrot.lane.b32.xlu0 %v4812, 127
    %v4848 = vpop.permute.xlu0 %4847
    %4849 = vrot.lane.b32.xlu0 %v4813, 127
    %v4850 = vpop.permute.xlu0 %4849
    %4851 = vrot.lane.b32.xlu0 %v4814, 127
    %v4852 = vpop.permute.xlu0 %4851
    %4853 = vrot.lane.b32.xlu0 %v4815, 127
    %v4854 = vpop.permute.xlu0 %4853
    %4855 = vrot.lane.b32.xlu0 %v4816, 127
    %v4856 = vpop.permute.xlu0 %4855
    %4857 = vrot.lane.b32.xlu0 %v4817, 127
    %v4858 = vpop.permute.xlu0 %4857
    %4859 = vrot.lane.b32.xlu0 %v4818, 127
    %v4860 = vpop.permute.xlu0 %4859
    %4861 = vrot.lane.b32.xlu0 %v4819, 127
    %v4862 = vpop.permute.xlu0 %4861
    %4863 = vrot.lane.b32.xlu0 %v4820, 127
    %v4864 = vpop.permute.xlu0 %4863
    %4865 = vrot.lane.b32.xlu0 %v4821, 127
    %v4866 = vpop.permute.xlu0 %4865
    %4867 = vrot.lane.b32.xlu0 %v4822, 127
    %v4868 = vpop.permute.xlu0 %4867
    %4869 = vrot.lane.b32.xlu0 %v4823, 127
    %v4870 = vpop.permute.xlu0 %4869
    %4871 = vrot.lane.b32.xlu0 %v4824, 127
    %v4872 = vpop.permute.xlu0 %4871
    %v4873 = vsel %vm1789, %v4842, %v4844
    %v4874 = vsel %vm1789, %v4844, %v4846
    %v4875 = vsel %vm1789, %v4846, %v4848
    %v4876 = vsel %vm1789, %v4850, %v4852
    %v4877 = vsel %vm1789, %v4852, %v4854
    %v4878 = vsel %vm1789, %v4854, %v4856
    %v4879 = vsel %vm1789, %v4858, %v4860
    %v4880 = vsel %vm1789, %v4860, %v4862
    %v4881 = vsel %vm1789, %v4862, %v4864
    %v4882 = vsel %vm1789, %v4866, %v4868
    %v4883 = vsel %vm1789, %v4868, %v4870
    %v4884 = vsel %vm1789, %v4870, %v4872
    %v4901 = vmax.f32 %v4809, %v4873
    %v4902 = vmax.f32 %v4810, %v4874
    %v4903 = vmax.f32 %v4811, %v4875
    %v4904 = vmax.f32 %v4812, %v4848
    %v4905 = vmax.f32 %v4813, %v4876
    %v4906 = vmax.f32 %v4814, %v4877
    %v4907 = vmax.f32 %v4815, %v4878
    %v4908 = vmax.f32 %v4816, %v4856
    %v4909 = vmax.f32 %v4817, %v4879
    %v4910 = vmax.f32 %v4818, %v4880
    %v4911 = vmax.f32 %v4819, %v4881
    %v4912 = vmax.f32 %v4820, %v4864
    %v4913 = vmax.f32 %v4821, %v4882
    %v4914 = vmax.f32 %v4822, %v4883
    %v4915 = vmax.f32 %v4823, %v4884
    %v4916 = vmax.f32 %v4824, %v4872
    %4933 = vrot.lane.b32.xlu0 %v4901, 112
    %v4934 = vpop.permute.xlu0 %4933
    %4935 = vrot.lane.b32.xlu0 %v4902, 112
    %v4936 = vpop.permute.xlu0 %4935
    %4937 = vrot.lane.b32.xlu0 %v4903, 112
    %v4938 = vpop.permute.xlu0 %4937
    %4939 = vrot.lane.b32.xlu0 %v4904, 112
    %v4940 = vpop.permute.xlu0 %4939
    %4941 = vrot.lane.b32.xlu0 %v4905, 112
    %v4942 = vpop.permute.xlu0 %4941
    %4943 = vrot.lane.b32.xlu0 %v4906, 112
    %v4944 = vpop.permute.xlu0 %4943
    %4945 = vrot.lane.b32.xlu0 %v4907, 112
    %v4946 = vpop.permute.xlu0 %4945
    %4947 = vrot.lane.b32.xlu0 %v4908, 112
    %v4948 = vpop.permute.xlu0 %4947
    %4949 = vrot.lane.b32.xlu0 %v4909, 112
    %v4950 = vpop.permute.xlu0 %4949
    %4951 = vrot.lane.b32.xlu0 %v4910, 112
    %v4952 = vpop.permute.xlu0 %4951
    %4953 = vrot.lane.b32.xlu0 %v4911, 112
    %v4954 = vpop.permute.xlu0 %4953
    %4955 = vrot.lane.b32.xlu0 %v4912, 112
    %v4956 = vpop.permute.xlu0 %4955
    %4957 = vrot.lane.b32.xlu0 %v4913, 112
    %v4958 = vpop.permute.xlu0 %4957
    %4959 = vrot.lane.b32.xlu0 %v4914, 112
    %v4960 = vpop.permute.xlu0 %4959
    %4961 = vrot.lane.b32.xlu0 %v4915, 112
    %v4962 = vpop.permute.xlu0 %4961
    %4963 = vrot.lane.b32.xlu0 %v4916, 112
    %v4964 = vpop.permute.xlu0 %4963
    %v4965 = vsel %vm4299, %v4934, %v4936
    %v4966 = vsel %vm4299, %v4936, %v4938
    %v4967 = vsel %vm4299, %v4938, %v4940
    %v4968 = vsel %vm4299, %v4942, %v4944
    %v4969 = vsel %vm4299, %v4944, %v4946
    %v4970 = vsel %vm4299, %v4946, %v4948
    %v4971 = vsel %vm4299, %v4950, %v4952
    %v4972 = vsel %vm4299, %v4952, %v4954
    %v4973 = vsel %vm4299, %v4954, %v4956
    %v4974 = vsel %vm4299, %v4958, %v4960
    %v4975 = vsel %vm4299, %v4960, %v4962
    %v4976 = vsel %vm4299, %v4962, %v4964
    %v4993 = vmax.f32 %v4901, %v4965
    %v4994 = vmax.f32 %v4902, %v4966
    %v4995 = vmax.f32 %v4903, %v4967
    %v4996 = vmax.f32 %v4904, %v4940
    %v4997 = vmax.f32 %v4905, %v4968
    %v4998 = vmax.f32 %v4906, %v4969
    %v4999 = vmax.f32 %v4907, %v4970
    %v5000 = vmax.f32 %v4908, %v4948
    %v5001 = vmax.f32 %v4909, %v4971
    %v5002 = vmax.f32 %v4910, %v4972
    %v5003 = vmax.f32 %v4911, %v4973
    %v5004 = vmax.f32 %v4912, %v4956
    %v5005 = vmax.f32 %v4913, %v4974
    %v5006 = vmax.f32 %v4914, %v4975
    %v5007 = vmax.f32 %v4915, %v4976
    %v5008 = vmax.f32 %v4916, %v4964
    %vm5009 = vcmask 629760
    %v5011 = vsel %vm5009, %v4994, 0
    %v5014 = vsel %vm5009, %v4998, 0
    %v5017 = vsel %vm5009, %v5002, 0
    %v5020 = vsel %vm5009, %v5006, 0
    %vm5022 = vcmask 1044480
    %v5024 = vsel %vm5022, %v1535, 0
    %5026 = vmatprep.subr.mxu0 0.0
    %5027 = vmatpush1.msra.mxu0 %v1510
    %5028 = vmatprep.subr.mxu0 0.0
    %5029 = vmatpush1.msra.mxu0 %v1511
    %5030 = vmatprep.subr.mxu0 0.0
    %5031 = vmatpush1.msra.mxu0 %v1512
    %5032 = vmatprep.subr.mxu0 0.0
    %5033 = vmatpush1.msra.mxu0 %v1513
    %5034 = vmatprep.subr.mxu0 0.0
    %5035 = vmatpush1.msra.mxu0 %v1514
    %5036 = vmatprep.subr.mxu0 0.0
    %5037 = vmatpush1.msra.mxu0 %v1515
    %5038 = vmatprep.subr.mxu0 0.0
    %5039 = vmatpush1.msra.mxu0 %v1516
    %5040 = vmatprep.subr.mxu0 0.0
    %5041 = vmatpush1.msra.mxu0 %v1517
    %5042 = vmatprep.subr.mxu0 0.0
    %5043 = vmatpush1.msra.mxu0 %v1518
    %5044 = vmatprep.subr.mxu0 0.0
    %5045 = vmatpush1.msra.mxu0 %v1519
    %5046 = vmatprep.subr.mxu0 0.0
    %5047 = vmatpush1.msra.mxu0 %v1520
    %5048 = vmatprep.subr.mxu0 0.0
    %5049 = vmatpush1.msra.mxu0 %v1521
    %5050 = vmatprep.subr.mxu0 0.0
    %5051 = vmatpush1.msra.mxu0 %v1522
    %5052 = vmatprep.subr.mxu0 0.0
    %5053 = vmatpush1.msra.mxu0 %v1523
    %5054 = vmatprep.subr.mxu0 0.0
    %5055 = vmatpush1.msra.mxu0 %v1524
    %5056 = vmatprep.subr.mxu0 0.0
    %5057 = vmatpush1.msra.mxu0 %v1525
    %5058 = vmatprep.subr.mxu0 0.0
    %5059 = vmatpush1.msra.mxu0 %v1526
    %5060 = vmatprep.subr.mxu0 0.0
    %5061 = vmatpush1.msra.mxu0 %v1527
    %5062 = vmatprep.subr.mxu0 0.0
    %5063 = vmatpush1.msra.mxu0 %v1528
    %5064 = vmatprep.subr.mxu0 0.0
    %5065 = vmatpush1.msra.mxu0 %v1529
    %5066 = vmatprep.subr.mxu0 0.0
    %5067 = vmatpush1.msra.mxu0 %v1530
    %5068 = vmatprep.subr.mxu0 0.0
    %5069 = vmatpush1.msra.mxu0 %v1531
    %5070 = vmatprep.subr.mxu0 0.0
    %5071 = vmatpush1.msra.mxu0 %v1532
    %5072 = vmatprep.subr.mxu0 0.0
    %5073 = vmatpush1.msra.mxu0 %v1533
    %5074 = vmatprep.subr.mxu0 0.0
    %5075 = vmatpush1.msra.mxu0 %v1534
    %5076 = vmatprep.subr.mxu0 0.0
    %5077 = vmatpush1.msra.mxu0 %v5024
    %5078 = vmatprep.subr.mxu0 0.0
    %5079 = vmatpush1.msra.mxu0 0.0
    %5080 = vmatprep.subr.mxu0 0.0
    %5081 = vmatpush1.msra.mxu0 0.0
    %5082 = vmatprep.subr.mxu0 0.0
    %5083 = vmatpush1.msra.mxu0 0.0
    %5084 = vmatprep.subr.mxu0 0.0
    %5085 = vmatpush1.msra.mxu0 0.0
    %5086 = vmatprep.subr.mxu0 0.0
    %5087 = vmatpush1.msra.mxu0 0.0
    %5088 = vmatprep.subr.mxu0 0.0
    %5089 = vmatpush1.msra.mxu0 0.0
    %5090 = vmatprep.mubr.f32.mxu0 %v5011
    %5091 = vmatmul.mubr.f32.gmra.mrb[0].mxu0 %v4993
    %v5092 = vpop.f32.mrb[0].mxu0
    %v5093 = vadd.f32 0.0, %v5092
    %v5094 = vpop.f32.mrb[0].mxu0
    %5095 = vmatprep.mubr.f32.mxu0 %v5014
    %5096 = vmatmul.mubr.f32.gmra.mrb[0].mxu0 %v4997
    %v5097 = vpop.f32.mrb[0].mxu0
    %v5098 = vadd.f32 0.0, %v5097
    %v5099 = vpop.f32.mrb[0].mxu0
    %5100 = vmatprep.mubr.f32.mxu0 %v5017
    %5101 = vmatmul.mubr.f32.gmra.mrb[0].mxu0 %v5001
    %v5102 = vpop.f32.mrb[0].mxu0
    %v5103 = vadd.f32 0.0, %v5102
    %v5104 = vpop.f32.mrb[0].mxu0
    %5105 = vmatprep.mubr.f32.mxu0 %v5020
    %5106 = vmatmul.mubr.f32.gmra.mrb[0].mxu0 %v5005
    %v5107 = vpop.f32.mrb[0].mxu0
    %v5108 = vadd.f32 0.0, %v5107
    %v5109 = vpop.f32.mrb[0].mxu0
    %5110 = vdwg.mxu0
    %vm5111 = vcmask 393216
    %5112 = vst.msk [vmem:[#allocation6] sm:$0x1] %vm5111, %v5093
    %v5115 = vunpack.c.l.s4 1983009808
    %v5116 = vunpack.c.0.s8 %v5115
    %v5117 = vlaneseq
    %v5118 = vshrl.u32 %v5117, 7
    %v5119 = vsub.s32 %v5116, %v5118
    %v5120 = vrot.slane %v5093, %v5119
    %v5121 = vrot.slane %v5120, 7
    %v5122 = vrot.slane %v5121, 2
    %5123 = vrot.lane.b32.xlu0 %v5122, 49
    %v5124 = vpop.permute.xlu0 %5123
    %vm5126 = vcmask 795016
    %5127 = vst.msk [vmem:[#allocation6] sm:$0x1] %vm5126, %v5124
    %v5128 = vcombine.high %v5120, %v5120
    %5129 = vrot.lane.b32.xlu0 %v5128, 98
    %v5130 = vpop.permute.xlu0 %5129
    %v5131 = vrot.slane %v5130, 6
    %v5132 = vsel %vm2382, %v5131, %v5130
    %vm5134 = vcmask 1041168
    %vm5135 = vcmask 149506
    %vm5136 = vmor %vm5135, %vm5134
    %5137 = vst.msk [vmem:[#allocation6] sm:$0x5] %vm5136, %v5132
    %v5138 = vrot.slane %v5128, 7
    %v5139 = vrot.slane %v5138, 2
    %5140 = vrot.lane.b32.xlu0 %v5139, 19
    %v5141 = vpop.permute.xlu0 %5140
    %vm5143 = vcmask 549016
    %5144 = vst.msk [vmem:[#allocation6 + $0x2] sm:$0x1] %vm5143, %v5141
    %v5145 = vcombine.high %v5093, %v5093
    %v5147 = vunpack.c.l.s4 1983009808
    %v5148 = vunpack.c.0.s8 %v5147
    %v5149 = vlaneseq
    %v5150 = vshrl.u32 %v5149, 7
    %v5151 = vsub.s32 %v5148, %v5150
    %v5152 = vrot.slane %v5145, %v5151
    %5153 = vrot.lane.b32.xlu0 %v5152, 68
    %v5154 = vpop.permute.xlu0 %5153
    %vm5156 = vcmask 950816
    %5157 = vst.msk [vmem:[#allocation6 + $0x2] sm:$0x1] %vm5156, %v5154
    %v5158 = vrot.slane %v5152, 7
    %v5159 = vrot.slane %v5158, 2
    %5160 = vrot.lane.b32.xlu0 %v5159, 117
    %v5161 = vpop.permute.xlu0 %5160
    %v5162 = vrot.slane %v5161, 6
    %v5163 = vsel %vm2044, %v5162, %v5161
    %vm5165 = vcmask 1041320
    %vm5166 = vcmask 305154
    %vm5167 = vmor %vm5166, %vm5165
    %5168 = vst.msk [vmem:[#allocation6 + $0x2] sm:$0x5] %vm5167, %v5163
    %v5169 = vcombine.high %v5152, %v5152
    %5170 = vrot.lane.b32.xlu0 %v5169, 38
    %v5171 = vpop.permute.xlu0 %5170
    %vm5173 = vcmask 704816
    %5174 = vst.msk [vmem:[#allocation6 + $0x4] sm:$0x1] %vm5173, %v5171
    %v5175 = vrot.slane %v5169, 7
    %v5176 = vrot.slane %v5175, 2
    %5177 = vrot.lane.b32.xlu0 %v5176, 87
    %v5178 = vpop.permute.xlu0 %5177
    %v5179 = vrot.slane %v5178, 6
    %vm5180 = vcmask 711680
    %v5181 = vsel %vm5180, %v5179, %v5178
    %vm5183 = vcmask 1041080
    %vm5184 = vcmask 59394
    %vm5185 = vmor %vm5184, %vm5183
    %5186 = vst.msk [vmem:[#allocation6 + $0x4] sm:$0x5] %vm5185, %v5181
    %v5189 = vunpack.c.l.s4 1983009808
    %v5190 = vunpack.c.0.s8 %v5189
    %v5191 = vlaneseq
    %v5192 = vshrl.u32 %v5191, 7
    %v5193 = vsub.s32 %v5190, %v5192
    %v5194 = vrot.slane %v5098, %v5193
    %5195 = vrot.lane.b32.xlu0 %v5194, 8
    %v5196 = vpop.permute.xlu0 %5195
    %vm5198 = vcmask 458816
    %5199 = vst.msk [vmem:[#allocation6 + $0x6] sm:$0x1] %vm5198, %v5196
    %v5200 = vrot.slane %v5194, 7
    %v5201 = vrot.slane %v5200, 2
    %5202 = vrot.lane.b32.xlu0 %v5201, 57
    %v5203 = vpop.permute.xlu0 %5202
    %vm5205 = vcmask 860616
    %5206 = vst.msk [vmem:[#allocation6 + $0x6] sm:$0x1] %vm5205, %v5203
    %v5207 = vcombine.high %v5194, %v5194
    %5208 = vrot.lane.b32.xlu0 %v5207, 106
    %v5209 = vpop.permute.xlu0 %5208
    %v5210 = vrot.slane %v5209, 6
    %vm5211 = vcmask 867328
    %v5212 = vsel %vm5211, %v5210, %v5209
    %vm5214 = vcmask 1041232
    %vm5215 = vcmask 215042
    %vm5216 = vmor %vm5215, %vm5214
    %5217 = vst.msk [vmem:[#allocation6 + $0x6] sm:$0x5] %vm5216, %v5212
    %v5218 = vrot.slane %v5207, 7
    %v5219 = vrot.slane %v5218, 2
    %5220 = vrot.lane.b32.xlu0 %v5219, 27
    %v5221 = vpop.permute.xlu0 %5220
    %vm5223 = vcmask 614616
    %5224 = vst.msk [vmem:[#allocation6 + $0x8] sm:$0x1] %vm5223, %v5221
    %v5225 = vcombine.high %v5098, %v5098
    %v5227 = vunpack.c.l.s4 1983009808
    %v5228 = vunpack.c.0.s8 %v5227
    %v5229 = vlaneseq
    %v5230 = vshrl.u32 %v5229, 7
    %v5231 = vsub.s32 %v5228, %v5230
    %v5232 = vrot.slane %v5225, %v5231
    %5233 = vrot.lane.b32.xlu0 %v5232, 76
    %v5234 = vpop.permute.xlu0 %5233
    %vm5236 = vcmask 1016416
    %5237 = vst.msk [vmem:[#allocation6 + $0x8] sm:$0x1] %vm5236, %v5234
    %v5238 = vrot.slane %v5232, 7
    %v5239 = vrot.slane %v5238, 2
    %5240 = vrot.lane.b32.xlu0 %v5239, 125
    %v5241 = vpop.permute.xlu0 %5240
    %v5242 = vrot.slane %v5241, 6
    %v5243 = vsel %vm1988, %v5242, %v5241
    %vm5245 = vcmask 1041384
    %vm5246 = vcmask 370690
    %vm5247 = vmor %vm5246, %vm5245
    %5248 = vst.msk [vmem:[#allocation6 + $0x8] sm:$0x5] %vm5247, %v5243
    %v5249 = vcombine.high %v5232, %v5232
    %5250 = vrot.lane.b32.xlu0 %v5249, 46
    %v5251 = vpop.permute.xlu0 %5250
    %vm5253 = vcmask 770416
    %5254 = vst.msk [vmem:[#allocation6 + $0xa] sm:$0x1] %vm5253, %v5251
    %v5255 = vrot.slane %v5249, 7
    %v5256 = vrot.slane %v5255, 2
    %5257 = vrot.lane.b32.xlu0 %v5256, 95
    %v5258 = vpop.permute.xlu0 %5257
    %v5259 = vrot.slane %v5258, 6
    %v5260 = vsel %vm4453, %v5259, %v5258
    %vm5262 = vcmask 1041144
    %vm5263 = vcmask 124930
    %vm5264 = vmor %vm5263, %vm5262
    %5265 = vst.msk [vmem:[#allocation6 + $0xa] sm:$0x5] %vm5264, %v5260
    %v5268 = vunpack.c.l.s4 1983009808
    %v5269 = vunpack.c.0.s8 %v5268
    %v5270 = vlaneseq
    %v5271 = vshrl.u32 %v5270, 7
    %v5272 = vsub.s32 %v5269, %v5271
    %v5273 = vrot.slane %v5103, %v5272
    %5274 = vrot.lane.b32.xlu0 %v5273, 16
    %v5275 = vpop.permute.xlu0 %5274
    %vm5277 = vcmask 524416
    %5278 = vst.msk [vmem:[#allocation6 + $0xc] sm:$0x1] %vm5277, %v5275
    %v5279 = vrot.slane %v5273, 7
    %v5280 = vrot.slane %v5279, 2
    %5281 = vrot.lane.b32.xlu0 %v5280, 65
    %v5282 = vpop.permute.xlu0 %5281
    %vm5284 = vcmask 926216
    %5285 = vst.msk [vmem:[#allocation6 + $0xc] sm:$0x1] %vm5284, %v5282
    %v5286 = vcombine.high %v5273, %v5273
    %5287 = vrot.lane.b32.xlu0 %v5286, 114
    %v5288 = vpop.permute.xlu0 %5287
    %v5289 = vrot.slane %v5288, 6
    %vm5290 = vcmask 932864
    %v5291 = vsel %vm5290, %v5289, %v5288
    %vm5293 = vcmask 1041296
    %vm5294 = vcmask 280578
    %vm5295 = vmor %vm5294, %vm5293
    %5296 = vst.msk [vmem:[#allocation6 + $0xc] sm:$0x5] %vm5295, %v5291
    %v5297 = vrot.slane %v5286, 7
    %v5298 = vrot.slane %v5297, 2
    %5299 = vrot.lane.b32.xlu0 %v5298, 35
    %v5300 = vpop.permute.xlu0 %5299
    %vm5302 = vcmask 680216
    %5303 = vst.msk [vmem:[#allocation6 + $0xe] sm:$0x1] %vm5302, %v5300
    %v5304 = vcombine.high %v5103, %v5103
    %v5306 = vunpack.c.l.s4 1983009808
    %v5307 = vunpack.c.0.s8 %v5306
    %v5308 = vlaneseq
    %v5309 = vshrl.u32 %v5308, 7
    %v5310 = vsub.s32 %v5307, %v5309
    %v5311 = vrot.slane %v5304, %v5310
    %5312 = vrot.lane.b32.xlu0 %v5311, 84
    %v5313 = vpop.permute.xlu0 %5312
    %v5314 = vrot.slane %v5313, 6
    %vm5315 = vcmask 687104
    %v5316 = vsel %vm5315, %v5314, %v5313
    %vm5318 = vcmask 1041056
    %vm5319 = vcmask 34818
    %vm5320 = vmor %vm5319, %vm5318
    %5321 = vst.msk [vmem:[#allocation6 + $0xe] sm:$0x5] %vm5320, %v5316
    %v5322 = vrot.slane %v5311, 7
    %v5323 = vrot.slane %v5322, 2
    %5324 = vrot.lane.b32.xlu0 %v5323, 5
    %v5325 = vpop.permute.xlu0 %5324
    %vm5327 = vcmask 434216
    %5328 = vst.msk [vmem:[#allocation6 + $0x10] sm:$0x1] %vm5327, %v5325
    %v5329 = vcombine.high %v5311, %v5311
    %5330 = vrot.lane.b32.xlu0 %v5329, 54
    %v5331 = vpop.permute.xlu0 %5330
    %vm5333 = vcmask 836016
    %5334 = vst.msk [vmem:[#allocation6 + $0x10] sm:$0x1] %vm5333, %v5331
    %v5335 = vrot.slane %v5329, 7
    %v5336 = vrot.slane %v5335, 2
    %5337 = vrot.lane.b32.xlu0 %v5336, 103
    %v5338 = vpop.permute.xlu0 %5337
    %v5339 = vrot.slane %v5338, 6
    %vm5340 = vcmask 842752
    %v5341 = vsel %vm5340, %v5339, %v5338
    %vm5343 = vcmask 1041208
    %vm5344 = vcmask 190466
    %vm5345 = vmor %vm5344, %vm5343
    %5346 = vst.msk [vmem:[#allocation6 + $0x10] sm:$0x5] %vm5345, %v5341
    %v5349 = vunpack.c.l.s4 1983009808
    %v5350 = vunpack.c.0.s8 %v5349
    %v5351 = vlaneseq
    %v5352 = vshrl.u32 %v5351, 7
    %v5353 = vsub.s32 %v5350, %v5352
    %v5354 = vrot.slane %v5108, %v5353
    %5355 = vrot.lane.b32.xlu0 %v5354, 24
    %v5356 = vpop.permute.xlu0 %5355
    %vm5358 = vcmask 590016
    %5359 = vst.msk [vmem:[#allocation6 + $0x12] sm:$0x1] %vm5358, %v5356
    %v5360 = vrot.slane %v5354, 7
    %v5361 = vrot.slane %v5360, 2
    %5362 = vrot.lane.b32.xlu0 %v5361, 73
    %v5363 = vpop.permute.xlu0 %5362
    %vm5365 = vcmask 991816
    %5366 = vst.msk [vmem:[#allocation6 + $0x12] sm:$0x1] %vm5365, %v5363
    %v5367 = vcombine.high %v5354, %v5354
    %5368 = vrot.lane.b32.xlu0 %v5367, 122
    %v5369 = vpop.permute.xlu0 %5368
    %v5370 = vrot.slane %v5369, 6
    %vm5371 = vcmask 998400
    %v5372 = vsel %vm5371, %v5370, %v5369
    %vm5374 = vcmask 1041360
    %vm5375 = vcmask 346114
    %vm5376 = vmor %vm5375, %vm5374
    %5377 = vst.msk [vmem:[#allocation6 + $0x12] sm:$0x5] %vm5376, %v5372
    %v5378 = vrot.slane %v5367, 7
    %v5379 = vrot.slane %v5378, 2
    %5380 = vrot.lane.b32.xlu0 %v5379, 43
    %v5381 = vpop.permute.xlu0 %5380
    %vm5383 = vcmask 745816
    %5384 = vst.msk [vmem:[#allocation6 + $0x14] sm:$0x1] %vm5383, %v5381
    %v5385 = vcombine.high %v5108, %v5108
    %v5387 = vunpack.c.l.s4 1983009808
    %v5388 = vunpack.c.0.s8 %v5387
    %v5389 = vlaneseq
    %v5390 = vshrl.u32 %v5389, 7
    %v5391 = vsub.s32 %v5388, %v5390
    %v5392 = vrot.slane %v5385, %v5391
    %5393 = vrot.lane.b32.xlu0 %v5392, 92
    %v5394 = vpop.permute.xlu0 %5393
    %v5395 = vrot.slane %v5394, 6
    %vm5396 = vcmask 752640
    %v5397 = vsel %vm5396, %v5395, %v5394
    %vm5399 = vcmask 1041120
    %vm5400 = vcmask 100354
    %vm5401 = vmor %vm5400, %vm5399
    %5402 = vst.msk [vmem:[#allocation6 + $0x14] sm:$0x5] %vm5401, %v5397
    %v5403 = vrot.slane %v5392, 7
    %v5404 = vrot.slane %v5403, 2
    %5405 = vrot.lane.b32.xlu0 %v5404, 13
    %v5406 = vpop.permute.xlu0 %5405
    %vm5408 = vcmask 499816
    %5409 = vst.msk [vmem:[#allocation6 + $0x16] sm:$0x1] %vm5408, %v5406
    %v5410 = vcombine.high %v5392, %v5392
    %5411 = vrot.lane.b32.xlu0 %v5410, 62
    %v5412 = vpop.permute.xlu0 %5411
    %vm5414 = vcmask 901616
    %5415 = vst.msk [vmem:[#allocation6 + $0x16] sm:$0x1] %vm5414, %v5412
    %v5416 = vrot.slane %v5410, 7
    %v5417 = vrot.slane %v5416, 2
    %5418 = vrot.lane.b32.xlu0 %v5417, 111
    %v5419 = vpop.permute.xlu0 %5418
    %v5420 = vrot.slane %v5419, 6
    %v5421 = vsel %vm1901, %v5420, %v5419
    %vm5423 = vcmask 1041272
    %vm5424 = vcmask 256002
    %vm5425 = vmor %vm5424, %vm5423
    %5426 = vst.msk [vmem:[#allocation6 + $0x16] sm:$0x5] %vm5425, %v5421
    %v5428 = vsel %vm5009, %v4996, 0
    %v5431 = vsel %vm5009, %v5000, 0
    %v5434 = vsel %vm5009, %v5004, 0
    %v5437 = vsel %vm5009, %v5008, 0
    %5439 = vmatprep.subr.mxu0 0.0
    %5440 = vmatpush1.msra.mxu0 %v1510
    %5441 = vmatprep.subr.mxu0 0.0
    %5442 = vmatpush1.msra.mxu0 %v1511
    %5443 = vmatprep.subr.mxu0 0.0
    %5444 = vmatpush1.msra.mxu0 %v1512
    %5445 = vmatprep.subr.mxu0 0.0
    %5446 = vmatpush1.msra.mxu0 %v1513
    %5447 = vmatprep.subr.mxu0 0.0
    %5448 = vmatpush1.msra.mxu0 %v1514
    %5449 = vmatprep.subr.mxu0 0.0
    %5450 = vmatpush1.msra.mxu0 %v1515
    %5451 = vmatprep.subr.mxu0 0.0
    %5452 = vmatpush1.msra.mxu0 %v1516
    %5453 = vmatprep.subr.mxu0 0.0
    %5454 = vmatpush1.msra.mxu0 %v1517
    %5455 = vmatprep.subr.mxu0 0.0
    %5456 = vmatpush1.msra.mxu0 %v1518
    %5457 = vmatprep.subr.mxu0 0.0
    %5458 = vmatpush1.msra.mxu0 %v1519
    %5459 = vmatprep.subr.mxu0 0.0
    %5460 = vmatpush1.msra.mxu0 %v1520
    %5461 = vmatprep.subr.mxu0 0.0
    %5462 = vmatpush1.msra.mxu0 %v1521
    %5463 = vmatprep.subr.mxu0 0.0
    %5464 = vmatpush1.msra.mxu0 %v1522
    %5465 = vmatprep.subr.mxu0 0.0
    %5466 = vmatpush1.msra.mxu0 %v1523
    %5467 = vmatprep.subr.mxu0 0.0
    %5468 = vmatpush1.msra.mxu0 %v1524
    %5469 = vmatprep.subr.mxu0 0.0
    %5470 = vmatpush1.msra.mxu0 %v1525
    %5471 = vmatprep.subr.mxu0 0.0
    %5472 = vmatpush1.msra.mxu0 %v1526
    %5473 = vmatprep.subr.mxu0 0.0
    %5474 = vmatpush1.msra.mxu0 %v1527
    %5475 = vmatprep.subr.mxu0 0.0
    %5476 = vmatpush1.msra.mxu0 %v1528
    %5477 = vmatprep.subr.mxu0 0.0
    %5478 = vmatpush1.msra.mxu0 %v1529
    %5479 = vmatprep.subr.mxu0 0.0
    %5480 = vmatpush1.msra.mxu0 %v1530
    %5481 = vmatprep.subr.mxu0 0.0
    %5482 = vmatpush1.msra.mxu0 %v1531
    %5483 = vmatprep.subr.mxu0 0.0
    %5484 = vmatpush1.msra.mxu0 %v1532
    %5485 = vmatprep.subr.mxu0 0.0
    %5486 = vmatpush1.msra.mxu0 %v1533
    %5487 = vmatprep.subr.mxu0 0.0
    %5488 = vmatpush1.msra.mxu0 %v1534
    %5489 = vmatprep.subr.mxu0 0.0
    %5490 = vmatpush1.msra.mxu0 %v5024
    %5491 = vmatprep.subr.mxu0 0.0
    %5492 = vmatpush1.msra.mxu0 0.0
    %5493 = vmatprep.subr.mxu0 0.0
    %5494 = vmatpush1.msra.mxu0 0.0
    %5495 = vmatprep.subr.mxu0 0.0
    %5496 = vmatpush1.msra.mxu0 0.0
    %5497 = vmatprep.subr.mxu0 0.0
    %5498 = vmatpush1.msra.mxu0 0.0
    %5499 = vmatprep.subr.mxu0 0.0
    %5500 = vmatpush1.msra.mxu0 0.0
    %5501 = vmatprep.subr.mxu0 0.0
    %5502 = vmatpush1.msra.mxu0 0.0
    %5503 = vmatprep.mubr.f32.mxu0 %v5428
    %5504 = vmatmul.mubr.f32.gmra.mrb[0].mxu0 %v4995
    %v5505 = vpop.f32.mrb[0].mxu0
    %v5506 = vadd.f32 0.0, %v5505
    %v5507 = vpop.f32.mrb[0].mxu0
    %5508 = vmatprep.mubr.f32.mxu0 %v5431
    %5509 = vmatmul.mubr.f32.gmra.mrb[0].mxu0 %v4999
    %v5510 = vpop.f32.mrb[0].mxu0
    %v5511 = vadd.f32 0.0, %v5510
    %v5512 = vpop.f32.mrb[0].mxu0
    %5513 = vmatprep.mubr.f32.mxu0 %v5434
    %5514 = vmatmul.mubr.f32.gmra.mrb[0].mxu0 %v5003
    %v5515 = vpop.f32.mrb[0].mxu0
    %v5516 = vadd.f32 0.0, %v5515
    %v5517 = vpop.f32.mrb[0].mxu0
    %5518 = vmatprep.mubr.f32.mxu0 %v5437
    %5519 = vmatmul.mubr.f32.gmra.mrb[0].mxu0 %v5007
    %v5520 = vpop.f32.mrb[0].mxu0
    %v5521 = vadd.f32 0.0, %v5520
    %v5522 = vpop.f32.mrb[0].mxu0
    %5523 = vdwg.mxu0
    %5524 = vst.msk [vmem:[#allocation6 + $0x1] sm:$0x1] %vm5111, %v5506
    %v5527 = vunpack.c.l.s4 1983009808
    %v5528 = vunpack.c.0.s8 %v5527
    %v5529 = vlaneseq
    %v5530 = vshrl.u32 %v5529, 7
    %v5531 = vsub.s32 %v5528, %v5530
    %v5532 = vrot.slane %v5506, %v5531
    %v5533 = vrot.slane %v5532, 7
    %v5534 = vrot.slane %v5533, 2
    %5535 = vrot.lane.b32.xlu0 %v5534, 49
    %v5536 = vpop.permute.xlu0 %5535
    %5538 = vst.msk [vmem:[#allocation6 + $0x1] sm:$0x1] %vm5126, %v5536
    %v5539 = vcombine.high %v5532, %v5532
    %5540 = vrot.lane.b32.xlu0 %v5539, 98
    %v5541 = vpop.permute.xlu0 %5540
    %v5542 = vrot.slane %v5541, 6
    %v5543 = vsel %vm2382, %v5542, %v5541
    %5545 = vst.msk [vmem:[#allocation6 + $0x1] sm:$0x5] %vm5136, %v5543
    %v5546 = vrot.slane %v5539, 7
    %v5547 = vrot.slane %v5546, 2
    %5548 = vrot.lane.b32.xlu0 %v5547, 19
    %v5549 = vpop.permute.xlu0 %5548
    %5551 = vst.msk [vmem:[#allocation6 + $0x3] sm:$0x1] %vm5143, %v5549
    %v5552 = vcombine.high %v5506, %v5506
    %v5554 = vunpack.c.l.s4 1983009808
    %v5555 = vunpack.c.0.s8 %v5554
    %v5556 = vlaneseq
    %v5557 = vshrl.u32 %v5556, 7
    %v5558 = vsub.s32 %v5555, %v5557
    %v5559 = vrot.slane %v5552, %v5558
    %5560 = vrot.lane.b32.xlu0 %v5559, 68
    %v5561 = vpop.permute.xlu0 %5560
    %5563 = vst.msk [vmem:[#allocation6 + $0x3] sm:$0x1] %vm5156, %v5561
    %v5564 = vrot.slane %v5559, 7
    %v5565 = vrot.slane %v5564, 2
    %5566 = vrot.lane.b32.xlu0 %v5565, 117
    %v5567 = vpop.permute.xlu0 %5566
    %v5568 = vrot.slane %v5567, 6
    %v5569 = vsel %vm2044, %v5568, %v5567
    %5571 = vst.msk [vmem:[#allocation6 + $0x3] sm:$0x5] %vm5167, %v5569
    %v5572 = vcombine.high %v5559, %v5559
    %5573 = vrot.lane.b32.xlu0 %v5572, 38
    %v5574 = vpop.permute.xlu0 %5573
    %5576 = vst.msk [vmem:[#allocation6 + $0x5] sm:$0x1] %vm5173, %v5574
    %v5577 = vrot.slane %v5572, 7
    %v5578 = vrot.slane %v5577, 2
    %5579 = vrot.lane.b32.xlu0 %v5578, 87
    %v5580 = vpop.permute.xlu0 %5579
    %v5581 = vrot.slane %v5580, 6
    %v5582 = vsel %vm5180, %v5581, %v5580
    %5584 = vst.msk [vmem:[#allocation6 + $0x5] sm:$0x5] %vm5185, %v5582
    %v5587 = vunpack.c.l.s4 1983009808
    %v5588 = vunpack.c.0.s8 %v5587
    %v5589 = vlaneseq
    %v5590 = vshrl.u32 %v5589, 7
    %v5591 = vsub.s32 %v5588, %v5590
    %v5592 = vrot.slane %v5511, %v5591
    %5593 = vrot.lane.b32.xlu0 %v5592, 8
    %v5594 = vpop.permute.xlu0 %5593
    %5596 = vst.msk [vmem:[#allocation6 + $0x7] sm:$0x1] %vm5198, %v5594
    %v5597 = vrot.slane %v5592, 7
    %v5598 = vrot.slane %v5597, 2
    %5599 = vrot.lane.b32.xlu0 %v5598, 57
    %v5600 = vpop.permute.xlu0 %5599
    %5602 = vst.msk [vmem:[#allocation6 + $0x7] sm:$0x1] %vm5205, %v5600
    %v5603 = vcombine.high %v5592, %v5592
    %5604 = vrot.lane.b32.xlu0 %v5603, 106
    %v5605 = vpop.permute.xlu0 %5604
    %v5606 = vrot.slane %v5605, 6
    %v5607 = vsel %vm5211, %v5606, %v5605
    %5609 = vst.msk [vmem:[#allocation6 + $0x7] sm:$0x5] %vm5216, %v5607
    %v5610 = vrot.slane %v5603, 7
    %v5611 = vrot.slane %v5610, 2
    %5612 = vrot.lane.b32.xlu0 %v5611, 27
    %v5613 = vpop.permute.xlu0 %5612
    %5615 = vst.msk [vmem:[#allocation6 + $0x9] sm:$0x1] %vm5223, %v5613
    %v5616 = vcombine.high %v5511, %v5511
    %v5618 = vunpack.c.l.s4 1983009808
    %v5619 = vunpack.c.0.s8 %v5618
    %v5620 = vlaneseq
    %v5621 = vshrl.u32 %v5620, 7
    %v5622 = vsub.s32 %v5619, %v5621
    %v5623 = vrot.slane %v5616, %v5622
    %5624 = vrot.lane.b32.xlu0 %v5623, 76
    %v5625 = vpop.permute.xlu0 %5624
    %5627 = vst.msk [vmem:[#allocation6 + $0x9] sm:$0x1] %vm5236, %v5625
    %v5628 = vrot.slane %v5623, 7
    %v5629 = vrot.slane %v5628, 2
    %5630 = vrot.lane.b32.xlu0 %v5629, 125
    %v5631 = vpop.permute.xlu0 %5630
    %v5632 = vrot.slane %v5631, 6
    %v5633 = vsel %vm1988, %v5632, %v5631
    %5635 = vst.msk [vmem:[#allocation6 + $0x9] sm:$0x5] %vm5247, %v5633
    %v5636 = vcombine.high %v5623, %v5623
    %5637 = vrot.lane.b32.xlu0 %v5636, 46
    %v5638 = vpop.permute.xlu0 %5637
    %5640 = vst.msk [vmem:[#allocation6 + $0xb] sm:$0x1] %vm5253, %v5638
    %v5641 = vrot.slane %v5636, 7
    %v5642 = vrot.slane %v5641, 2
    %5643 = vrot.lane.b32.xlu0 %v5642, 95
    %v5644 = vpop.permute.xlu0 %5643
    %v5645 = vrot.slane %v5644, 6
    %v5646 = vsel %vm4453, %v5645, %v5644
    %5648 = vst.msk [vmem:[#allocation6 + $0xb] sm:$0x5] %vm5264, %v5646
    %v5651 = vunpack.c.l.s4 1983009808
    %v5652 = vunpack.c.0.s8 %v5651
    %v5653 = vlaneseq
    %v5654 = vshrl.u32 %v5653, 7
    %v5655 = vsub.s32 %v5652, %v5654
    %v5656 = vrot.slane %v5516, %v5655
    %5657 = vrot.lane.b32.xlu0 %v5656, 16
    %v5658 = vpop.permute.xlu0 %5657
    %5660 = vst.msk [vmem:[#allocation6 + $0xd] sm:$0x1] %vm5277, %v5658
    %v5661 = vrot.slane %v5656, 7
    %v5662 = vrot.slane %v5661, 2
    %5663 = vrot.lane.b32.xlu0 %v5662, 65
    %v5664 = vpop.permute.xlu0 %5663
    %5666 = vst.msk [vmem:[#allocation6 + $0xd] sm:$0x1] %vm5284, %v5664
    %v5667 = vcombine.high %v5656, %v5656
    %5668 = vrot.lane.b32.xlu0 %v5667, 114
    %v5669 = vpop.permute.xlu0 %5668
    %v5670 = vrot.slane %v5669, 6
    %v5671 = vsel %vm5290, %v5670, %v5669
    %5673 = vst.msk [vmem:[#allocation6 + $0xd] sm:$0x5] %vm5295, %v5671
    %v5674 = vrot.slane %v5667, 7
    %v5675 = vrot.slane %v5674, 2
    %5676 = vrot.lane.b32.xlu0 %v5675, 35
    %v5677 = vpop.permute.xlu0 %5676
    %5679 = vst.msk [vmem:[#allocation6 + $0xf] sm:$0x1] %vm5302, %v5677
    %v5680 = vcombine.high %v5516, %v5516
    %v5682 = vunpack.c.l.s4 1983009808
    %v5683 = vunpack.c.0.s8 %v5682
    %v5684 = vlaneseq
    %v5685 = vshrl.u32 %v5684, 7
    %v5686 = vsub.s32 %v5683, %v5685
    %v5687 = vrot.slane %v5680, %v5686
    %5688 = vrot.lane.b32.xlu0 %v5687, 84
    %v5689 = vpop.permute.xlu0 %5688
    %v5690 = vrot.slane %v5689, 6
    %v5691 = vsel %vm5315, %v5690, %v5689
    %5693 = vst.msk [vmem:[#allocation6 + $0xf] sm:$0x5] %vm5320, %v5691
    %v5694 = vrot.slane %v5687, 7
    %v5695 = vrot.slane %v5694, 2
    %5696 = vrot.lane.b32.xlu0 %v5695, 5
    %v5697 = vpop.permute.xlu0 %5696
    %5699 = vst.msk [vmem:[#allocation6 + $0x11] sm:$0x1] %vm5327, %v5697
    %v5700 = vcombine.high %v5687, %v5687
    %5701 = vrot.lane.b32.xlu0 %v5700, 54
    %v5702 = vpop.permute.xlu0 %5701
    %5704 = vst.msk [vmem:[#allocation6 + $0x11] sm:$0x1] %vm5333, %v5702
    %v5705 = vrot.slane %v5700, 7
    %v5706 = vrot.slane %v5705, 2
    %5707 = vrot.lane.b32.xlu0 %v5706, 103
    %v5708 = vpop.permute.xlu0 %5707
    %v5709 = vrot.slane %v5708, 6
    %v5710 = vsel %vm5340, %v5709, %v5708
    %5712 = vst.msk [vmem:[#allocation6 + $0x11] sm:$0x5] %vm5345, %v5710
    %v5715 = vunpack.c.l.s4 1983009808
    %v5716 = vunpack.c.0.s8 %v5715
    %v5717 = vlaneseq
    %v5718 = vshrl.u32 %v5717, 7
    %v5719 = vsub.s32 %v5716, %v5718
    %v5720 = vrot.slane %v5521, %v5719
    %5721 = vrot.lane.b32.xlu0 %v5720, 24
    %v5722 = vpop.permute.xlu0 %5721
    %5724 = vst.msk [vmem:[#allocation6 + $0x13] sm:$0x1] %vm5358, %v5722
    %v5725 = vrot.slane %v5720, 7
    %v5726 = vrot.slane %v5725, 2
    %5727 = vrot.lane.b32.xlu0 %v5726, 73
    %v5728 = vpop.permute.xlu0 %5727
    %5730 = vst.msk [vmem:[#allocation6 + $0x13] sm:$0x1] %vm5365, %v5728
    %v5731 = vcombine.high %v5720, %v5720
    %5732 = vrot.lane.b32.xlu0 %v5731, 122
    %v5733 = vpop.permute.xlu0 %5732
    %v5734 = vrot.slane %v5733, 6
    %v5735 = vsel %vm5371, %v5734, %v5733
    %5737 = vst.msk [vmem:[#allocation6 + $0x13] sm:$0x5] %vm5376, %v5735
    %v5738 = vrot.slane %v5731, 7
    %v5739 = vrot.slane %v5738, 2
    %5740 = vrot.lane.b32.xlu0 %v5739, 43
    %v5741 = vpop.permute.xlu0 %5740
    %5743 = vst.msk [vmem:[#allocation6 + $0x15] sm:$0x1] %vm5383, %v5741
    %v5744 = vcombine.high %v5521, %v5521
    %v5746 = vunpack.c.l.s4 1983009808
    %v5747 = vunpack.c.0.s8 %v5746
    %v5748 = vlaneseq
    %v5749 = vshrl.u32 %v5748, 7
    %v5750 = vsub.s32 %v5747, %v5749
    %v5751 = vrot.slane %v5744, %v5750
    %5752 = vrot.lane.b32.xlu0 %v5751, 92
    %v5753 = vpop.permute.xlu0 %5752
    %v5754 = vrot.slane %v5753, 6
    %v5755 = vsel %vm5396, %v5754, %v5753
    %5757 = vst.msk [vmem:[#allocation6 + $0x15] sm:$0x5] %vm5401, %v5755
    %v5758 = vrot.slane %v5751, 7
    %v5759 = vrot.slane %v5758, 2
    %5760 = vrot.lane.b32.xlu0 %v5759, 13
    %v5761 = vpop.permute.xlu0 %5760
    %5763 = vst.msk [vmem:[#allocation6 + $0x17] sm:$0x1] %vm5408, %v5761
    %v5764 = vcombine.high %v5751, %v5751
    %5765 = vrot.lane.b32.xlu0 %v5764, 62
    %v5766 = vpop.permute.xlu0 %5765
    %5768 = vst.msk [vmem:[#allocation6 + $0x17] sm:$0x1] %vm5414, %v5766
    %v5769 = vrot.slane %v5764, 7
    %v5770 = vrot.slane %v5769, 2
    %5771 = vrot.lane.b32.xlu0 %v5770, 111
    %v5772 = vpop.permute.xlu0 %5771
    %v5773 = vrot.slane %v5772, 6
    %v5774 = vsel %vm1901, %v5773, %v5772
    %5776 = vst.msk [vmem:[#allocation6 + $0x17] sm:$0x5] %vm5425, %v5774
    %v5777 = vld [vmem:[#allocation6] sm:$0xff]
    %v5778 = vld [vmem:[#allocation6 + $0x8] sm:$0xff]
    %v5779 = vld [vmem:[#allocation6 + $0x10] sm:$0xff]
    %v5780 = vld [vmem:[#allocation6 + $0x18] sm:$0x3]
    %v5785 = vcombine.high %v5777, %v5777
    %v5787 = vunpack.c.l.s4 1983009808
    %v5788 = vunpack.c.0.s8 %v5787
    %v5789 = vlaneseq
    %v5790 = vshrl.u32 %v5789, 7
    %v5791 = vsub.s32 %v5788, %v5790
    %v5792 = vrot.slane %v5777, %v5791
    %v5794 = vunpack.c.l.s4 1983009808
    %v5795 = vunpack.c.0.s8 %v5794
    %v5796 = vlaneseq
    %v5797 = vshrl.u32 %v5796, 7
    %v5798 = vsub.s32 %v5795, %v5797
    %v5799 = vrot.slane %v5785, %v5798
    %v5800 = vcombine.high %v5792, %v5792
    %v5801 = vcombine.high %v5799, %v5799
    %v5802 = vcombine.high %v5778, %v5778
    %v5804 = vunpack.c.l.s4 1983009808
    %v5805 = vunpack.c.0.s8 %v5804
    %v5806 = vlaneseq
    %v5807 = vshrl.u32 %v5806, 7
    %v5808 = vsub.s32 %v5805, %v5807
    %v5809 = vrot.slane %v5778, %v5808
    %v5811 = vunpack.c.l.s4 1983009808
    %v5812 = vunpack.c.0.s8 %v5811
    %v5813 = vlaneseq
    %v5814 = vshrl.u32 %v5813, 7
    %v5815 = vsub.s32 %v5812, %v5814
    %v5816 = vrot.slane %v5802, %v5815
    %v5817 = vcombine.high %v5809, %v5809
    %v5818 = vcombine.high %v5816, %v5816
    %v5819 = vcombine.high %v5779, %v5779
    %v5821 = vunpack.c.l.s4 1983009808
    %v5822 = vunpack.c.0.s8 %v5821
    %v5823 = vlaneseq
    %v5824 = vshrl.u32 %v5823, 7
    %v5825 = vsub.s32 %v5822, %v5824
    %v5826 = vrot.slane %v5779, %v5825
    %v5828 = vunpack.c.l.s4 1983009808
    %v5829 = vunpack.c.0.s8 %v5828
    %v5830 = vlaneseq
    %v5831 = vshrl.u32 %v5830, 7
    %v5832 = vsub.s32 %v5829, %v5831
    %v5833 = vrot.slane %v5819, %v5832
    %v5834 = vcombine.high %v5826, %v5826
    %v5835 = vcombine.high %v5833, %v5833
    %v5837 = vunpack.c.l.s4 1983009808
    %v5838 = vunpack.c.0.s8 %v5837
    %v5839 = vlaneseq
    %v5840 = vshrl.u32 %v5839, 7
    %v5841 = vsub.s32 %v5838, %v5840
    %v5842 = vrot.slane %v5780, %v5841
    %v5856 = vpack.c.bf16 %v5792, %v5792
    %v5857 = vpack.c.bf16 %v5800, %v5800
    %v5858 = vpack.c.bf16 %v5799, %v5799
    %v5859 = vpack.c.bf16 %v5801, %v5801
    %v5860 = vpack.c.bf16 %v5809, %v5809
    %v5861 = vpack.c.bf16 %v5817, %v5817
    %v5862 = vpack.c.bf16 %v5816, %v5816
    %v5863 = vpack.c.bf16 %v5818, %v5818
    %v5864 = vpack.c.bf16 %v5826, %v5826
    %v5865 = vpack.c.bf16 %v5834, %v5834
    %v5866 = vpack.c.bf16 %v5833, %v5833
    %v5867 = vpack.c.bf16 %v5835, %v5835
    %v5868 = vpack.c.bf16 %v5842, %v5842
    %s5869 = smul.u32 4, 196
    %s5870 = smul.u32 %s5869, 8
    %s5871 = sshll.u32 %s5870, 4
    %5872 = dma.done [#allocation9], %s5871
    %v5873 = vld [vmem:[#allocation7] sm:$0xff]
    %v5874 = vld [vmem:[#allocation7 + $0x8] sm:$0xff]
    %v5875 = vld [vmem:[#allocation7 + $0x10] sm:$0xff]
    %v5876 = vld [vmem:[#allocation7 + $0x18] sm:$0xff]
    %v5877 = vld [vmem:[#allocation7 + $0x20] sm:$0xff]
    %v5878 = vld [vmem:[#allocation7 + $0x28] sm:$0xff]
    %v5879 = vld [vmem:[#allocation7 + $0x30] sm:$0xff]
    %v5880 = vld [vmem:[#allocation7 + $0x38] sm:$0xff]
    %v5881 = vld [vmem:[#allocation7 + $0x40] sm:$0xff]
    %v5882 = vld [vmem:[#allocation7 + $0x48] sm:$0xff]
    %v5883 = vld [vmem:[#allocation7 + $0x50] sm:$0xff]
    %v5884 = vld [vmem:[#allocation7 + $0x58] sm:$0xff]
    %v5885 = vld [vmem:[#allocation7 + $0x60] sm:$0xff]
    %v5886 = vld [vmem:[#allocation7 + $0x68] sm:$0xff]
    %v5887 = vld [vmem:[#allocation7 + $0x70] sm:$0xff]
    %v5888 = vld [vmem:[#allocation7 + $0x78] sm:$0xff]
    %v5889 = vld [vmem:[#allocation7 + $0x80] sm:$0xff]
    %v5890 = vld [vmem:[#allocation7 + $0x88] sm:$0xff]
    %v5891 = vld [vmem:[#allocation7 + $0x90] sm:$0xff]
    %v5892 = vld [vmem:[#allocation7 + $0x98] sm:$0xff]
    %v5893 = vld [vmem:[#allocation7 + $0xa0] sm:$0xff]
    %v5894 = vld [vmem:[#allocation7 + $0xa8] sm:$0xff]
    %v5895 = vld [vmem:[#allocation7 + $0xb0] sm:$0xff]
    %v5896 = vld [vmem:[#allocation7 + $0xb8] sm:$0xff]
    %v5897 = vld [vmem:[#allocation7 + $0xc0] sm:$0xff]
    %v5898 = vld [vmem:[#allocation7 + $0xc8] sm:$0xff]
    %v5899 = vld [vmem:[#allocation7 + $0xd0] sm:$0xff]
    %v5900 = vld [vmem:[#allocation7 + $0xd8] sm:$0xff]
    %v5901 = vld [vmem:[#allocation7 + $0xe0] sm:$0xff]
    %v5902 = vld [vmem:[#allocation7 + $0xe8] sm:$0xff]
    %v5903 = vld [vmem:[#allocation7 + $0xf0] sm:$0xff]
    %v5904 = vld [vmem:[#allocation7 + $0xf8] sm:$0xff]
    %v5905 = vld [vmem:[#allocation7 + $0x100] sm:$0xff]
    %v5906 = vld [vmem:[#allocation7 + $0x108] sm:$0xff]
    %v5907 = vld [vmem:[#allocation7 + $0x110] sm:$0xff]
    %v5908 = vld [vmem:[#allocation7 + $0x118] sm:$0xff]
    %v5909 = vld [vmem:[#allocation7 + $0x120] sm:$0xff]
    %v5910 = vld [vmem:[#allocation7 + $0x128] sm:$0xff]
    %v5911 = vld [vmem:[#allocation7 + $0x130] sm:$0xff]
    %v5912 = vld [vmem:[#allocation7 + $0x138] sm:$0xff]
    %v5913 = vld [vmem:[#allocation7 + $0x140] sm:$0xff]
    %v5914 = vld [vmem:[#allocation7 + $0x148] sm:$0xff]
    %v5915 = vld [vmem:[#allocation7 + $0x150] sm:$0xff]
    %v5916 = vld [vmem:[#allocation7 + $0x158] sm:$0xff]
    %v5917 = vld [vmem:[#allocation7 + $0x160] sm:$0xff]
    %v5918 = vld [vmem:[#allocation7 + $0x168] sm:$0xff]
    %v5919 = vld [vmem:[#allocation7 + $0x170] sm:$0xff]
    %v5920 = vld [vmem:[#allocation7 + $0x178] sm:$0xff]
    %v5921 = vld [vmem:[#allocation7 + $0x180] sm:$0xff]
    %v5922 = vld [vmem:[#allocation7 + $0x188] sm:$0xff]
    %v5923 = vld [vmem:[#allocation7 + $0x190] sm:$0xff]
    %v5924 = vld [vmem:[#allocation7 + $0x198] sm:$0xff]
    %v5925 = vld [vmem:[#allocation7 + $0x1a0] sm:$0xff]
    %v5926 = vld [vmem:[#allocation7 + $0x1a8] sm:$0xff]
    %v5927 = vld [vmem:[#allocation7 + $0x1b0] sm:$0xff]
    %v5928 = vld [vmem:[#allocation7 + $0x1b8] sm:$0xff]
    %v5929 = vld [vmem:[#allocation7 + $0x1c0] sm:$0xff]
    %v5930 = vld [vmem:[#allocation7 + $0x1c8] sm:$0xff]
    %v5931 = vld [vmem:[#allocation7 + $0x1d0] sm:$0xff]
    %v5932 = vld [vmem:[#allocation7 + $0x1d8] sm:$0xff]
    %v5933 = vld [vmem:[#allocation7 + $0x1e0] sm:$0xff]
    %v5934 = vld [vmem:[#allocation7 + $0x1e8] sm:$0xff]
    %v5935 = vld [vmem:[#allocation7 + $0x1f0] sm:$0xff]
    %v5936 = vld [vmem:[#allocation7 + $0x1f8] sm:$0xff]
    %v5937 = vld [vmem:[#allocation7 + $0x200] sm:$0xff]
    %v5938 = vld [vmem:[#allocation7 + $0x208] sm:$0xff]
    %v5939 = vld [vmem:[#allocation7 + $0x210] sm:$0xff]
    %v5940 = vld [vmem:[#allocation7 + $0x218] sm:$0xff]
    %v5941 = vld [vmem:[#allocation7 + $0x220] sm:$0xff]
    %v5942 = vld [vmem:[#allocation7 + $0x228] sm:$0xff]
    %v5943 = vld [vmem:[#allocation7 + $0x230] sm:$0xff]
    %v5944 = vld [vmem:[#allocation7 + $0x238] sm:$0xff]
    %v5945 = vld [vmem:[#allocation7 + $0x240] sm:$0xff]
    %v5946 = vld [vmem:[#allocation7 + $0x248] sm:$0xff]
    %v5947 = vld [vmem:[#allocation7 + $0x250] sm:$0xff]
    %v5948 = vld [vmem:[#allocation7 + $0x258] sm:$0xff]
    %v5949 = vld [vmem:[#allocation7 + $0x260] sm:$0xff]
    %v5950 = vld [vmem:[#allocation7 + $0x268] sm:$0xff]
    %v5951 = vld [vmem:[#allocation7 + $0x270] sm:$0xff]
    %v5952 = vld [vmem:[#allocation7 + $0x278] sm:$0xff]
    %v5953 = vld [vmem:[#allocation7 + $0x280] sm:$0xff]
    %v5954 = vld [vmem:[#allocation7 + $0x288] sm:$0xff]
    %v5955 = vld [vmem:[#allocation7 + $0x290] sm:$0xff]
    %v5956 = vld [vmem:[#allocation7 + $0x298] sm:$0xff]
    %v5957 = vld [vmem:[#allocation7 + $0x2a0] sm:$0xff]
    %v5958 = vld [vmem:[#allocation7 + $0x2a8] sm:$0xff]
    %v5959 = vld [vmem:[#allocation7 + $0x2b0] sm:$0xff]
    %v5960 = vld [vmem:[#allocation7 + $0x2b8] sm:$0xff]
    %v5961 = vld [vmem:[#allocation7 + $0x2c0] sm:$0xff]
    %v5962 = vld [vmem:[#allocation7 + $0x2c8] sm:$0xff]
    %v5963 = vld [vmem:[#allocation7 + $0x2d0] sm:$0xff]
    %v5964 = vld [vmem:[#allocation7 + $0x2d8] sm:$0xff]
    %v5965 = vld [vmem:[#allocation7 + $0x2e0] sm:$0xff]
    %v5966 = vld [vmem:[#allocation7 + $0x2e8] sm:$0xff]
    %v5967 = vld [vmem:[#allocation7 + $0x2f0] sm:$0xff]
    %v5968 = vld [vmem:[#allocation7 + $0x2f8] sm:$0xff]
    %v5969 = vld [vmem:[#allocation7 + $0x300] sm:$0xff]
    %v5970 = vld [vmem:[#allocation7 + $0x308] sm:$0xff]
    %v5971 = vld [vmem:[#allocation7 + $0x310] sm:$0xff]
    %v5972 = vld [vmem:[#allocation7 + $0x318] sm:$0xff]
    %v5973 = vld [vmem:[#allocation7 + $0x320] sm:$0xff]
    %v5974 = vld [vmem:[#allocation7 + $0x328] sm:$0xff]
    %v5975 = vld [vmem:[#allocation7 + $0x330] sm:$0xff]
    %v5976 = vld [vmem:[#allocation7 + $0x338] sm:$0xff]
    %v5977 = vld [vmem:[#allocation7 + $0x340] sm:$0xff]
    %v5978 = vld [vmem:[#allocation7 + $0x348] sm:$0xff]
    %v5979 = vld [vmem:[#allocation7 + $0x350] sm:$0xff]
    %v5980 = vld [vmem:[#allocation7 + $0x358] sm:$0xff]
    %v5981 = vld [vmem:[#allocation7 + $0x360] sm:$0xff]
    %v5982 = vld [vmem:[#allocation7 + $0x368] sm:$0xff]
    %v5983 = vld [vmem:[#allocation7 + $0x370] sm:$0xff]
    %v5984 = vld [vmem:[#allocation7 + $0x378] sm:$0xff]
    %v5985 = vld [vmem:[#allocation7 + $0x380] sm:$0xff]
    %v5986 = vld [vmem:[#allocation7 + $0x388] sm:$0xff]
    %v5987 = vld [vmem:[#allocation7 + $0x390] sm:$0xff]
    %v5988 = vld [vmem:[#allocation7 + $0x398] sm:$0xff]
    %v5989 = vld [vmem:[#allocation7 + $0x3a0] sm:$0xff]
    %v5990 = vld [vmem:[#allocation7 + $0x3a8] sm:$0xff]
    %v5991 = vld [vmem:[#allocation7 + $0x3b0] sm:$0xff]
    %v5992 = vld [vmem:[#allocation7 + $0x3b8] sm:$0xff]
    %v5993 = vld [vmem:[#allocation7 + $0x3c0] sm:$0xff]
    %v5994 = vld [vmem:[#allocation7 + $0x3c8] sm:$0xff]
    %v5995 = vld [vmem:[#allocation7 + $0x3d0] sm:$0xff]
    %v5996 = vld [vmem:[#allocation7 + $0x3d8] sm:$0xff]
    %v5997 = vld [vmem:[#allocation7 + $0x3e0] sm:$0xff]
    %v5998 = vld [vmem:[#allocation7 + $0x3e8] sm:$0xff]
    %v5999 = vld [vmem:[#allocation7 + $0x3f0] sm:$0xff]
    %v6000 = vld [vmem:[#allocation7 + $0x3f8] sm:$0xff]
    %v6001 = vld [vmem:[#allocation7 + $0x400] sm:$0xff]
    %v6002 = vld [vmem:[#allocation7 + $0x408] sm:$0xff]
    %v6003 = vld [vmem:[#allocation7 + $0x410] sm:$0xff]
    %v6004 = vld [vmem:[#allocation7 + $0x418] sm:$0xff]
    %v6005 = vld [vmem:[#allocation7 + $0x420] sm:$0xff]
    %v6006 = vld [vmem:[#allocation7 + $0x428] sm:$0xff]
    %v6007 = vld [vmem:[#allocation7 + $0x430] sm:$0xff]
    %v6008 = vld [vmem:[#allocation7 + $0x438] sm:$0xff]
    %v6009 = vld [vmem:[#allocation7 + $0x440] sm:$0xff]
    %v6010 = vld [vmem:[#allocation7 + $0x448] sm:$0xff]
    %v6011 = vld [vmem:[#allocation7 + $0x450] sm:$0xff]
    %v6012 = vld [vmem:[#allocation7 + $0x458] sm:$0xff]
    %v6013 = vld [vmem:[#allocation7 + $0x460] sm:$0xff]
    %v6014 = vld [vmem:[#allocation7 + $0x468] sm:$0xff]
    %v6015 = vld [vmem:[#allocation7 + $0x470] sm:$0xff]
    %v6016 = vld [vmem:[#allocation7 + $0x478] sm:$0xff]
    %v6017 = vld [vmem:[#allocation7 + $0x480] sm:$0xff]
    %v6018 = vld [vmem:[#allocation7 + $0x488] sm:$0xff]
    %v6019 = vld [vmem:[#allocation7 + $0x490] sm:$0xff]
    %v6020 = vld [vmem:[#allocation7 + $0x498] sm:$0xff]
    %v6021 = vld [vmem:[#allocation7 + $0x4a0] sm:$0xff]
    %v6022 = vld [vmem:[#allocation7 + $0x4a8] sm:$0xff]
    %v6023 = vld [vmem:[#allocation7 + $0x4b0] sm:$0xff]
    %v6024 = vld [vmem:[#allocation7 + $0x4b8] sm:$0xff]
    %v6025 = vld [vmem:[#allocation7 + $0x4c0] sm:$0xff]
    %v6026 = vld [vmem:[#allocation7 + $0x4c8] sm:$0xff]
    %v6027 = vld [vmem:[#allocation7 + $0x4d0] sm:$0xff]
    %v6028 = vld [vmem:[#allocation7 + $0x4d8] sm:$0xff]
    %v6029 = vld [vmem:[#allocation7 + $0x4e0] sm:$0xff]
    %v6030 = vld [vmem:[#allocation7 + $0x4e8] sm:$0xff]
    %v6031 = vld [vmem:[#allocation7 + $0x4f0] sm:$0xff]
    %v6032 = vld [vmem:[#allocation7 + $0x4f8] sm:$0xff]
    %v6033 = vld [vmem:[#allocation7 + $0x500] sm:$0xff]
    %v6034 = vld [vmem:[#allocation7 + $0x508] sm:$0xff]
    %v6035 = vld [vmem:[#allocation7 + $0x510] sm:$0xff]
    %v6036 = vld [vmem:[#allocation7 + $0x518] sm:$0xff]
    %v6037 = vld [vmem:[#allocation7 + $0x520] sm:$0xff]
    %v6038 = vld [vmem:[#allocation7 + $0x528] sm:$0xff]
    %v6039 = vld [vmem:[#allocation7 + $0x530] sm:$0xff]
    %v6040 = vld [vmem:[#allocation7 + $0x538] sm:$0xff]
    %v6041 = vld [vmem:[#allocation7 + $0x540] sm:$0xff]
    %v6042 = vld [vmem:[#allocation7 + $0x548] sm:$0xff]
    %v6043 = vld [vmem:[#allocation7 + $0x550] sm:$0xff]
    %v6044 = vld [vmem:[#allocation7 + $0x558] sm:$0xff]
    %v6045 = vld [vmem:[#allocation7 + $0x560] sm:$0xff]
    %v6046 = vld [vmem:[#allocation7 + $0x568] sm:$0xff]
    %v6047 = vld [vmem:[#allocation7 + $0x570] sm:$0xff]
    %v6048 = vld [vmem:[#allocation7 + $0x578] sm:$0xff]
    %v6049 = vld [vmem:[#allocation7 + $0x580] sm:$0xff]
    %v6050 = vld [vmem:[#allocation7 + $0x588] sm:$0xff]
    %v6051 = vld [vmem:[#allocation7 + $0x590] sm:$0xff]
    %v6052 = vld [vmem:[#allocation7 + $0x598] sm:$0xff]
    %v6053 = vld [vmem:[#allocation7 + $0x5a0] sm:$0xff]
    %v6054 = vld [vmem:[#allocation7 + $0x5a8] sm:$0xff]
    %v6055 = vld [vmem:[#allocation7 + $0x5b0] sm:$0xff]
    %v6056 = vld [vmem:[#allocation7 + $0x5b8] sm:$0xff]
    %v6057 = vld [vmem:[#allocation7 + $0x5c0] sm:$0xff]
    %v6058 = vld [vmem:[#allocation7 + $0x5c8] sm:$0xff]
    %v6059 = vld [vmem:[#allocation7 + $0x5d0] sm:$0xff]
    %v6060 = vld [vmem:[#allocation7 + $0x5d8] sm:$0xff]
    %v6061 = vld [vmem:[#allocation7 + $0x5e0] sm:$0xff]
    %v6062 = vld [vmem:[#allocation7 + $0x5e8] sm:$0xff]
    %v6063 = vld [vmem:[#allocation7 + $0x5f0] sm:$0xff]
    %v6064 = vld [vmem:[#allocation7 + $0x5f8] sm:$0xff]
    %v6065 = vld [vmem:[#allocation7 + $0x600] sm:$0xff]
    %v6066 = vld [vmem:[#allocation7 + $0x608] sm:$0xff]
    %v6067 = vld [vmem:[#allocation7 + $0x610] sm:$0xff]
    %v6068 = vld [vmem:[#allocation7 + $0x618] sm:$0xff]
    %v6069 = vld [vmem:[#allocation7 + $0x620] sm:$0xff]
    %v6070 = vld [vmem:[#allocation7 + $0x628] sm:$0xff]
    %v6071 = vld [vmem:[#allocation7 + $0x630] sm:$0xff]
    %v6072 = vld [vmem:[#allocation7 + $0x638] sm:$0xff]
    %v6073 = vld [vmem:[#allocation7 + $0x640] sm:$0xff]
    %v6074 = vld [vmem:[#allocation7 + $0x648] sm:$0xff]
    %v6075 = vld [vmem:[#allocation7 + $0x650] sm:$0xff]
    %v6076 = vld [vmem:[#allocation7 + $0x658] sm:$0xff]
    %v6077 = vld [vmem:[#allocation7 + $0x660] sm:$0xff]
    %v6078 = vld [vmem:[#allocation7 + $0x668] sm:$0xff]
    %v6079 = vld [vmem:[#allocation7 + $0x670] sm:$0xff]
    %v6080 = vld [vmem:[#allocation7 + $0x678] sm:$0xff]
    %v6081 = vld [vmem:[#allocation7 + $0x680] sm:$0xff]
    %v6082 = vld [vmem:[#allocation7 + $0x688] sm:$0xff]
    %v6083 = vld [vmem:[#allocation7 + $0x690] sm:$0xff]
    %v6084 = vld [vmem:[#allocation7 + $0x698] sm:$0xff]
    %v6085 = vld [vmem:[#allocation7 + $0x6a0] sm:$0xff]
    %v6086 = vld [vmem:[#allocation7 + $0x6a8] sm:$0xff]
    %v6087 = vld [vmem:[#allocation7 + $0x6b0] sm:$0xff]
    %v6088 = vld [vmem:[#allocation7 + $0x6b8] sm:$0xff]
    %v6089 = vld [vmem:[#allocation7 + $0x6c0] sm:$0xff]
    %v6090 = vld [vmem:[#allocation7 + $0x6c8] sm:$0xff]
    %v6091 = vld [vmem:[#allocation7 + $0x6d0] sm:$0xff]
    %v6092 = vld [vmem:[#allocation7 + $0x6d8] sm:$0xff]
    %v6093 = vld [vmem:[#allocation7 + $0x6e0] sm:$0xff]
    %v6094 = vld [vmem:[#allocation7 + $0x6e8] sm:$0xff]
    %v6095 = vld [vmem:[#allocation7 + $0x6f0] sm:$0xff]
    %v6096 = vld [vmem:[#allocation7 + $0x6f8] sm:$0xff]
    %v6097 = vld [vmem:[#allocation7 + $0x700] sm:$0xff]
    %v6098 = vld [vmem:[#allocation7 + $0x708] sm:$0xff]
    %v6099 = vld [vmem:[#allocation7 + $0x710] sm:$0xff]
    %v6100 = vld [vmem:[#allocation7 + $0x718] sm:$0xff]
    %v6101 = vld [vmem:[#allocation7 + $0x720] sm:$0xff]
    %v6102 = vld [vmem:[#allocation7 + $0x728] sm:$0xff]
    %v6103 = vld [vmem:[#allocation7 + $0x730] sm:$0xff]
    %v6104 = vld [vmem:[#allocation7 + $0x738] sm:$0xff]
    %v6105 = vld [vmem:[#allocation7 + $0x740] sm:$0xff]
    %v6106 = vld [vmem:[#allocation7 + $0x748] sm:$0xff]
    %v6107 = vld [vmem:[#allocation7 + $0x750] sm:$0xff]
    %v6108 = vld [vmem:[#allocation7 + $0x758] sm:$0xff]
    %v6109 = vld [vmem:[#allocation7 + $0x760] sm:$0xff]
    %v6110 = vld [vmem:[#allocation7 + $0x768] sm:$0xff]
    %v6111 = vld [vmem:[#allocation7 + $0x770] sm:$0xff]
    %v6112 = vld [vmem:[#allocation7 + $0x778] sm:$0xff]
    %v6113 = vld [vmem:[#allocation7 + $0x780] sm:$0xff]
    %v6114 = vld [vmem:[#allocation7 + $0x788] sm:$0xff]
    %v6115 = vld [vmem:[#allocation7 + $0x790] sm:$0xff]
    %v6116 = vld [vmem:[#allocation7 + $0x798] sm:$0xff]
    %v6117 = vld [vmem:[#allocation7 + $0x7a0] sm:$0xff]
    %v6118 = vld [vmem:[#allocation7 + $0x7a8] sm:$0xff]
    %v6119 = vld [vmem:[#allocation7 + $0x7b0] sm:$0xff]
    %v6120 = vld [vmem:[#allocation7 + $0x7b8] sm:$0xff]
    %v6121 = vld [vmem:[#allocation7 + $0x7c0] sm:$0xff]
    %v6122 = vld [vmem:[#allocation7 + $0x7c8] sm:$0xff]
    %v6123 = vld [vmem:[#allocation7 + $0x7d0] sm:$0xff]
    %v6124 = vld [vmem:[#allocation7 + $0x7d8] sm:$0xff]
    %v6125 = vld [vmem:[#allocation7 + $0x7e0] sm:$0xff]
    %v6126 = vld [vmem:[#allocation7 + $0x7e8] sm:$0xff]
    %v6127 = vld [vmem:[#allocation7 + $0x7f0] sm:$0xff]
    %v6128 = vld [vmem:[#allocation7 + $0x7f8] sm:$0xff]
    %v6129 = vld [vmem:[#allocation7 + $0x800] sm:$0xff]
    %v6130 = vld [vmem:[#allocation7 + $0x808] sm:$0xff]
    %v6131 = vld [vmem:[#allocation7 + $0x810] sm:$0xff]
    %v6132 = vld [vmem:[#allocation7 + $0x818] sm:$0xff]
    %v6133 = vld [vmem:[#allocation7 + $0x820] sm:$0xff]
    %v6134 = vld [vmem:[#allocation7 + $0x828] sm:$0xff]
    %v6135 = vld [vmem:[#allocation7 + $0x830] sm:$0xff]
    %v6136 = vld [vmem:[#allocation7 + $0x838] sm:$0xff]
    %v6137 = vld [vmem:[#allocation7 + $0x840] sm:$0xff]
    %v6138 = vld [vmem:[#allocation7 + $0x848] sm:$0xff]
    %v6139 = vld [vmem:[#allocation7 + $0x850] sm:$0xff]
    %v6140 = vld [vmem:[#allocation7 + $0x858] sm:$0xff]
    %v6141 = vld [vmem:[#allocation7 + $0x860] sm:$0xff]
    %v6142 = vld [vmem:[#allocation7 + $0x868] sm:$0xff]
    %v6143 = vld [vmem:[#allocation7 + $0x870] sm:$0xff]
    %v6144 = vld [vmem:[#allocation7 + $0x878] sm:$0xff]
    %v6145 = vld [vmem:[#allocation7 + $0x880] sm:$0xff]
    %v6146 = vld [vmem:[#allocation7 + $0x888] sm:$0xff]
    %v6147 = vld [vmem:[#allocation7 + $0x890] sm:$0xff]
    %v6148 = vld [vmem:[#allocation7 + $0x898] sm:$0xff]
    %v6149 = vld [vmem:[#allocation7 + $0x8a0] sm:$0xff]
    %v6150 = vld [vmem:[#allocation7 + $0x8a8] sm:$0xff]
    %v6151 = vld [vmem:[#allocation7 + $0x8b0] sm:$0xff]
    %v6152 = vld [vmem:[#allocation7 + $0x8b8] sm:$0xff]
    %v6153 = vld [vmem:[#allocation7 + $0x8c0] sm:$0xff]
    %v6154 = vld [vmem:[#allocation7 + $0x8c8] sm:$0xff]
    %v6155 = vld [vmem:[#allocation7 + $0x8d0] sm:$0xff]
    %v6156 = vld [vmem:[#allocation7 + $0x8d8] sm:$0xff]
    %v6157 = vld [vmem:[#allocation7 + $0x8e0] sm:$0xff]
    %v6158 = vld [vmem:[#allocation7 + $0x8e8] sm:$0xff]
    %v6159 = vld [vmem:[#allocation7 + $0x8f0] sm:$0xff]
    %v6160 = vld [vmem:[#allocation7 + $0x8f8] sm:$0xff]
    %v6161 = vld [vmem:[#allocation7 + $0x900] sm:$0xff]
    %v6162 = vld [vmem:[#allocation7 + $0x908] sm:$0xff]
    %v6163 = vld [vmem:[#allocation7 + $0x910] sm:$0xff]
    %v6164 = vld [vmem:[#allocation7 + $0x918] sm:$0xff]
    %v6165 = vld [vmem:[#allocation7 + $0x920] sm:$0xff]
    %v6166 = vld [vmem:[#allocation7 + $0x928] sm:$0xff]
    %v6167 = vld [vmem:[#allocation7 + $0x930] sm:$0xff]
    %v6168 = vld [vmem:[#allocation7 + $0x938] sm:$0xff]
    %v6169 = vld [vmem:[#allocation7 + $0x940] sm:$0xff]
    %v6170 = vld [vmem:[#allocation7 + $0x948] sm:$0xff]
    %v6171 = vld [vmem:[#allocation7 + $0x950] sm:$0xff]
    %v6172 = vld [vmem:[#allocation7 + $0x958] sm:$0xff]
    %v6173 = vld [vmem:[#allocation7 + $0x960] sm:$0xff]
    %v6174 = vld [vmem:[#allocation7 + $0x968] sm:$0xff]
    %v6175 = vld [vmem:[#allocation7 + $0x970] sm:$0xff]
    %v6176 = vld [vmem:[#allocation7 + $0x978] sm:$0xff]
    %v6177 = vld [vmem:[#allocation7 + $0x980] sm:$0xff]
    %v6178 = vld [vmem:[#allocation7 + $0x988] sm:$0xff]
    %v6179 = vld [vmem:[#allocation7 + $0x990] sm:$0xff]
    %v6180 = vld [vmem:[#allocation7 + $0x998] sm:$0xff]
    %v6181 = vld [vmem:[#allocation7 + $0x9a0] sm:$0xff]
    %v6182 = vld [vmem:[#allocation7 + $0x9a8] sm:$0xff]
    %v6183 = vld [vmem:[#allocation7 + $0x9b0] sm:$0xff]
    %v6184 = vld [vmem:[#allocation7 + $0x9b8] sm:$0xff]
    %v6185 = vld [vmem:[#allocation7 + $0x9c0] sm:$0xff]
    %v6186 = vld [vmem:[#allocation7 + $0x9c8] sm:$0xff]
    %v6187 = vld [vmem:[#allocation7 + $0x9d0] sm:$0xff]
    %v6188 = vld [vmem:[#allocation7 + $0x9d8] sm:$0xff]
    %v6189 = vld [vmem:[#allocation7 + $0x9e0] sm:$0xff]
    %v6190 = vld [vmem:[#allocation7 + $0x9e8] sm:$0xff]
    %v6191 = vld [vmem:[#allocation7 + $0x9f0] sm:$0xff]
    %v6192 = vld [vmem:[#allocation7 + $0x9f8] sm:$0xff]
    %v6193 = vld [vmem:[#allocation7 + $0xa00] sm:$0xff]
    %v6194 = vld [vmem:[#allocation7 + $0xa08] sm:$0xff]
    %v6195 = vld [vmem:[#allocation7 + $0xa10] sm:$0xff]
    %v6196 = vld [vmem:[#allocation7 + $0xa18] sm:$0xff]
    %v6197 = vld [vmem:[#allocation7 + $0xa20] sm:$0xff]
    %v6198 = vld [vmem:[#allocation7 + $0xa28] sm:$0xff]
    %v6199 = vld [vmem:[#allocation7 + $0xa30] sm:$0xff]
    %v6200 = vld [vmem:[#allocation7 + $0xa38] sm:$0xff]
    %v6201 = vld [vmem:[#allocation7 + $0xa40] sm:$0xff]
    %v6202 = vld [vmem:[#allocation7 + $0xa48] sm:$0xff]
    %v6203 = vld [vmem:[#allocation7 + $0xa50] sm:$0xff]
    %v6204 = vld [vmem:[#allocation7 + $0xa58] sm:$0xff]
    %v6205 = vld [vmem:[#allocation7 + $0xa60] sm:$0xff]
    %v6206 = vld [vmem:[#allocation7 + $0xa68] sm:$0xff]
    %v6207 = vld [vmem:[#allocation7 + $0xa70] sm:$0xff]
    %v6208 = vld [vmem:[#allocation7 + $0xa78] sm:$0xff]
    %v6209 = vld [vmem:[#allocation7 + $0xa80] sm:$0xff]
    %v6210 = vld [vmem:[#allocation7 + $0xa88] sm:$0xff]
    %v6211 = vld [vmem:[#allocation7 + $0xa90] sm:$0xff]
    %v6212 = vld [vmem:[#allocation7 + $0xa98] sm:$0xff]
    %v6213 = vld [vmem:[#allocation7 + $0xaa0] sm:$0xff]
    %v6214 = vld [vmem:[#allocation7 + $0xaa8] sm:$0xff]
    %v6215 = vld [vmem:[#allocation7 + $0xab0] sm:$0xff]
    %v6216 = vld [vmem:[#allocation7 + $0xab8] sm:$0xff]
    %v6217 = vld [vmem:[#allocation7 + $0xac0] sm:$0xff]
    %v6218 = vld [vmem:[#allocation7 + $0xac8] sm:$0xff]
    %v6219 = vld [vmem:[#allocation7 + $0xad0] sm:$0xff]
    %v6220 = vld [vmem:[#allocation7 + $0xad8] sm:$0xff]
    %v6221 = vld [vmem:[#allocation7 + $0xae0] sm:$0xff]
    %v6222 = vld [vmem:[#allocation7 + $0xae8] sm:$0xff]
    %v6223 = vld [vmem:[#allocation7 + $0xaf0] sm:$0xff]
    %v6224 = vld [vmem:[#allocation7 + $0xaf8] sm:$0xff]
    %v6225 = vld [vmem:[#allocation7 + $0xb00] sm:$0xff]
    %v6226 = vld [vmem:[#allocation7 + $0xb08] sm:$0xff]
    %v6227 = vld [vmem:[#allocation7 + $0xb10] sm:$0xff]
    %v6228 = vld [vmem:[#allocation7 + $0xb18] sm:$0xff]
    %v6229 = vld [vmem:[#allocation7 + $0xb20] sm:$0xff]
    %v6230 = vld [vmem:[#allocation7 + $0xb28] sm:$0xff]
    %v6231 = vld [vmem:[#allocation7 + $0xb30] sm:$0xff]
    %v6232 = vld [vmem:[#allocation7 + $0xb38] sm:$0xff]
    %v6233 = vld [vmem:[#allocation7 + $0xb40] sm:$0xff]
    %v6234 = vld [vmem:[#allocation7 + $0xb48] sm:$0xff]
    %v6235 = vld [vmem:[#allocation7 + $0xb50] sm:$0xff]
    %v6236 = vld [vmem:[#allocation7 + $0xb58] sm:$0xff]
    %v6237 = vld [vmem:[#allocation7 + $0xb60] sm:$0xff]
    %v6238 = vld [vmem:[#allocation7 + $0xb68] sm:$0xff]
    %v6239 = vld [vmem:[#allocation7 + $0xb70] sm:$0xff]
    %v6240 = vld [vmem:[#allocation7 + $0xb78] sm:$0xff]
    %v6241 = vld [vmem:[#allocation7 + $0xb80] sm:$0xff]
    %v6242 = vld [vmem:[#allocation7 + $0xb88] sm:$0xff]
    %v6243 = vld [vmem:[#allocation7 + $0xb90] sm:$0xff]
    %v6244 = vld [vmem:[#allocation7 + $0xb98] sm:$0xff]
    %v6245 = vld [vmem:[#allocation7 + $0xba0] sm:$0xff]
    %v6246 = vld [vmem:[#allocation7 + $0xba8] sm:$0xff]
    %v6247 = vld [vmem:[#allocation7 + $0xbb0] sm:$0xff]
    %v6248 = vld [vmem:[#allocation7 + $0xbb8] sm:$0xff]
    %v6249 = vld [vmem:[#allocation7 + $0xbc0] sm:$0xff]
    %v6250 = vld [vmem:[#allocation7 + $0xbc8] sm:$0xff]
    %v6251 = vld [vmem:[#allocation7 + $0xbd0] sm:$0xff]
    %v6252 = vld [vmem:[#allocation7 + $0xbd8] sm:$0xff]
    %v6253 = vld [vmem:[#allocation7 + $0xbe0] sm:$0xff]
    %v6254 = vld [vmem:[#allocation7 + $0xbe8] sm:$0xff]
    %v6255 = vld [vmem:[#allocation7 + $0xbf0] sm:$0xff]
    %v6256 = vld [vmem:[#allocation7 + $0xbf8] sm:$0xff]
    %v6257 = vld [vmem:[#allocation7 + $0xc00] sm:$0xff]
    %v6258 = vld [vmem:[#allocation7 + $0xc08] sm:$0xff]
    %v6259 = vld [vmem:[#allocation7 + $0xc10] sm:$0xff]
    %v6260 = vld [vmem:[#allocation7 + $0xc18] sm:$0xff]
    %v6261 = vld [vmem:[#allocation7 + $0xc20] sm:$0xff]
    %v6262 = vld [vmem:[#allocation7 + $0xc28] sm:$0xff]
    %v6263 = vld [vmem:[#allocation7 + $0xc30] sm:$0xff]
    %v6264 = vld [vmem:[#allocation7 + $0xc38] sm:$0xff]
    %v6265 = vld [vmem:[#allocation7 + $0xc40] sm:$0xff]
    %v6266 = vld [vmem:[#allocation7 + $0xc48] sm:$0xff]
    %v6267 = vld [vmem:[#allocation7 + $0xc50] sm:$0xff]
    %v6268 = vld [vmem:[#allocation7 + $0xc58] sm:$0xff]
    %v6269 = vld [vmem:[#allocation7 + $0xc60] sm:$0xff]
    %v6270 = vld [vmem:[#allocation7 + $0xc68] sm:$0xff]
    %v6271 = vld [vmem:[#allocation7 + $0xc70] sm:$0xff]
    %v6272 = vld [vmem:[#allocation7 + $0xc78] sm:$0xff]
    %v6273 = vld [vmem:[#allocation7 + $0xc80] sm:$0xff]
    %v6274 = vld [vmem:[#allocation7 + $0xc88] sm:$0xff]
    %v6275 = vld [vmem:[#allocation7 + $0xc90] sm:$0xff]
    %v6276 = vld [vmem:[#allocation7 + $0xc98] sm:$0xff]
    %v6277 = vld [vmem:[#allocation7 + $0xca0] sm:$0xff]
    %v6278 = vld [vmem:[#allocation7 + $0xca8] sm:$0xff]
    %v6279 = vld [vmem:[#allocation7 + $0xcb0] sm:$0xff]
    %v6280 = vld [vmem:[#allocation7 + $0xcb8] sm:$0xff]
    %v6281 = vld [vmem:[#allocation7 + $0xcc0] sm:$0xff]
    %v6282 = vld [vmem:[#allocation7 + $0xcc8] sm:$0xff]
    %v6283 = vld [vmem:[#allocation7 + $0xcd0] sm:$0xff]
    %v6284 = vld [vmem:[#allocation7 + $0xcd8] sm:$0xff]
    %v6285 = vld [vmem:[#allocation7 + $0xce0] sm:$0xff]
    %v6286 = vld [vmem:[#allocation7 + $0xce8] sm:$0xff]
    %v6287 = vld [vmem:[#allocation7 + $0xcf0] sm:$0xff]
    %v6288 = vld [vmem:[#allocation7 + $0xcf8] sm:$0xff]
    %v6289 = vld [vmem:[#allocation7 + $0xd00] sm:$0xff]
    %v6290 = vld [vmem:[#allocation7 + $0xd08] sm:$0xff]
    %v6291 = vld [vmem:[#allocation7 + $0xd10] sm:$0xff]
    %v6292 = vld [vmem:[#allocation7 + $0xd18] sm:$0xff]
    %v6293 = vld [vmem:[#allocation7 + $0xd20] sm:$0xff]
    %v6294 = vld [vmem:[#allocation7 + $0xd28] sm:$0xff]
    %v6295 = vld [vmem:[#allocation7 + $0xd30] sm:$0xff]
    %v6296 = vld [vmem:[#allocation7 + $0xd38] sm:$0xff]
    %v6297 = vld [vmem:[#allocation7 + $0xd40] sm:$0xff]
    %v6298 = vld [vmem:[#allocation7 + $0xd48] sm:$0xff]
    %v6299 = vld [vmem:[#allocation7 + $0xd50] sm:$0xff]
    %v6300 = vld [vmem:[#allocation7 + $0xd58] sm:$0xff]
    %v6301 = vld [vmem:[#allocation7 + $0xd60] sm:$0xff]
    %v6302 = vld [vmem:[#allocation7 + $0xd68] sm:$0xff]
    %v6303 = vld [vmem:[#allocation7 + $0xd70] sm:$0xff]
    %v6304 = vld [vmem:[#allocation7 + $0xd78] sm:$0xff]
    %v6305 = vld [vmem:[#allocation7 + $0xd80] sm:$0xff]
    %v6306 = vld [vmem:[#allocation7 + $0xd88] sm:$0xff]
    %v6307 = vld [vmem:[#allocation7 + $0xd90] sm:$0xff]
    %v6308 = vld [vmem:[#allocation7 + $0xd98] sm:$0xff]
    %v6309 = vld [vmem:[#allocation7 + $0xda0] sm:$0xff]
    %v6310 = vld [vmem:[#allocation7 + $0xda8] sm:$0xff]
    %v6311 = vld [vmem:[#allocation7 + $0xdb0] sm:$0xff]
    %v6312 = vld [vmem:[#allocation7 + $0xdb8] sm:$0xff]
    %v6313 = vld [vmem:[#allocation7 + $0xdc0] sm:$0xff]
    %v6314 = vld [vmem:[#allocation7 + $0xdc8] sm:$0xff]
    %v6315 = vld [vmem:[#allocation7 + $0xdd0] sm:$0xff]
    %v6316 = vld [vmem:[#allocation7 + $0xdd8] sm:$0xff]
    %v6317 = vld [vmem:[#allocation7 + $0xde0] sm:$0xff]
    %v6318 = vld [vmem:[#allocation7 + $0xde8] sm:$0xff]
    %v6319 = vld [vmem:[#allocation7 + $0xdf0] sm:$0xff]
    %v6320 = vld [vmem:[#allocation7 + $0xdf8] sm:$0xff]
    %v6321 = vld [vmem:[#allocation7 + $0xe00] sm:$0xff]
    %v6322 = vld [vmem:[#allocation7 + $0xe08] sm:$0xff]
    %v6323 = vld [vmem:[#allocation7 + $0xe10] sm:$0xff]
    %v6324 = vld [vmem:[#allocation7 + $0xe18] sm:$0xff]
    %v6325 = vld [vmem:[#allocation7 + $0xe20] sm:$0xff]
    %v6326 = vld [vmem:[#allocation7 + $0xe28] sm:$0xff]
    %v6327 = vld [vmem:[#allocation7 + $0xe30] sm:$0xff]
    %v6328 = vld [vmem:[#allocation7 + $0xe38] sm:$0xff]
    %v6329 = vld [vmem:[#allocation7 + $0xe40] sm:$0xff]
    %v6330 = vld [vmem:[#allocation7 + $0xe48] sm:$0xff]
    %v6331 = vld [vmem:[#allocation7 + $0xe50] sm:$0xff]
    %v6332 = vld [vmem:[#allocation7 + $0xe58] sm:$0xff]
    %v6333 = vld [vmem:[#allocation7 + $0xe60] sm:$0xff]
    %v6334 = vld [vmem:[#allocation7 + $0xe68] sm:$0xff]
    %v6335 = vld [vmem:[#allocation7 + $0xe70] sm:$0xff]
    %v6336 = vld [vmem:[#allocation7 + $0xe78] sm:$0xff]
    %v6337 = vld [vmem:[#allocation7 + $0xe80] sm:$0xff]
    %v6338 = vld [vmem:[#allocation7 + $0xe88] sm:$0xff]
    %v6339 = vld [vmem:[#allocation7 + $0xe90] sm:$0xff]
    %v6340 = vld [vmem:[#allocation7 + $0xe98] sm:$0xff]
    %v6341 = vld [vmem:[#allocation7 + $0xea0] sm:$0xff]
    %v6342 = vld [vmem:[#allocation7 + $0xea8] sm:$0xff]
    %v6343 = vld [vmem:[#allocation7 + $0xeb0] sm:$0xff]
    %v6344 = vld [vmem:[#allocation7 + $0xeb8] sm:$0xff]
    %v6345 = vld [vmem:[#allocation7 + $0xec0] sm:$0xff]
    %v6346 = vld [vmem:[#allocation7 + $0xec8] sm:$0xff]
    %v6347 = vld [vmem:[#allocation7 + $0xed0] sm:$0xff]
    %v6348 = vld [vmem:[#allocation7 + $0xed8] sm:$0xff]
    %v6349 = vld [vmem:[#allocation7 + $0xee0] sm:$0xff]
    %v6350 = vld [vmem:[#allocation7 + $0xee8] sm:$0xff]
    %v6351 = vld [vmem:[#allocation7 + $0xef0] sm:$0xff]
    %v6352 = vld [vmem:[#allocation7 + $0xef8] sm:$0xff]
    %v6353 = vld [vmem:[#allocation7 + $0xf00] sm:$0xff]
    %v6354 = vld [vmem:[#allocation7 + $0xf08] sm:$0xff]
    %v6355 = vld [vmem:[#allocation7 + $0xf10] sm:$0xff]
    %v6356 = vld [vmem:[#allocation7 + $0xf18] sm:$0xff]
    %v6357 = vld [vmem:[#allocation7 + $0xf20] sm:$0xff]
    %v6358 = vld [vmem:[#allocation7 + $0xf28] sm:$0xff]
    %v6359 = vld [vmem:[#allocation7 + $0xf30] sm:$0xff]
    %v6360 = vld [vmem:[#allocation7 + $0xf38] sm:$0xff]
    %v6361 = vld [vmem:[#allocation7 + $0xf40] sm:$0xff]
    %v6362 = vld [vmem:[#allocation7 + $0xf48] sm:$0xff]
    %v6363 = vld [vmem:[#allocation7 + $0xf50] sm:$0xff]
    %v6364 = vld [vmem:[#allocation7 + $0xf58] sm:$0xff]
    %v6365 = vld [vmem:[#allocation7 + $0xf60] sm:$0xff]
    %v6366 = vld [vmem:[#allocation7 + $0xf68] sm:$0xff]
    %v6367 = vld [vmem:[#allocation7 + $0xf70] sm:$0xff]
    %v6368 = vld [vmem:[#allocation7 + $0xf78] sm:$0xff]
    %v6369 = vld [vmem:[#allocation7 + $0xf80] sm:$0xff]
    %v6370 = vld [vmem:[#allocation7 + $0xf88] sm:$0xff]
    %v6371 = vld [vmem:[#allocation7 + $0xf90] sm:$0xff]
    %v6372 = vld [vmem:[#allocation7 + $0xf98] sm:$0xff]
    %v6373 = vld [vmem:[#allocation7 + $0xfa0] sm:$0xff]
    %v6374 = vld [vmem:[#allocation7 + $0xfa8] sm:$0xff]
    %v6375 = vld [vmem:[#allocation7 + $0xfb0] sm:$0xff]
    %v6376 = vld [vmem:[#allocation7 + $0xfb8] sm:$0xff]
    %v6377 = vld [vmem:[#allocation7 + $0xfc0] sm:$0xff]
    %v6378 = vld [vmem:[#allocation7 + $0xfc8] sm:$0xff]
    %v6379 = vld [vmem:[#allocation7 + $0xfd0] sm:$0xff]
    %v6380 = vld [vmem:[#allocation7 + $0xfd8] sm:$0xff]
    %v6381 = vld [vmem:[#allocation7 + $0xfe0] sm:$0xff]
    %v6382 = vld [vmem:[#allocation7 + $0xfe8] sm:$0xff]
    %v6383 = vld [vmem:[#allocation7 + $0xff0] sm:$0xff]
    %v6384 = vld [vmem:[#allocation7 + $0xff8] sm:$0xff]
    %v6385 = vld [vmem:[#allocation7 + $0x1000] sm:$0xff]
    %v6386 = vld [vmem:[#allocation7 + $0x1008] sm:$0xff]
    %v6387 = vld [vmem:[#allocation7 + $0x1010] sm:$0xff]
    %v6388 = vld [vmem:[#allocation7 + $0x1018] sm:$0xff]
    %v6389 = vld [vmem:[#allocation7 + $0x1020] sm:$0xff]
    %v6390 = vld [vmem:[#allocation7 + $0x1028] sm:$0xff]
    %v6391 = vld [vmem:[#allocation7 + $0x1030] sm:$0xff]
    %v6392 = vld [vmem:[#allocation7 + $0x1038] sm:$0xff]
    %v6393 = vld [vmem:[#allocation7 + $0x1040] sm:$0xff]
    %v6394 = vld [vmem:[#allocation7 + $0x1048] sm:$0xff]
    %v6395 = vld [vmem:[#allocation7 + $0x1050] sm:$0xff]
    %v6396 = vld [vmem:[#allocation7 + $0x1058] sm:$0xff]
    %v6397 = vld [vmem:[#allocation7 + $0x1060] sm:$0xff]
    %v6398 = vld [vmem:[#allocation7 + $0x1068] sm:$0xff]
    %v6399 = vld [vmem:[#allocation7 + $0x1070] sm:$0xff]
    %v6400 = vld [vmem:[#allocation7 + $0x1078] sm:$0xff]
    %v6401 = vld [vmem:[#allocation7 + $0x1080] sm:$0xff]
    %v6402 = vld [vmem:[#allocation7 + $0x1088] sm:$0xff]
    %v6403 = vld [vmem:[#allocation7 + $0x1090] sm:$0xff]
    %v6404 = vld [vmem:[#allocation7 + $0x1098] sm:$0xff]
    %v6405 = vld [vmem:[#allocation7 + $0x10a0] sm:$0xff]
    %v6406 = vld [vmem:[#allocation7 + $0x10a8] sm:$0xff]
    %v6407 = vld [vmem:[#allocation7 + $0x10b0] sm:$0xff]
    %v6408 = vld [vmem:[#allocation7 + $0x10b8] sm:$0xff]
    %v6409 = vld [vmem:[#allocation7 + $0x10c0] sm:$0xff]
    %v6410 = vld [vmem:[#allocation7 + $0x10c8] sm:$0xff]
    %v6411 = vld [vmem:[#allocation7 + $0x10d0] sm:$0xff]
    %v6412 = vld [vmem:[#allocation7 + $0x10d8] sm:$0xff]
    %v6413 = vld [vmem:[#allocation7 + $0x10e0] sm:$0xff]
    %v6414 = vld [vmem:[#allocation7 + $0x10e8] sm:$0xff]
    %v6415 = vld [vmem:[#allocation7 + $0x10f0] sm:$0xff]
    %v6416 = vld [vmem:[#allocation7 + $0x10f8] sm:$0xff]
    %v6417 = vld [vmem:[#allocation7 + $0x1100] sm:$0xff]
    %v6418 = vld [vmem:[#allocation7 + $0x1108] sm:$0xff]
    %v6419 = vld [vmem:[#allocation7 + $0x1110] sm:$0xff]
    %v6420 = vld [vmem:[#allocation7 + $0x1118] sm:$0xff]
    %v6421 = vld [vmem:[#allocation7 + $0x1120] sm:$0xff]
    %v6422 = vld [vmem:[#allocation7 + $0x1128] sm:$0xff]
    %v6423 = vld [vmem:[#allocation7 + $0x1130] sm:$0xff]
    %v6424 = vld [vmem:[#allocation7 + $0x1138] sm:$0xff]
    %v6425 = vld [vmem:[#allocation7 + $0x1140] sm:$0xff]
    %v6426 = vld [vmem:[#allocation7 + $0x1148] sm:$0xff]
    %v6427 = vld [vmem:[#allocation7 + $0x1150] sm:$0xff]
    %v6428 = vld [vmem:[#allocation7 + $0x1158] sm:$0xff]
    %v6429 = vld [vmem:[#allocation7 + $0x1160] sm:$0xff]
    %v6430 = vld [vmem:[#allocation7 + $0x1168] sm:$0xff]
    %v6431 = vld [vmem:[#allocation7 + $0x1170] sm:$0xff]
    %v6432 = vld [vmem:[#allocation7 + $0x1178] sm:$0xff]
    %v6433 = vld [vmem:[#allocation7 + $0x1180] sm:$0xff]
    %v6434 = vld [vmem:[#allocation7 + $0x1188] sm:$0xff]
    %v6435 = vld [vmem:[#allocation7 + $0x1190] sm:$0xff]
    %v6436 = vld [vmem:[#allocation7 + $0x1198] sm:$0xff]
    %v6437 = vld [vmem:[#allocation7 + $0x11a0] sm:$0xff]
    %v6438 = vld [vmem:[#allocation7 + $0x11a8] sm:$0xff]
    %v6439 = vld [vmem:[#allocation7 + $0x11b0] sm:$0xff]
    %v6440 = vld [vmem:[#allocation7 + $0x11b8] sm:$0xff]
    %v6441 = vld [vmem:[#allocation7 + $0x11c0] sm:$0xff]
    %v6442 = vld [vmem:[#allocation7 + $0x11c8] sm:$0xff]
    %v6443 = vld [vmem:[#allocation7 + $0x11d0] sm:$0xff]
    %v6444 = vld [vmem:[#allocation7 + $0x11d8] sm:$0xff]
    %v6445 = vld [vmem:[#allocation7 + $0x11e0] sm:$0xff]
    %v6446 = vld [vmem:[#allocation7 + $0x11e8] sm:$0xff]
    %v6447 = vld [vmem:[#allocation7 + $0x11f0] sm:$0xff]
    %v6448 = vld [vmem:[#allocation7 + $0x11f8] sm:$0xff]
    %v6449 = vld [vmem:[#allocation7 + $0x1200] sm:$0xff]
    %v6450 = vld [vmem:[#allocation7 + $0x1208] sm:$0xff]
    %v6451 = vld [vmem:[#allocation7 + $0x1210] sm:$0xff]
    %v6452 = vld [vmem:[#allocation7 + $0x1218] sm:$0xff]
    %v6453 = vld [vmem:[#allocation7 + $0x1220] sm:$0xff]
    %v6454 = vld [vmem:[#allocation7 + $0x1228] sm:$0xff]
    %v6455 = vld [vmem:[#allocation7 + $0x1230] sm:$0xff]
    %v6456 = vld [vmem:[#allocation7 + $0x1238] sm:$0xff]
    %v6457 = vld [vmem:[#allocation7 + $0x1240] sm:$0xff]
    %v6458 = vld [vmem:[#allocation7 + $0x1248] sm:$0xff]
    %v6459 = vld [vmem:[#allocation7 + $0x1250] sm:$0xff]
    %v6460 = vld [vmem:[#allocation7 + $0x1258] sm:$0xff]
    %v6461 = vld [vmem:[#allocation7 + $0x1260] sm:$0xff]
    %v6462 = vld [vmem:[#allocation7 + $0x1268] sm:$0xff]
    %v6463 = vld [vmem:[#allocation7 + $0x1270] sm:$0xff]
    %v6464 = vld [vmem:[#allocation7 + $0x1278] sm:$0xff]
    %v6465 = vld [vmem:[#allocation7 + $0x1280] sm:$0xff]
    %v6466 = vld [vmem:[#allocation7 + $0x1288] sm:$0xff]
    %v6467 = vld [vmem:[#allocation7 + $0x1290] sm:$0xff]
    %v6468 = vld [vmem:[#allocation7 + $0x1298] sm:$0xff]
    %v6469 = vld [vmem:[#allocation7 + $0x12a0] sm:$0xff]
    %v6470 = vld [vmem:[#allocation7 + $0x12a8] sm:$0xff]
    %v6471 = vld [vmem:[#allocation7 + $0x12b0] sm:$0xff]
    %v6472 = vld [vmem:[#allocation7 + $0x12b8] sm:$0xff]
    %v6473 = vld [vmem:[#allocation7 + $0x12c0] sm:$0xff]
    %v6474 = vld [vmem:[#allocation7 + $0x12c8] sm:$0xff]
    %v6475 = vld [vmem:[#allocation7 + $0x12d0] sm:$0xff]
    %v6476 = vld [vmem:[#allocation7 + $0x12d8] sm:$0xff]
    %v6477 = vld [vmem:[#allocation7 + $0x12e0] sm:$0xff]
    %v6478 = vld [vmem:[#allocation7 + $0x12e8] sm:$0xff]
    %v6479 = vld [vmem:[#allocation7 + $0x12f0] sm:$0xff]
    %v6480 = vld [vmem:[#allocation7 + $0x12f8] sm:$0xff]
    %v6481 = vld [vmem:[#allocation7 + $0x1300] sm:$0xff]
    %v6482 = vld [vmem:[#allocation7 + $0x1308] sm:$0xff]
    %v6483 = vld [vmem:[#allocation7 + $0x1310] sm:$0xff]
    %v6484 = vld [vmem:[#allocation7 + $0x1318] sm:$0xff]
    %v6485 = vld [vmem:[#allocation7 + $0x1320] sm:$0xff]
    %v6486 = vld [vmem:[#allocation7 + $0x1328] sm:$0xff]
    %v6487 = vld [vmem:[#allocation7 + $0x1330] sm:$0xff]
    %v6488 = vld [vmem:[#allocation7 + $0x1338] sm:$0xff]
    %v6489 = vld [vmem:[#allocation7 + $0x1340] sm:$0xff]
    %v6490 = vld [vmem:[#allocation7 + $0x1348] sm:$0xff]
    %v6491 = vld [vmem:[#allocation7 + $0x1350] sm:$0xff]
    %v6492 = vld [vmem:[#allocation7 + $0x1358] sm:$0xff]
    %v6493 = vld [vmem:[#allocation7 + $0x1360] sm:$0xff]
    %v6494 = vld [vmem:[#allocation7 + $0x1368] sm:$0xff]
    %v6495 = vld [vmem:[#allocation7 + $0x1370] sm:$0xff]
    %v6496 = vld [vmem:[#allocation7 + $0x1378] sm:$0xff]
    %v6497 = vld [vmem:[#allocation7 + $0x1380] sm:$0xff]
    %v6498 = vld [vmem:[#allocation7 + $0x1388] sm:$0xff]
    %v6499 = vld [vmem:[#allocation7 + $0x1390] sm:$0xff]
    %v6500 = vld [vmem:[#allocation7 + $0x1398] sm:$0xff]
    %v6501 = vld [vmem:[#allocation7 + $0x13a0] sm:$0xff]
    %v6502 = vld [vmem:[#allocation7 + $0x13a8] sm:$0xff]
    %v6503 = vld [vmem:[#allocation7 + $0x13b0] sm:$0xff]
    %v6504 = vld [vmem:[#allocation7 + $0x13b8] sm:$0xff]
    %v6505 = vld [vmem:[#allocation7 + $0x13c0] sm:$0xff]
    %v6506 = vld [vmem:[#allocation7 + $0x13c8] sm:$0xff]
    %v6507 = vld [vmem:[#allocation7 + $0x13d0] sm:$0xff]
    %v6508 = vld [vmem:[#allocation7 + $0x13d8] sm:$0xff]
    %v6509 = vld [vmem:[#allocation7 + $0x13e0] sm:$0xff]
    %v6510 = vld [vmem:[#allocation7 + $0x13e8] sm:$0xff]
    %v6511 = vld [vmem:[#allocation7 + $0x13f0] sm:$0xff]
    %v6512 = vld [vmem:[#allocation7 + $0x13f8] sm:$0xff]
    %v6513 = vld [vmem:[#allocation7 + $0x1400] sm:$0xff]
    %v6514 = vld [vmem:[#allocation7 + $0x1408] sm:$0xff]
    %v6515 = vld [vmem:[#allocation7 + $0x1410] sm:$0xff]
    %v6516 = vld [vmem:[#allocation7 + $0x1418] sm:$0xff]
    %v6517 = vld [vmem:[#allocation7 + $0x1420] sm:$0xff]
    %v6518 = vld [vmem:[#allocation7 + $0x1428] sm:$0xff]
    %v6519 = vld [vmem:[#allocation7 + $0x1430] sm:$0xff]
    %v6520 = vld [vmem:[#allocation7 + $0x1438] sm:$0xff]
    %v6521 = vld [vmem:[#allocation7 + $0x1440] sm:$0xff]
    %v6522 = vld [vmem:[#allocation7 + $0x1448] sm:$0xff]
    %v6523 = vld [vmem:[#allocation7 + $0x1450] sm:$0xff]
    %v6524 = vld [vmem:[#allocation7 + $0x1458] sm:$0xff]
    %v6525 = vld [vmem:[#allocation7 + $0x1460] sm:$0xff]
    %v6526 = vld [vmem:[#allocation7 + $0x1468] sm:$0xff]
    %v6527 = vld [vmem:[#allocation7 + $0x1470] sm:$0xff]
    %v6528 = vld [vmem:[#allocation7 + $0x1478] sm:$0xff]
    %v6529 = vld [vmem:[#allocation7 + $0x1480] sm:$0xff]
    %v6530 = vld [vmem:[#allocation7 + $0x1488] sm:$0xff]
    %v6531 = vld [vmem:[#allocation7 + $0x1490] sm:$0xff]
    %v6532 = vld [vmem:[#allocation7 + $0x1498] sm:$0xff]
    %v6533 = vld [vmem:[#allocation7 + $0x14a0] sm:$0xff]
    %v6534 = vld [vmem:[#allocation7 + $0x14a8] sm:$0xff]
    %v6535 = vld [vmem:[#allocation7 + $0x14b0] sm:$0xff]
    %v6536 = vld [vmem:[#allocation7 + $0x14b8] sm:$0xff]
    %v6537 = vld [vmem:[#allocation7 + $0x14c0] sm:$0xff]
    %v6538 = vld [vmem:[#allocation7 + $0x14c8] sm:$0xff]
    %v6539 = vld [vmem:[#allocation7 + $0x14d0] sm:$0xff]
    %v6540 = vld [vmem:[#allocation7 + $0x14d8] sm:$0xff]
    %v6541 = vld [vmem:[#allocation7 + $0x14e0] sm:$0xff]
    %v6542 = vld [vmem:[#allocation7 + $0x14e8] sm:$0xff]
    %v6543 = vld [vmem:[#allocation7 + $0x14f0] sm:$0xff]
    %v6544 = vld [vmem:[#allocation7 + $0x14f8] sm:$0xff]
    %v6545 = vld [vmem:[#allocation7 + $0x1500] sm:$0xff]
    %v6546 = vld [vmem:[#allocation7 + $0x1508] sm:$0xff]
    %v6547 = vld [vmem:[#allocation7 + $0x1510] sm:$0xff]
    %v6548 = vld [vmem:[#allocation7 + $0x1518] sm:$0xff]
    %v6549 = vld [vmem:[#allocation7 + $0x1520] sm:$0xff]
    %v6550 = vld [vmem:[#allocation7 + $0x1528] sm:$0xff]
    %v6551 = vld [vmem:[#allocation7 + $0x1530] sm:$0xff]
    %v6552 = vld [vmem:[#allocation7 + $0x1538] sm:$0xff]
    %v6553 = vld [vmem:[#allocation7 + $0x1540] sm:$0xff]
    %v6554 = vld [vmem:[#allocation7 + $0x1548] sm:$0xff]
    %v6555 = vld [vmem:[#allocation7 + $0x1550] sm:$0xff]
    %v6556 = vld [vmem:[#allocation7 + $0x1558] sm:$0xff]
    %v6557 = vld [vmem:[#allocation7 + $0x1560] sm:$0xff]
    %v6558 = vld [vmem:[#allocation7 + $0x1568] sm:$0xff]
    %v6559 = vld [vmem:[#allocation7 + $0x1570] sm:$0xff]
    %v6560 = vld [vmem:[#allocation7 + $0x1578] sm:$0xff]
    %v6561 = vld [vmem:[#allocation7 + $0x1580] sm:$0xff]
    %v6562 = vld [vmem:[#allocation7 + $0x1588] sm:$0xff]
    %v6563 = vld [vmem:[#allocation7 + $0x1590] sm:$0xff]
    %v6564 = vld [vmem:[#allocation7 + $0x1598] sm:$0xff]
    %v6565 = vld [vmem:[#allocation7 + $0x15a0] sm:$0xff]
    %v6566 = vld [vmem:[#allocation7 + $0x15a8] sm:$0xff]
    %v6567 = vld [vmem:[#allocation7 + $0x15b0] sm:$0xff]
    %v6568 = vld [vmem:[#allocation7 + $0x15b8] sm:$0xff]
    %v6569 = vld [vmem:[#allocation7 + $0x15c0] sm:$0xff]
    %v6570 = vld [vmem:[#allocation7 + $0x15c8] sm:$0xff]
    %v6571 = vld [vmem:[#allocation7 + $0x15d0] sm:$0xff]
    %v6572 = vld [vmem:[#allocation7 + $0x15d8] sm:$0xff]
    %v6573 = vld [vmem:[#allocation7 + $0x15e0] sm:$0xff]
    %v6574 = vld [vmem:[#allocation7 + $0x15e8] sm:$0xff]
    %v6575 = vld [vmem:[#allocation7 + $0x15f0] sm:$0xff]
    %v6576 = vld [vmem:[#allocation7 + $0x15f8] sm:$0xff]
    %v6577 = vld [vmem:[#allocation7 + $0x1600] sm:$0xff]
    %v6578 = vld [vmem:[#allocation7 + $0x1608] sm:$0xff]
    %v6579 = vld [vmem:[#allocation7 + $0x1610] sm:$0xff]
    %v6580 = vld [vmem:[#allocation7 + $0x1618] sm:$0xff]
    %v6581 = vld [vmem:[#allocation7 + $0x1620] sm:$0xff]
    %v6582 = vld [vmem:[#allocation7 + $0x1628] sm:$0xff]
    %v6583 = vld [vmem:[#allocation7 + $0x1630] sm:$0xff]
    %v6584 = vld [vmem:[#allocation7 + $0x1638] sm:$0xff]
    %v6585 = vld [vmem:[#allocation7 + $0x1640] sm:$0xff]
    %v6586 = vld [vmem:[#allocation7 + $0x1648] sm:$0xff]
    %v6587 = vld [vmem:[#allocation7 + $0x1650] sm:$0xff]
    %v6588 = vld [vmem:[#allocation7 + $0x1658] sm:$0xff]
    %v6589 = vld [vmem:[#allocation7 + $0x1660] sm:$0xff]
    %v6590 = vld [vmem:[#allocation7 + $0x1668] sm:$0xff]
    %v6591 = vld [vmem:[#allocation7 + $0x1670] sm:$0xff]
    %v6592 = vld [vmem:[#allocation7 + $0x1678] sm:$0xff]
    %v6593 = vld [vmem:[#allocation7 + $0x1680] sm:$0xff]
    %v6594 = vld [vmem:[#allocation7 + $0x1688] sm:$0xff]
    %v6595 = vld [vmem:[#allocation7 + $0x1690] sm:$0xff]
    %v6596 = vld [vmem:[#allocation7 + $0x1698] sm:$0xff]
    %v6597 = vld [vmem:[#allocation7 + $0x16a0] sm:$0xff]
    %v6598 = vld [vmem:[#allocation7 + $0x16a8] sm:$0xff]
    %v6599 = vld [vmem:[#allocation7 + $0x16b0] sm:$0xff]
    %v6600 = vld [vmem:[#allocation7 + $0x16b8] sm:$0xff]
    %v6601 = vld [vmem:[#allocation7 + $0x16c0] sm:$0xff]
    %v6602 = vld [vmem:[#allocation7 + $0x16c8] sm:$0xff]
    %v6603 = vld [vmem:[#allocation7 + $0x16d0] sm:$0xff]
    %v6604 = vld [vmem:[#allocation7 + $0x16d8] sm:$0xff]
    %v6605 = vld [vmem:[#allocation7 + $0x16e0] sm:$0xff]
    %v6606 = vld [vmem:[#allocation7 + $0x16e8] sm:$0xff]
    %v6607 = vld [vmem:[#allocation7 + $0x16f0] sm:$0xff]
    %v6608 = vld [vmem:[#allocation7 + $0x16f8] sm:$0xff]
    %v6609 = vld [vmem:[#allocation7 + $0x1700] sm:$0xff]
    %v6610 = vld [vmem:[#allocation7 + $0x1708] sm:$0xff]
    %v6611 = vld [vmem:[#allocation7 + $0x1710] sm:$0xff]
    %v6612 = vld [vmem:[#allocation7 + $0x1718] sm:$0xff]
    %v6613 = vld [vmem:[#allocation7 + $0x1720] sm:$0xff]
    %v6614 = vld [vmem:[#allocation7 + $0x1728] sm:$0xff]
    %v6615 = vld [vmem:[#allocation7 + $0x1730] sm:$0xff]
    %v6616 = vld [vmem:[#allocation7 + $0x1738] sm:$0xff]
    %v6617 = vld [vmem:[#allocation7 + $0x1740] sm:$0xff]
    %v6618 = vld [vmem:[#allocation7 + $0x1748] sm:$0xff]
    %v6619 = vld [vmem:[#allocation7 + $0x1750] sm:$0xff]
    %v6620 = vld [vmem:[#allocation7 + $0x1758] sm:$0xff]
    %v6621 = vld [vmem:[#allocation7 + $0x1760] sm:$0xff]
    %v6622 = vld [vmem:[#allocation7 + $0x1768] sm:$0xff]
    %v6623 = vld [vmem:[#allocation7 + $0x1770] sm:$0xff]
    %v6624 = vld [vmem:[#allocation7 + $0x1778] sm:$0xff]
    %v6625 = vld [vmem:[#allocation7 + $0x1780] sm:$0xff]
    %v6626 = vld [vmem:[#allocation7 + $0x1788] sm:$0xff]
    %v6627 = vld [vmem:[#allocation7 + $0x1790] sm:$0xff]
    %v6628 = vld [vmem:[#allocation7 + $0x1798] sm:$0xff]
    %v6629 = vld [vmem:[#allocation7 + $0x17a0] sm:$0xff]
    %v6630 = vld [vmem:[#allocation7 + $0x17a8] sm:$0xff]
    %v6631 = vld [vmem:[#allocation7 + $0x17b0] sm:$0xff]
    %v6632 = vld [vmem:[#allocation7 + $0x17b8] sm:$0xff]
    %v6633 = vld [vmem:[#allocation7 + $0x17c0] sm:$0xff]
    %v6634 = vld [vmem:[#allocation7 + $0x17c8] sm:$0xff]
    %v6635 = vld [vmem:[#allocation7 + $0x17d0] sm:$0xff]
    %v6636 = vld [vmem:[#allocation7 + $0x17d8] sm:$0xff]
    %v6637 = vld [vmem:[#allocation7 + $0x17e0] sm:$0xff]
    %v6638 = vld [vmem:[#allocation7 + $0x17e8] sm:$0xff]
    %v6639 = vld [vmem:[#allocation7 + $0x17f0] sm:$0xff]
    %v6640 = vld [vmem:[#allocation7 + $0x17f8] sm:$0xff]
    %v6641 = vld [vmem:[#allocation7 + $0x1800] sm:$0xff]
    %v6642 = vld [vmem:[#allocation7 + $0x1808] sm:$0xff]
    %v6643 = vld [vmem:[#allocation7 + $0x1810] sm:$0xff]
    %v6644 = vld [vmem:[#allocation7 + $0x1818] sm:$0xff]
    %v6645 = vld [vmem:[#allocation7 + $0x1820] sm:$0xff]
    %v6646 = vld [vmem:[#allocation7 + $0x1828] sm:$0xff]
    %v6647 = vld [vmem:[#allocation7 + $0x1830] sm:$0xff]
    %v6648 = vld [vmem:[#allocation7 + $0x1838] sm:$0xff]
    %v6649 = vld [vmem:[#allocation7 + $0x1840] sm:$0xff]
    %v6650 = vld [vmem:[#allocation7 + $0x1848] sm:$0xff]
    %v6651 = vld [vmem:[#allocation7 + $0x1850] sm:$0xff]
    %v6652 = vld [vmem:[#allocation7 + $0x1858] sm:$0xff]
    %v6653 = vld [vmem:[#allocation7 + $0x1860] sm:$0xff]
    %v6654 = vld [vmem:[#allocation7 + $0x1868] sm:$0xff]
    %v6655 = vld [vmem:[#allocation7 + $0x1870] sm:$0xff]
    %v6656 = vld [vmem:[#allocation7 + $0x1878] sm:$0xff]
    %v6657 = vld [vmem:[#allocation15] sm:$0xff]
    %v6659 = vlaneseq
    %v6660 = vshrl.u32 %v6659, 7
    %v6661 = vsub.s32 0, %v6660
    %v6662 = vrot.slane %v6657, %v6661
    %v6663 = vlaneseq
    %v6664 = vshrl.u32 %v6663, 7
    %v6665 = vsub.s32 1, %v6664
    %v6666 = vrot.slane %v6657, %v6665
    %v6667 = vlaneseq
    %v6668 = vshrl.u32 %v6667, 7
    %v6669 = vsub.s32 2, %v6668
    %v6670 = vrot.slane %v6657, %v6669
    %v6671 = vlaneseq
    %v6672 = vshrl.u32 %v6671, 7
    %v6673 = vsub.s32 3, %v6672
    %v6674 = vrot.slane %v6657, %v6673
    %v6675 = vlaneseq
    %v6676 = vshrl.u32 %v6675, 7
    %v6677 = vsub.s32 4, %v6676
    %v6678 = vrot.slane %v6657, %v6677
    %v6679 = vlaneseq
    %v6680 = vshrl.u32 %v6679, 7
    %v6681 = vsub.s32 5, %v6680
    %v6682 = vrot.slane %v6657, %v6681
    %v6683 = vlaneseq
    %v6684 = vshrl.u32 %v6683, 7
    %v6685 = vsub.s32 6, %v6684
    %v6686 = vrot.slane %v6657, %v6685
    %v6687 = vlaneseq
    %v6688 = vshrl.u32 %v6687, 7
    %v6689 = vsub.s32 7, %v6688
    %v6690 = vrot.slane %v6657, %v6689
    %vm6699 = vcmask 261120
    %v6701 = vsel %vm6699, %v5868, 0
    %6703 = vmatprep.subr.bf16.mxu0 %v5874
    %6704 = vmatpush1.bf16.msra.mxu0 %v5873
    %6705 = vmatprep.subr.bf16.mxu0 %v5882
    %6706 = vmatpush1.bf16.msra.mxu0 %v5881
    %6707 = vmatprep.subr.bf16.mxu0 %v5890
    %6708 = vmatpush1.bf16.msra.mxu0 %v5889
    %6709 = vmatprep.subr.bf16.mxu0 %v5898
    %6710 = vmatpush1.bf16.msra.mxu0 %v5897
    %6711 = vmatprep.subr.bf16.mxu0 %v5906
    %6712 = vmatpush1.bf16.msra.mxu0 %v5905
    %6713 = vmatprep.subr.bf16.mxu0 %v5914
    %6714 = vmatpush1.bf16.msra.mxu0 %v5913
    %6715 = vmatprep.subr.bf16.mxu0 %v5922
    %6716 = vmatpush1.bf16.msra.mxu0 %v5921
    %6717 = vmatprep.subr.bf16.mxu0 %v5930
    %6718 = vmatpush1.bf16.msra.mxu0 %v5929
    %6719 = vmatprep.subr.bf16.mxu0 %v5938
    %6720 = vmatpush1.bf16.msra.mxu0 %v5937
    %6721 = vmatprep.subr.bf16.mxu0 %v5946
    %6722 = vmatpush1.bf16.msra.mxu0 %v5945
    %6723 = vmatprep.subr.bf16.mxu0 %v5954
    %6724 = vmatpush1.bf16.msra.mxu0 %v5953
    %6725 = vmatprep.subr.bf16.mxu0 %v5962
    %6726 = vmatpush1.bf16.msra.mxu0 %v5961
    %6727 = vmatprep.subr.bf16.mxu0 %v5970
    %6728 = vmatpush1.bf16.msra.mxu0 %v5969
    %6729 = vmatprep.subr.bf16.mxu0 %v5978
    %6730 = vmatpush1.bf16.msra.mxu0 %v5977
    %6731 = vmatprep.subr.bf16.mxu0 %v5986
    %6732 = vmatpush1.bf16.msra.mxu0 %v5985
    %6733 = vmatprep.subr.bf16.mxu0 %v5994
    %6734 = vmatpush1.bf16.msra.mxu0 %v5993
    %6735 = vmatprep.mubr.bf16.mxu0 %v5857
    %6736 = vmatmul.mubr.bf16.gmra.mrb[0].mxu0 %v5856
    %v6737 = vpop.f32.mrb[0].mxu0
    %v6738 = vadd.f32 %v6662, %v6737
    %v6739 = vpop.f32.mrb[0].mxu0
    %v6740 = vadd.f32 %v6666, %v6739
    %v6741 = vpop.f32.mrb[0].mxu0
    %v6742 = vpop.f32.mrb[0].mxu0
    %6743 = vdwg.mxu0
    %6744 = vmatprep.subr.bf16.mxu0 %v6002
    %6745 = vmatpush1.bf16.msra.mxu0 %v6001
    %6746 = vmatprep.subr.bf16.mxu0 %v6010
    %6747 = vmatpush1.bf16.msra.mxu0 %v6009
    %6748 = vmatprep.subr.bf16.mxu0 %v6018
    %6749 = vmatpush1.bf16.msra.mxu0 %v6017
    %6750 = vmatprep.subr.bf16.mxu0 %v6026
    %6751 = vmatpush1.bf16.msra.mxu0 %v6025
    %6752 = vmatprep.subr.bf16.mxu0 %v6034
    %6753 = vmatpush1.bf16.msra.mxu0 %v6033
    %6754 = vmatprep.subr.bf16.mxu0 %v6042
    %6755 = vmatpush1.bf16.msra.mxu0 %v6041
    %6756 = vmatprep.subr.bf16.mxu0 %v6050
    %6757 = vmatpush1.bf16.msra.mxu0 %v6049
    %6758 = vmatprep.subr.bf16.mxu0 %v6058
    %6759 = vmatpush1.bf16.msra.mxu0 %v6057
    %6760 = vmatprep.subr.bf16.mxu0 %v6066
    %6761 = vmatpush1.bf16.msra.mxu0 %v6065
    %6762 = vmatprep.subr.bf16.mxu0 %v6074
    %6763 = vmatpush1.bf16.msra.mxu0 %v6073
    %6764 = vmatprep.subr.bf16.mxu0 %v6082
    %6765 = vmatpush1.bf16.msra.mxu0 %v6081
    %6766 = vmatprep.subr.bf16.mxu0 %v6090
    %6767 = vmatpush1.bf16.msra.mxu0 %v6089
    %6768 = vmatprep.subr.bf16.mxu0 %v6098
    %6769 = vmatpush1.bf16.msra.mxu0 %v6097
    %6770 = vmatprep.subr.bf16.mxu0 %v6106
    %6771 = vmatpush1.bf16.msra.mxu0 %v6105
    %6772 = vmatprep.subr.bf16.mxu0 %v6114
    %6773 = vmatpush1.bf16.msra.mxu0 %v6113
    %6774 = vmatprep.subr.bf16.mxu0 %v6122
    %6775 = vmatpush1.bf16.msra.mxu0 %v6121
    %6776 = vmatprep.mubr.bf16.mxu0 %v5859
    %6777 = vmatmul.mubr.bf16.gmra.mrb[0].mxu0 %v5858
    %v6778 = vpop.f32.mrb[0].mxu0
    %v6779 = vadd.f32 %v6738, %v6778
    %v6780 = vpop.f32.mrb[0].mxu0
    %v6781 = vadd.f32 %v6740, %v6780
    %v6782 = vpop.f32.mrb[0].mxu0
    %v6783 = vpop.f32.mrb[0].mxu0
    %6784 = vdwg.mxu0
    %6785 = vmatprep.subr.bf16.mxu0 %v6130
    %6786 = vmatpush1.bf16.msra.mxu0 %v6129
    %6787 = vmatprep.subr.bf16.mxu0 %v6138
    %6788 = vmatpush1.bf16.msra.mxu0 %v6137
    %6789 = vmatprep.subr.bf16.mxu0 %v6146
    %6790 = vmatpush1.bf16.msra.mxu0 %v6145
    %6791 = vmatprep.subr.bf16.mxu0 %v6154
    %6792 = vmatpush1.bf16.msra.mxu0 %v6153
    %6793 = vmatprep.subr.bf16.mxu0 %v6162
    %6794 = vmatpush1.bf16.msra.mxu0 %v6161
    %6795 = vmatprep.subr.bf16.mxu0 %v6170
    %6796 = vmatpush1.bf16.msra.mxu0 %v6169
    %6797 = vmatprep.subr.bf16.mxu0 %v6178
    %6798 = vmatpush1.bf16.msra.mxu0 %v6177
    %6799 = vmatprep.subr.bf16.mxu0 %v6186
    %6800 = vmatpush1.bf16.msra.mxu0 %v6185
    %6801 = vmatprep.subr.bf16.mxu0 %v6194
    %6802 = vmatpush1.bf16.msra.mxu0 %v6193
    %6803 = vmatprep.subr.bf16.mxu0 %v6202
    %6804 = vmatpush1.bf16.msra.mxu0 %v6201
    %6805 = vmatprep.subr.bf16.mxu0 %v6210
    %6806 = vmatpush1.bf16.msra.mxu0 %v6209
    %6807 = vmatprep.subr.bf16.mxu0 %v6218
    %6808 = vmatpush1.bf16.msra.mxu0 %v6217
    %6809 = vmatprep.subr.bf16.mxu0 %v6226
    %6810 = vmatpush1.bf16.msra.mxu0 %v6225
    %6811 = vmatprep.subr.bf16.mxu0 %v6234
    %6812 = vmatpush1.bf16.msra.mxu0 %v6233
    %6813 = vmatprep.subr.bf16.mxu0 %v6242
    %6814 = vmatpush1.bf16.msra.mxu0 %v6241
    %6815 = vmatprep.subr.bf16.mxu0 %v6250
    %6816 = vmatpush1.bf16.msra.mxu0 %v6249
    %6817 = vmatprep.mubr.bf16.mxu0 %v5861
    %6818 = vmatmul.mubr.bf16.gmra.mrb[0].mxu0 %v5860
    %v6819 = vpop.f32.mrb[0].mxu0
    %v6820 = vadd.f32 %v6779, %v6819
    %v6821 = vpop.f32.mrb[0].mxu0
    %v6822 = vadd.f32 %v6781, %v6821
    %v6823 = vpop.f32.mrb[0].mxu0
    %v6824 = vpop.f32.mrb[0].mxu0
    %6825 = vdwg.mxu0
    %6826 = vmatprep.subr.bf16.mxu0 %v6258
    %6827 = vmatpush1.bf16.msra.mxu0 %v6257
    %6828 = vmatprep.subr.bf16.mxu0 %v6266
    %6829 = vmatpush1.bf16.msra.mxu0 %v6265
    %6830 = vmatprep.subr.bf16.mxu0 %v6274
    %6831 = vmatpush1.bf16.msra.mxu0 %v6273
    %6832 = vmatprep.subr.bf16.mxu0 %v6282
    %6833 = vmatpush1.bf16.msra.mxu0 %v6281
    %6834 = vmatprep.subr.bf16.mxu0 %v6290
    %6835 = vmatpush1.bf16.msra.mxu0 %v6289
    %6836 = vmatprep.subr.bf16.mxu0 %v6298
    %6837 = vmatpush1.bf16.msra.mxu0 %v6297
    %6838 = vmatprep.subr.bf16.mxu0 %v6306
    %6839 = vmatpush1.bf16.msra.mxu0 %v6305
    %6840 = vmatprep.subr.bf16.mxu0 %v6314
    %6841 = vmatpush1.bf16.msra.mxu0 %v6313
    %6842 = vmatprep.subr.bf16.mxu0 %v6322
    %6843 = vmatpush1.bf16.msra.mxu0 %v6321
    %6844 = vmatprep.subr.bf16.mxu0 %v6330
    %6845 = vmatpush1.bf16.msra.mxu0 %v6329
    %6846 = vmatprep.subr.bf16.mxu0 %v6338
    %6847 = vmatpush1.bf16.msra.mxu0 %v6337
    %6848 = vmatprep.subr.bf16.mxu0 %v6346
    %6849 = vmatpush1.bf16.msra.mxu0 %v6345
    %6850 = vmatprep.subr.bf16.mxu0 %v6354
    %6851 = vmatpush1.bf16.msra.mxu0 %v6353
    %6852 = vmatprep.subr.bf16.mxu0 %v6362
    %6853 = vmatpush1.bf16.msra.mxu0 %v6361
    %6854 = vmatprep.subr.bf16.mxu0 %v6370
    %6855 = vmatpush1.bf16.msra.mxu0 %v6369
    %6856 = vmatprep.subr.bf16.mxu0 %v6378
    %6857 = vmatpush1.bf16.msra.mxu0 %v6377
    %6858 = vmatprep.mubr.bf16.mxu0 %v5863
    %6859 = vmatmul.mubr.bf16.gmra.mrb[0].mxu0 %v5862
    %v6860 = vpop.f32.mrb[0].mxu0
    %v6861 = vadd.f32 %v6820, %v6860
    %v6862 = vpop.f32.mrb[0].mxu0
    %v6863 = vadd.f32 %v6822, %v6862
    %v6864 = vpop.f32.mrb[0].mxu0
    %v6865 = vpop.f32.mrb[0].mxu0
    %6866 = vdwg.mxu0
    %6867 = vmatprep.subr.bf16.mxu0 %v6386
    %6868 = vmatpush1.bf16.msra.mxu0 %v6385
    %6869 = vmatprep.subr.bf16.mxu0 %v6394
    %6870 = vmatpush1.bf16.msra.mxu0 %v6393
    %6871 = vmatprep.subr.bf16.mxu0 %v6402
    %6872 = vmatpush1.bf16.msra.mxu0 %v6401
    %6873 = vmatprep.subr.bf16.mxu0 %v6410
    %6874 = vmatpush1.bf16.msra.mxu0 %v6409
    %6875 = vmatprep.subr.bf16.mxu0 %v6418
    %6876 = vmatpush1.bf16.msra.mxu0 %v6417
    %6877 = vmatprep.subr.bf16.mxu0 %v6426
    %6878 = vmatpush1.bf16.msra.mxu0 %v6425
    %6879 = vmatprep.subr.bf16.mxu0 %v6434
    %6880 = vmatpush1.bf16.msra.mxu0 %v6433
    %6881 = vmatprep.subr.bf16.mxu0 %v6442
    %6882 = vmatpush1.bf16.msra.mxu0 %v6441
    %6883 = vmatprep.subr.bf16.mxu0 %v6450
    %6884 = vmatpush1.bf16.msra.mxu0 %v6449
    %6885 = vmatprep.subr.bf16.mxu0 %v6458
    %6886 = vmatpush1.bf16.msra.mxu0 %v6457
    %6887 = vmatprep.subr.bf16.mxu0 %v6466
    %6888 = vmatpush1.bf16.msra.mxu0 %v6465
    %6889 = vmatprep.subr.bf16.mxu0 %v6474
    %6890 = vmatpush1.bf16.msra.mxu0 %v6473
    %6891 = vmatprep.subr.bf16.mxu0 %v6482
    %6892 = vmatpush1.bf16.msra.mxu0 %v6481
    %6893 = vmatprep.subr.bf16.mxu0 %v6490
    %6894 = vmatpush1.bf16.msra.mxu0 %v6489
    %6895 = vmatprep.subr.bf16.mxu0 %v6498
    %6896 = vmatpush1.bf16.msra.mxu0 %v6497
    %6897 = vmatprep.subr.bf16.mxu0 %v6506
    %6898 = vmatpush1.bf16.msra.mxu0 %v6505
    %6899 = vmatprep.mubr.bf16.mxu0 %v5865
    %6900 = vmatmul.mubr.bf16.gmra.mrb[0].mxu0 %v5864
    %v6901 = vpop.f32.mrb[0].mxu0
    %v6902 = vadd.f32 %v6861, %v6901
    %v6903 = vpop.f32.mrb[0].mxu0
    %v6904 = vadd.f32 %v6863, %v6903
    %v6905 = vpop.f32.mrb[0].mxu0
    %v6906 = vpop.f32.mrb[0].mxu0
    %6907 = vdwg.mxu0
    %6908 = vmatprep.subr.bf16.mxu0 %v6514
    %6909 = vmatpush1.bf16.msra.mxu0 %v6513
    %6910 = vmatprep.subr.bf16.mxu0 %v6522
    %6911 = vmatpush1.bf16.msra.mxu0 %v6521
    %6912 = vmatprep.subr.bf16.mxu0 %v6530
    %6913 = vmatpush1.bf16.msra.mxu0 %v6529
    %6914 = vmatprep.subr.bf16.mxu0 %v6538
    %6915 = vmatpush1.bf16.msra.mxu0 %v6537
    %6916 = vmatprep.subr.bf16.mxu0 %v6546
    %6917 = vmatpush1.bf16.msra.mxu0 %v6545
    %6918 = vmatprep.subr.bf16.mxu0 %v6554
    %6919 = vmatpush1.bf16.msra.mxu0 %v6553
    %6920 = vmatprep.subr.bf16.mxu0 %v6562
    %6921 = vmatpush1.bf16.msra.mxu0 %v6561
    %6922 = vmatprep.subr.bf16.mxu0 %v6570
    %6923 = vmatpush1.bf16.msra.mxu0 %v6569
    %6924 = vmatprep.subr.bf16.mxu0 %v6578
    %6925 = vmatpush1.bf16.msra.mxu0 %v6577
    %6926 = vmatprep.subr.bf16.mxu0 %v6586
    %6927 = vmatpush1.bf16.msra.mxu0 %v6585
    %6928 = vmatprep.subr.bf16.mxu0 %v6594
    %6929 = vmatpush1.bf16.msra.mxu0 %v6593
    %6930 = vmatprep.subr.bf16.mxu0 %v6602
    %6931 = vmatpush1.bf16.msra.mxu0 %v6601
    %6932 = vmatprep.subr.bf16.mxu0 %v6610
    %6933 = vmatpush1.bf16.msra.mxu0 %v6609
    %6934 = vmatprep.subr.bf16.mxu0 %v6618
    %6935 = vmatpush1.bf16.msra.mxu0 %v6617
    %6936 = vmatprep.subr.bf16.mxu0 %v6626
    %6937 = vmatpush1.bf16.msra.mxu0 %v6625
    %6938 = vmatprep.subr.bf16.mxu0 %v6634
    %6939 = vmatpush1.bf16.msra.mxu0 %v6633
    %6940 = vmatprep.mubr.bf16.mxu0 %v5867
    %6941 = vmatmul.mubr.bf16.gmra.mrb[0].mxu0 %v5866
    %v6942 = vpop.f32.mrb[0].mxu0
    %v6943 = vadd.f32 %v6902, %v6942
    %v6944 = vpop.f32.mrb[0].mxu0
    %v6945 = vadd.f32 %v6904, %v6944
    %v6946 = vpop.f32.mrb[0].mxu0
    %v6947 = vpop.f32.mrb[0].mxu0
    %6948 = vdwg.mxu0
    %6949 = vmatprep.subr.bf16.mxu0 %v6642
    %6950 = vmatpush1.bf16.msra.mxu0 %v6641
    %6951 = vmatprep.subr.bf16.mxu0 %v6650
    %6952 = vmatpush1.bf16.msra.mxu0 %v6649
    %6953 = vmatprep.subr.bf16.mxu0 0
    %6954 = vmatpush1.bf16.msra.mxu0 0
    %6955 = vmatprep.subr.bf16.mxu0 0
    %6956 = vmatpush1.bf16.msra.mxu0 0
    %6957 = vmatprep.subr.bf16.mxu0 0
    %6958 = vmatpush1.bf16.msra.mxu0 0
    %6959 = vmatprep.subr.bf16.mxu0 0
    %6960 = vmatpush1.bf16.msra.mxu0 0
    %6961 = vmatprep.subr.bf16.mxu0 0
    %6962 = vmatpush1.bf16.msra.mxu0 0
    %6963 = vmatprep.subr.bf16.mxu0 0
    %6964 = vmatpush1.bf16.msra.mxu0 0
    %6965 = vmatprep.subr.bf16.mxu0 0
    %6966 = vmatpush1.bf16.msra.mxu0 0
    %6967 = vmatprep.subr.bf16.mxu0 0
    %6968 = vmatpush1.bf16.msra.mxu0 0
    %6969 = vmatprep.subr.bf16.mxu0 0
    %6970 = vmatpush1.bf16.msra.mxu0 0
    %6971 = vmatprep.subr.bf16.mxu0 0
    %6972 = vmatpush1.bf16.msra.mxu0 0
    %6973 = vmatprep.subr.bf16.mxu0 0
    %6974 = vmatpush1.bf16.msra.mxu0 0
    %6975 = vmatprep.subr.bf16.mxu0 0
    %6976 = vmatpush1.bf16.msra.mxu0 0
    %6977 = vmatprep.subr.bf16.mxu0 0
    %6978 = vmatpush1.bf16.msra.mxu0 0
    %6979 = vmatprep.subr.bf16.mxu0 0
    %6980 = vmatpush1.bf16.msra.mxu0 0
    %6981 = vmatprep.mubr.bf16.mxu0 0
    %6982 = vmatmul.mubr.bf16.gmra.mrb[0].mxu0 %v6701
    %v6983 = vpop.f32.mrb[0].mxu0
    %v6984 = vadd.f32 %v6943, %v6983
    %v6985 = vpop.f32.mrb[0].mxu0
    %v6986 = vadd.f32 %v6945, %v6985
    %v6987 = vpop.f32.mrb[0].mxu0
    %v6988 = vpop.f32.mrb[0].mxu0
    %6989 = vdwg.mxu0
    %6990 = vmatprep.subr.bf16.mxu0 %v5876
    %6991 = vmatpush1.bf16.msra.mxu0 %v5875
    %6992 = vmatprep.subr.bf16.mxu0 %v5884
    %6993 = vmatpush1.bf16.msra.mxu0 %v5883
    %6994 = vmatprep.subr.bf16.mxu0 %v5892
    %6995 = vmatpush1.bf16.msra.mxu0 %v5891
    %6996 = vmatprep.subr.bf16.mxu0 %v5900
    %6997 = vmatpush1.bf16.msra.mxu0 %v5899
    %6998 = vmatprep.subr.bf16.mxu0 %v5908
    %6999 = vmatpush1.bf16.msra.mxu0 %v5907
    %7000 = vmatprep.subr.bf16.mxu0 %v5916
    %7001 = vmatpush1.bf16.msra.mxu0 %v5915
    %7002 = vmatprep.subr.bf16.mxu0 %v5924
    %7003 = vmatpush1.bf16.msra.mxu0 %v5923
    %7004 = vmatprep.subr.bf16.mxu0 %v5932
    %7005 = vmatpush1.bf16.msra.mxu0 %v5931
    %7006 = vmatprep.subr.bf16.mxu0 %v5940
    %7007 = vmatpush1.bf16.msra.mxu0 %v5939
    %7008 = vmatprep.subr.bf16.mxu0 %v5948
    %7009 = vmatpush1.bf16.msra.mxu0 %v5947
    %7010 = vmatprep.subr.bf16.mxu0 %v5956
    %7011 = vmatpush1.bf16.msra.mxu0 %v5955
    %7012 = vmatprep.subr.bf16.mxu0 %v5964
    %7013 = vmatpush1.bf16.msra.mxu0 %v5963
    %7014 = vmatprep.subr.bf16.mxu0 %v5972
    %7015 = vmatpush1.bf16.msra.mxu0 %v5971
    %7016 = vmatprep.subr.bf16.mxu0 %v5980
    %7017 = vmatpush1.bf16.msra.mxu0 %v5979
    %7018 = vmatprep.subr.bf16.mxu0 %v5988
    %7019 = vmatpush1.bf16.msra.mxu0 %v5987
    %7020 = vmatprep.subr.bf16.mxu0 %v5996
    %7021 = vmatpush1.bf16.msra.mxu0 %v5995
    %7022 = vmatprep.mubr.bf16.mxu0 %v5857
    %7023 = vmatmul.mubr.bf16.gmra.mrb[0].mxu0 %v5856
    %v7024 = vpop.f32.mrb[0].mxu0
    %v7025 = vadd.f32 %v6670, %v7024
    %v7026 = vpop.f32.mrb[0].mxu0
    %v7027 = vadd.f32 %v6674, %v7026
    %v7028 = vpop.f32.mrb[0].mxu0
    %v7029 = vpop.f32.mrb[0].mxu0
    %7030 = vdwg.mxu0
    %7031 = vmatprep.subr.bf16.mxu0 %v6004
    %7032 = vmatpush1.bf16.msra.mxu0 %v6003
    %7033 = vmatprep.subr.bf16.mxu0 %v6012
    %7034 = vmatpush1.bf16.msra.mxu0 %v6011
    %7035 = vmatprep.subr.bf16.mxu0 %v6020
    %7036 = vmatpush1.bf16.msra.mxu0 %v6019
    %7037 = vmatprep.subr.bf16.mxu0 %v6028
    %7038 = vmatpush1.bf16.msra.mxu0 %v6027
    %7039 = vmatprep.subr.bf16.mxu0 %v6036
    %7040 = vmatpush1.bf16.msra.mxu0 %v6035
    %7041 = vmatprep.subr.bf16.mxu0 %v6044
    %7042 = vmatpush1.bf16.msra.mxu0 %v6043
    %7043 = vmatprep.subr.bf16.mxu0 %v6052
    %7044 = vmatpush1.bf16.msra.mxu0 %v6051
    %7045 = vmatprep.subr.bf16.mxu0 %v6060
    %7046 = vmatpush1.bf16.msra.mxu0 %v6059
    %7047 = vmatprep.subr.bf16.mxu0 %v6068
    %7048 = vmatpush1.bf16.msra.mxu0 %v6067
    %7049 = vmatprep.subr.bf16.mxu0 %v6076
    %7050 = vmatpush1.bf16.msra.mxu0 %v6075
    %7051 = vmatprep.subr.bf16.mxu0 %v6084
    %7052 = vmatpush1.bf16.msra.mxu0 %v6083
    %7053 = vmatprep.subr.bf16.mxu0 %v6092
    %7054 = vmatpush1.bf16.msra.mxu0 %v6091
    %7055 = vmatprep.subr.bf16.mxu0 %v6100
    %7056 = vmatpush1.bf16.msra.mxu0 %v6099
    %7057 = vmatprep.subr.bf16.mxu0 %v6108
    %7058 = vmatpush1.bf16.msra.mxu0 %v6107
    %7059 = vmatprep.subr.bf16.mxu0 %v6116
    %7060 = vmatpush1.bf16.msra.mxu0 %v6115
    %7061 = vmatprep.subr.bf16.mxu0 %v6124
    %7062 = vmatpush1.bf16.msra.mxu0 %v6123
    %7063 = vmatprep.mubr.bf16.mxu0 %v5859
    %7064 = vmatmul.mubr.bf16.gmra.mrb[0].mxu0 %v5858
    %v7065 = vpop.f32.mrb[0].mxu0
    %v7066 = vadd.f32 %v7025, %v7065
    %v7067 = vpop.f32.mrb[0].mxu0
    %v7068 = vadd.f32 %v7027, %v7067
    %v7069 = vpop.f32.mrb[0].mxu0
    %v7070 = vpop.f32.mrb[0].mxu0
    %7071 = vdwg.mxu0
    %7072 = vmatprep.subr.bf16.mxu0 %v6132
    %7073 = vmatpush1.bf16.msra.mxu0 %v6131
    %7074 = vmatprep.subr.bf16.mxu0 %v6140
    %7075 = vmatpush1.bf16.msra.mxu0 %v6139
    %7076 = vmatprep.subr.bf16.mxu0 %v6148
    %7077 = vmatpush1.bf16.msra.mxu0 %v6147
    %7078 = vmatprep.subr.bf16.mxu0 %v6156
    %7079 = vmatpush1.bf16.msra.mxu0 %v6155
    %7080 = vmatprep.subr.bf16.mxu0 %v6164
    %7081 = vmatpush1.bf16.msra.mxu0 %v6163
    %7082 = vmatprep.subr.bf16.mxu0 %v6172
    %7083 = vmatpush1.bf16.msra.mxu0 %v6171
    %7084 = vmatprep.subr.bf16.mxu0 %v6180
    %7085 = vmatpush1.bf16.msra.mxu0 %v6179
    %7086 = vmatprep.subr.bf16.mxu0 %v6188
    %7087 = vmatpush1.bf16.msra.mxu0 %v6187
    %7088 = vmatprep.subr.bf16.mxu0 %v6196
    %7089 = vmatpush1.bf16.msra.mxu0 %v6195
    %7090 = vmatprep.subr.bf16.mxu0 %v6204
    %7091 = vmatpush1.bf16.msra.mxu0 %v6203
    %7092 = vmatprep.subr.bf16.mxu0 %v6212
    %7093 = vmatpush1.bf16.msra.mxu0 %v6211
    %7094 = vmatprep.subr.bf16.mxu0 %v6220
    %7095 = vmatpush1.bf16.msra.mxu0 %v6219
    %7096 = vmatprep.subr.bf16.mxu0 %v6228
    %7097 = vmatpush1.bf16.msra.mxu0 %v6227
    %7098 = vmatprep.subr.bf16.mxu0 %v6236
    %7099 = vmatpush1.bf16.msra.mxu0 %v6235
    %7100 = vmatprep.subr.bf16.mxu0 %v6244
    %7101 = vmatpush1.bf16.msra.mxu0 %v6243
    %7102 = vmatprep.subr.bf16.mxu0 %v6252
    %7103 = vmatpush1.bf16.msra.mxu0 %v6251
    %7104 = vmatprep.mubr.bf16.mxu0 %v5861
    %7105 = vmatmul.mubr.bf16.gmra.mrb[0].mxu0 %v5860
    %v7106 = vpop.f32.mrb[0].mxu0
    %v7107 = vadd.f32 %v7066, %v7106
    %v7108 = vpop.f32.mrb[0].mxu0
    %v7109 = vadd.f32 %v7068, %v7108
    %v7110 = vpop.f32.mrb[0].mxu0
    %v7111 = vpop.f32.mrb[0].mxu0
    %7112 = vdwg.mxu0
    %7113 = vmatprep.subr.bf16.mxu0 %v6260
    %7114 = vmatpush1.bf16.msra.mxu0 %v6259
    %7115 = vmatprep.subr.bf16.mxu0 %v6268
    %7116 = vmatpush1.bf16.msra.mxu0 %v6267
    %7117 = vmatprep.subr.bf16.mxu0 %v6276
    %7118 = vmatpush1.bf16.msra.mxu0 %v6275
    %7119 = vmatprep.subr.bf16.mxu0 %v6284
    %7120 = vmatpush1.bf16.msra.mxu0 %v6283
    %7121 = vmatprep.subr.bf16.mxu0 %v6292
    %7122 = vmatpush1.bf16.msra.mxu0 %v6291
    %7123 = vmatprep.subr.bf16.mxu0 %v6300
    %7124 = vmatpush1.bf16.msra.mxu0 %v6299
    %7125 = vmatprep.subr.bf16.mxu0 %v6308
    %7126 = vmatpush1.bf16.msra.mxu0 %v6307
    %7127 = vmatprep.subr.bf16.mxu0 %v6316
    %7128 = vmatpush1.bf16.msra.mxu0 %v6315
    %7129 = vmatprep.subr.bf16.mxu0 %v6324
    %7130 = vmatpush1.bf16.msra.mxu0 %v6323
    %7131 = vmatprep.subr.bf16.mxu0 %v6332
    %7132 = vmatpush1.bf16.msra.mxu0 %v6331
    %7133 = vmatprep.subr.bf16.mxu0 %v6340
    %7134 = vmatpush1.bf16.msra.mxu0 %v6339
    %7135 = vmatprep.subr.bf16.mxu0 %v6348
    %7136 = vmatpush1.bf16.msra.mxu0 %v6347
    %7137 = vmatprep.subr.bf16.mxu0 %v6356
    %7138 = vmatpush1.bf16.msra.mxu0 %v6355
    %7139 = vmatprep.subr.bf16.mxu0 %v6364
    %7140 = vmatpush1.bf16.msra.mxu0 %v6363
    %7141 = vmatprep.subr.bf16.mxu0 %v6372
    %7142 = vmatpush1.bf16.msra.mxu0 %v6371
    %7143 = vmatprep.subr.bf16.mxu0 %v6380
    %7144 = vmatpush1.bf16.msra.mxu0 %v6379
    %7145 = vmatprep.mubr.bf16.mxu0 %v5863
    %7146 = vmatmul.mubr.bf16.gmra.mrb[0].mxu0 %v5862
    %v7147 = vpop.f32.mrb[0].mxu0
    %v7148 = vadd.f32 %v7107, %v7147
    %v7149 = vpop.f32.mrb[0].mxu0
    %v7150 = vadd.f32 %v7109, %v7149
    %v7151 = vpop.f32.mrb[0].mxu0
    %v7152 = vpop.f32.mrb[0].mxu0
    %7153 = vdwg.mxu0
    %7154 = vmatprep.subr.bf16.mxu0 %v6388
    %7155 = vmatpush1.bf16.msra.mxu0 %v6387
    %7156 = vmatprep.subr.bf16.mxu0 %v6396
    %7157 = vmatpush1.bf16.msra.mxu0 %v6395
    %7158 = vmatprep.subr.bf16.mxu0 %v6404
    %7159 = vmatpush1.bf16.msra.mxu0 %v6403
    %7160 = vmatprep.subr.bf16.mxu0 %v6412
    %7161 = vmatpush1.bf16.msra.mxu0 %v6411
    %7162 = vmatprep.subr.bf16.mxu0 %v6420
    %7163 = vmatpush1.bf16.msra.mxu0 %v6419
    %7164 = vmatprep.subr.bf16.mxu0 %v6428
    %7165 = vmatpush1.bf16.msra.mxu0 %v6427
    %7166 = vmatprep.subr.bf16.mxu0 %v6436
    %7167 = vmatpush1.bf16.msra.mxu0 %v6435
    %7168 = vmatprep.subr.bf16.mxu0 %v6444
    %7169 = vmatpush1.bf16.msra.mxu0 %v6443
    %7170 = vmatprep.subr.bf16.mxu0 %v6452
    %7171 = vmatpush1.bf16.msra.mxu0 %v6451
    %7172 = vmatprep.subr.bf16.mxu0 %v6460
    %7173 = vmatpush1.bf16.msra.mxu0 %v6459
    %7174 = vmatprep.subr.bf16.mxu0 %v6468
    %7175 = vmatpush1.bf16.msra.mxu0 %v6467
    %7176 = vmatprep.subr.bf16.mxu0 %v6476
    %7177 = vmatpush1.bf16.msra.mxu0 %v6475
    %7178 = vmatprep.subr.bf16.mxu0 %v6484
    %7179 = vmatpush1.bf16.msra.mxu0 %v6483
    %7180 = vmatprep.subr.bf16.mxu0 %v6492
    %7181 = vmatpush1.bf16.msra.mxu0 %v6491
    %7182 = vmatprep.subr.bf16.mxu0 %v6500
    %7183 = vmatpush1.bf16.msra.mxu0 %v6499
    %7184 = vmatprep.subr.bf16.mxu0 %v6508
    %7185 = vmatpush1.bf16.msra.mxu0 %v6507
    %7186 = vmatprep.mubr.bf16.mxu0 %v5865
    %7187 = vmatmul.mubr.bf16.gmra.mrb[0].mxu0 %v5864
    %v7188 = vpop.f32.mrb[0].mxu0
    %v7189 = vadd.f32 %v7148, %v7188
    %v7190 = vpop.f32.mrb[0].mxu0
    %v7191 = vadd.f32 %v7150, %v7190
    %v7192 = vpop.f32.mrb[0].mxu0
    %v7193 = vpop.f32.mrb[0].mxu0
    %7194 = vdwg.mxu0
    %7195 = vmatprep.subr.bf16.mxu0 %v6516
    %7196 = vmatpush1.bf16.msra.mxu0 %v6515
    %7197 = vmatprep.subr.bf16.mxu0 %v6524
    %7198 = vmatpush1.bf16.msra.mxu0 %v6523
    %7199 = vmatprep.subr.bf16.mxu0 %v6532
    %7200 = vmatpush1.bf16.msra.mxu0 %v6531
    %7201 = vmatprep.subr.bf16.mxu0 %v6540
    %7202 = vmatpush1.bf16.msra.mxu0 %v6539
    %7203 = vmatprep.subr.bf16.mxu0 %v6548
    %7204 = vmatpush1.bf16.msra.mxu0 %v6547
    %7205 = vmatprep.subr.bf16.mxu0 %v6556
    %7206 = vmatpush1.bf16.msra.mxu0 %v6555
    %7207 = vmatprep.subr.bf16.mxu0 %v6564
    %7208 = vmatpush1.bf16.msra.mxu0 %v6563
    %7209 = vmatprep.subr.bf16.mxu0 %v6572
    %7210 = vmatpush1.bf16.msra.mxu0 %v6571
    %7211 = vmatprep.subr.bf16.mxu0 %v6580
    %7212 = vmatpush1.bf16.msra.mxu0 %v6579
    %7213 = vmatprep.subr.bf16.mxu0 %v6588
    %7214 = vmatpush1.bf16.msra.mxu0 %v6587
    %7215 = vmatprep.subr.bf16.mxu0 %v6596
    %7216 = vmatpush1.bf16.msra.mxu0 %v6595
    %7217 = vmatprep.subr.bf16.mxu0 %v6604
    %7218 = vmatpush1.bf16.msra.mxu0 %v6603
    %7219 = vmatprep.subr.bf16.mxu0 %v6612
    %7220 = vmatpush1.bf16.msra.mxu0 %v6611
    %7221 = vmatprep.subr.bf16.mxu0 %v6620
    %7222 = vmatpush1.bf16.msra.mxu0 %v6619
    %7223 = vmatprep.subr.bf16.mxu0 %v6628
    %7224 = vmatpush1.bf16.msra.mxu0 %v6627
    %7225 = vmatprep.subr.bf16.mxu0 %v6636
    %7226 = vmatpush1.bf16.msra.mxu0 %v6635
    %7227 = vmatprep.mubr.bf16.mxu0 %v5867
    %7228 = vmatmul.mubr.bf16.gmra.mrb[0].mxu0 %v5866
    %v7229 = vpop.f32.mrb[0].mxu0
    %v7230 = vadd.f32 %v7189, %v7229
    %v7231 = vpop.f32.mrb[0].mxu0
    %v7232 = vadd.f32 %v7191, %v7231
    %v7233 = vpop.f32.mrb[0].mxu0
    %v7234 = vpop.f32.mrb[0].mxu0
    %7235 = vdwg.mxu0
    %7236 = vmatprep.subr.bf16.mxu0 %v6644
    %7237 = vmatpush1.bf16.msra.mxu0 %v6643
    %7238 = vmatprep.subr.bf16.mxu0 %v6652
    %7239 = vmatpush1.bf16.msra.mxu0 %v6651
    %7240 = vmatprep.subr.bf16.mxu0 0
    %7241 = vmatpush1.bf16.msra.mxu0 0
    %7242 = vmatprep.subr.bf16.mxu0 0
    %7243 = vmatpush1.bf16.msra.mxu0 0
    %7244 = vmatprep.subr.bf16.mxu0 0
    %7245 = vmatpush1.bf16.msra.mxu0 0
    %7246 = vmatprep.subr.bf16.mxu0 0
    %7247 = vmatpush1.bf16.msra.mxu0 0
    %7248 = vmatprep.subr.bf16.mxu0 0
    %7249 = vmatpush1.bf16.msra.mxu0 0
    %7250 = vmatprep.subr.bf16.mxu0 0
    %7251 = vmatpush1.bf16.msra.mxu0 0
    %7252 = vmatprep.subr.bf16.mxu0 0
    %7253 = vmatpush1.bf16.msra.mxu0 0
    %7254 = vmatprep.subr.bf16.mxu0 0
    %7255 = vmatpush1.bf16.msra.mxu0 0
    %7256 = vmatprep.subr.bf16.mxu0 0
    %7257 = vmatpush1.bf16.msra.mxu0 0
    %7258 = vmatprep.subr.bf16.mxu0 0
    %7259 = vmatpush1.bf16.msra.mxu0 0
    %7260 = vmatprep.subr.bf16.mxu0 0
    %7261 = vmatpush1.bf16.msra.mxu0 0
    %7262 = vmatprep.subr.bf16.mxu0 0
    %7263 = vmatpush1.bf16.msra.mxu0 0
    %7264 = vmatprep.subr.bf16.mxu0 0
    %7265 = vmatpush1.bf16.msra.mxu0 0
    %7266 = vmatprep.subr.bf16.mxu0 0
    %7267 = vmatpush1.bf16.msra.mxu0 0
    %7268 = vmatprep.mubr.bf16.mxu0 0
    %7269 = vmatmul.mubr.bf16.gmra.mrb[0].mxu0 %v6701
    %v7270 = vpop.f32.mrb[0].mxu0
    %v7271 = vadd.f32 %v7230, %v7270
    %v7272 = vpop.f32.mrb[0].mxu0
    %v7273 = vadd.f32 %v7232, %v7272
    %v7274 = vpop.f32.mrb[0].mxu0
    %v7275 = vpop.f32.mrb[0].mxu0
    %7276 = vdwg.mxu0
    %7277 = vmatprep.subr.bf16.mxu0 %v5878
    %7278 = vmatpush1.bf16.msra.mxu0 %v5877
    %7279 = vmatprep.subr.bf16.mxu0 %v5886
    %7280 = vmatpush1.bf16.msra.mxu0 %v5885
    %7281 = vmatprep.subr.bf16.mxu0 %v5894
    %7282 = vmatpush1.bf16.msra.mxu0 %v5893
    %7283 = vmatprep.subr.bf16.mxu0 %v5902
    %7284 = vmatpush1.bf16.msra.mxu0 %v5901
    %7285 = vmatprep.subr.bf16.mxu0 %v5910
    %7286 = vmatpush1.bf16.msra.mxu0 %v5909
    %7287 = vmatprep.subr.bf16.mxu0 %v5918
    %7288 = vmatpush1.bf16.msra.mxu0 %v5917
    %7289 = vmatprep.subr.bf16.mxu0 %v5926
    %7290 = vmatpush1.bf16.msra.mxu0 %v5925
    %7291 = vmatprep.subr.bf16.mxu0 %v5934
    %7292 = vmatpush1.bf16.msra.mxu0 %v5933
    %7293 = vmatprep.subr.bf16.mxu0 %v5942
    %7294 = vmatpush1.bf16.msra.mxu0 %v5941
    %7295 = vmatprep.subr.bf16.mxu0 %v5950
    %7296 = vmatpush1.bf16.msra.mxu0 %v5949
    %7297 = vmatprep.subr.bf16.mxu0 %v5958
    %7298 = vmatpush1.bf16.msra.mxu0 %v5957
    %7299 = vmatprep.subr.bf16.mxu0 %v5966
    %7300 = vmatpush1.bf16.msra.mxu0 %v5965
    %7301 = vmatprep.subr.bf16.mxu0 %v5974
    %7302 = vmatpush1.bf16.msra.mxu0 %v5973
    %7303 = vmatprep.subr.bf16.mxu0 %v5982
    %7304 = vmatpush1.bf16.msra.mxu0 %v5981
    %7305 = vmatprep.subr.bf16.mxu0 %v5990
    %7306 = vmatpush1.bf16.msra.mxu0 %v5989
    %7307 = vmatprep.subr.bf16.mxu0 %v5998
    %7308 = vmatpush1.bf16.msra.mxu0 %v5997
    %7309 = vmatprep.mubr.bf16.mxu0 %v5857
    %7310 = vmatmul.mubr.bf16.gmra.mrb[0].mxu0 %v5856
    %v7311 = vpop.f32.mrb[0].mxu0
    %v7312 = vadd.f32 %v6678, %v7311
    %v7313 = vpop.f32.mrb[0].mxu0
    %v7314 = vadd.f32 %v6682, %v7313
    %v7315 = vpop.f32.mrb[0].mxu0
    %v7316 = vpop.f32.mrb[0].mxu0
    %7317 = vdwg.mxu0
    %7318 = vmatprep.subr.bf16.mxu0 %v6006
    %7319 = vmatpush1.bf16.msra.mxu0 %v6005
    %7320 = vmatprep.subr.bf16.mxu0 %v6014
    %7321 = vmatpush1.bf16.msra.mxu0 %v6013
    %7322 = vmatprep.subr.bf16.mxu0 %v6022
    %7323 = vmatpush1.bf16.msra.mxu0 %v6021
    %7324 = vmatprep.subr.bf16.mxu0 %v6030
    %7325 = vmatpush1.bf16.msra.mxu0 %v6029
    %7326 = vmatprep.subr.bf16.mxu0 %v6038
    %7327 = vmatpush1.bf16.msra.mxu0 %v6037
    %7328 = vmatprep.subr.bf16.mxu0 %v6046
    %7329 = vmatpush1.bf16.msra.mxu0 %v6045
    %7330 = vmatprep.subr.bf16.mxu0 %v6054
    %7331 = vmatpush1.bf16.msra.mxu0 %v6053
    %7332 = vmatprep.subr.bf16.mxu0 %v6062
    %7333 = vmatpush1.bf16.msra.mxu0 %v6061
    %7334 = vmatprep.subr.bf16.mxu0 %v6070
    %7335 = vmatpush1.bf16.msra.mxu0 %v6069
    %7336 = vmatprep.subr.bf16.mxu0 %v6078
    %7337 = vmatpush1.bf16.msra.mxu0 %v6077
    %7338 = vmatprep.subr.bf16.mxu0 %v6086
    %7339 = vmatpush1.bf16.msra.mxu0 %v6085
    %7340 = vmatprep.subr.bf16.mxu0 %v6094
    %7341 = vmatpush1.bf16.msra.mxu0 %v6093
    %7342 = vmatprep.subr.bf16.mxu0 %v6102
    %7343 = vmatpush1.bf16.msra.mxu0 %v6101
    %7344 = vmatprep.subr.bf16.mxu0 %v6110
    %7345 = vmatpush1.bf16.msra.mxu0 %v6109
    %7346 = vmatprep.subr.bf16.mxu0 %v6118
    %7347 = vmatpush1.bf16.msra.mxu0 %v6117
    %7348 = vmatprep.subr.bf16.mxu0 %v6126
    %7349 = vmatpush1.bf16.msra.mxu0 %v6125
    %7350 = vmatprep.mubr.bf16.mxu0 %v5859
    %7351 = vmatmul.mubr.bf16.gmra.mrb[0].mxu0 %v5858
    %v7352 = vpop.f32.mrb[0].mxu0
    %v7353 = vadd.f32 %v7312, %v7352
    %v7354 = vpop.f32.mrb[0].mxu0
    %v7355 = vadd.f32 %v7314, %v7354
    %v7356 = vpop.f32.mrb[0].mxu0
    %v7357 = vpop.f32.mrb[0].mxu0
    %7358 = vdwg.mxu0
    %7359 = vmatprep.subr.bf16.mxu0 %v6134
    %7360 = vmatpush1.bf16.msra.mxu0 %v6133
    %7361 = vmatprep.subr.bf16.mxu0 %v6142
    %7362 = vmatpush1.bf16.msra.mxu0 %v6141
    %7363 = vmatprep.subr.bf16.mxu0 %v6150
    %7364 = vmatpush1.bf16.msra.mxu0 %v6149
    %7365 = vmatprep.subr.bf16.mxu0 %v6158
    %7366 = vmatpush1.bf16.msra.mxu0 %v6157
    %7367 = vmatprep.subr.bf16.mxu0 %v6166
    %7368 = vmatpush1.bf16.msra.mxu0 %v6165
    %7369 = vmatprep.subr.bf16.mxu0 %v6174
    %7370 = vmatpush1.bf16.msra.mxu0 %v6173
    %7371 = vmatprep.subr.bf16.mxu0 %v6182
    %7372 = vmatpush1.bf16.msra.mxu0 %v6181
    %7373 = vmatprep.subr.bf16.mxu0 %v6190
    %7374 = vmatpush1.bf16.msra.mxu0 %v6189
    %7375 = vmatprep.subr.bf16.mxu0 %v6198
    %7376 = vmatpush1.bf16.msra.mxu0 %v6197
    %7377 = vmatprep.subr.bf16.mxu0 %v6206
    %7378 = vmatpush1.bf16.msra.mxu0 %v6205
    %7379 = vmatprep.subr.bf16.mxu0 %v6214
    %7380 = vmatpush1.bf16.msra.mxu0 %v6213
    %7381 = vmatprep.subr.bf16.mxu0 %v6222
    %7382 = vmatpush1.bf16.msra.mxu0 %v6221
    %7383 = vmatprep.subr.bf16.mxu0 %v6230
    %7384 = vmatpush1.bf16.msra.mxu0 %v6229
    %7385 = vmatprep.subr.bf16.mxu0 %v6238
    %7386 = vmatpush1.bf16.msra.mxu0 %v6237
    %7387 = vmatprep.subr.bf16.mxu0 %v6246
    %7388 = vmatpush1.bf16.msra.mxu0 %v6245
    %7389 = vmatprep.subr.bf16.mxu0 %v6254
    %7390 = vmatpush1.bf16.msra.mxu0 %v6253
    %7391 = vmatprep.mubr.bf16.mxu0 %v5861
    %7392 = vmatmul.mubr.bf16.gmra.mrb[0].mxu0 %v5860
    %v7393 = vpop.f32.mrb[0].mxu0
    %v7394 = vadd.f32 %v7353, %v7393
    %v7395 = vpop.f32.mrb[0].mxu0
    %v7396 = vadd.f32 %v7355, %v7395
    %v7397 = vpop.f32.mrb[0].mxu0
    %v7398 = vpop.f32.mrb[0].mxu0
    %7399 = vdwg.mxu0
    %7400 = vmatprep.subr.bf16.mxu0 %v6262
    %7401 = vmatpush1.bf16.msra.mxu0 %v6261
    %7402 = vmatprep.subr.bf16.mxu0 %v6270
    %7403 = vmatpush1.bf16.msra.mxu0 %v6269
    %7404 = vmatprep.subr.bf16.mxu0 %v6278
    %7405 = vmatpush1.bf16.msra.mxu0 %v6277
    %7406 = vmatprep.subr.bf16.mxu0 %v6286
    %7407 = vmatpush1.bf16.msra.mxu0 %v6285
    %7408 = vmatprep.subr.bf16.mxu0 %v6294
    %7409 = vmatpush1.bf16.msra.mxu0 %v6293
    %7410 = vmatprep.subr.bf16.mxu0 %v6302
    %7411 = vmatpush1.bf16.msra.mxu0 %v6301
    %7412 = vmatprep.subr.bf16.mxu0 %v6310
    %7413 = vmatpush1.bf16.msra.mxu0 %v6309
    %7414 = vmatprep.subr.bf16.mxu0 %v6318
    %7415 = vmatpush1.bf16.msra.mxu0 %v6317
    %7416 = vmatprep.subr.bf16.mxu0 %v6326
    %7417 = vmatpush1.bf16.msra.mxu0 %v6325
    %7418 = vmatprep.subr.bf16.mxu0 %v6334
    %7419 = vmatpush1.bf16.msra.mxu0 %v6333
    %7420 = vmatprep.subr.bf16.mxu0 %v6342
    %7421 = vmatpush1.bf16.msra.mxu0 %v6341
    %7422 = vmatprep.subr.bf16.mxu0 %v6350
    %7423 = vmatpush1.bf16.msra.mxu0 %v6349
    %7424 = vmatprep.subr.bf16.mxu0 %v6358
    %7425 = vmatpush1.bf16.msra.mxu0 %v6357
    %7426 = vmatprep.subr.bf16.mxu0 %v6366
    %7427 = vmatpush1.bf16.msra.mxu0 %v6365
    %7428 = vmatprep.subr.bf16.mxu0 %v6374
    %7429 = vmatpush1.bf16.msra.mxu0 %v6373
    %7430 = vmatprep.subr.bf16.mxu0 %v6382
    %7431 = vmatpush1.bf16.msra.mxu0 %v6381
    %7432 = vmatprep.mubr.bf16.mxu0 %v5863
    %7433 = vmatmul.mubr.bf16.gmra.mrb[0].mxu0 %v5862
    %v7434 = vpop.f32.mrb[0].mxu0
    %v7435 = vadd.f32 %v7394, %v7434
    %v7436 = vpop.f32.mrb[0].mxu0
    %v7437 = vadd.f32 %v7396, %v7436
    %v7438 = vpop.f32.mrb[0].mxu0
    %v7439 = vpop.f32.mrb[0].mxu0
    %7440 = vdwg.mxu0
    %7441 = vmatprep.subr.bf16.mxu0 %v6390
    %7442 = vmatpush1.bf16.msra.mxu0 %v6389
    %7443 = vmatprep.subr.bf16.mxu0 %v6398
    %7444 = vmatpush1.bf16.msra.mxu0 %v6397
    %7445 = vmatprep.subr.bf16.mxu0 %v6406
    %7446 = vmatpush1.bf16.msra.mxu0 %v6405
    %7447 = vmatprep.subr.bf16.mxu0 %v6414
    %7448 = vmatpush1.bf16.msra.mxu0 %v6413
    %7449 = vmatprep.subr.bf16.mxu0 %v6422
    %7450 = vmatpush1.bf16.msra.mxu0 %v6421
    %7451 = vmatprep.subr.bf16.mxu0 %v6430
    %7452 = vmatpush1.bf16.msra.mxu0 %v6429
    %7453 = vmatprep.subr.bf16.mxu0 %v6438
    %7454 = vmatpush1.bf16.msra.mxu0 %v6437
    %7455 = vmatprep.subr.bf16.mxu0 %v6446
    %7456 = vmatpush1.bf16.msra.mxu0 %v6445
    %7457 = vmatprep.subr.bf16.mxu0 %v6454
    %7458 = vmatpush1.bf16.msra.mxu0 %v6453
    %7459 = vmatprep.subr.bf16.mxu0 %v6462
    %7460 = vmatpush1.bf16.msra.mxu0 %v6461
    %7461 = vmatprep.subr.bf16.mxu0 %v6470
    %7462 = vmatpush1.bf16.msra.mxu0 %v6469
    %7463 = vmatprep.subr.bf16.mxu0 %v6478
    %7464 = vmatpush1.bf16.msra.mxu0 %v6477
    %7465 = vmatprep.subr.bf16.mxu0 %v6486
    %7466 = vmatpush1.bf16.msra.mxu0 %v6485
    %7467 = vmatprep.subr.bf16.mxu0 %v6494
    %7468 = vmatpush1.bf16.msra.mxu0 %v6493
    %7469 = vmatprep.subr.bf16.mxu0 %v6502
    %7470 = vmatpush1.bf16.msra.mxu0 %v6501
    %7471 = vmatprep.subr.bf16.mxu0 %v6510
    %7472 = vmatpush1.bf16.msra.mxu0 %v6509
    %7473 = vmatprep.mubr.bf16.mxu0 %v5865
    %7474 = vmatmul.mubr.bf16.gmra.mrb[0].mxu0 %v5864
    %v7475 = vpop.f32.mrb[0].mxu0
    %v7476 = vadd.f32 %v7435, %v7475
    %v7477 = vpop.f32.mrb[0].mxu0
    %v7478 = vadd.f32 %v7437, %v7477
    %v7479 = vpop.f32.mrb[0].mxu0
    %v7480 = vpop.f32.mrb[0].mxu0
    %7481 = vdwg.mxu0
    %7482 = vmatprep.subr.bf16.mxu0 %v6518
    %7483 = vmatpush1.bf16.msra.mxu0 %v6517
    %7484 = vmatprep.subr.bf16.mxu0 %v6526
    %7485 = vmatpush1.bf16.msra.mxu0 %v6525
    %7486 = vmatprep.subr.bf16.mxu0 %v6534
    %7487 = vmatpush1.bf16.msra.mxu0 %v6533
    %7488 = vmatprep.subr.bf16.mxu0 %v6542
    %7489 = vmatpush1.bf16.msra.mxu0 %v6541
    %7490 = vmatprep.subr.bf16.mxu0 %v6550
    %7491 = vmatpush1.bf16.msra.mxu0 %v6549
    %7492 = vmatprep.subr.bf16.mxu0 %v6558
    %7493 = vmatpush1.bf16.msra.mxu0 %v6557
    %7494 = vmatprep.subr.bf16.mxu0 %v6566
    %7495 = vmatpush1.bf16.msra.mxu0 %v6565
    %7496 = vmatprep.subr.bf16.mxu0 %v6574
    %7497 = vmatpush1.bf16.msra.mxu0 %v6573
    %7498 = vmatprep.subr.bf16.mxu0 %v6582
    %7499 = vmatpush1.bf16.msra.mxu0 %v6581
    %7500 = vmatprep.subr.bf16.mxu0 %v6590
    %7501 = vmatpush1.bf16.msra.mxu0 %v6589
    %7502 = vmatprep.subr.bf16.mxu0 %v6598
    %7503 = vmatpush1.bf16.msra.mxu0 %v6597
    %7504 = vmatprep.subr.bf16.mxu0 %v6606
    %7505 = vmatpush1.bf16.msra.mxu0 %v6605
    %7506 = vmatprep.subr.bf16.mxu0 %v6614
    %7507 = vmatpush1.bf16.msra.mxu0 %v6613
    %7508 = vmatprep.subr.bf16.mxu0 %v6622
    %7509 = vmatpush1.bf16.msra.mxu0 %v6621
    %7510 = vmatprep.subr.bf16.mxu0 %v6630
    %7511 = vmatpush1.bf16.msra.mxu0 %v6629
    %7512 = vmatprep.subr.bf16.mxu0 %v6638
    %7513 = vmatpush1.bf16.msra.mxu0 %v6637
    %7514 = vmatprep.mubr.bf16.mxu0 %v5867
    %7515 = vmatmul.mubr.bf16.gmra.mrb[0].mxu0 %v5866
    %v7516 = vpop.f32.mrb[0].mxu0
    %v7517 = vadd.f32 %v7476, %v7516
    %v7518 = vpop.f32.mrb[0].mxu0
    %v7519 = vadd.f32 %v7478, %v7518
    %v7520 = vpop.f32.mrb[0].mxu0
    %v7521 = vpop.f32.mrb[0].mxu0
    %7522 = vdwg.mxu0
    %7523 = vmatprep.subr.bf16.mxu0 %v6646
    %7524 = vmatpush1.bf16.msra.mxu0 %v6645
    %7525 = vmatprep.subr.bf16.mxu0 %v6654
    %7526 = vmatpush1.bf16.msra.mxu0 %v6653
    %7527 = vmatprep.subr.bf16.mxu0 0
    %7528 = vmatpush1.bf16.msra.mxu0 0
    %7529 = vmatprep.subr.bf16.mxu0 0
    %7530 = vmatpush1.bf16.msra.mxu0 0
    %7531 = vmatprep.subr.bf16.mxu0 0
    %7532 = vmatpush1.bf16.msra.mxu0 0
    %7533 = vmatprep.subr.bf16.mxu0 0
    %7534 = vmatpush1.bf16.msra.mxu0 0
    %7535 = vmatprep.subr.bf16.mxu0 0
    %7536 = vmatpush1.bf16.msra.mxu0 0
    %7537 = vmatprep.subr.bf16.mxu0 0
    %7538 = vmatpush1.bf16.msra.mxu0 0
    %7539 = vmatprep.subr.bf16.mxu0 0
    %7540 = vmatpush1.bf16.msra.mxu0 0
    %7541 = vmatprep.subr.bf16.mxu0 0
    %7542 = vmatpush1.bf16.msra.mxu0 0
    %7543 = vmatprep.subr.bf16.mxu0 0
    %7544 = vmatpush1.bf16.msra.mxu0 0
    %7545 = vmatprep.subr.bf16.mxu0 0
    %7546 = vmatpush1.bf16.msra.mxu0 0
    %7547 = vmatprep.subr.bf16.mxu0 0
    %7548 = vmatpush1.bf16.msra.mxu0 0
    %7549 = vmatprep.subr.bf16.mxu0 0
    %7550 = vmatpush1.bf16.msra.mxu0 0
    %7551 = vmatprep.subr.bf16.mxu0 0
    %7552 = vmatpush1.bf16.msra.mxu0 0
    %7553 = vmatprep.subr.bf16.mxu0 0
    %7554 = vmatpush1.bf16.msra.mxu0 0
    %7555 = vmatprep.mubr.bf16.mxu0 0
    %7556 = vmatmul.mubr.bf16.gmra.mrb[0].mxu0 %v6701
    %v7557 = vpop.f32.mrb[0].mxu0
    %v7558 = vadd.f32 %v7517, %v7557
    %v7559 = vpop.f32.mrb[0].mxu0
    %v7560 = vadd.f32 %v7519, %v7559
    %v7561 = vpop.f32.mrb[0].mxu0
    %v7562 = vpop.f32.mrb[0].mxu0
    %7563 = vdwg.mxu0
    %7564 = vmatprep.subr.bf16.mxu0 %v5880
    %7565 = vmatpush1.bf16.msra.mxu0 %v5879
    %7566 = vmatprep.subr.bf16.mxu0 %v5888
    %7567 = vmatpush1.bf16.msra.mxu0 %v5887
    %7568 = vmatprep.subr.bf16.mxu0 %v5896
    %7569 = vmatpush1.bf16.msra.mxu0 %v5895
    %7570 = vmatprep.subr.bf16.mxu0 %v5904
    %7571 = vmatpush1.bf16.msra.mxu0 %v5903
    %7572 = vmatprep.subr.bf16.mxu0 %v5912
    %7573 = vmatpush1.bf16.msra.mxu0 %v5911
    %7574 = vmatprep.subr.bf16.mxu0 %v5920
    %7575 = vmatpush1.bf16.msra.mxu0 %v5919
    %7576 = vmatprep.subr.bf16.mxu0 %v5928
    %7577 = vmatpush1.bf16.msra.mxu0 %v5927
    %7578 = vmatprep.subr.bf16.mxu0 %v5936
    %7579 = vmatpush1.bf16.msra.mxu0 %v5935
    %7580 = vmatprep.subr.bf16.mxu0 %v5944
    %7581 = vmatpush1.bf16.msra.mxu0 %v5943
    %7582 = vmatprep.subr.bf16.mxu0 %v5952
    %7583 = vmatpush1.bf16.msra.mxu0 %v5951
    %7584 = vmatprep.subr.bf16.mxu0 %v5960
    %7585 = vmatpush1.bf16.msra.mxu0 %v5959
    %7586 = vmatprep.subr.bf16.mxu0 %v5968
    %7587 = vmatpush1.bf16.msra.mxu0 %v5967
    %7588 = vmatprep.subr.bf16.mxu0 %v5976
    %7589 = vmatpush1.bf16.msra.mxu0 %v5975
    %7590 = vmatprep.subr.bf16.mxu0 %v5984
    %7591 = vmatpush1.bf16.msra.mxu0 %v5983
    %7592 = vmatprep.subr.bf16.mxu0 %v5992
    %7593 = vmatpush1.bf16.msra.mxu0 %v5991
    %7594 = vmatprep.subr.bf16.mxu0 %v6000
    %7595 = vmatpush1.bf16.msra.mxu0 %v5999
    %7596 = vmatprep.mubr.bf16.mxu0 %v5857
    %7597 = vmatmul.mubr.bf16.gmra.mrb[0].mxu0 %v5856
    %v7598 = vpop.f32.mrb[0].mxu0
    %v7599 = vadd.f32 %v6686, %v7598
    %v7600 = vpop.f32.mrb[0].mxu0
    %v7601 = vadd.f32 %v6690, %v7600
    %v7602 = vpop.f32.mrb[0].mxu0
    %v7603 = vpop.f32.mrb[0].mxu0
    %7604 = vdwg.mxu0
    %7605 = vmatprep.subr.bf16.mxu0 %v6008
    %7606 = vmatpush1.bf16.msra.mxu0 %v6007
    %7607 = vmatprep.subr.bf16.mxu0 %v6016
    %7608 = vmatpush1.bf16.msra.mxu0 %v6015
    %7609 = vmatprep.subr.bf16.mxu0 %v6024
    %7610 = vmatpush1.bf16.msra.mxu0 %v6023
    %7611 = vmatprep.subr.bf16.mxu0 %v6032
    %7612 = vmatpush1.bf16.msra.mxu0 %v6031
    %7613 = vmatprep.subr.bf16.mxu0 %v6040
    %7614 = vmatpush1.bf16.msra.mxu0 %v6039
    %7615 = vmatprep.subr.bf16.mxu0 %v6048
    %7616 = vmatpush1.bf16.msra.mxu0 %v6047
    %7617 = vmatprep.subr.bf16.mxu0 %v6056
    %7618 = vmatpush1.bf16.msra.mxu0 %v6055
    %7619 = vmatprep.subr.bf16.mxu0 %v6064
    %7620 = vmatpush1.bf16.msra.mxu0 %v6063
    %7621 = vmatprep.subr.bf16.mxu0 %v6072
    %7622 = vmatpush1.bf16.msra.mxu0 %v6071
    %7623 = vmatprep.subr.bf16.mxu0 %v6080
    %7624 = vmatpush1.bf16.msra.mxu0 %v6079
    %7625 = vmatprep.subr.bf16.mxu0 %v6088
    %7626 = vmatpush1.bf16.msra.mxu0 %v6087
    %7627 = vmatprep.subr.bf16.mxu0 %v6096
    %7628 = vmatpush1.bf16.msra.mxu0 %v6095
    %7629 = vmatprep.subr.bf16.mxu0 %v6104
    %7630 = vmatpush1.bf16.msra.mxu0 %v6103
    %7631 = vmatprep.subr.bf16.mxu0 %v6112
    %7632 = vmatpush1.bf16.msra.mxu0 %v6111
    %7633 = vmatprep.subr.bf16.mxu0 %v6120
    %7634 = vmatpush1.bf16.msra.mxu0 %v6119
    %7635 = vmatprep.subr.bf16.mxu0 %v6128
    %7636 = vmatpush1.bf16.msra.mxu0 %v6127
    %7637 = vmatprep.mubr.bf16.mxu0 %v5859
    %7638 = vmatmul.mubr.bf16.gmra.mrb[0].mxu0 %v5858
    %v7639 = vpop.f32.mrb[0].mxu0
    %v7640 = vadd.f32 %v7599, %v7639
    %v7641 = vpop.f32.mrb[0].mxu0
    %v7642 = vadd.f32 %v7601, %v7641
    %v7643 = vpop.f32.mrb[0].mxu0
    %v7644 = vpop.f32.mrb[0].mxu0
    %7645 = vdwg.mxu0
    %7646 = vmatprep.subr.bf16.mxu0 %v6136
    %7647 = vmatpush1.bf16.msra.mxu0 %v6135
    %7648 = vmatprep.subr.bf16.mxu0 %v6144
    %7649 = vmatpush1.bf16.msra.mxu0 %v6143
    %7650 = vmatprep.subr.bf16.mxu0 %v6152
    %7651 = vmatpush1.bf16.msra.mxu0 %v6151
    %7652 = vmatprep.subr.bf16.mxu0 %v6160
    %7653 = vmatpush1.bf16.msra.mxu0 %v6159
    %7654 = vmatprep.subr.bf16.mxu0 %v6168
    %7655 = vmatpush1.bf16.msra.mxu0 %v6167
    %7656 = vmatprep.subr.bf16.mxu0 %v6176
    %7657 = vmatpush1.bf16.msra.mxu0 %v6175
    %7658 = vmatprep.subr.bf16.mxu0 %v6184
    %7659 = vmatpush1.bf16.msra.mxu0 %v6183
    %7660 = vmatprep.subr.bf16.mxu0 %v6192
    %7661 = vmatpush1.bf16.msra.mxu0 %v6191
    %7662 = vmatprep.subr.bf16.mxu0 %v6200
    %7663 = vmatpush1.bf16.msra.mxu0 %v6199
    %7664 = vmatprep.subr.bf16.mxu0 %v6208
    %7665 = vmatpush1.bf16.msra.mxu0 %v6207
    %7666 = vmatprep.subr.bf16.mxu0 %v6216
    %7667 = vmatpush1.bf16.msra.mxu0 %v6215
    %7668 = vmatprep.subr.bf16.mxu0 %v6224
    %7669 = vmatpush1.bf16.msra.mxu0 %v6223
    %7670 = vmatprep.subr.bf16.mxu0 %v6232
    %7671 = vmatpush1.bf16.msra.mxu0 %v6231
    %7672 = vmatprep.subr.bf16.mxu0 %v6240
    %7673 = vmatpush1.bf16.msra.mxu0 %v6239
    %7674 = vmatprep.subr.bf16.mxu0 %v6248
    %7675 = vmatpush1.bf16.msra.mxu0 %v6247
    %7676 = vmatprep.subr.bf16.mxu0 %v6256
    %7677 = vmatpush1.bf16.msra.mxu0 %v6255
    %7678 = vmatprep.mubr.bf16.mxu0 %v5861
    %7679 = vmatmul.mubr.bf16.gmra.mrb[0].mxu0 %v5860
    %v7680 = vpop.f32.mrb[0].mxu0
    %v7681 = vadd.f32 %v7640, %v7680
    %v7682 = vpop.f32.mrb[0].mxu0
    %v7683 = vadd.f32 %v7642, %v7682
    %v7684 = vpop.f32.mrb[0].mxu0
    %v7685 = vpop.f32.mrb[0].mxu0
    %7686 = vdwg.mxu0
    %7687 = vmatprep.subr.bf16.mxu0 %v6264
    %7688 = vmatpush1.bf16.msra.mxu0 %v6263
    %7689 = vmatprep.subr.bf16.mxu0 %v6272
    %7690 = vmatpush1.bf16.msra.mxu0 %v6271
    %7691 = vmatprep.subr.bf16.mxu0 %v6280
    %7692 = vmatpush1.bf16.msra.mxu0 %v6279
    %7693 = vmatprep.subr.bf16.mxu0 %v6288
    %7694 = vmatpush1.bf16.msra.mxu0 %v6287
    %7695 = vmatprep.subr.bf16.mxu0 %v6296
    %7696 = vmatpush1.bf16.msra.mxu0 %v6295
    %7697 = vmatprep.subr.bf16.mxu0 %v6304
    %7698 = vmatpush1.bf16.msra.mxu0 %v6303
    %7699 = vmatprep.subr.bf16.mxu0 %v6312
    %7700 = vmatpush1.bf16.msra.mxu0 %v6311
    %7701 = vmatprep.subr.bf16.mxu0 %v6320
    %7702 = vmatpush1.bf16.msra.mxu0 %v6319
    %7703 = vmatprep.subr.bf16.mxu0 %v6328
    %7704 = vmatpush1.bf16.msra.mxu0 %v6327
    %7705 = vmatprep.subr.bf16.mxu0 %v6336
    %7706 = vmatpush1.bf16.msra.mxu0 %v6335
    %7707 = vmatprep.subr.bf16.mxu0 %v6344
    %7708 = vmatpush1.bf16.msra.mxu0 %v6343
    %7709 = vmatprep.subr.bf16.mxu0 %v6352
    %7710 = vmatpush1.bf16.msra.mxu0 %v6351
    %7711 = vmatprep.subr.bf16.mxu0 %v6360
    %7712 = vmatpush1.bf16.msra.mxu0 %v6359
    %7713 = vmatprep.subr.bf16.mxu0 %v6368
    %7714 = vmatpush1.bf16.msra.mxu0 %v6367
    %7715 = vmatprep.subr.bf16.mxu0 %v6376
    %7716 = vmatpush1.bf16.msra.mxu0 %v6375
    %7717 = vmatprep.subr.bf16.mxu0 %v6384
    %7718 = vmatpush1.bf16.msra.mxu0 %v6383
    %7719 = vmatprep.mubr.bf16.mxu0 %v5863
    %7720 = vmatmul.mubr.bf16.gmra.mrb[0].mxu0 %v5862
    %v7721 = vpop.f32.mrb[0].mxu0
    %v7722 = vadd.f32 %v7681, %v7721
    %v7723 = vpop.f32.mrb[0].mxu0
    %v7724 = vadd.f32 %v7683, %v7723
    %v7725 = vpop.f32.mrb[0].mxu0
    %v7726 = vpop.f32.mrb[0].mxu0
    %7727 = vdwg.mxu0
    %7728 = vmatprep.subr.bf16.mxu0 %v6392
    %7729 = vmatpush1.bf16.msra.mxu0 %v6391
    %7730 = vmatprep.subr.bf16.mxu0 %v6400
    %7731 = vmatpush1.bf16.msra.mxu0 %v6399
    %7732 = vmatprep.subr.bf16.mxu0 %v6408
    %7733 = vmatpush1.bf16.msra.mxu0 %v6407
    %7734 = vmatprep.subr.bf16.mxu0 %v6416
    %7735 = vmatpush1.bf16.msra.mxu0 %v6415
    %7736 = vmatprep.subr.bf16.mxu0 %v6424
    %7737 = vmatpush1.bf16.msra.mxu0 %v6423
    %7738 = vmatprep.subr.bf16.mxu0 %v6432
    %7739 = vmatpush1.bf16.msra.mxu0 %v6431
    %7740 = vmatprep.subr.bf16.mxu0 %v6440
    %7741 = vmatpush1.bf16.msra.mxu0 %v6439
    %7742 = vmatprep.subr.bf16.mxu0 %v6448
    %7743 = vmatpush1.bf16.msra.mxu0 %v6447
    %7744 = vmatprep.subr.bf16.mxu0 %v6456
    %7745 = vmatpush1.bf16.msra.mxu0 %v6455
    %7746 = vmatprep.subr.bf16.mxu0 %v6464
    %7747 = vmatpush1.bf16.msra.mxu0 %v6463
    %7748 = vmatprep.subr.bf16.mxu0 %v6472
    %7749 = vmatpush1.bf16.msra.mxu0 %v6471
    %7750 = vmatprep.subr.bf16.mxu0 %v6480
    %7751 = vmatpush1.bf16.msra.mxu0 %v6479
    %7752 = vmatprep.subr.bf16.mxu0 %v6488
    %7753 = vmatpush1.bf16.msra.mxu0 %v6487
    %7754 = vmatprep.subr.bf16.mxu0 %v6496
    %7755 = vmatpush1.bf16.msra.mxu0 %v6495
    %7756 = vmatprep.subr.bf16.mxu0 %v6504
    %7757 = vmatpush1.bf16.msra.mxu0 %v6503
    %7758 = vmatprep.subr.bf16.mxu0 %v6512
    %7759 = vmatpush1.bf16.msra.mxu0 %v6511
    %7760 = vmatprep.mubr.bf16.mxu0 %v5865
    %7761 = vmatmul.mubr.bf16.gmra.mrb[0].mxu0 %v5864
    %v7762 = vpop.f32.mrb[0].mxu0
    %v7763 = vadd.f32 %v7722, %v7762
    %v7764 = vpop.f32.mrb[0].mxu0
    %v7765 = vadd.f32 %v7724, %v7764
    %v7766 = vpop.f32.mrb[0].mxu0
    %v7767 = vpop.f32.mrb[0].mxu0
    %7768 = vdwg.mxu0
    %7769 = vmatprep.subr.bf16.mxu0 %v6520
    %7770 = vmatpush1.bf16.msra.mxu0 %v6519
    %7771 = vmatprep.subr.bf16.mxu0 %v6528
    %7772 = vmatpush1.bf16.msra.mxu0 %v6527
    %7773 = vmatprep.subr.bf16.mxu0 %v6536
    %7774 = vmatpush1.bf16.msra.mxu0 %v6535
    %7775 = vmatprep.subr.bf16.mxu0 %v6544
    %7776 = vmatpush1.bf16.msra.mxu0 %v6543
    %7777 = vmatprep.subr.bf16.mxu0 %v6552
    %7778 = vmatpush1.bf16.msra.mxu0 %v6551
    %7779 = vmatprep.subr.bf16.mxu0 %v6560
    %7780 = vmatpush1.bf16.msra.mxu0 %v6559
    %7781 = vmatprep.subr.bf16.mxu0 %v6568
    %7782 = vmatpush1.bf16.msra.mxu0 %v6567
    %7783 = vmatprep.subr.bf16.mxu0 %v6576
    %7784 = vmatpush1.bf16.msra.mxu0 %v6575
    %7785 = vmatprep.subr.bf16.mxu0 %v6584
    %7786 = vmatpush1.bf16.msra.mxu0 %v6583
    %7787 = vmatprep.subr.bf16.mxu0 %v6592
    %7788 = vmatpush1.bf16.msra.mxu0 %v6591
    %7789 = vmatprep.subr.bf16.mxu0 %v6600
    %7790 = vmatpush1.bf16.msra.mxu0 %v6599
    %7791 = vmatprep.subr.bf16.mxu0 %v6608
    %7792 = vmatpush1.bf16.msra.mxu0 %v6607
    %7793 = vmatprep.subr.bf16.mxu0 %v6616
    %7794 = vmatpush1.bf16.msra.mxu0 %v6615
    %7795 = vmatprep.subr.bf16.mxu0 %v6624
    %7796 = vmatpush1.bf16.msra.mxu0 %v6623
    %7797 = vmatprep.subr.bf16.mxu0 %v6632
    %7798 = vmatpush1.bf16.msra.mxu0 %v6631
    %7799 = vmatprep.subr.bf16.mxu0 %v6640
    %7800 = vmatpush1.bf16.msra.mxu0 %v6639
    %7801 = vmatprep.mubr.bf16.mxu0 %v5867
    %7802 = vmatmul.mubr.bf16.gmra.mrb[0].mxu0 %v5866
    %v7803 = vpop.f32.mrb[0].mxu0
    %v7804 = vadd.f32 %v7763, %v7803
    %v7805 = vpop.f32.mrb[0].mxu0
    %v7806 = vadd.f32 %v7765, %v7805
    %v7807 = vpop.f32.mrb[0].mxu0
    %v7808 = vpop.f32.mrb[0].mxu0
    %7809 = vdwg.mxu0
    %7810 = vmatprep.subr.bf16.mxu0 %v6648
    %7811 = vmatpush1.bf16.msra.mxu0 %v6647
    %7812 = vmatprep.subr.bf16.mxu0 %v6656
    %7813 = vmatpush1.bf16.msra.mxu0 %v6655
    %7814 = vmatprep.subr.bf16.mxu0 0
    %7815 = vmatpush1.bf16.msra.mxu0 0
    %7816 = vmatprep.subr.bf16.mxu0 0
    %7817 = vmatpush1.bf16.msra.mxu0 0
    %7818 = vmatprep.subr.bf16.mxu0 0
    %7819 = vmatpush1.bf16.msra.mxu0 0
    %7820 = vmatprep.subr.bf16.mxu0 0
    %7821 = vmatpush1.bf16.msra.mxu0 0
    %7822 = vmatprep.subr.bf16.mxu0 0
    %7823 = vmatpush1.bf16.msra.mxu0 0
    %7824 = vmatprep.subr.bf16.mxu0 0
    %7825 = vmatpush1.bf16.msra.mxu0 0
    %7826 = vmatprep.subr.bf16.mxu0 0
    %7827 = vmatpush1.bf16.msra.mxu0 0
    %7828 = vmatprep.subr.bf16.mxu0 0
    %7829 = vmatpush1.bf16.msra.mxu0 0
    %7830 = vmatprep.subr.bf16.mxu0 0
    %7831 = vmatpush1.bf16.msra.mxu0 0
    %7832 = vmatprep.subr.bf16.mxu0 0
    %7833 = vmatpush1.bf16.msra.mxu0 0
    %7834 = vmatprep.subr.bf16.mxu0 0
    %7835 = vmatpush1.bf16.msra.mxu0 0
    %7836 = vmatprep.subr.bf16.mxu0 0
    %7837 = vmatpush1.bf16.msra.mxu0 0
    %7838 = vmatprep.subr.bf16.mxu0 0
    %7839 = vmatpush1.bf16.msra.mxu0 0
    %7840 = vmatprep.subr.bf16.mxu0 0
    %7841 = vmatpush1.bf16.msra.mxu0 0
    %7842 = vmatprep.mubr.bf16.mxu0 0
    %7843 = vmatmul.mubr.bf16.gmra.mrb[0].mxu0 %v6701
    %v7844 = vpop.f32.mrb[0].mxu0
    %v7845 = vadd.f32 %v7804, %v7844
    %v7846 = vpop.f32.mrb[0].mxu0
    %v7847 = vadd.f32 %v7806, %v7846
    %v7848 = vpop.f32.mrb[0].mxu0
    %v7849 = vpop.f32.mrb[0].mxu0
    %7850 = vdwg.mxu0
    %v7851 = vmax.f32 %v6984, 0.0
    %v7852 = vmax.f32 %v6986, 0.0
    %v7853 = vmax.f32 %v7271, 0.0
    %v7854 = vmax.f32 %v7273, 0.0
    %v7855 = vmax.f32 %v7558, 0.0
    %v7856 = vmax.f32 %v7560, 0.0
    %v7857 = vmax.f32 %v7845, 0.0
    %v7858 = vmax.f32 %v7847, 0.0
    %v7859 = vpack.c.bf16 %v7851, %v7851
    %v7860 = vpack.c.bf16 %v7852, %v7852
    %v7861 = vpack.c.bf16 %v7853, %v7853
    %v7862 = vpack.c.bf16 %v7854, %v7854
    %v7863 = vpack.c.bf16 %v7855, %v7855
    %v7864 = vpack.c.bf16 %v7856, %v7856
    %v7865 = vpack.c.bf16 %v7857, %v7857
    %v7866 = vpack.c.bf16 %v7858, %v7858
    %s7867 = smul.u32 4, 64
    %s7868 = smul.u32 %s7867, 8
    %s7869 = sshll.u32 %s7868, 4
    %7870 = dma.done %s133, %s7869
    %v7871 = vld [vmem:[#allocation8] sm:$0xff]
    %v7872 = vld [vmem:[#allocation8 + $0x8] sm:$0xff]
    %v7873 = vld [vmem:[#allocation8 + $0x10] sm:$0xff]
    %v7874 = vld [vmem:[#allocation8 + $0x18] sm:$0xff]
    %v7875 = vld [vmem:[#allocation8 + $0x20] sm:$0xff]
    %v7876 = vld [vmem:[#allocation8 + $0x28] sm:$0xff]
    %v7877 = vld [vmem:[#allocation8 + $0x30] sm:$0xff]
    %v7878 = vld [vmem:[#allocation8 + $0x38] sm:$0xff]
    %v7879 = vld [vmem:[#allocation8 + $0x40] sm:$0xff]
    %v7880 = vld [vmem:[#allocation8 + $0x48] sm:$0xff]
    %v7881 = vld [vmem:[#allocation8 + $0x50] sm:$0xff]
    %v7882 = vld [vmem:[#allocation8 + $0x58] sm:$0xff]
    %v7883 = vld [vmem:[#allocation8 + $0x60] sm:$0xff]
    %v7884 = vld [vmem:[#allocation8 + $0x68] sm:$0xff]
    %v7885 = vld [vmem:[#allocation8 + $0x70] sm:$0xff]
    %v7886 = vld [vmem:[#allocation8 + $0x78] sm:$0xff]
    %v7887 = vld [vmem:[#allocation8 + $0x80] sm:$0xff]
    %v7888 = vld [vmem:[#allocation8 + $0x88] sm:$0xff]
    %v7889 = vld [vmem:[#allocation8 + $0x90] sm:$0xff]
    %v7890 = vld [vmem:[#allocation8 + $0x98] sm:$0xff]
    %v7891 = vld [vmem:[#allocation8 + $0xa0] sm:$0xff]
    %v7892 = vld [vmem:[#allocation8 + $0xa8] sm:$0xff]
    %v7893 = vld [vmem:[#allocation8 + $0xb0] sm:$0xff]
    %v7894 = vld [vmem:[#allocation8 + $0xb8] sm:$0xff]
    %v7895 = vld [vmem:[#allocation8 + $0xc0] sm:$0xff]
    %v7896 = vld [vmem:[#allocation8 + $0xc8] sm:$0xff]
    %v7897 = vld [vmem:[#allocation8 + $0xd0] sm:$0xff]
    %v7898 = vld [vmem:[#allocation8 + $0xd8] sm:$0xff]
    %v7899 = vld [vmem:[#allocation8 + $0xe0] sm:$0xff]
    %v7900 = vld [vmem:[#allocation8 + $0xe8] sm:$0xff]
    %v7901 = vld [vmem:[#allocation8 + $0xf0] sm:$0xff]
    %v7902 = vld [vmem:[#allocation8 + $0xf8] sm:$0xff]
    %v7903 = vld [vmem:[#allocation8 + $0x100] sm:$0xff]
    %v7904 = vld [vmem:[#allocation8 + $0x108] sm:$0xff]
    %v7905 = vld [vmem:[#allocation8 + $0x110] sm:$0xff]
    %v7906 = vld [vmem:[#allocation8 + $0x118] sm:$0xff]
    %v7907 = vld [vmem:[#allocation8 + $0x120] sm:$0xff]
    %v7908 = vld [vmem:[#allocation8 + $0x128] sm:$0xff]
    %v7909 = vld [vmem:[#allocation8 + $0x130] sm:$0xff]
    %v7910 = vld [vmem:[#allocation8 + $0x138] sm:$0xff]
    %v7911 = vld [vmem:[#allocation8 + $0x140] sm:$0xff]
    %v7912 = vld [vmem:[#allocation8 + $0x148] sm:$0xff]
    %v7913 = vld [vmem:[#allocation8 + $0x150] sm:$0xff]
    %v7914 = vld [vmem:[#allocation8 + $0x158] sm:$0xff]
    %v7915 = vld [vmem:[#allocation8 + $0x160] sm:$0xff]
    %v7916 = vld [vmem:[#allocation8 + $0x168] sm:$0xff]
    %v7917 = vld [vmem:[#allocation8 + $0x170] sm:$0xff]
    %v7918 = vld [vmem:[#allocation8 + $0x178] sm:$0xff]
    %v7919 = vld [vmem:[#allocation8 + $0x180] sm:$0xff]
    %v7920 = vld [vmem:[#allocation8 + $0x188] sm:$0xff]
    %v7921 = vld [vmem:[#allocation8 + $0x190] sm:$0xff]
    %v7922 = vld [vmem:[#allocation8 + $0x198] sm:$0xff]
    %v7923 = vld [vmem:[#allocation8 + $0x1a0] sm:$0xff]
    %v7924 = vld [vmem:[#allocation8 + $0x1a8] sm:$0xff]
    %v7925 = vld [vmem:[#allocation8 + $0x1b0] sm:$0xff]
    %v7926 = vld [vmem:[#allocation8 + $0x1b8] sm:$0xff]
    %v7927 = vld [vmem:[#allocation8 + $0x1c0] sm:$0xff]
    %v7928 = vld [vmem:[#allocation8 + $0x1c8] sm:$0xff]
    %v7929 = vld [vmem:[#allocation8 + $0x1d0] sm:$0xff]
    %v7930 = vld [vmem:[#allocation8 + $0x1d8] sm:$0xff]
    %v7931 = vld [vmem:[#allocation8 + $0x1e0] sm:$0xff]
    %v7932 = vld [vmem:[#allocation8 + $0x1e8] sm:$0xff]
    %v7933 = vld [vmem:[#allocation8 + $0x1f0] sm:$0xff]
    %v7934 = vld [vmem:[#allocation8 + $0x1f8] sm:$0xff]
    %v7935 = vld [vmem:[#allocation8 + $0x200] sm:$0xff]
    %v7936 = vld [vmem:[#allocation8 + $0x208] sm:$0xff]
    %v7937 = vld [vmem:[#allocation8 + $0x210] sm:$0xff]
    %v7938 = vld [vmem:[#allocation8 + $0x218] sm:$0xff]
    %v7939 = vld [vmem:[#allocation8 + $0x220] sm:$0xff]
    %v7940 = vld [vmem:[#allocation8 + $0x228] sm:$0xff]
    %v7941 = vld [vmem:[#allocation8 + $0x230] sm:$0xff]
    %v7942 = vld [vmem:[#allocation8 + $0x238] sm:$0xff]
    %v7943 = vld [vmem:[#allocation8 + $0x240] sm:$0xff]
    %v7944 = vld [vmem:[#allocation8 + $0x248] sm:$0xff]
    %v7945 = vld [vmem:[#allocation8 + $0x250] sm:$0xff]
    %v7946 = vld [vmem:[#allocation8 + $0x258] sm:$0xff]
    %v7947 = vld [vmem:[#allocation8 + $0x260] sm:$0xff]
    %v7948 = vld [vmem:[#allocation8 + $0x268] sm:$0xff]
    %v7949 = vld [vmem:[#allocation8 + $0x270] sm:$0xff]
    %v7950 = vld [vmem:[#allocation8 + $0x278] sm:$0xff]
    %v7951 = vld [vmem:[#allocation8 + $0x280] sm:$0xff]
    %v7952 = vld [vmem:[#allocation8 + $0x288] sm:$0xff]
    %v7953 = vld [vmem:[#allocation8 + $0x290] sm:$0xff]
    %v7954 = vld [vmem:[#allocation8 + $0x298] sm:$0xff]
    %v7955 = vld [vmem:[#allocation8 + $0x2a0] sm:$0xff]
    %v7956 = vld [vmem:[#allocation8 + $0x2a8] sm:$0xff]
    %v7957 = vld [vmem:[#allocation8 + $0x2b0] sm:$0xff]
    %v7958 = vld [vmem:[#allocation8 + $0x2b8] sm:$0xff]
    %v7959 = vld [vmem:[#allocation8 + $0x2c0] sm:$0xff]
    %v7960 = vld [vmem:[#allocation8 + $0x2c8] sm:$0xff]
    %v7961 = vld [vmem:[#allocation8 + $0x2d0] sm:$0xff]
    %v7962 = vld [vmem:[#allocation8 + $0x2d8] sm:$0xff]
    %v7963 = vld [vmem:[#allocation8 + $0x2e0] sm:$0xff]
    %v7964 = vld [vmem:[#allocation8 + $0x2e8] sm:$0xff]
    %v7965 = vld [vmem:[#allocation8 + $0x2f0] sm:$0xff]
    %v7966 = vld [vmem:[#allocation8 + $0x2f8] sm:$0xff]
    %v7967 = vld [vmem:[#allocation8 + $0x300] sm:$0xff]
    %v7968 = vld [vmem:[#allocation8 + $0x308] sm:$0xff]
    %v7969 = vld [vmem:[#allocation8 + $0x310] sm:$0xff]
    %v7970 = vld [vmem:[#allocation8 + $0x318] sm:$0xff]
    %v7971 = vld [vmem:[#allocation8 + $0x320] sm:$0xff]
    %v7972 = vld [vmem:[#allocation8 + $0x328] sm:$0xff]
    %v7973 = vld [vmem:[#allocation8 + $0x330] sm:$0xff]
    %v7974 = vld [vmem:[#allocation8 + $0x338] sm:$0xff]
    %v7975 = vld [vmem:[#allocation8 + $0x340] sm:$0xff]
    %v7976 = vld [vmem:[#allocation8 + $0x348] sm:$0xff]
    %v7977 = vld [vmem:[#allocation8 + $0x350] sm:$0xff]
    %v7978 = vld [vmem:[#allocation8 + $0x358] sm:$0xff]
    %v7979 = vld [vmem:[#allocation8 + $0x360] sm:$0xff]
    %v7980 = vld [vmem:[#allocation8 + $0x368] sm:$0xff]
    %v7981 = vld [vmem:[#allocation8 + $0x370] sm:$0xff]
    %v7982 = vld [vmem:[#allocation8 + $0x378] sm:$0xff]
    %v7983 = vld [vmem:[#allocation8 + $0x380] sm:$0xff]
    %v7984 = vld [vmem:[#allocation8 + $0x388] sm:$0xff]
    %v7985 = vld [vmem:[#allocation8 + $0x390] sm:$0xff]
    %v7986 = vld [vmem:[#allocation8 + $0x398] sm:$0xff]
    %v7987 = vld [vmem:[#allocation8 + $0x3a0] sm:$0xff]
    %v7988 = vld [vmem:[#allocation8 + $0x3a8] sm:$0xff]
    %v7989 = vld [vmem:[#allocation8 + $0x3b0] sm:$0xff]
    %v7990 = vld [vmem:[#allocation8 + $0x3b8] sm:$0xff]
    %v7991 = vld [vmem:[#allocation8 + $0x3c0] sm:$0xff]
    %v7992 = vld [vmem:[#allocation8 + $0x3c8] sm:$0xff]
    %v7993 = vld [vmem:[#allocation8 + $0x3d0] sm:$0xff]
    %v7994 = vld [vmem:[#allocation8 + $0x3d8] sm:$0xff]
    %v7995 = vld [vmem:[#allocation8 + $0x3e0] sm:$0xff]
    %v7996 = vld [vmem:[#allocation8 + $0x3e8] sm:$0xff]
    %v7997 = vld [vmem:[#allocation8 + $0x3f0] sm:$0xff]
    %v7998 = vld [vmem:[#allocation8 + $0x3f8] sm:$0xff]
    %v7999 = vld [vmem:[#allocation8 + $0x400] sm:$0xff]
    %v8000 = vld [vmem:[#allocation8 + $0x408] sm:$0xff]
    %v8001 = vld [vmem:[#allocation8 + $0x410] sm:$0xff]
    %v8002 = vld [vmem:[#allocation8 + $0x418] sm:$0xff]
    %v8003 = vld [vmem:[#allocation8 + $0x420] sm:$0xff]
    %v8004 = vld [vmem:[#allocation8 + $0x428] sm:$0xff]
    %v8005 = vld [vmem:[#allocation8 + $0x430] sm:$0xff]
    %v8006 = vld [vmem:[#allocation8 + $0x438] sm:$0xff]
    %v8007 = vld [vmem:[#allocation8 + $0x440] sm:$0xff]
    %v8008 = vld [vmem:[#allocation8 + $0x448] sm:$0xff]
    %v8009 = vld [vmem:[#allocation8 + $0x450] sm:$0xff]
    %v8010 = vld [vmem:[#allocation8 + $0x458] sm:$0xff]
    %v8011 = vld [vmem:[#allocation8 + $0x460] sm:$0xff]
    %v8012 = vld [vmem:[#allocation8 + $0x468] sm:$0xff]
    %v8013 = vld [vmem:[#allocation8 + $0x470] sm:$0xff]
    %v8014 = vld [vmem:[#allocation8 + $0x478] sm:$0xff]
    %v8015 = vld [vmem:[#allocation8 + $0x480] sm:$0xff]
    %v8016 = vld [vmem:[#allocation8 + $0x488] sm:$0xff]
    %v8017 = vld [vmem:[#allocation8 + $0x490] sm:$0xff]
    %v8018 = vld [vmem:[#allocation8 + $0x498] sm:$0xff]
    %v8019 = vld [vmem:[#allocation8 + $0x4a0] sm:$0xff]
    %v8020 = vld [vmem:[#allocation8 + $0x4a8] sm:$0xff]
    %v8021 = vld [vmem:[#allocation8 + $0x4b0] sm:$0xff]
    %v8022 = vld [vmem:[#allocation8 + $0x4b8] sm:$0xff]
    %v8023 = vld [vmem:[#allocation8 + $0x4c0] sm:$0xff]
    %v8024 = vld [vmem:[#allocation8 + $0x4c8] sm:$0xff]
    %v8025 = vld [vmem:[#allocation8 + $0x4d0] sm:$0xff]
    %v8026 = vld [vmem:[#allocation8 + $0x4d8] sm:$0xff]
    %v8027 = vld [vmem:[#allocation8 + $0x4e0] sm:$0xff]
    %v8028 = vld [vmem:[#allocation8 + $0x4e8] sm:$0xff]
    %v8029 = vld [vmem:[#allocation8 + $0x4f0] sm:$0xff]
    %v8030 = vld [vmem:[#allocation8 + $0x4f8] sm:$0xff]
    %v8031 = vld [vmem:[#allocation8 + $0x500] sm:$0xff]
    %v8032 = vld [vmem:[#allocation8 + $0x508] sm:$0xff]
    %v8033 = vld [vmem:[#allocation8 + $0x510] sm:$0xff]
    %v8034 = vld [vmem:[#allocation8 + $0x518] sm:$0xff]
    %v8035 = vld [vmem:[#allocation8 + $0x520] sm:$0xff]
    %v8036 = vld [vmem:[#allocation8 + $0x528] sm:$0xff]
    %v8037 = vld [vmem:[#allocation8 + $0x530] sm:$0xff]
    %v8038 = vld [vmem:[#allocation8 + $0x538] sm:$0xff]
    %v8039 = vld [vmem:[#allocation8 + $0x540] sm:$0xff]
    %v8040 = vld [vmem:[#allocation8 + $0x548] sm:$0xff]
    %v8041 = vld [vmem:[#allocation8 + $0x550] sm:$0xff]
    %v8042 = vld [vmem:[#allocation8 + $0x558] sm:$0xff]
    %v8043 = vld [vmem:[#allocation8 + $0x560] sm:$0xff]
    %v8044 = vld [vmem:[#allocation8 + $0x568] sm:$0xff]
    %v8045 = vld [vmem:[#allocation8 + $0x570] sm:$0xff]
    %v8046 = vld [vmem:[#allocation8 + $0x578] sm:$0xff]
    %v8047 = vld [vmem:[#allocation8 + $0x580] sm:$0xff]
    %v8048 = vld [vmem:[#allocation8 + $0x588] sm:$0xff]
    %v8049 = vld [vmem:[#allocation8 + $0x590] sm:$0xff]
    %v8050 = vld [vmem:[#allocation8 + $0x598] sm:$0xff]
    %v8051 = vld [vmem:[#allocation8 + $0x5a0] sm:$0xff]
    %v8052 = vld [vmem:[#allocation8 + $0x5a8] sm:$0xff]
    %v8053 = vld [vmem:[#allocation8 + $0x5b0] sm:$0xff]
    %v8054 = vld [vmem:[#allocation8 + $0x5b8] sm:$0xff]
    %v8055 = vld [vmem:[#allocation8 + $0x5c0] sm:$0xff]
    %v8056 = vld [vmem:[#allocation8 + $0x5c8] sm:$0xff]
    %v8057 = vld [vmem:[#allocation8 + $0x5d0] sm:$0xff]
    %v8058 = vld [vmem:[#allocation8 + $0x5d8] sm:$0xff]
    %v8059 = vld [vmem:[#allocation8 + $0x5e0] sm:$0xff]
    %v8060 = vld [vmem:[#allocation8 + $0x5e8] sm:$0xff]
    %v8061 = vld [vmem:[#allocation8 + $0x5f0] sm:$0xff]
    %v8062 = vld [vmem:[#allocation8 + $0x5f8] sm:$0xff]
    %v8063 = vld [vmem:[#allocation8 + $0x600] sm:$0xff]
    %v8064 = vld [vmem:[#allocation8 + $0x608] sm:$0xff]
    %v8065 = vld [vmem:[#allocation8 + $0x610] sm:$0xff]
    %v8066 = vld [vmem:[#allocation8 + $0x618] sm:$0xff]
    %v8067 = vld [vmem:[#allocation8 + $0x620] sm:$0xff]
    %v8068 = vld [vmem:[#allocation8 + $0x628] sm:$0xff]
    %v8069 = vld [vmem:[#allocation8 + $0x630] sm:$0xff]
    %v8070 = vld [vmem:[#allocation8 + $0x638] sm:$0xff]
    %v8071 = vld [vmem:[#allocation8 + $0x640] sm:$0xff]
    %v8072 = vld [vmem:[#allocation8 + $0x648] sm:$0xff]
    %v8073 = vld [vmem:[#allocation8 + $0x650] sm:$0xff]
    %v8074 = vld [vmem:[#allocation8 + $0x658] sm:$0xff]
    %v8075 = vld [vmem:[#allocation8 + $0x660] sm:$0xff]
    %v8076 = vld [vmem:[#allocation8 + $0x668] sm:$0xff]
    %v8077 = vld [vmem:[#allocation8 + $0x670] sm:$0xff]
    %v8078 = vld [vmem:[#allocation8 + $0x678] sm:$0xff]
    %v8079 = vld [vmem:[#allocation8 + $0x680] sm:$0xff]
    %v8080 = vld [vmem:[#allocation8 + $0x688] sm:$0xff]
    %v8081 = vld [vmem:[#allocation8 + $0x690] sm:$0xff]
    %v8082 = vld [vmem:[#allocation8 + $0x698] sm:$0xff]
    %v8083 = vld [vmem:[#allocation8 + $0x6a0] sm:$0xff]
    %v8084 = vld [vmem:[#allocation8 + $0x6a8] sm:$0xff]
    %v8085 = vld [vmem:[#allocation8 + $0x6b0] sm:$0xff]
    %v8086 = vld [vmem:[#allocation8 + $0x6b8] sm:$0xff]
    %v8087 = vld [vmem:[#allocation8 + $0x6c0] sm:$0xff]
    %v8088 = vld [vmem:[#allocation8 + $0x6c8] sm:$0xff]
    %v8089 = vld [vmem:[#allocation8 + $0x6d0] sm:$0xff]
    %v8090 = vld [vmem:[#allocation8 + $0x6d8] sm:$0xff]
    %v8091 = vld [vmem:[#allocation8 + $0x6e0] sm:$0xff]
    %v8092 = vld [vmem:[#allocation8 + $0x6e8] sm:$0xff]
    %v8093 = vld [vmem:[#allocation8 + $0x6f0] sm:$0xff]
    %v8094 = vld [vmem:[#allocation8 + $0x6f8] sm:$0xff]
    %v8095 = vld [vmem:[#allocation8 + $0x700] sm:$0xff]
    %v8096 = vld [vmem:[#allocation8 + $0x708] sm:$0xff]
    %v8097 = vld [vmem:[#allocation8 + $0x710] sm:$0xff]
    %v8098 = vld [vmem:[#allocation8 + $0x718] sm:$0xff]
    %v8099 = vld [vmem:[#allocation8 + $0x720] sm:$0xff]
    %v8100 = vld [vmem:[#allocation8 + $0x728] sm:$0xff]
    %v8101 = vld [vmem:[#allocation8 + $0x730] sm:$0xff]
    %v8102 = vld [vmem:[#allocation8 + $0x738] sm:$0xff]
    %v8103 = vld [vmem:[#allocation8 + $0x740] sm:$0xff]
    %v8104 = vld [vmem:[#allocation8 + $0x748] sm:$0xff]
    %v8105 = vld [vmem:[#allocation8 + $0x750] sm:$0xff]
    %v8106 = vld [vmem:[#allocation8 + $0x758] sm:$0xff]
    %v8107 = vld [vmem:[#allocation8 + $0x760] sm:$0xff]
    %v8108 = vld [vmem:[#allocation8 + $0x768] sm:$0xff]
    %v8109 = vld [vmem:[#allocation8 + $0x770] sm:$0xff]
    %v8110 = vld [vmem:[#allocation8 + $0x778] sm:$0xff]
    %v8111 = vld [vmem:[#allocation8 + $0x780] sm:$0xff]
    %v8112 = vld [vmem:[#allocation8 + $0x788] sm:$0xff]
    %v8113 = vld [vmem:[#allocation8 + $0x790] sm:$0xff]
    %v8114 = vld [vmem:[#allocation8 + $0x798] sm:$0xff]
    %v8115 = vld [vmem:[#allocation8 + $0x7a0] sm:$0xff]
    %v8116 = vld [vmem:[#allocation8 + $0x7a8] sm:$0xff]
    %v8117 = vld [vmem:[#allocation8 + $0x7b0] sm:$0xff]
    %v8118 = vld [vmem:[#allocation8 + $0x7b8] sm:$0xff]
    %v8119 = vld [vmem:[#allocation8 + $0x7c0] sm:$0xff]
    %v8120 = vld [vmem:[#allocation8 + $0x7c8] sm:$0xff]
    %v8121 = vld [vmem:[#allocation8 + $0x7d0] sm:$0xff]
    %v8122 = vld [vmem:[#allocation8 + $0x7d8] sm:$0xff]
    %v8123 = vld [vmem:[#allocation8 + $0x7e0] sm:$0xff]
    %v8124 = vld [vmem:[#allocation8 + $0x7e8] sm:$0xff]
    %v8125 = vld [vmem:[#allocation8 + $0x7f0] sm:$0xff]
    %v8126 = vld [vmem:[#allocation8 + $0x7f8] sm:$0xff]
    %s8127 = sshll.u32 %s7868, 4
    %8128 = dma.done %s170, %s8127
    %v8129 = vld [vmem:[%s169] sm:$0xff]
    %v8130 = vld [vmem:[%s169 + $0x8] sm:$0xff]
    %v8131 = vld [vmem:[%s169 + $0x10] sm:$0xff]
    %v8132 = vld [vmem:[%s169 + $0x18] sm:$0xff]
    %v8133 = vld [vmem:[%s169 + $0x20] sm:$0xff]
    %v8134 = vld [vmem:[%s169 + $0x28] sm:$0xff]
    %v8135 = vld [vmem:[%s169 + $0x30] sm:$0xff]
    %v8136 = vld [vmem:[%s169 + $0x38] sm:$0xff]
    %v8137 = vld [vmem:[%s169 + $0x40] sm:$0xff]
    %v8138 = vld [vmem:[%s169 + $0x48] sm:$0xff]
    %v8139 = vld [vmem:[%s169 + $0x50] sm:$0xff]
    %v8140 = vld [vmem:[%s169 + $0x58] sm:$0xff]
    %v8141 = vld [vmem:[%s169 + $0x60] sm:$0xff]
    %v8142 = vld [vmem:[%s169 + $0x68] sm:$0xff]
    %v8143 = vld [vmem:[%s169 + $0x70] sm:$0xff]
    %v8144 = vld [vmem:[%s169 + $0x78] sm:$0xff]
    %v8145 = vld [vmem:[%s169 + $0x80] sm:$0xff]
    %v8146 = vld [vmem:[%s169 + $0x88] sm:$0xff]
    %v8147 = vld [vmem:[%s169 + $0x90] sm:$0xff]
    %v8148 = vld [vmem:[%s169 + $0x98] sm:$0xff]
    %v8149 = vld [vmem:[%s169 + $0xa0] sm:$0xff]
    %v8150 = vld [vmem:[%s169 + $0xa8] sm:$0xff]
    %v8151 = vld [vmem:[%s169 + $0xb0] sm:$0xff]
    %v8152 = vld [vmem:[%s169 + $0xb8] sm:$0xff]
    %v8153 = vld [vmem:[%s169 + $0xc0] sm:$0xff]
    %v8154 = vld [vmem:[%s169 + $0xc8] sm:$0xff]
    %v8155 = vld [vmem:[%s169 + $0xd0] sm:$0xff]
    %v8156 = vld [vmem:[%s169 + $0xd8] sm:$0xff]
    %v8157 = vld [vmem:[%s169 + $0xe0] sm:$0xff]
    %v8158 = vld [vmem:[%s169 + $0xe8] sm:$0xff]
    %v8159 = vld [vmem:[%s169 + $0xf0] sm:$0xff]
    %v8160 = vld [vmem:[%s169 + $0xf8] sm:$0xff]
    %v8161 = vld [vmem:[%s169 + $0x100] sm:$0xff]
    %v8162 = vld [vmem:[%s169 + $0x108] sm:$0xff]
    %v8163 = vld [vmem:[%s169 + $0x110] sm:$0xff]
    %v8164 = vld [vmem:[%s169 + $0x118] sm:$0xff]
    %v8165 = vld [vmem:[%s169 + $0x120] sm:$0xff]
    %v8166 = vld [vmem:[%s169 + $0x128] sm:$0xff]
    %v8167 = vld [vmem:[%s169 + $0x130] sm:$0xff]
    %v8168 = vld [vmem:[%s169 + $0x138] sm:$0xff]
    %v8169 = vld [vmem:[%s169 + $0x140] sm:$0xff]
    %v8170 = vld [vmem:[%s169 + $0x148] sm:$0xff]
    %v8171 = vld [vmem:[%s169 + $0x150] sm:$0xff]
    %v8172 = vld [vmem:[%s169 + $0x158] sm:$0xff]
    %v8173 = vld [vmem:[%s169 + $0x160] sm:$0xff]
    %v8174 = vld [vmem:[%s169 + $0x168] sm:$0xff]
    %v8175 = vld [vmem:[%s169 + $0x170] sm:$0xff]
    %v8176 = vld [vmem:[%s169 + $0x178] sm:$0xff]
    %v8177 = vld [vmem:[%s169 + $0x180] sm:$0xff]
    %v8178 = vld [vmem:[%s169 + $0x188] sm:$0xff]
    %v8179 = vld [vmem:[%s169 + $0x190] sm:$0xff]
    %v8180 = vld [vmem:[%s169 + $0x198] sm:$0xff]
    %v8181 = vld [vmem:[%s169 + $0x1a0] sm:$0xff]
    %v8182 = vld [vmem:[%s169 + $0x1a8] sm:$0xff]
    %v8183 = vld [vmem:[%s169 + $0x1b0] sm:$0xff]
    %v8184 = vld [vmem:[%s169 + $0x1b8] sm:$0xff]
    %v8185 = vld [vmem:[%s169 + $0x1c0] sm:$0xff]
    %v8186 = vld [vmem:[%s169 + $0x1c8] sm:$0xff]
    %v8187 = vld [vmem:[%s169 + $0x1d0] sm:$0xff]
    %v8188 = vld [vmem:[%s169 + $0x1d8] sm:$0xff]
    %v8189 = vld [vmem:[%s169 + $0x1e0] sm:$0xff]
    %v8190 = vld [vmem:[%s169 + $0x1e8] sm:$0xff]
    %v8191 = vld [vmem:[%s169 + $0x1f0] sm:$0xff]
    %v8192 = vld [vmem:[%s169 + $0x1f8] sm:$0xff]
    %v8193 = vld [vmem:[%s169 + $0x200] sm:$0xff]
    %v8194 = vld [vmem:[%s169 + $0x208] sm:$0xff]
    %v8195 = vld [vmem:[%s169 + $0x210] sm:$0xff]
    %v8196 = vld [vmem:[%s169 + $0x218] sm:$0xff]
    %v8197 = vld [vmem:[%s169 + $0x220] sm:$0xff]
    %v8198 = vld [vmem:[%s169 + $0x228] sm:$0xff]
    %v8199 = vld [vmem:[%s169 + $0x230] sm:$0xff]
    %v8200 = vld [vmem:[%s169 + $0x238] sm:$0xff]
    %v8201 = vld [vmem:[%s169 + $0x240] sm:$0xff]
    %v8202 = vld [vmem:[%s169 + $0x248] sm:$0xff]
    %v8203 = vld [vmem:[%s169 + $0x250] sm:$0xff]
    %v8204 = vld [vmem:[%s169 + $0x258] sm:$0xff]
    %v8205 = vld [vmem:[%s169 + $0x260] sm:$0xff]
    %v8206 = vld [vmem:[%s169 + $0x268] sm:$0xff]
    %v8207 = vld [vmem:[%s169 + $0x270] sm:$0xff]
    %v8208 = vld [vmem:[%s169 + $0x278] sm:$0xff]
    %v8209 = vld [vmem:[%s169 + $0x280] sm:$0xff]
    %v8210 = vld [vmem:[%s169 + $0x288] sm:$0xff]
    %v8211 = vld [vmem:[%s169 + $0x290] sm:$0xff]
    %v8212 = vld [vmem:[%s169 + $0x298] sm:$0xff]
    %v8213 = vld [vmem:[%s169 + $0x2a0] sm:$0xff]
    %v8214 = vld [vmem:[%s169 + $0x2a8] sm:$0xff]
    %v8215 = vld [vmem:[%s169 + $0x2b0] sm:$0xff]
    %v8216 = vld [vmem:[%s169 + $0x2b8] sm:$0xff]
    %v8217 = vld [vmem:[%s169 + $0x2c0] sm:$0xff]
    %v8218 = vld [vmem:[%s169 + $0x2c8] sm:$0xff]
    %v8219 = vld [vmem:[%s169 + $0x2d0] sm:$0xff]
    %v8220 = vld [vmem:[%s169 + $0x2d8] sm:$0xff]
    %v8221 = vld [vmem:[%s169 + $0x2e0] sm:$0xff]
    %v8222 = vld [vmem:[%s169 + $0x2e8] sm:$0xff]
    %v8223 = vld [vmem:[%s169 + $0x2f0] sm:$0xff]
    %v8224 = vld [vmem:[%s169 + $0x2f8] sm:$0xff]
    %v8225 = vld [vmem:[%s169 + $0x300] sm:$0xff]
    %v8226 = vld [vmem:[%s169 + $0x308] sm:$0xff]
    %v8227 = vld [vmem:[%s169 + $0x310] sm:$0xff]
    %v8228 = vld [vmem:[%s169 + $0x318] sm:$0xff]
    %v8229 = vld [vmem:[%s169 + $0x320] sm:$0xff]
    %v8230 = vld [vmem:[%s169 + $0x328] sm:$0xff]
    %v8231 = vld [vmem:[%s169 + $0x330] sm:$0xff]
    %v8232 = vld [vmem:[%s169 + $0x338] sm:$0xff]
    %v8233 = vld [vmem:[%s169 + $0x340] sm:$0xff]
    %v8234 = vld [vmem:[%s169 + $0x348] sm:$0xff]
    %v8235 = vld [vmem:[%s169 + $0x350] sm:$0xff]
    %v8236 = vld [vmem:[%s169 + $0x358] sm:$0xff]
    %v8237 = vld [vmem:[%s169 + $0x360] sm:$0xff]
    %v8238 = vld [vmem:[%s169 + $0x368] sm:$0xff]
    %v8239 = vld [vmem:[%s169 + $0x370] sm:$0xff]
    %v8240 = vld [vmem:[%s169 + $0x378] sm:$0xff]
    %v8241 = vld [vmem:[%s169 + $0x380] sm:$0xff]
    %v8242 = vld [vmem:[%s169 + $0x388] sm:$0xff]
    %v8243 = vld [vmem:[%s169 + $0x390] sm:$0xff]
    %v8244 = vld [vmem:[%s169 + $0x398] sm:$0xff]
    %v8245 = vld [vmem:[%s169 + $0x3a0] sm:$0xff]
    %v8246 = vld [vmem:[%s169 + $0x3a8] sm:$0xff]
    %v8247 = vld [vmem:[%s169 + $0x3b0] sm:$0xff]
    %v8248 = vld [vmem:[%s169 + $0x3b8] sm:$0xff]
    %v8249 = vld [vmem:[%s169 + $0x3c0] sm:$0xff]
    %v8250 = vld [vmem:[%s169 + $0x3c8] sm:$0xff]
    %v8251 = vld [vmem:[%s169 + $0x3d0] sm:$0xff]
    %v8252 = vld [vmem:[%s169 + $0x3d8] sm:$0xff]
    %v8253 = vld [vmem:[%s169 + $0x3e0] sm:$0xff]
    %v8254 = vld [vmem:[%s169 + $0x3e8] sm:$0xff]
    %v8255 = vld [vmem:[%s169 + $0x3f0] sm:$0xff]
    %v8256 = vld [vmem:[%s169 + $0x3f8] sm:$0xff]
    %v8257 = vld [vmem:[%s169 + $0x400] sm:$0xff]
    %v8258 = vld [vmem:[%s169 + $0x408] sm:$0xff]
    %v8259 = vld [vmem:[%s169 + $0x410] sm:$0xff]
    %v8260 = vld [vmem:[%s169 + $0x418] sm:$0xff]
    %v8261 = vld [vmem:[%s169 + $0x420] sm:$0xff]
    %v8262 = vld [vmem:[%s169 + $0x428] sm:$0xff]
    %v8263 = vld [vmem:[%s169 + $0x430] sm:$0xff]
    %v8264 = vld [vmem:[%s169 + $0x438] sm:$0xff]
    %v8265 = vld [vmem:[%s169 + $0x440] sm:$0xff]
    %v8266 = vld [vmem:[%s169 + $0x448] sm:$0xff]
    %v8267 = vld [vmem:[%s169 + $0x450] sm:$0xff]
    %v8268 = vld [vmem:[%s169 + $0x458] sm:$0xff]
    %v8269 = vld [vmem:[%s169 + $0x460] sm:$0xff]
    %v8270 = vld [vmem:[%s169 + $0x468] sm:$0xff]
    %v8271 = vld [vmem:[%s169 + $0x470] sm:$0xff]
    %v8272 = vld [vmem:[%s169 + $0x478] sm:$0xff]
    %v8273 = vld [vmem:[%s169 + $0x480] sm:$0xff]
    %v8274 = vld [vmem:[%s169 + $0x488] sm:$0xff]
    %v8275 = vld [vmem:[%s169 + $0x490] sm:$0xff]
    %v8276 = vld [vmem:[%s169 + $0x498] sm:$0xff]
    %v8277 = vld [vmem:[%s169 + $0x4a0] sm:$0xff]
    %v8278 = vld [vmem:[%s169 + $0x4a8] sm:$0xff]
    %v8279 = vld [vmem:[%s169 + $0x4b0] sm:$0xff]
    %v8280 = vld [vmem:[%s169 + $0x4b8] sm:$0xff]
    %v8281 = vld [vmem:[%s169 + $0x4c0] sm:$0xff]
    %v8282 = vld [vmem:[%s169 + $0x4c8] sm:$0xff]
    %v8283 = vld [vmem:[%s169 + $0x4d0] sm:$0xff]
    %v8284 = vld [vmem:[%s169 + $0x4d8] sm:$0xff]
    %v8285 = vld [vmem:[%s169 + $0x4e0] sm:$0xff]
    %v8286 = vld [vmem:[%s169 + $0x4e8] sm:$0xff]
    %v8287 = vld [vmem:[%s169 + $0x4f0] sm:$0xff]
    %v8288 = vld [vmem:[%s169 + $0x4f8] sm:$0xff]
    %v8289 = vld [vmem:[%s169 + $0x500] sm:$0xff]
    %v8290 = vld [vmem:[%s169 + $0x508] sm:$0xff]
    %v8291 = vld [vmem:[%s169 + $0x510] sm:$0xff]
    %v8292 = vld [vmem:[%s169 + $0x518] sm:$0xff]
    %v8293 = vld [vmem:[%s169 + $0x520] sm:$0xff]
    %v8294 = vld [vmem:[%s169 + $0x528] sm:$0xff]
    %v8295 = vld [vmem:[%s169 + $0x530] sm:$0xff]
    %v8296 = vld [vmem:[%s169 + $0x538] sm:$0xff]
    %v8297 = vld [vmem:[%s169 + $0x540] sm:$0xff]
    %v8298 = vld [vmem:[%s169 + $0x548] sm:$0xff]
    %v8299 = vld [vmem:[%s169 + $0x550] sm:$0xff]
    %v8300 = vld [vmem:[%s169 + $0x558] sm:$0xff]
    %v8301 = vld [vmem:[%s169 + $0x560] sm:$0xff]
    %v8302 = vld [vmem:[%s169 + $0x568] sm:$0xff]
    %v8303 = vld [vmem:[%s169 + $0x570] sm:$0xff]
    %v8304 = vld [vmem:[%s169 + $0x578] sm:$0xff]
    %v8305 = vld [vmem:[%s169 + $0x580] sm:$0xff]
    %v8306 = vld [vmem:[%s169 + $0x588] sm:$0xff]
    %v8307 = vld [vmem:[%s169 + $0x590] sm:$0xff]
    %v8308 = vld [vmem:[%s169 + $0x598] sm:$0xff]
    %v8309 = vld [vmem:[%s169 + $0x5a0] sm:$0xff]
    %v8310 = vld [vmem:[%s169 + $0x5a8] sm:$0xff]
    %v8311 = vld [vmem:[%s169 + $0x5b0] sm:$0xff]
    %v8312 = vld [vmem:[%s169 + $0x5b8] sm:$0xff]
    %v8313 = vld [vmem:[%s169 + $0x5c0] sm:$0xff]
    %v8314 = vld [vmem:[%s169 + $0x5c8] sm:$0xff]
    %v8315 = vld [vmem:[%s169 + $0x5d0] sm:$0xff]
    %v8316 = vld [vmem:[%s169 + $0x5d8] sm:$0xff]
    %v8317 = vld [vmem:[%s169 + $0x5e0] sm:$0xff]
    %v8318 = vld [vmem:[%s169 + $0x5e8] sm:$0xff]
    %v8319 = vld [vmem:[%s169 + $0x5f0] sm:$0xff]
    %v8320 = vld [vmem:[%s169 + $0x5f8] sm:$0xff]
    %v8321 = vld [vmem:[%s169 + $0x600] sm:$0xff]
    %v8322 = vld [vmem:[%s169 + $0x608] sm:$0xff]
    %v8323 = vld [vmem:[%s169 + $0x610] sm:$0xff]
    %v8324 = vld [vmem:[%s169 + $0x618] sm:$0xff]
    %v8325 = vld [vmem:[%s169 + $0x620] sm:$0xff]
    %v8326 = vld [vmem:[%s169 + $0x628] sm:$0xff]
    %v8327 = vld [vmem:[%s169 + $0x630] sm:$0xff]
    %v8328 = vld [vmem:[%s169 + $0x638] sm:$0xff]
    %v8329 = vld [vmem:[%s169 + $0x640] sm:$0xff]
    %v8330 = vld [vmem:[%s169 + $0x648] sm:$0xff]
    %v8331 = vld [vmem:[%s169 + $0x650] sm:$0xff]
    %v8332 = vld [vmem:[%s169 + $0x658] sm:$0xff]
    %v8333 = vld [vmem:[%s169 + $0x660] sm:$0xff]
    %v8334 = vld [vmem:[%s169 + $0x668] sm:$0xff]
    %v8335 = vld [vmem:[%s169 + $0x670] sm:$0xff]
    %v8336 = vld [vmem:[%s169 + $0x678] sm:$0xff]
    %v8337 = vld [vmem:[%s169 + $0x680] sm:$0xff]
    %v8338 = vld [vmem:[%s169 + $0x688] sm:$0xff]
    %v8339 = vld [vmem:[%s169 + $0x690] sm:$0xff]
    %v8340 = vld [vmem:[%s169 + $0x698] sm:$0xff]
    %v8341 = vld [vmem:[%s169 + $0x6a0] sm:$0xff]
    %v8342 = vld [vmem:[%s169 + $0x6a8] sm:$0xff]
    %v8343 = vld [vmem:[%s169 + $0x6b0] sm:$0xff]
    %v8344 = vld [vmem:[%s169 + $0x6b8] sm:$0xff]
    %v8345 = vld [vmem:[%s169 + $0x6c0] sm:$0xff]
    %v8346 = vld [vmem:[%s169 + $0x6c8] sm:$0xff]
    %v8347 = vld [vmem:[%s169 + $0x6d0] sm:$0xff]
    %v8348 = vld [vmem:[%s169 + $0x6d8] sm:$0xff]
    %v8349 = vld [vmem:[%s169 + $0x6e0] sm:$0xff]
    %v8350 = vld [vmem:[%s169 + $0x6e8] sm:$0xff]
    %v8351 = vld [vmem:[%s169 + $0x6f0] sm:$0xff]
    %v8352 = vld [vmem:[%s169 + $0x6f8] sm:$0xff]
    %v8353 = vld [vmem:[%s169 + $0x700] sm:$0xff]
    %v8354 = vld [vmem:[%s169 + $0x708] sm:$0xff]
    %v8355 = vld [vmem:[%s169 + $0x710] sm:$0xff]
    %v8356 = vld [vmem:[%s169 + $0x718] sm:$0xff]
    %v8357 = vld [vmem:[%s169 + $0x720] sm:$0xff]
    %v8358 = vld [vmem:[%s169 + $0x728] sm:$0xff]
    %v8359 = vld [vmem:[%s169 + $0x730] sm:$0xff]
    %v8360 = vld [vmem:[%s169 + $0x738] sm:$0xff]
    %v8361 = vld [vmem:[%s169 + $0x740] sm:$0xff]
    %v8362 = vld [vmem:[%s169 + $0x748] sm:$0xff]
    %v8363 = vld [vmem:[%s169 + $0x750] sm:$0xff]
    %v8364 = vld [vmem:[%s169 + $0x758] sm:$0xff]
    %v8365 = vld [vmem:[%s169 + $0x760] sm:$0xff]
    %v8366 = vld [vmem:[%s169 + $0x768] sm:$0xff]
    %v8367 = vld [vmem:[%s169 + $0x770] sm:$0xff]
    %v8368 = vld [vmem:[%s169 + $0x778] sm:$0xff]
    %v8369 = vld [vmem:[%s169 + $0x780] sm:$0xff]
    %v8370 = vld [vmem:[%s169 + $0x788] sm:$0xff]
    %v8371 = vld [vmem:[%s169 + $0x790] sm:$0xff]
    %v8372 = vld [vmem:[%s169 + $0x798] sm:$0xff]
    %v8373 = vld [vmem:[%s169 + $0x7a0] sm:$0xff]
    %v8374 = vld [vmem:[%s169 + $0x7a8] sm:$0xff]
    %v8375 = vld [vmem:[%s169 + $0x7b0] sm:$0xff]
    %v8376 = vld [vmem:[%s169 + $0x7b8] sm:$0xff]
    %v8377 = vld [vmem:[%s169 + $0x7c0] sm:$0xff]
    %v8378 = vld [vmem:[%s169 + $0x7c8] sm:$0xff]
    %v8379 = vld [vmem:[%s169 + $0x7d0] sm:$0xff]
    %v8380 = vld [vmem:[%s169 + $0x7d8] sm:$0xff]
    %v8381 = vld [vmem:[%s169 + $0x7e0] sm:$0xff]
    %v8382 = vld [vmem:[%s169 + $0x7e8] sm:$0xff]
    %v8383 = vld [vmem:[%s169 + $0x7f0] sm:$0xff]
    %v8384 = vld [vmem:[%s169 + $0x7f8] sm:$0xff]
    %8385 = vmatprep.subr.bf16.mxu0 %v8130
    %8386 = vmatpush1.bf16.msra.mxu0 %v8129
    %8387 = vmatprep.subr.bf16.mxu0 %v8138
    %8388 = vmatpush1.bf16.msra.mxu0 %v8137
    %8389 = vmatprep.subr.bf16.mxu0 %v8146
    %8390 = vmatpush1.bf16.msra.mxu0 %v8145
    %8391 = vmatprep.subr.bf16.mxu0 %v8154
    %8392 = vmatpush1.bf16.msra.mxu0 %v8153
    %8393 = vmatprep.subr.bf16.mxu0 %v8162
    %8394 = vmatpush1.bf16.msra.mxu0 %v8161
    %8395 = vmatprep.subr.bf16.mxu0 %v8170
    %8396 = vmatpush1.bf16.msra.mxu0 %v8169
    %8397 = vmatprep.subr.bf16.mxu0 %v8178
    %8398 = vmatpush1.bf16.msra.mxu0 %v8177
    %8399 = vmatprep.subr.bf16.mxu0 %v8186
    %8400 = vmatpush1.bf16.msra.mxu0 %v8185
    %8401 = vmatprep.subr.bf16.mxu0 %v8194
    %8402 = vmatpush1.bf16.msra.mxu0 %v8193
    %8403 = vmatprep.subr.bf16.mxu0 %v8202
    %8404 = vmatpush1.bf16.msra.mxu0 %v8201
    %8405 = vmatprep.subr.bf16.mxu0 %v8210
    %8406 = vmatpush1.bf16.msra.mxu0 %v8209
    %8407 = vmatprep.subr.bf16.mxu0 %v8218
    %8408 = vmatpush1.bf16.msra.mxu0 %v8217
    %8409 = vmatprep.subr.bf16.mxu0 %v8226
    %8410 = vmatpush1.bf16.msra.mxu0 %v8225
    %8411 = vmatprep.subr.bf16.mxu0 %v8234
    %8412 = vmatpush1.bf16.msra.mxu0 %v8233
    %8413 = vmatprep.subr.bf16.mxu0 %v8242
    %8414 = vmatpush1.bf16.msra.mxu0 %v8241
    %8415 = vmatprep.subr.bf16.mxu0 %v8250
    %8416 = vmatpush1.bf16.msra.mxu0 %v8249
    %8417 = vmatprep.mubr.bf16.mxu0 %v7864
    %8418 = vmatmul.mubr.bf16.gmra.mrb[0].mxu0 %v7863
    %v8419 = vpop.f32.mrb[0].mxu0
    %v8420 = vadd.f32 0.0, %v8419
    %v8421 = vpop.f32.mrb[0].mxu0
    %v8422 = vadd.f32 0.0, %v8421
    %v8423 = vpop.f32.mrb[0].mxu0
    %v8424 = vpop.f32.mrb[0].mxu0
    %8425 = vdwg.mxu0
    %8426 = vmatprep.subr.bf16.mxu0 %v8258
    %8427 = vmatpush1.bf16.msra.mxu0 %v8257
    %8428 = vmatprep.subr.bf16.mxu0 %v8266
    %8429 = vmatpush1.bf16.msra.mxu0 %v8265
    %8430 = vmatprep.subr.bf16.mxu0 %v8274
    %8431 = vmatpush1.bf16.msra.mxu0 %v8273
    %8432 = vmatprep.subr.bf16.mxu0 %v8282
    %8433 = vmatpush1.bf16.msra.mxu0 %v8281
    %8434 = vmatprep.subr.bf16.mxu0 %v8290
    %8435 = vmatpush1.bf16.msra.mxu0 %v8289
    %8436 = vmatprep.subr.bf16.mxu0 %v8298
    %8437 = vmatpush1.bf16.msra.mxu0 %v8297
    %8438 = vmatprep.subr.bf16.mxu0 %v8306
    %8439 = vmatpush1.bf16.msra.mxu0 %v8305
    %8440 = vmatprep.subr.bf16.mxu0 %v8314
    %8441 = vmatpush1.bf16.msra.mxu0 %v8313
    %8442 = vmatprep.subr.bf16.mxu0 %v8322
    %8443 = vmatpush1.bf16.msra.mxu0 %v8321
    %8444 = vmatprep.subr.bf16.mxu0 %v8330
    %8445 = vmatpush1.bf16.msra.mxu0 %v8329
    %8446 = vmatprep.subr.bf16.mxu0 %v8338
    %8447 = vmatpush1.bf16.msra.mxu0 %v8337
    %8448 = vmatprep.subr.bf16.mxu0 %v8346
    %8449 = vmatpush1.bf16.msra.mxu0 %v8345
    %8450 = vmatprep.subr.bf16.mxu0 %v8354
    %8451 = vmatpush1.bf16.msra.mxu0 %v8353
    %8452 = vmatprep.subr.bf16.mxu0 %v8362
    %8453 = vmatpush1.bf16.msra.mxu0 %v8361
    %8454 = vmatprep.subr.bf16.mxu0 %v8370
    %8455 = vmatpush1.bf16.msra.mxu0 %v8369
    %8456 = vmatprep.subr.bf16.mxu0 %v8378
    %8457 = vmatpush1.bf16.msra.mxu0 %v8377
    %8458 = vmatprep.mubr.bf16.mxu0 %v7866
    %8459 = vmatmul.mubr.bf16.gmra.mrb[0].mxu0 %v7865
    %v8460 = vpop.f32.mrb[0].mxu0
    %v8461 = vadd.f32 %v8420, %v8460
    %v8462 = vpop.f32.mrb[0].mxu0
    %v8463 = vadd.f32 %v8422, %v8462
    %v8464 = vpop.f32.mrb[0].mxu0
    %v8465 = vpop.f32.mrb[0].mxu0
    %8466 = vdwg.mxu0
    %8467 = vmatprep.subr.bf16.mxu0 %v8132
    %8468 = vmatpush1.bf16.msra.mxu0 %v8131
    %8469 = vmatprep.subr.bf16.mxu0 %v8140
    %8470 = vmatpush1.bf16.msra.mxu0 %v8139
    %8471 = vmatprep.subr.bf16.mxu0 %v8148
    %8472 = vmatpush1.bf16.msra.mxu0 %v8147
    %8473 = vmatprep.subr.bf16.mxu0 %v8156
    %8474 = vmatpush1.bf16.msra.mxu0 %v8155
    %8475 = vmatprep.subr.bf16.mxu0 %v8164
    %8476 = vmatpush1.bf16.msra.mxu0 %v8163
    %8477 = vmatprep.subr.bf16.mxu0 %v8172
    %8478 = vmatpush1.bf16.msra.mxu0 %v8171
    %8479 = vmatprep.subr.bf16.mxu0 %v8180
    %8480 = vmatpush1.bf16.msra.mxu0 %v8179
    %8481 = vmatprep.subr.bf16.mxu0 %v8188
    %8482 = vmatpush1.bf16.msra.mxu0 %v8187
    %8483 = vmatprep.subr.bf16.mxu0 %v8196
    %8484 = vmatpush1.bf16.msra.mxu0 %v8195
    %8485 = vmatprep.subr.bf16.mxu0 %v8204
    %8486 = vmatpush1.bf16.msra.mxu0 %v8203
    %8487 = vmatprep.subr.bf16.mxu0 %v8212
    %8488 = vmatpush1.bf16.msra.mxu0 %v8211
    %8489 = vmatprep.subr.bf16.mxu0 %v8220
    %8490 = vmatpush1.bf16.msra.mxu0 %v8219
    %8491 = vmatprep.subr.bf16.mxu0 %v8228
    %8492 = vmatpush1.bf16.msra.mxu0 %v8227
    %8493 = vmatprep.subr.bf16.mxu0 %v8236
    %8494 = vmatpush1.bf16.msra.mxu0 %v8235
    %8495 = vmatprep.subr.bf16.mxu0 %v8244
    %8496 = vmatpush1.bf16.msra.mxu0 %v8243
    %8497 = vmatprep.subr.bf16.mxu0 %v8252
    %8498 = vmatpush1.bf16.msra.mxu0 %v8251
    %8499 = vmatprep.mubr.bf16.mxu0 %v7864
    %8500 = vmatmul.mubr.bf16.gmra.mrb[0].mxu0 %v7863
    %v8501 = vpop.f32.mrb[0].mxu0
    %v8502 = vadd.f32 0.0, %v8501
    %v8503 = vpop.f32.mrb[0].mxu0
    %v8504 = vadd.f32 0.0, %v8503
    %v8505 = vpop.f32.mrb[0].mxu0
    %v8506 = vpop.f32.mrb[0].mxu0
    %8507 = vdwg.mxu0
    %8508 = vmatprep.subr.bf16.mxu0 %v8260
    %8509 = vmatpush1.bf16.msra.mxu0 %v8259
    %8510 = vmatprep.subr.bf16.mxu0 %v8268
    %8511 = vmatpush1.bf16.msra.mxu0 %v8267
    %8512 = vmatprep.subr.bf16.mxu0 %v8276
    %8513 = vmatpush1.bf16.msra.mxu0 %v8275
    %8514 = vmatprep.subr.bf16.mxu0 %v8284
    %8515 = vmatpush1.bf16.msra.mxu0 %v8283
    %8516 = vmatprep.subr.bf16.mxu0 %v8292
    %8517 = vmatpush1.bf16.msra.mxu0 %v8291
    %8518 = vmatprep.subr.bf16.mxu0 %v8300
    %8519 = vmatpush1.bf16.msra.mxu0 %v8299
    %8520 = vmatprep.subr.bf16.mxu0 %v8308
    %8521 = vmatpush1.bf16.msra.mxu0 %v8307
    %8522 = vmatprep.subr.bf16.mxu0 %v8316
    %8523 = vmatpush1.bf16.msra.mxu0 %v8315
    %8524 = vmatprep.subr.bf16.mxu0 %v8324
    %8525 = vmatpush1.bf16.msra.mxu0 %v8323
    %8526 = vmatprep.subr.bf16.mxu0 %v8332
    %8527 = vmatpush1.bf16.msra.mxu0 %v8331
    %8528 = vmatprep.subr.bf16.mxu0 %v8340
    %8529 = vmatpush1.bf16.msra.mxu0 %v8339
    %8530 = vmatprep.subr.bf16.mxu0 %v8348
    %8531 = vmatpush1.bf16.msra.mxu0 %v8347
    %8532 = vmatprep.subr.bf16.mxu0 %v8356
    %8533 = vmatpush1.bf16.msra.mxu0 %v8355
    %8534 = vmatprep.subr.bf16.mxu0 %v8364
    %8535 = vmatpush1.bf16.msra.mxu0 %v8363
    %8536 = vmatprep.subr.bf16.mxu0 %v8372
    %8537 = vmatpush1.bf16.msra.mxu0 %v8371
    %8538 = vmatprep.subr.bf16.mxu0 %v8380
    %8539 = vmatpush1.bf16.msra.mxu0 %v8379
    %8540 = vmatprep.mubr.bf16.mxu0 %v7866
    %8541 = vmatmul.mubr.bf16.gmra.mrb[0].mxu0 %v7865
    %v8542 = vpop.f32.mrb[0].mxu0
    %v8543 = vadd.f32 %v8502, %v8542
    %v8544 = vpop.f32.mrb[0].mxu0
    %v8545 = vadd.f32 %v8504, %v8544
    %v8546 = vpop.f32.mrb[0].mxu0
    %v8547 = vpop.f32.mrb[0].mxu0
    %8548 = vdwg.mxu0
    %8549 = vmatprep.subr.bf16.mxu0 %v8134
    %8550 = vmatpush1.bf16.msra.mxu0 %v8133
    %8551 = vmatprep.subr.bf16.mxu0 %v8142
    %8552 = vmatpush1.bf16.msra.mxu0 %v8141
    %8553 = vmatprep.subr.bf16.mxu0 %v8150
    %8554 = vmatpush1.bf16.msra.mxu0 %v8149
    %8555 = vmatprep.subr.bf16.mxu0 %v8158
    %8556 = vmatpush1.bf16.msra.mxu0 %v8157
    %8557 = vmatprep.subr.bf16.mxu0 %v8166
    %8558 = vmatpush1.bf16.msra.mxu0 %v8165
    %8559 = vmatprep.subr.bf16.mxu0 %v8174
    %8560 = vmatpush1.bf16.msra.mxu0 %v8173
    %8561 = vmatprep.subr.bf16.mxu0 %v8182
    %8562 = vmatpush1.bf16.msra.mxu0 %v8181
    %8563 = vmatprep.subr.bf16.mxu0 %v8190
    %8564 = vmatpush1.bf16.msra.mxu0 %v8189
    %8565 = vmatprep.subr.bf16.mxu0 %v8198
    %8566 = vmatpush1.bf16.msra.mxu0 %v8197
    %8567 = vmatprep.subr.bf16.mxu0 %v8206
    %8568 = vmatpush1.bf16.msra.mxu0 %v8205
    %8569 = vmatprep.subr.bf16.mxu0 %v8214
    %8570 = vmatpush1.bf16.msra.mxu0 %v8213
    %8571 = vmatprep.subr.bf16.mxu0 %v8222
    %8572 = vmatpush1.bf16.msra.mxu0 %v8221
    %8573 = vmatprep.subr.bf16.mxu0 %v8230
    %8574 = vmatpush1.bf16.msra.mxu0 %v8229
    %8575 = vmatprep.subr.bf16.mxu0 %v8238
    %8576 = vmatpush1.bf16.msra.mxu0 %v8237
    %8577 = vmatprep.subr.bf16.mxu0 %v8246
    %8578 = vmatpush1.bf16.msra.mxu0 %v8245
    %8579 = vmatprep.subr.bf16.mxu0 %v8254
    %8580 = vmatpush1.bf16.msra.mxu0 %v8253
    %8581 = vmatprep.mubr.bf16.mxu0 %v7864
    %8582 = vmatmul.mubr.bf16.gmra.mrb[0].mxu0 %v7863
    %v8583 = vpop.f32.mrb[0].mxu0
    %v8584 = vadd.f32 0.0, %v8583
    %v8585 = vpop.f32.mrb[0].mxu0
    %v8586 = vadd.f32 0.0, %v8585
    %v8587 = vpop.f32.mrb[0].mxu0
    %v8588 = vpop.f32.mrb[0].mxu0
    %8589 = vdwg.mxu0
    %8590 = vmatprep.subr.bf16.mxu0 %v8262
    %8591 = vmatpush1.bf16.msra.mxu0 %v8261
    %8592 = vmatprep.subr.bf16.mxu0 %v8270
    %8593 = vmatpush1.bf16.msra.mxu0 %v8269
    %8594 = vmatprep.subr.bf16.mxu0 %v8278
    %8595 = vmatpush1.bf16.msra.mxu0 %v8277
    %8596 = vmatprep.subr.bf16.mxu0 %v8286
    %8597 = vmatpush1.bf16.msra.mxu0 %v8285
    %8598 = vmatprep.subr.bf16.mxu0 %v8294
    %8599 = vmatpush1.bf16.msra.mxu0 %v8293
    %8600 = vmatprep.subr.bf16.mxu0 %v8302
    %8601 = vmatpush1.bf16.msra.mxu0 %v8301
    %8602 = vmatprep.subr.bf16.mxu0 %v8310
    %8603 = vmatpush1.bf16.msra.mxu0 %v8309
    %8604 = vmatprep.subr.bf16.mxu0 %v8318
    %8605 = vmatpush1.bf16.msra.mxu0 %v8317
    %8606 = vmatprep.subr.bf16.mxu0 %v8326
    %8607 = vmatpush1.bf16.msra.mxu0 %v8325
    %8608 = vmatprep.subr.bf16.mxu0 %v8334
    %8609 = vmatpush1.bf16.msra.mxu0 %v8333
    %8610 = vmatprep.subr.bf16.mxu0 %v8342
    %8611 = vmatpush1.bf16.msra.mxu0 %v8341
    %8612 = vmatprep.subr.bf16.mxu0 %v8350
    %8613 = vmatpush1.bf16.msra.mxu0 %v8349
    %8614 = vmatprep.subr.bf16.mxu0 %v8358
    %8615 = vmatpush1.bf16.msra.mxu0 %v8357
    %8616 = vmatprep.subr.bf16.mxu0 %v8366
    %8617 = vmatpush1.bf16.msra.mxu0 %v8365
    %8618 = vmatprep.subr.bf16.mxu0 %v8374
    %8619 = vmatpush1.bf16.msra.mxu0 %v8373
    %8620 = vmatprep.subr.bf16.mxu0 %v8382
    %8621 = vmatpush1.bf16.msra.mxu0 %v8381
    %8622 = vmatprep.mubr.bf16.mxu0 %v7866
    %8623 = vmatmul.mubr.bf16.gmra.mrb[0].mxu0 %v7865
    %v8624 = vpop.f32.mrb[0].mxu0
    %v8625 = vadd.f32 %v8584, %v8624
    %v8626 = vpop.f32.mrb[0].mxu0
    %v8627 = vadd.f32 %v8586, %v8626
    %v8628 = vpop.f32.mrb[0].mxu0
    %v8629 = vpop.f32.mrb[0].mxu0
    %8630 = vdwg.mxu0
    %8631 = vmatprep.subr.bf16.mxu0 %v8136
    %8632 = vmatpush1.bf16.msra.mxu0 %v8135
    %8633 = vmatprep.subr.bf16.mxu0 %v8144
    %8634 = vmatpush1.bf16.msra.mxu0 %v8143
    %8635 = vmatprep.subr.bf16.mxu0 %v8152
    %8636 = vmatpush1.bf16.msra.mxu0 %v8151
    %8637 = vmatprep.subr.bf16.mxu0 %v8160
    %8638 = vmatpush1.bf16.msra.mxu0 %v8159
    %8639 = vmatprep.subr.bf16.mxu0 %v8168
    %8640 = vmatpush1.bf16.msra.mxu0 %v8167
    %8641 = vmatprep.subr.bf16.mxu0 %v8176
    %8642 = vmatpush1.bf16.msra.mxu0 %v8175
    %8643 = vmatprep.subr.bf16.mxu0 %v8184
    %8644 = vmatpush1.bf16.msra.mxu0 %v8183
    %8645 = vmatprep.subr.bf16.mxu0 %v8192
    %8646 = vmatpush1.bf16.msra.mxu0 %v8191
    %8647 = vmatprep.subr.bf16.mxu0 %v8200
    %8648 = vmatpush1.bf16.msra.mxu0 %v8199
    %8649 = vmatprep.subr.bf16.mxu0 %v8208
    %8650 = vmatpush1.bf16.msra.mxu0 %v8207
    %8651 = vmatprep.subr.bf16.mxu0 %v8216
    %8652 = vmatpush1.bf16.msra.mxu0 %v8215
    %8653 = vmatprep.subr.bf16.mxu0 %v8224
    %8654 = vmatpush1.bf16.msra.mxu0 %v8223
    %8655 = vmatprep.subr.bf16.mxu0 %v8232
    %8656 = vmatpush1.bf16.msra.mxu0 %v8231
    %8657 = vmatprep.subr.bf16.mxu0 %v8240
    %8658 = vmatpush1.bf16.msra.mxu0 %v8239
    %8659 = vmatprep.subr.bf16.mxu0 %v8248
    %8660 = vmatpush1.bf16.msra.mxu0 %v8247
    %8661 = vmatprep.subr.bf16.mxu0 %v8256
    %8662 = vmatpush1.bf16.msra.mxu0 %v8255
    %8663 = vmatprep.mubr.bf16.mxu0 %v7864
    %8664 = vmatmul.mubr.bf16.gmra.mrb[0].mxu0 %v7863
    %v8665 = vpop.f32.mrb[0].mxu0
    %v8666 = vadd.f32 0.0, %v8665
    %v8667 = vpop.f32.mrb[0].mxu0
    %v8668 = vadd.f32 0.0, %v8667
    %v8669 = vpop.f32.mrb[0].mxu0
    %v8670 = vpop.f32.mrb[0].mxu0
    %8671 = vdwg.mxu0
    %8672 = vmatprep.subr.bf16.mxu0 %v8264
    %8673 = vmatpush1.bf16.msra.mxu0 %v8263
    %8674 = vmatprep.subr.bf16.mxu0 %v8272
    %8675 = vmatpush1.bf16.msra.mxu0 %v8271
    %8676 = vmatprep.subr.bf16.mxu0 %v8280
    %8677 = vmatpush1.bf16.msra.mxu0 %v8279
    %8678 = vmatprep.subr.bf16.mxu0 %v8288
    %8679 = vmatpush1.bf16.msra.mxu0 %v8287
    %8680 = vmatprep.subr.bf16.mxu0 %v8296
    %8681 = vmatpush1.bf16.msra.mxu0 %v8295
    %8682 = vmatprep.subr.bf16.mxu0 %v8304
    %8683 = vmatpush1.bf16.msra.mxu0 %v8303
    %8684 = vmatprep.subr.bf16.mxu0 %v8312
    %8685 = vmatpush1.bf16.msra.mxu0 %v8311
    %8686 = vmatprep.subr.bf16.mxu0 %v8320
    %8687 = vmatpush1.bf16.msra.mxu0 %v8319
    %8688 = vmatprep.subr.bf16.mxu0 %v8328
    %8689 = vmatpush1.bf16.msra.mxu0 %v8327
    %8690 = vmatprep.subr.bf16.mxu0 %v8336
    %8691 = vmatpush1.bf16.msra.mxu0 %v8335
    %8692 = vmatprep.subr.bf16.mxu0 %v8344
    %8693 = vmatpush1.bf16.msra.mxu0 %v8343
    %8694 = vmatprep.subr.bf16.mxu0 %v8352
    %8695 = vmatpush1.bf16.msra.mxu0 %v8351
    %8696 = vmatprep.subr.bf16.mxu0 %v8360
    %8697 = vmatpush1.bf16.msra.mxu0 %v8359
    %8698 = vmatprep.subr.bf16.mxu0 %v8368
    %8699 = vmatpush1.bf16.msra.mxu0 %v8367
    %8700 = vmatprep.subr.bf16.mxu0 %v8376
    %8701 = vmatpush1.bf16.msra.mxu0 %v8375
    %8702 = vmatprep.subr.bf16.mxu0 %v8384
    %8703 = vmatpush1.bf16.msra.mxu0 %v8383
    %8704 = vmatprep.mubr.bf16.mxu0 %v7866
    %8705 = vmatmul.mubr.bf16.gmra.mrb[0].mxu0 %v7865
    %v8706 = vpop.f32.mrb[0].mxu0
    %v8707 = vadd.f32 %v8666, %v8706
    %v8708 = vpop.f32.mrb[0].mxu0
    %v8709 = vadd.f32 %v8668, %v8708
    %v8710 = vpop.f32.mrb[0].mxu0
    %v8711 = vpop.f32.mrb[0].mxu0
    %8712 = vdwg.mxu0
    %8713 = vmatprep.subr.bf16.mxu0 %v7872
    %8714 = vmatpush1.bf16.msra.mxu0 %v7871
    %8715 = vmatprep.subr.bf16.mxu0 %v7880
    %8716 = vmatpush1.bf16.msra.mxu0 %v7879
    %8717 = vmatprep.subr.bf16.mxu0 %v7888
    %8718 = vmatpush1.bf16.msra.mxu0 %v7887
    %8719 = vmatprep.subr.bf16.mxu0 %v7896
    %8720 = vmatpush1.bf16.msra.mxu0 %v7895
    %8721 = vmatprep.subr.bf16.mxu0 %v7904
    %8722 = vmatpush1.bf16.msra.mxu0 %v7903
    %8723 = vmatprep.subr.bf16.mxu0 %v7912
    %8724 = vmatpush1.bf16.msra.mxu0 %v7911
    %8725 = vmatprep.subr.bf16.mxu0 %v7920
    %8726 = vmatpush1.bf16.msra.mxu0 %v7919
    %8727 = vmatprep.subr.bf16.mxu0 %v7928
    %8728 = vmatpush1.bf16.msra.mxu0 %v7927
    %8729 = vmatprep.subr.bf16.mxu0 %v7936
    %8730 = vmatpush1.bf16.msra.mxu0 %v7935
    %8731 = vmatprep.subr.bf16.mxu0 %v7944
    %8732 = vmatpush1.bf16.msra.mxu0 %v7943
    %8733 = vmatprep.subr.bf16.mxu0 %v7952
    %8734 = vmatpush1.bf16.msra.mxu0 %v7951
    %8735 = vmatprep.subr.bf16.mxu0 %v7960
    %8736 = vmatpush1.bf16.msra.mxu0 %v7959
    %8737 = vmatprep.subr.bf16.mxu0 %v7968
    %8738 = vmatpush1.bf16.msra.mxu0 %v7967
    %8739 = vmatprep.subr.bf16.mxu0 %v7976
    %8740 = vmatpush1.bf16.msra.mxu0 %v7975
    %8741 = vmatprep.subr.bf16.mxu0 %v7984
    %8742 = vmatpush1.bf16.msra.mxu0 %v7983
    %8743 = vmatprep.subr.bf16.mxu0 %v7992
    %8744 = vmatpush1.bf16.msra.mxu0 %v7991
    %8745 = vmatprep.mubr.bf16.mxu0 %v7860
    %8746 = vmatmul.mubr.bf16.gmra.mrb[0].mxu0 %v7859
    %v8747 = vpop.f32.mrb[0].mxu0
    %v8748 = vadd.f32 %v8461, %v8747
    %v8749 = vpop.f32.mrb[0].mxu0
    %v8750 = vadd.f32 %v8463, %v8749
    %v8751 = vpop.f32.mrb[0].mxu0
    %v8752 = vpop.f32.mrb[0].mxu0
    %8753 = vdwg.mxu0
    %8754 = vmatprep.subr.bf16.mxu0 %v8000
    %8755 = vmatpush1.bf16.msra.mxu0 %v7999
    %8756 = vmatprep.subr.bf16.mxu0 %v8008
    %8757 = vmatpush1.bf16.msra.mxu0 %v8007
    %8758 = vmatprep.subr.bf16.mxu0 %v8016
    %8759 = vmatpush1.bf16.msra.mxu0 %v8015
    %8760 = vmatprep.subr.bf16.mxu0 %v8024
    %8761 = vmatpush1.bf16.msra.mxu0 %v8023
    %8762 = vmatprep.subr.bf16.mxu0 %v8032
    %8763 = vmatpush1.bf16.msra.mxu0 %v8031
    %8764 = vmatprep.subr.bf16.mxu0 %v8040
    %8765 = vmatpush1.bf16.msra.mxu0 %v8039
    %8766 = vmatprep.subr.bf16.mxu0 %v8048
    %8767 = vmatpush1.bf16.msra.mxu0 %v8047
    %8768 = vmatprep.subr.bf16.mxu0 %v8056
    %8769 = vmatpush1.bf16.msra.mxu0 %v8055
    %8770 = vmatprep.subr.bf16.mxu0 %v8064
    %8771 = vmatpush1.bf16.msra.mxu0 %v8063
    %8772 = vmatprep.subr.bf16.mxu0 %v8072
    %8773 = vmatpush1.bf16.msra.mxu0 %v8071
    %8774 = vmatprep.subr.bf16.mxu0 %v8080
    %8775 = vmatpush1.bf16.msra.mxu0 %v8079
    %8776 = vmatprep.subr.bf16.mxu0 %v8088
    %8777 = vmatpush1.bf16.msra.mxu0 %v8087
    %8778 = vmatprep.subr.bf16.mxu0 %v8096
    %8779 = vmatpush1.bf16.msra.mxu0 %v8095
    %8780 = vmatprep.subr.bf16.mxu0 %v8104
    %8781 = vmatpush1.bf16.msra.mxu0 %v8103
    %8782 = vmatprep.subr.bf16.mxu0 %v8112
    %8783 = vmatpush1.bf16.msra.mxu0 %v8111
    %8784 = vmatprep.subr.bf16.mxu0 %v8120
    %8785 = vmatpush1.bf16.msra.mxu0 %v8119
    %8786 = vmatprep.mubr.bf16.mxu0 %v7862
    %8787 = vmatmul.mubr.bf16.gmra.mrb[0].mxu0 %v7861
    %v8788 = vpop.f32.mrb[0].mxu0
    %v8789 = vadd.f32 %v8748, %v8788
    %v8790 = vpop.f32.mrb[0].mxu0
    %v8791 = vadd.f32 %v8750, %v8790
    %v8792 = vpop.f32.mrb[0].mxu0
    %v8793 = vpop.f32.mrb[0].mxu0
    %8794 = vdwg.mxu0
    %8795 = vmatprep.subr.bf16.mxu0 %v7874
    %8796 = vmatpush1.bf16.msra.mxu0 %v7873
    %8797 = vmatprep.subr.bf16.mxu0 %v7882
    %8798 = vmatpush1.bf16.msra.mxu0 %v7881
    %8799 = vmatprep.subr.bf16.mxu0 %v7890
    %8800 = vmatpush1.bf16.msra.mxu0 %v7889
    %8801 = vmatprep.subr.bf16.mxu0 %v7898
    %8802 = vmatpush1.bf16.msra.mxu0 %v7897
    %8803 = vmatprep.subr.bf16.mxu0 %v7906
    %8804 = vmatpush1.bf16.msra.mxu0 %v7905
    %8805 = vmatprep.subr.bf16.mxu0 %v7914
    %8806 = vmatpush1.bf16.msra.mxu0 %v7913
    %8807 = vmatprep.subr.bf16.mxu0 %v7922
    %8808 = vmatpush1.bf16.msra.mxu0 %v7921
    %8809 = vmatprep.subr.bf16.mxu0 %v7930
    %8810 = vmatpush1.bf16.msra.mxu0 %v7929
    %8811 = vmatprep.subr.bf16.mxu0 %v7938
    %8812 = vmatpush1.bf16.msra.mxu0 %v7937
    %8813 = vmatprep.subr.bf16.mxu0 %v7946
    %8814 = vmatpush1.bf16.msra.mxu0 %v7945
    %8815 = vmatprep.subr.bf16.mxu0 %v7954
    %8816 = vmatpush1.bf16.msra.mxu0 %v7953
    %8817 = vmatprep.subr.bf16.mxu0 %v7962
    %8818 = vmatpush1.bf16.msra.mxu0 %v7961
    %8819 = vmatprep.subr.bf16.mxu0 %v7970
    %8820 = vmatpush1.bf16.msra.mxu0 %v7969
    %8821 = vmatprep.subr.bf16.mxu0 %v7978
    %8822 = vmatpush1.bf16.msra.mxu0 %v7977
    %8823 = vmatprep.subr.bf16.mxu0 %v7986
    %8824 = vmatpush1.bf16.msra.mxu0 %v7985
    %8825 = vmatprep.subr.bf16.mxu0 %v7994
    %8826 = vmatpush1.bf16.msra.mxu0 %v7993
    %8827 = vmatprep.mubr.bf16.mxu0 %v7860
    %8828 = vmatmul.mubr.bf16.gmra.mrb[0].mxu0 %v7859
    %v8829 = vpop.f32.mrb[0].mxu0
    %v8830 = vadd.f32 %v8543, %v8829
    %v8831 = vpop.f32.mrb[0].mxu0
    %v8832 = vadd.f32 %v8545, %v8831
    %v8833 = vpop.f32.mrb[0].mxu0
    %v8834 = vpop.f32.mrb[0].mxu0
    %8835 = vdwg.mxu0
    %8836 = vmatprep.subr.bf16.mxu0 %v8002
    %8837 = vmatpush1.bf16.msra.mxu0 %v8001
    %8838 = vmatprep.subr.bf16.mxu0 %v8010
    %8839 = vmatpush1.bf16.msra.mxu0 %v8009
    %8840 = vmatprep.subr.bf16.mxu0 %v8018
    %8841 = vmatpush1.bf16.msra.mxu0 %v8017
    %8842 = vmatprep.subr.bf16.mxu0 %v8026
    %8843 = vmatpush1.bf16.msra.mxu0 %v8025
    %8844 = vmatprep.subr.bf16.mxu0 %v8034
    %8845 = vmatpush1.bf16.msra.mxu0 %v8033
    %8846 = vmatprep.subr.bf16.mxu0 %v8042
    %8847 = vmatpush1.bf16.msra.mxu0 %v8041
    %8848 = vmatprep.subr.bf16.mxu0 %v8050
    %8849 = vmatpush1.bf16.msra.mxu0 %v8049
    %8850 = vmatprep.subr.bf16.mxu0 %v8058
    %8851 = vmatpush1.bf16.msra.mxu0 %v8057
    %8852 = vmatprep.subr.bf16.mxu0 %v8066
    %8853 = vmatpush1.bf16.msra.mxu0 %v8065
    %8854 = vmatprep.subr.bf16.mxu0 %v8074
    %8855 = vmatpush1.bf16.msra.mxu0 %v8073
    %8856 = vmatprep.subr.bf16.mxu0 %v8082
    %8857 = vmatpush1.bf16.msra.mxu0 %v8081
    %8858 = vmatprep.subr.bf16.mxu0 %v8090
    %8859 = vmatpush1.bf16.msra.mxu0 %v8089
    %8860 = vmatprep.subr.bf16.mxu0 %v8098
    %8861 = vmatpush1.bf16.msra.mxu0 %v8097
    %8862 = vmatprep.subr.bf16.mxu0 %v8106
    %8863 = vmatpush1.bf16.msra.mxu0 %v8105
    %8864 = vmatprep.subr.bf16.mxu0 %v8114
    %8865 = vmatpush1.bf16.msra.mxu0 %v8113
    %8866 = vmatprep.subr.bf16.mxu0 %v8122
    %8867 = vmatpush1.bf16.msra.mxu0 %v8121
    %8868 = vmatprep.mubr.bf16.mxu0 %v7862
    %8869 = vmatmul.mubr.bf16.gmra.mrb[0].mxu0 %v7861
    %v8870 = vpop.f32.mrb[0].mxu0
    %v8871 = vadd.f32 %v8830, %v8870
    %v8872 = vpop.f32.mrb[0].mxu0
    %v8873 = vadd.f32 %v8832, %v8872
    %v8874 = vpop.f32.mrb[0].mxu0
    %v8875 = vpop.f32.mrb[0].mxu0
    %8876 = vdwg.mxu0
    %8877 = vmatprep.subr.bf16.mxu0 %v7876
    %8878 = vmatpush1.bf16.msra.mxu0 %v7875
    %8879 = vmatprep.subr.bf16.mxu0 %v7884
    %8880 = vmatpush1.bf16.msra.mxu0 %v7883
    %8881 = vmatprep.subr.bf16.mxu0 %v7892
    %8882 = vmatpush1.bf16.msra.mxu0 %v7891
    %8883 = vmatprep.subr.bf16.mxu0 %v7900
    %8884 = vmatpush1.bf16.msra.mxu0 %v7899
    %8885 = vmatprep.subr.bf16.mxu0 %v7908
    %8886 = vmatpush1.bf16.msra.mxu0 %v7907
    %8887 = vmatprep.subr.bf16.mxu0 %v7916
    %8888 = vmatpush1.bf16.msra.mxu0 %v7915
    %8889 = vmatprep.subr.bf16.mxu0 %v7924
    %8890 = vmatpush1.bf16.msra.mxu0 %v7923
    %8891 = vmatprep.subr.bf16.mxu0 %v7932
    %8892 = vmatpush1.bf16.msra.mxu0 %v7931
    %8893 = vmatprep.subr.bf16.mxu0 %v7940
    %8894 = vmatpush1.bf16.msra.mxu0 %v7939
    %8895 = vmatprep.subr.bf16.mxu0 %v7948
    %8896 = vmatpush1.bf16.msra.mxu0 %v7947
    %8897 = vmatprep.subr.bf16.mxu0 %v7956
    %8898 = vmatpush1.bf16.msra.mxu0 %v7955
    %8899 = vmatprep.subr.bf16.mxu0 %v7964
    %8900 = vmatpush1.bf16.msra.mxu0 %v7963
    %8901 = vmatprep.subr.bf16.mxu0 %v7972
    %8902 = vmatpush1.bf16.msra.mxu0 %v7971
    %8903 = vmatprep.subr.bf16.mxu0 %v7980
    %8904 = vmatpush1.bf16.msra.mxu0 %v7979
    %8905 = vmatprep.subr.bf16.mxu0 %v7988
    %8906 = vmatpush1.bf16.msra.mxu0 %v7987
    %8907 = vmatprep.subr.bf16.mxu0 %v7996
    %8908 = vmatpush1.bf16.msra.mxu0 %v7995
    %8909 = vmatprep.mubr.bf16.mxu0 %v7860
    %8910 = vmatmul.mubr.bf16.gmra.mrb[0].mxu0 %v7859
    %v8911 = vpop.f32.mrb[0].mxu0
    %v8912 = vadd.f32 %v8625, %v8911
    %v8913 = vpop.f32.mrb[0].mxu0
    %v8914 = vadd.f32 %v8627, %v8913
    %v8915 = vpop.f32.mrb[0].mxu0
    %v8916 = vpop.f32.mrb[0].mxu0
    %8917 = vdwg.mxu0
    %8918 = vmatprep.subr.bf16.mxu0 %v8004
    %8919 = vmatpush1.bf16.msra.mxu0 %v8003
    %8920 = vmatprep.subr.bf16.mxu0 %v8012
    %8921 = vmatpush1.bf16.msra.mxu0 %v8011
    %8922 = vmatprep.subr.bf16.mxu0 %v8020
    %8923 = vmatpush1.bf16.msra.mxu0 %v8019
    %8924 = vmatprep.subr.bf16.mxu0 %v8028
    %8925 = vmatpush1.bf16.msra.mxu0 %v8027
    %8926 = vmatprep.subr.bf16.mxu0 %v8036
    %8927 = vmatpush1.bf16.msra.mxu0 %v8035
    %8928 = vmatprep.subr.bf16.mxu0 %v8044
    %8929 = vmatpush1.bf16.msra.mxu0 %v8043
    %8930 = vmatprep.subr.bf16.mxu0 %v8052
    %8931 = vmatpush1.bf16.msra.mxu0 %v8051
    %8932 = vmatprep.subr.bf16.mxu0 %v8060
    %8933 = vmatpush1.bf16.msra.mxu0 %v8059
    %8934 = vmatprep.subr.bf16.mxu0 %v8068
    %8935 = vmatpush1.bf16.msra.mxu0 %v8067
    %8936 = vmatprep.subr.bf16.mxu0 %v8076
    %8937 = vmatpush1.bf16.msra.mxu0 %v8075
    %8938 = vmatprep.subr.bf16.mxu0 %v8084
    %8939 = vmatpush1.bf16.msra.mxu0 %v8083
    %8940 = vmatprep.subr.bf16.mxu0 %v8092
    %8941 = vmatpush1.bf16.msra.mxu0 %v8091
    %8942 = vmatprep.subr.bf16.mxu0 %v8100
    %8943 = vmatpush1.bf16.msra.mxu0 %v8099
    %8944 = vmatprep.subr.bf16.mxu0 %v8108
    %8945 = vmatpush1.bf16.msra.mxu0 %v8107
    %8946 = vmatprep.subr.bf16.mxu0 %v8116
    %8947 = vmatpush1.bf16.msra.mxu0 %v8115
    %8948 = vmatprep.subr.bf16.mxu0 %v8124
    %8949 = vmatpush1.bf16.msra.mxu0 %v8123
    %8950 = vmatprep.mubr.bf16.mxu0 %v7862
    %8951 = vmatmul.mubr.bf16.gmra.mrb[0].mxu0 %v7861
    %v8952 = vpop.f32.mrb[0].mxu0
    %v8953 = vadd.f32 %v8912, %v8952
    %v8954 = vpop.f32.mrb[0].mxu0
    %v8955 = vadd.f32 %v8914, %v8954
    %v8956 = vpop.f32.mrb[0].mxu0
    %v8957 = vpop.f32.mrb[0].mxu0
    %8958 = vdwg.mxu0
    %8959 = vmatprep.subr.bf16.mxu0 %v7878
    %8960 = vmatpush1.bf16.msra.mxu0 %v7877
    %8961 = vmatprep.subr.bf16.mxu0 %v7886
    %8962 = vmatpush1.bf16.msra.mxu0 %v7885
    %8963 = vmatprep.subr.bf16.mxu0 %v7894
    %8964 = vmatpush1.bf16.msra.mxu0 %v7893
    %8965 = vmatprep.subr.bf16.mxu0 %v7902
    %8966 = vmatpush1.bf16.msra.mxu0 %v7901
    %8967 = vmatprep.subr.bf16.mxu0 %v7910
    %8968 = vmatpush1.bf16.msra.mxu0 %v7909
    %8969 = vmatprep.subr.bf16.mxu0 %v7918
    %8970 = vmatpush1.bf16.msra.mxu0 %v7917
    %8971 = vmatprep.subr.bf16.mxu0 %v7926
    %8972 = vmatpush1.bf16.msra.mxu0 %v7925
    %8973 = vmatprep.subr.bf16.mxu0 %v7934
    %8974 = vmatpush1.bf16.msra.mxu0 %v7933
    %8975 = vmatprep.subr.bf16.mxu0 %v7942
    %8976 = vmatpush1.bf16.msra.mxu0 %v7941
    %8977 = vmatprep.subr.bf16.mxu0 %v7950
    %8978 = vmatpush1.bf16.msra.mxu0 %v7949
    %8979 = vmatprep.subr.bf16.mxu0 %v7958
    %8980 = vmatpush1.bf16.msra.mxu0 %v7957
    %8981 = vmatprep.subr.bf16.mxu0 %v7966
    %8982 = vmatpush1.bf16.msra.mxu0 %v7965
    %8983 = vmatprep.subr.bf16.mxu0 %v7974
    %8984 = vmatpush1.bf16.msra.mxu0 %v7973
    %8985 = vmatprep.subr.bf16.mxu0 %v7982
    %8986 = vmatpush1.bf16.msra.mxu0 %v7981
    %8987 = vmatprep.subr.bf16.mxu0 %v7990
    %8988 = vmatpush1.bf16.msra.mxu0 %v7989
    %8989 = vmatprep.subr.bf16.mxu0 %v7998
    %8990 = vmatpush1.bf16.msra.mxu0 %v7997
    %8991 = vmatprep.mubr.bf16.mxu0 %v7860
    %8992 = vmatmul.mubr.bf16.gmra.mrb[0].mxu0 %v7859
    %v8993 = vpop.f32.mrb[0].mxu0
    %v8994 = vadd.f32 %v8707, %v8993
    %v8995 = vpop.f32.mrb[0].mxu0
    %v8996 = vadd.f32 %v8709, %v8995
    %v8997 = vpop.f32.mrb[0].mxu0
    %v8998 = vpop.f32.mrb[0].mxu0
    %8999 = vdwg.mxu0
    %9000 = vmatprep.subr.bf16.mxu0 %v8006
    %9001 = vmatpush1.bf16.msra.mxu0 %v8005
    %9002 = vmatprep.subr.bf16.mxu0 %v8014
    %9003 = vmatpush1.bf16.msra.mxu0 %v8013
    %9004 = vmatprep.subr.bf16.mxu0 %v8022
    %9005 = vmatpush1.bf16.msra.mxu0 %v8021
    %9006 = vmatprep.subr.bf16.mxu0 %v8030
    %9007 = vmatpush1.bf16.msra.mxu0 %v8029
    %9008 = vmatprep.subr.bf16.mxu0 %v8038
    %9009 = vmatpush1.bf16.msra.mxu0 %v8037
    %9010 = vmatprep.subr.bf16.mxu0 %v8046
    %9011 = vmatpush1.bf16.msra.mxu0 %v8045
    %9012 = vmatprep.subr.bf16.mxu0 %v8054
    %9013 = vmatpush1.bf16.msra.mxu0 %v8053
    %9014 = vmatprep.subr.bf16.mxu0 %v8062
    %9015 = vmatpush1.bf16.msra.mxu0 %v8061
    %9016 = vmatprep.subr.bf16.mxu0 %v8070
    %9017 = vmatpush1.bf16.msra.mxu0 %v8069
    %9018 = vmatprep.subr.bf16.mxu0 %v8078
    %9019 = vmatpush1.bf16.msra.mxu0 %v8077
    %9020 = vmatprep.subr.bf16.mxu0 %v8086
    %9021 = vmatpush1.bf16.msra.mxu0 %v8085
    %9022 = vmatprep.subr.bf16.mxu0 %v8094
    %9023 = vmatpush1.bf16.msra.mxu0 %v8093
    %9024 = vmatprep.subr.bf16.mxu0 %v8102
    %9025 = vmatpush1.bf16.msra.mxu0 %v8101
    %9026 = vmatprep.subr.bf16.mxu0 %v8110
    %9027 = vmatpush1.bf16.msra.mxu0 %v8109
    %9028 = vmatprep.subr.bf16.mxu0 %v8118
    %9029 = vmatpush1.bf16.msra.mxu0 %v8117
    %9030 = vmatprep.subr.bf16.mxu0 %v8126
    %9031 = vmatpush1.bf16.msra.mxu0 %v8125
    %9032 = vmatprep.mubr.bf16.mxu0 %v7862
    %9033 = vmatmul.mubr.bf16.gmra.mrb[0].mxu0 %v7861
    %v9034 = vpop.f32.mrb[0].mxu0
    %v9035 = vadd.f32 %v8994, %v9034
    %v9036 = vpop.f32.mrb[0].mxu0
    %v9037 = vadd.f32 %v8996, %v9036
    %v9038 = vpop.f32.mrb[0].mxu0
    %v9039 = vpop.f32.mrb[0].mxu0
    %9040 = vdwg.mxu0
    %v9041 = vld [vmem:[#allocation16] sm:$0xff]
    %v9043 = vlaneseq
    %v9044 = vshrl.u32 %v9043, 7
    %v9045 = vsub.s32 0, %v9044
    %v9046 = vrot.slane %v9041, %v9045
    %v9047 = vlaneseq
    %v9048 = vshrl.u32 %v9047, 7
    %v9049 = vsub.s32 1, %v9048
    %v9050 = vrot.slane %v9041, %v9049
    %v9051 = vlaneseq
    %v9052 = vshrl.u32 %v9051, 7
    %v9053 = vsub.s32 2, %v9052
    %v9054 = vrot.slane %v9041, %v9053
    %v9055 = vlaneseq
    %v9056 = vshrl.u32 %v9055, 7
    %v9057 = vsub.s32 3, %v9056
    %v9058 = vrot.slane %v9041, %v9057
    %v9059 = vlaneseq
    %v9060 = vshrl.u32 %v9059, 7
    %v9061 = vsub.s32 4, %v9060
    %v9062 = vrot.slane %v9041, %v9061
    %v9063 = vlaneseq
    %v9064 = vshrl.u32 %v9063, 7
    %v9065 = vsub.s32 5, %v9064
    %v9066 = vrot.slane %v9041, %v9065
    %v9067 = vlaneseq
    %v9068 = vshrl.u32 %v9067, 7
    %v9069 = vsub.s32 6, %v9068
    %v9070 = vrot.slane %v9041, %v9069
    %v9071 = vlaneseq
    %v9072 = vshrl.u32 %v9071, 7
    %v9073 = vsub.s32 7, %v9072
    %v9074 = vrot.slane %v9041, %v9073
    %v9083 = vadd.f32 %v8789, %v9046
    %v9084 = vadd.f32 %v8791, %v9050
    %v9085 = vadd.f32 %v8871, %v9054
    %v9086 = vadd.f32 %v8873, %v9058
    %v9087 = vadd.f32 %v8953, %v9062
    %v9088 = vadd.f32 %v8955, %v9066
    %v9089 = vadd.f32 %v9035, %v9070
    %v9090 = vadd.f32 %v9037, %v9074
    %v9091 = vmax.f32 %v9083, 0.0
    %v9092 = vmax.f32 %v9084, 0.0
    %v9093 = vmax.f32 %v9085, 0.0
    %v9094 = vmax.f32 %v9086, 0.0
    %v9095 = vmax.f32 %v9087, 0.0
    %v9096 = vmax.f32 %v9088, 0.0
    %v9097 = vmax.f32 %v9089, 0.0
    %v9098 = vmax.f32 %v9090, 0.0
    %v9099 = vpack.c.bf16 %v9091, %v9091
    %v9100 = vpack.c.bf16 %v9092, %v9092
    %v9101 = vpack.c.bf16 %v9093, %v9093
    %v9102 = vpack.c.bf16 %v9094, %v9094
    %v9103 = vpack.c.bf16 %v9095, %v9095
    %v9104 = vpack.c.bf16 %v9096, %v9096
    %v9105 = vpack.c.bf16 %v9097, %v9097
    %v9106 = vpack.c.bf16 %v9098, %v9098
    %v9107 = vld [vmem:[%s7] sm:$0xf]
    %v9108 = vld [vmem:[%s7 + $0x4] sm:$0xf]
    %v9109 = vld [vmem:[%s7 + $0x8] sm:$0xf]
    %v9110 = vld [vmem:[%s7 + $0xc] sm:$0xf]
    %v9111 = vld [vmem:[%s7 + $0x10] sm:$0xf]
    %v9112 = vld [vmem:[%s7 + $0x14] sm:$0xf]
    %v9113 = vld [vmem:[%s7 + $0x18] sm:$0xf]
    %v9114 = vld [vmem:[%s7 + $0x1c] sm:$0xf]
    %v9115 = vld [vmem:[%s7 + $0x20] sm:$0xf]
    %v9116 = vld [vmem:[%s7 + $0x24] sm:$0xf]
    %v9117 = vld [vmem:[%s7 + $0x28] sm:$0xf]
    %v9118 = vld [vmem:[%s7 + $0x2c] sm:$0xf]
    %v9119 = vld [vmem:[%s7 + $0x30] sm:$0xf]
    %v9120 = vld [vmem:[%s7 + $0x34] sm:$0xf]
    %v9121 = vld [vmem:[%s7 + $0x38] sm:$0xf]
    %v9122 = vld [vmem:[%s7 + $0x3c] sm:$0xf]
    %v9123 = vld [vmem:[%s7 + $0x40] sm:$0xf]
    %v9124 = vld [vmem:[%s7 + $0x44] sm:$0xf]
    %v9125 = vld [vmem:[%s7 + $0x48] sm:$0xf]
    %v9126 = vld [vmem:[%s7 + $0x4c] sm:$0xf]
    %v9127 = vld [vmem:[%s7 + $0x50] sm:$0xf]
    %v9128 = vld [vmem:[%s7 + $0x54] sm:$0xf]
    %v9129 = vld [vmem:[%s7 + $0x58] sm:$0xf]
    %v9130 = vld [vmem:[%s7 + $0x5c] sm:$0xf]
    %v9131 = vld [vmem:[%s7 + $0x60] sm:$0xf]
    %v9132 = vld [vmem:[%s7 + $0x64] sm:$0xf]
    %v9133 = vld [vmem:[%s7 + $0x68] sm:$0xf]
    %v9134 = vld [vmem:[%s7 + $0x6c] sm:$0xf]
    %v9135 = vld [vmem:[%s7 + $0x70] sm:$0xf]
    %v9136 = vld [vmem:[%s7 + $0x74] sm:$0xf]
    %v9137 = vld [vmem:[%s7 + $0x78] sm:$0xf]
    %v9138 = vld [vmem:[%s7 + $0x7c] sm:$0xf]
    %v9139 = vld [vmem:[%s7 + $0x80] sm:$0xf]
    %v9140 = vld [vmem:[%s7 + $0x84] sm:$0xf]
    %v9141 = vld [vmem:[%s7 + $0x88] sm:$0xf]
    %v9142 = vld [vmem:[%s7 + $0x8c] sm:$0xf]
    %v9143 = vld [vmem:[%s7 + $0x90] sm:$0xf]
    %v9144 = vld [vmem:[%s7 + $0x94] sm:$0xf]
    %v9145 = vld [vmem:[%s7 + $0x98] sm:$0xf]
    %v9146 = vld [vmem:[%s7 + $0x9c] sm:$0xf]
    %v9147 = vld [vmem:[%s7 + $0xa0] sm:$0xf]
    %v9148 = vld [vmem:[%s7 + $0xa4] sm:$0xf]
    %v9149 = vld [vmem:[%s7 + $0xa8] sm:$0xf]
    %v9150 = vld [vmem:[%s7 + $0xac] sm:$0xf]
    %v9151 = vld [vmem:[%s7 + $0xb0] sm:$0xf]
    %v9152 = vld [vmem:[%s7 + $0xb4] sm:$0xf]
    %v9153 = vld [vmem:[%s7 + $0xb8] sm:$0xf]
    %v9154 = vld [vmem:[%s7 + $0xbc] sm:$0xf]
    %v9155 = vld [vmem:[%s7 + $0xc0] sm:$0xf]
    %v9156 = vld [vmem:[%s7 + $0xc4] sm:$0xf]
    %v9157 = vld [vmem:[%s7 + $0xc8] sm:$0xf]
    %v9158 = vld [vmem:[%s7 + $0xcc] sm:$0xf]
    %v9159 = vld [vmem:[%s7 + $0xd0] sm:$0xf]
    %v9160 = vld [vmem:[%s7 + $0xd4] sm:$0xf]
    %v9161 = vld [vmem:[%s7 + $0xd8] sm:$0xf]
    %v9162 = vld [vmem:[%s7 + $0xdc] sm:$0xf]
    %v9163 = vld [vmem:[%s7 + $0xe0] sm:$0xf]
    %v9164 = vld [vmem:[%s7 + $0xe4] sm:$0xf]
    %v9165 = vld [vmem:[%s7 + $0xe8] sm:$0xf]
    %v9166 = vld [vmem:[%s7 + $0xec] sm:$0xf]
    %v9167 = vld [vmem:[%s7 + $0xf0] sm:$0xf]
    %v9168 = vld [vmem:[%s7 + $0xf4] sm:$0xf]
    %v9169 = vld [vmem:[%s7 + $0xf8] sm:$0xf]
    %v9170 = vld [vmem:[%s7 + $0xfc] sm:$0xf]
    %v9171 = vld [vmem:[%s7 + $0x100] sm:$0xf]
    %v9172 = vld [vmem:[%s7 + $0x104] sm:$0xf]
    %v9173 = vld [vmem:[%s7 + $0x108] sm:$0xf]
    %v9174 = vld [vmem:[%s7 + $0x10c] sm:$0xf]
    %v9175 = vld [vmem:[%s7 + $0x110] sm:$0xf]
    %v9176 = vld [vmem:[%s7 + $0x114] sm:$0xf]
    %v9177 = vld [vmem:[%s7 + $0x118] sm:$0xf]
    %v9178 = vld [vmem:[%s7 + $0x11c] sm:$0xf]
    %v9179 = vld [vmem:[%s7 + $0x120] sm:$0xf]
    %v9180 = vld [vmem:[%s7 + $0x124] sm:$0xf]
    %v9181 = vld [vmem:[%s7 + $0x128] sm:$0xf]
    %v9182 = vld [vmem:[%s7 + $0x12c] sm:$0xf]
    %v9183 = vld [vmem:[%s7 + $0x130] sm:$0xf]
    %v9184 = vld [vmem:[%s7 + $0x134] sm:$0xf]
    %v9185 = vld [vmem:[%s7 + $0x138] sm:$0xf]
    %v9186 = vld [vmem:[%s7 + $0x13c] sm:$0xf]
    %v9187 = vld [vmem:[%s7 + $0x140] sm:$0xf]
    %v9188 = vld [vmem:[%s7 + $0x144] sm:$0xf]
    %v9189 = vld [vmem:[%s7 + $0x148] sm:$0xf]
    %v9190 = vld [vmem:[%s7 + $0x14c] sm:$0xf]
    %v9191 = vld [vmem:[%s7 + $0x150] sm:$0xf]
    %v9192 = vld [vmem:[%s7 + $0x154] sm:$0xf]
    %v9193 = vld [vmem:[%s7 + $0x158] sm:$0xf]
    %v9194 = vld [vmem:[%s7 + $0x15c] sm:$0xf]
    %v9195 = vld [vmem:[%s7 + $0x160] sm:$0xf]
    %v9196 = vld [vmem:[%s7 + $0x164] sm:$0xf]
    %v9197 = vld [vmem:[%s7 + $0x168] sm:$0xf]
    %v9198 = vld [vmem:[%s7 + $0x16c] sm:$0xf]
    %v9199 = vld [vmem:[%s7 + $0x170] sm:$0xf]
    %v9200 = vld [vmem:[%s7 + $0x174] sm:$0xf]
    %v9201 = vld [vmem:[%s7 + $0x178] sm:$0xf]
    %v9202 = vld [vmem:[%s7 + $0x17c] sm:$0xf]
    %v9203 = vld [vmem:[%s7 + $0x180] sm:$0xf]
    %v9204 = vld [vmem:[%s7 + $0x184] sm:$0xf]
    %v9205 = vld [vmem:[%s7 + $0x188] sm:$0xf]
    %v9206 = vld [vmem:[%s7 + $0x18c] sm:$0xf]
    %v9207 = vld [vmem:[%s7 + $0x190] sm:$0xf]
    %v9208 = vld [vmem:[%s7 + $0x194] sm:$0xf]
    %v9209 = vld [vmem:[%s7 + $0x198] sm:$0xf]
    %v9210 = vld [vmem:[%s7 + $0x19c] sm:$0xf]
    %v9211 = vld [vmem:[%s7 + $0x1a0] sm:$0xf]
    %v9212 = vld [vmem:[%s7 + $0x1a4] sm:$0xf]
    %v9213 = vld [vmem:[%s7 + $0x1a8] sm:$0xf]
    %v9214 = vld [vmem:[%s7 + $0x1ac] sm:$0xf]
    %v9215 = vld [vmem:[%s7 + $0x1b0] sm:$0xf]
    %v9216 = vld [vmem:[%s7 + $0x1b4] sm:$0xf]
    %v9217 = vld [vmem:[%s7 + $0x1b8] sm:$0xf]
    %v9218 = vld [vmem:[%s7 + $0x1bc] sm:$0xf]
    %v9219 = vld [vmem:[%s7 + $0x1c0] sm:$0xf]
    %v9220 = vld [vmem:[%s7 + $0x1c4] sm:$0xf]
    %v9221 = vld [vmem:[%s7 + $0x1c8] sm:$0xf]
    %v9222 = vld [vmem:[%s7 + $0x1cc] sm:$0xf]
    %v9223 = vld [vmem:[%s7 + $0x1d0] sm:$0xf]
    %v9224 = vld [vmem:[%s7 + $0x1d4] sm:$0xf]
    %v9225 = vld [vmem:[%s7 + $0x1d8] sm:$0xf]
    %v9226 = vld [vmem:[%s7 + $0x1dc] sm:$0xf]
    %v9227 = vld [vmem:[%s7 + $0x1e0] sm:$0xf]
    %v9228 = vld [vmem:[%s7 + $0x1e4] sm:$0xf]
    %v9229 = vld [vmem:[%s7 + $0x1e8] sm:$0xf]
    %v9230 = vld [vmem:[%s7 + $0x1ec] sm:$0xf]
    %v9231 = vld [vmem:[%s7 + $0x1f0] sm:$0xf]
    %v9232 = vld [vmem:[%s7 + $0x1f4] sm:$0xf]
    %v9233 = vld [vmem:[%s7 + $0x1f8] sm:$0xf]
    %v9234 = vld [vmem:[%s7 + $0x1fc] sm:$0xf]
    %v9235 = vld [vmem:[#allocation18] sm:$0x1]
    %v9237 = vlaneseq
    %v9238 = vshrl.u32 %v9237, 7
    %v9239 = vsub.s32 0, %v9238
    %v9240 = vrot.slane %v9235, %v9239
    %v9370 = vunpack.c.l.b16 %v9107
    %v9371 = vunpack.c.l.b16 %v9108
    %v9372 = vunpack.c.l.b16 %v9109
    %v9373 = vunpack.c.l.b16 %v9110
    %v9374 = vunpack.c.l.b16 %v9111
    %v9375 = vunpack.c.l.b16 %v9112
    %v9376 = vunpack.c.l.b16 %v9113
    %v9377 = vunpack.c.l.b16 %v9114
    %v9378 = vunpack.c.l.b16 %v9115
    %v9379 = vunpack.c.l.b16 %v9116
    %v9380 = vunpack.c.l.b16 %v9117
    %v9381 = vunpack.c.l.b16 %v9118
    %v9382 = vunpack.c.l.b16 %v9119
    %v9383 = vunpack.c.l.b16 %v9120
    %v9384 = vunpack.c.l.b16 %v9121
    %v9385 = vunpack.c.l.b16 %v9122
    %v9386 = vunpack.c.l.b16 %v9123
    %v9387 = vunpack.c.l.b16 %v9124
    %v9388 = vunpack.c.l.b16 %v9125
    %v9389 = vunpack.c.l.b16 %v9126
    %v9390 = vunpack.c.l.b16 %v9127
    %v9391 = vunpack.c.l.b16 %v9128
    %v9392 = vunpack.c.l.b16 %v9129
    %v9393 = vunpack.c.l.b16 %v9130
    %v9394 = vunpack.c.l.b16 %v9131
    %v9395 = vunpack.c.l.b16 %v9132
    %v9396 = vunpack.c.l.b16 %v9133
    %v9397 = vunpack.c.l.b16 %v9134
    %v9398 = vunpack.c.l.b16 %v9135
    %v9399 = vunpack.c.l.b16 %v9136
    %v9400 = vunpack.c.l.b16 %v9137
    %v9401 = vunpack.c.l.b16 %v9138
    %v9402 = vunpack.c.l.b16 %v9139
    %v9403 = vunpack.c.l.b16 %v9140
    %v9404 = vunpack.c.l.b16 %v9141
    %v9405 = vunpack.c.l.b16 %v9142
    %v9406 = vunpack.c.l.b16 %v9143
    %v9407 = vunpack.c.l.b16 %v9144
    %v9408 = vunpack.c.l.b16 %v9145
    %v9409 = vunpack.c.l.b16 %v9146
    %v9410 = vunpack.c.l.b16 %v9147
    %v9411 = vunpack.c.l.b16 %v9148
    %v9412 = vunpack.c.l.b16 %v9149
    %v9413 = vunpack.c.l.b16 %v9150
    %v9414 = vunpack.c.l.b16 %v9151
    %v9415 = vunpack.c.l.b16 %v9152
    %v9416 = vunpack.c.l.b16 %v9153
    %v9417 = vunpack.c.l.b16 %v9154
    %v9418 = vunpack.c.l.b16 %v9155
    %v9419 = vunpack.c.l.b16 %v9156
    %v9420 = vunpack.c.l.b16 %v9157
    %v9421 = vunpack.c.l.b16 %v9158
    %v9422 = vunpack.c.l.b16 %v9159
    %v9423 = vunpack.c.l.b16 %v9160
    %v9424 = vunpack.c.l.b16 %v9161
    %v9425 = vunpack.c.l.b16 %v9162
    %v9426 = vunpack.c.l.b16 %v9163
    %v9427 = vunpack.c.l.b16 %v9164
    %v9428 = vunpack.c.l.b16 %v9165
    %v9429 = vunpack.c.l.b16 %v9166
    %v9430 = vunpack.c.l.b16 %v9167
    %v9431 = vunpack.c.l.b16 %v9168
    %v9432 = vunpack.c.l.b16 %v9169
    %v9433 = vunpack.c.l.b16 %v9170
    %v9434 = vunpack.c.l.b16 %v9171
    %v9435 = vunpack.c.l.b16 %v9172
    %v9436 = vunpack.c.l.b16 %v9173
    %v9437 = vunpack.c.l.b16 %v9174
    %v9438 = vunpack.c.l.b16 %v9175
    %v9439 = vunpack.c.l.b16 %v9176
    %v9440 = vunpack.c.l.b16 %v9177
    %v9441 = vunpack.c.l.b16 %v9178
    %v9442 = vunpack.c.l.b16 %v9179
    %v9443 = vunpack.c.l.b16 %v9180
    %v9444 = vunpack.c.l.b16 %v9181
    %v9445 = vunpack.c.l.b16 %v9182
    %v9446 = vunpack.c.l.b16 %v9183
    %v9447 = vunpack.c.l.b16 %v9184
    %v9448 = vunpack.c.l.b16 %v9185
    %v9449 = vunpack.c.l.b16 %v9186
    %v9450 = vunpack.c.l.b16 %v9187
    %v9451 = vunpack.c.l.b16 %v9188
    %v9452 = vunpack.c.l.b16 %v9189
    %v9453 = vunpack.c.l.b16 %v9190
    %v9454 = vunpack.c.l.b16 %v9191
    %v9455 = vunpack.c.l.b16 %v9192
    %v9456 = vunpack.c.l.b16 %v9193
    %v9457 = vunpack.c.l.b16 %v9194
    %v9458 = vunpack.c.l.b16 %v9195
    %v9459 = vunpack.c.l.b16 %v9196
    %v9460 = vunpack.c.l.b16 %v9197
    %v9461 = vunpack.c.l.b16 %v9198
    %v9462 = vunpack.c.l.b16 %v9199
    %v9463 = vunpack.c.l.b16 %v9200
    %v9464 = vunpack.c.l.b16 %v9201
    %v9465 = vunpack.c.l.b16 %v9202
    %v9466 = vunpack.c.l.b16 %v9203
    %v9467 = vunpack.c.l.b16 %v9204
    %v9468 = vunpack.c.l.b16 %v9205
    %v9469 = vunpack.c.l.b16 %v9206
    %v9470 = vunpack.c.l.b16 %v9207
    %v9471 = vunpack.c.l.b16 %v9208
    %v9472 = vunpack.c.l.b16 %v9209
    %v9473 = vunpack.c.l.b16 %v9210
    %v9474 = vunpack.c.l.b16 %v9211
    %v9475 = vunpack.c.l.b16 %v9212
    %v9476 = vunpack.c.l.b16 %v9213
    %v9477 = vunpack.c.l.b16 %v9214
    %v9478 = vunpack.c.l.b16 %v9215
    %v9479 = vunpack.c.l.b16 %v9216
    %v9480 = vunpack.c.l.b16 %v9217
    %v9481 = vunpack.c.l.b16 %v9218
    %v9482 = vunpack.c.l.b16 %v9219
    %v9483 = vunpack.c.l.b16 %v9220
    %v9484 = vunpack.c.l.b16 %v9221
    %v9485 = vunpack.c.l.b16 %v9222
    %v9486 = vunpack.c.l.b16 %v9223
    %v9487 = vunpack.c.l.b16 %v9224
    %v9488 = vunpack.c.l.b16 %v9225
    %v9489 = vunpack.c.l.b16 %v9226
    %v9490 = vunpack.c.l.b16 %v9227
    %v9491 = vunpack.c.l.b16 %v9228
    %v9492 = vunpack.c.l.b16 %v9229
    %v9493 = vunpack.c.l.b16 %v9230
    %v9494 = vunpack.c.l.b16 %v9231
    %v9495 = vunpack.c.l.b16 %v9232
    %v9496 = vunpack.c.l.b16 %v9233
    %v9497 = vunpack.c.l.b16 %v9234
    %v9498 = vpack.c.b16 %v9371, %v9370
    %v9499 = vpack.c.b16 %v9373, %v9372
    %v9500 = vpack.c.b16 %v9375, %v9374
    %v9501 = vpack.c.b16 %v9377, %v9376
    %v9502 = vpack.c.b16 %v9379, %v9378
    %v9503 = vpack.c.b16 %v9381, %v9380
    %v9504 = vpack.c.b16 %v9383, %v9382
    %v9505 = vpack.c.b16 %v9385, %v9384
    %v9506 = vpack.c.b16 %v9387, %v9386
    %v9507 = vpack.c.b16 %v9389, %v9388
    %v9508 = vpack.c.b16 %v9391, %v9390
    %v9509 = vpack.c.b16 %v9393, %v9392
    %v9510 = vpack.c.b16 %v9395, %v9394
    %v9511 = vpack.c.b16 %v9397, %v9396
    %v9512 = vpack.c.b16 %v9399, %v9398
    %v9513 = vpack.c.b16 %v9401, %v9400
    %v9514 = vpack.c.b16 %v9403, %v9402
    %v9515 = vpack.c.b16 %v9405, %v9404
    %v9516 = vpack.c.b16 %v9407, %v9406
    %v9517 = vpack.c.b16 %v9409, %v9408
    %v9518 = vpack.c.b16 %v9411, %v9410
    %v9519 = vpack.c.b16 %v9413, %v9412
    %v9520 = vpack.c.b16 %v9415, %v9414
    %v9521 = vpack.c.b16 %v9417, %v9416
    %v9522 = vpack.c.b16 %v9419, %v9418
    %v9523 = vpack.c.b16 %v9421, %v9420
    %v9524 = vpack.c.b16 %v9423, %v9422
    %v9525 = vpack.c.b16 %v9425, %v9424
    %v9526 = vpack.c.b16 %v9427, %v9426
    %v9527 = vpack.c.b16 %v9429, %v9428
    %v9528 = vpack.c.b16 %v9431, %v9430
    %v9529 = vpack.c.b16 %v9433, %v9432
    %v9530 = vpack.c.b16 %v9435, %v9434
    %v9531 = vpack.c.b16 %v9437, %v9436
    %v9532 = vpack.c.b16 %v9439, %v9438
    %v9533 = vpack.c.b16 %v9441, %v9440
    %v9534 = vpack.c.b16 %v9443, %v9442
    %v9535 = vpack.c.b16 %v9445, %v9444
    %v9536 = vpack.c.b16 %v9447, %v9446
    %v9537 = vpack.c.b16 %v9449, %v9448
    %v9538 = vpack.c.b16 %v9451, %v9450
    %v9539 = vpack.c.b16 %v9453, %v9452
    %v9540 = vpack.c.b16 %v9455, %v9454
    %v9541 = vpack.c.b16 %v9457, %v9456
    %v9542 = vpack.c.b16 %v9459, %v9458
    %v9543 = vpack.c.b16 %v9461, %v9460
    %v9544 = vpack.c.b16 %v9463, %v9462
    %v9545 = vpack.c.b16 %v9465, %v9464
    %v9546 = vpack.c.b16 %v9467, %v9466
    %v9547 = vpack.c.b16 %v9469, %v9468
    %v9548 = vpack.c.b16 %v9471, %v9470
    %v9549 = vpack.c.b16 %v9473, %v9472
    %v9550 = vpack.c.b16 %v9475, %v9474
    %v9551 = vpack.c.b16 %v9477, %v9476
    %v9552 = vpack.c.b16 %v9479, %v9478
    %v9553 = vpack.c.b16 %v9481, %v9480
    %v9554 = vpack.c.b16 %v9483, %v9482
    %v9555 = vpack.c.b16 %v9485, %v9484
    %v9556 = vpack.c.b16 %v9487, %v9486
    %v9557 = vpack.c.b16 %v9489, %v9488
    %v9558 = vpack.c.b16 %v9491, %v9490
    %v9559 = vpack.c.b16 %v9493, %v9492
    %v9560 = vpack.c.b16 %v9495, %v9494
    %v9561 = vpack.c.b16 %v9497, %v9496
    %9626 = vmatprep.subr.bf16.mxu0 0
    %9627 = vmatpush1.bf16.msra.mxu0 %v9498
    %9628 = vmatprep.subr.bf16.mxu0 0
    %9629 = vmatpush1.bf16.msra.mxu0 %v9499
    %9630 = vmatprep.subr.bf16.mxu0 0
    %9631 = vmatpush1.bf16.msra.mxu0 %v9500
    %9632 = vmatprep.subr.bf16.mxu0 0
    %9633 = vmatpush1.bf16.msra.mxu0 %v9501
    %9634 = vmatprep.subr.bf16.mxu0 0
    %9635 = vmatpush1.bf16.msra.mxu0 %v9502
    %9636 = vmatprep.subr.bf16.mxu0 0
    %9637 = vmatpush1.bf16.msra.mxu0 %v9503
    %9638 = vmatprep.subr.bf16.mxu0 0
    %9639 = vmatpush1.bf16.msra.mxu0 %v9504
    %9640 = vmatprep.subr.bf16.mxu0 0
    %9641 = vmatpush1.bf16.msra.mxu0 %v9505
    %9642 = vmatprep.subr.bf16.mxu0 0
    %9643 = vmatpush1.bf16.msra.mxu0 %v9506
    %9644 = vmatprep.subr.bf16.mxu0 0
    %9645 = vmatpush1.bf16.msra.mxu0 %v9507
    %9646 = vmatprep.subr.bf16.mxu0 0
    %9647 = vmatpush1.bf16.msra.mxu0 %v9508
    %9648 = vmatprep.subr.bf16.mxu0 0
    %9649 = vmatpush1.bf16.msra.mxu0 %v9509
    %9650 = vmatprep.subr.bf16.mxu0 0
    %9651 = vmatpush1.bf16.msra.mxu0 %v9510
    %9652 = vmatprep.subr.bf16.mxu0 0
    %9653 = vmatpush1.bf16.msra.mxu0 %v9511
    %9654 = vmatprep.subr.bf16.mxu0 0
    %9655 = vmatpush1.bf16.msra.mxu0 %v9512
    %9656 = vmatprep.subr.bf16.mxu0 0
    %9657 = vmatpush1.bf16.msra.mxu0 %v9513
    %9658 = vmatprep.mubr.bf16.mxu0 %v9100
    %9659 = vmatmul.mubr.bf16.gmra.mrb[0].mxu0 %v9099
    %v9660 = vpop.f32.mrb[0].mxu0
    %v9661 = vadd.f32 %v9240, %v9660
    %v9662 = vpop.f32.mrb[0].mxu0
    %v9663 = vpop.f32.mrb[0].mxu0
    %v9664 = vpop.f32.mrb[0].mxu0
    %9665 = vdwg.mxu0
    %9666 = vmatprep.subr.bf16.mxu0 0
    %9667 = vmatpush1.bf16.msra.mxu0 %v9514
    %9668 = vmatprep.subr.bf16.mxu0 0
    %9669 = vmatpush1.bf16.msra.mxu0 %v9515
    %9670 = vmatprep.subr.bf16.mxu0 0
    %9671 = vmatpush1.bf16.msra.mxu0 %v9516
    %9672 = vmatprep.subr.bf16.mxu0 0
    %9673 = vmatpush1.bf16.msra.mxu0 %v9517
    %9674 = vmatprep.subr.bf16.mxu0 0
    %9675 = vmatpush1.bf16.msra.mxu0 %v9518
    %9676 = vmatprep.subr.bf16.mxu0 0
    %9677 = vmatpush1.bf16.msra.mxu0 %v9519
    %9678 = vmatprep.subr.bf16.mxu0 0
    %9679 = vmatpush1.bf16.msra.mxu0 %v9520
    %9680 = vmatprep.subr.bf16.mxu0 0
    %9681 = vmatpush1.bf16.msra.mxu0 %v9521
    %9682 = vmatprep.subr.bf16.mxu0 0
    %9683 = vmatpush1.bf16.msra.mxu0 %v9522
    %9684 = vmatprep.subr.bf16.mxu0 0
    %9685 = vmatpush1.bf16.msra.mxu0 %v9523
    %9686 = vmatprep.subr.bf16.mxu0 0
    %9687 = vmatpush1.bf16.msra.mxu0 %v9524
    %9688 = vmatprep.subr.bf16.mxu0 0
    %9689 = vmatpush1.bf16.msra.mxu0 %v9525
    %9690 = vmatprep.subr.bf16.mxu0 0
    %9691 = vmatpush1.bf16.msra.mxu0 %v9526
    %9692 = vmatprep.subr.bf16.mxu0 0
    %9693 = vmatpush1.bf16.msra.mxu0 %v9527
    %9694 = vmatprep.subr.bf16.mxu0 0
    %9695 = vmatpush1.bf16.msra.mxu0 %v9528
    %9696 = vmatprep.subr.bf16.mxu0 0
    %9697 = vmatpush1.bf16.msra.mxu0 %v9529
    %9698 = vmatprep.mubr.bf16.mxu0 %v9102
    %9699 = vmatmul.mubr.bf16.gmra.mrb[0].mxu0 %v9101
    %v9700 = vpop.f32.mrb[0].mxu0
    %v9701 = vadd.f32 %v9661, %v9700
    %v9702 = vpop.f32.mrb[0].mxu0
    %v9703 = vpop.f32.mrb[0].mxu0
    %v9704 = vpop.f32.mrb[0].mxu0
    %9705 = vdwg.mxu0
    %9706 = vmatprep.subr.bf16.mxu0 0
    %9707 = vmatpush1.bf16.msra.mxu0 %v9530
    %9708 = vmatprep.subr.bf16.mxu0 0
    %9709 = vmatpush1.bf16.msra.mxu0 %v9531
    %9710 = vmatprep.subr.bf16.mxu0 0
    %9711 = vmatpush1.bf16.msra.mxu0 %v9532
    %9712 = vmatprep.subr.bf16.mxu0 0
    %9713 = vmatpush1.bf16.msra.mxu0 %v9533
    %9714 = vmatprep.subr.bf16.mxu0 0
    %9715 = vmatpush1.bf16.msra.mxu0 %v9534
    %9716 = vmatprep.subr.bf16.mxu0 0
    %9717 = vmatpush1.bf16.msra.mxu0 %v9535
    %9718 = vmatprep.subr.bf16.mxu0 0
    %9719 = vmatpush1.bf16.msra.mxu0 %v9536
    %9720 = vmatprep.subr.bf16.mxu0 0
    %9721 = vmatpush1.bf16.msra.mxu0 %v9537
    %9722 = vmatprep.subr.bf16.mxu0 0
    %9723 = vmatpush1.bf16.msra.mxu0 %v9538
    %9724 = vmatprep.subr.bf16.mxu0 0
    %9725 = vmatpush1.bf16.msra.mxu0 %v9539
    %9726 = vmatprep.subr.bf16.mxu0 0
    %9727 = vmatpush1.bf16.msra.mxu0 %v9540
    %9728 = vmatprep.subr.bf16.mxu0 0
    %9729 = vmatpush1.bf16.msra.mxu0 %v9541
    %9730 = vmatprep.subr.bf16.mxu0 0
    %9731 = vmatpush1.bf16.msra.mxu0 %v9542
    %9732 = vmatprep.subr.bf16.mxu0 0
    %9733 = vmatpush1.bf16.msra.mxu0 %v9543
    %9734 = vmatprep.subr.bf16.mxu0 0
    %9735 = vmatpush1.bf16.msra.mxu0 %v9544
    %9736 = vmatprep.subr.bf16.mxu0 0
    %9737 = vmatpush1.bf16.msra.mxu0 %v9545
    %9738 = vmatprep.mubr.bf16.mxu0 %v9104
    %9739 = vmatmul.mubr.bf16.gmra.mrb[0].mxu0 %v9103
    %v9740 = vpop.f32.mrb[0].mxu0
    %v9741 = vadd.f32 %v9701, %v9740
    %v9742 = vpop.f32.mrb[0].mxu0
    %v9743 = vpop.f32.mrb[0].mxu0
    %v9744 = vpop.f32.mrb[0].mxu0
    %9745 = vdwg.mxu0
    %9746 = vmatprep.subr.bf16.mxu0 0
    %9747 = vmatpush1.bf16.msra.mxu0 %v9546
    %9748 = vmatprep.subr.bf16.mxu0 0
    %9749 = vmatpush1.bf16.msra.mxu0 %v9547
    %9750 = vmatprep.subr.bf16.mxu0 0
    %9751 = vmatpush1.bf16.msra.mxu0 %v9548
    %9752 = vmatprep.subr.bf16.mxu0 0
    %9753 = vmatpush1.bf16.msra.mxu0 %v9549
    %9754 = vmatprep.subr.bf16.mxu0 0
    %9755 = vmatpush1.bf16.msra.mxu0 %v9550
    %9756 = vmatprep.subr.bf16.mxu0 0
    %9757 = vmatpush1.bf16.msra.mxu0 %v9551
    %9758 = vmatprep.subr.bf16.mxu0 0
    %9759 = vmatpush1.bf16.msra.mxu0 %v9552
    %9760 = vmatprep.subr.bf16.mxu0 0
    %9761 = vmatpush1.bf16.msra.mxu0 %v9553
    %9762 = vmatprep.subr.bf16.mxu0 0
    %9763 = vmatpush1.bf16.msra.mxu0 %v9554
    %9764 = vmatprep.subr.bf16.mxu0 0
    %9765 = vmatpush1.bf16.msra.mxu0 %v9555
    %9766 = vmatprep.subr.bf16.mxu0 0
    %9767 = vmatpush1.bf16.msra.mxu0 %v9556
    %9768 = vmatprep.subr.bf16.mxu0 0
    %9769 = vmatpush1.bf16.msra.mxu0 %v9557
    %9770 = vmatprep.subr.bf16.mxu0 0
    %9771 = vmatpush1.bf16.msra.mxu0 %v9558
    %9772 = vmatprep.subr.bf16.mxu0 0
    %9773 = vmatpush1.bf16.msra.mxu0 %v9559
    %9774 = vmatprep.subr.bf16.mxu0 0
    %9775 = vmatpush1.bf16.msra.mxu0 %v9560
    %9776 = vmatprep.subr.bf16.mxu0 0
    %9777 = vmatpush1.bf16.msra.mxu0 %v9561
    %9778 = vmatprep.mubr.bf16.mxu0 %v9106
    %9779 = vmatmul.mubr.bf16.gmra.mrb[0].mxu0 %v9105
    %v9780 = vpop.f32.mrb[0].mxu0
    %v9781 = vadd.f32 %v9741, %v9780
    %v9782 = vpop.f32.mrb[0].mxu0
    %v9783 = vpop.f32.mrb[0].mxu0
    %v9784 = vpop.f32.mrb[0].mxu0
    %9785 = vdwg.mxu0
    %vm9786 = vcmask 74752
    %9787 = vst.msk [vmem:[#allocation19] sm:$0x3] %vm9786, %v9781
    // Predicated region
    $region58: #{cnn_forward.1} parent=1 // pred_check
      _
    $region59: #{cnn_forward.1} parent=1 // pred_check_branch
      %9789 = sbr.rel (0) target = $region61
    $region60: #{cnn_forward.1} parent=1 // pred_region
      %s9791 = ssub.s32 32, 32
      %9792 = vsyncadd [#allocation12], %s9791
      %s9794 = sshll.u32 [#allocation19], 4
      %s9795 = int_to_ptr.vmem [resolvable:$true] %s9794
      %9797 = dma.vmem_to_hbm [thread:$0]  %s9795, 32, %s11, [#allocation12]
    $region61: #{cnn_forward.1} parent=1 // pred_fallthru
      _
    // Predicated region
    $region62: #{cnn_forward.1} parent=1 // pred_check
      _
    $region63: #{cnn_forward.1} parent=1 // pred_check_branch
      %9799 = sbr.rel (0) target = $region65
    $region64: #{cnn_forward.1} parent=1 // pred_region
      %9800 = dma.done [#allocation12], 32
    $region65: #{cnn_forward.1} parent=1 // pred_fallthru
      _
    %9801 = vsyncpa [#allocation11], 1
    %9802 = vsyncpa [#allocation14], 1
    %9803 = vsyncpa [#allocation17], 1
    %9804 = vsyncpa [#allocation12], 1
  %9805 = vsyncmov [#allocation9]
  %s9806 = vpop.sfrf %9805
  %p9807 = scmp.eq.s32.totalorder %s9806, 0
  %p9808 = pneg %p9807
  %9810 = shalt.err (%p9808)
  %s9811 = scalar_lea.sflag [#allocation9], 1
  %9812 = vsyncmov %s9811
  %s9813 = vpop.sfrf %9812
  %p9814 = scmp.eq.s32.totalorder %s9813, 0
  %p9815 = pneg %p9814
  %9817 = shalt.err (%p9815)
  %s9818 = scalar_lea.sflag [#allocation9], 2
  %9819 = vsyncmov %s9818
  %s9820 = vpop.sfrf %9819
  %p9821 = scmp.eq.s32.totalorder %s9820, 0
  %p9822 = pneg %p9821
  %9824 = shalt.err (%p9822)

</llo_original>
